<compile_context>
chip_gen: v7x
topology: tpu7x:2x2x1
jax: 0.10.0
libtpu: 0.0.40
codegen_flags: <defaults>
</compile_context>

<pallas_src>
import functools

import jax
import jax.numpy as jnp
from jax import lax
from jax.experimental import pallas as pl
from jax.experimental.pallas import tpu as pltpu


_TILE = 256                       # MXU-native tile for v6e/v7x (use 128 on v5e)
_VMEM_LIMIT = 48 * 1024 * 1024    # leaves headroom on v7x's 64 MiB physical VMEM


def _round_up(x, m):
    return (x + m - 1) // m * m


def _pad2d(x, row_mult, col_mult):
    r, c = x.shape
    rp, cp = _round_up(r, row_mult), _round_up(c, col_mult)
    if (rp, cp) == (r, c):
        return x
    return jnp.pad(x, ((0, rp - r), (0, cp - c)))


def _compiler_params():
    return pltpu.CompilerParams(
        dimension_semantics=("parallel", "parallel", "arbitrary"),
        vmem_limit_bytes=_VMEM_LIMIT)


def _cost(m, n, k, in_itemsize, out_itemsize):
    return pl.CostEstimate(
        flops=2 * m * n * k,
        transcendentals=0,
        bytes_accessed=(m * k + k * n) * in_itemsize + m * n * out_itemsize)


# ---------------------------------------------------------------------------
# Kernel bodies
# ---------------------------------------------------------------------------

def _matmul_kernel(a_ref, b_ref, o_ref, acc_ref, *, relu):
    """One (tm, tn) output tile; K-reduction over grid axis 2, f32 accumulator."""
    @pl.when(pl.program_id(2) == 0)
    def _init():
        acc_ref[...] = jnp.zeros_like(acc_ref)

    acc_ref[...] += jnp.dot(a_ref[...], b_ref[...],
                            preferred_element_type=jnp.float32)

    @pl.when(pl.program_id(2) == pl.num_programs(2) - 1)
    def _finalize():
        acc = acc_ref[...]
        if relu:
            acc = jnp.maximum(acc, 0.0)
        o_ref[...] = acc.astype(o_ref.dtype)


def _matmul_relu_scale_kernel(a_ref, b_ref, r_ref, z_ref, zr_ref, acc_ref):
    """dd layer: z = relu(A @ B); also emits z * r so the DistMult relation
    scaling is done once per drug-feature tile (hoisted out of the decoder)."""
    @pl.when(pl.program_id(2) == 0)
    def _init():
        acc_ref[...] = jnp.zeros_like(acc_ref)

    acc_ref[...] += jnp.dot(a_ref[...], b_ref[...],
                            preferred_element_type=jnp.float32)

    @pl.when(pl.program_id(2) == pl.num_programs(2) - 1)
    def _finalize():
        z = jnp.maximum(acc_ref[...], 0.0)
        z_ref[...] = z.astype(z_ref.dtype)
        zr_ref[...] = (z * r_ref[...].astype(jnp.float32)).astype(zr_ref.dtype)


def _matmul_nt_kernel(a_ref, b_ref, o_ref, acc_ref):
    """O = A @ B^T, contracting axis 1 of both operands (no transpose of B)."""
    @pl.when(pl.program_id(2) == 0)
    def _init():
        acc_ref[...] = jnp.zeros_like(acc_ref)

    acc_ref[...] += lax.dot_general(
        a_ref[...], b_ref[...],
        dimension_numbers=(((1,), (1,)), ((), ())),
        preferred_element_type=jnp.float32)

    @pl.when(pl.program_id(2) == pl.num_programs(2) - 1)
    def _finalize():
        o_ref[...] = acc_ref[...].astype(o_ref.dtype)


# ---------------------------------------------------------------------------
# Tiled pallas_call wrappers (intermediates round-trip HBM between stages)
# ---------------------------------------------------------------------------

def _tiled_matmul(a, b, *, relu=False, out_dtype=jnp.float32,
                  tm=_TILE, tn=_TILE, tk=_TILE):
    m, k = a.shape
    k2, n = b.shape
    assert k == k2, (a.shape, b.shape)
    a_p = _pad2d(a, tm, tk)
    b_p = _pad2d(b, tk, tn)
    mp, kp = a_p.shape
    np_ = b_p.shape[1]
    grid = (mp // tm, np_ // tn, kp // tk)
    out = pl.pallas_call(
        functools.partial(_matmul_kernel, relu=relu),
        out_shape=jax.ShapeDtypeStruct((mp, np_), out_dtype),
        grid_spec=pltpu.PrefetchScalarGridSpec(
            num_scalar_prefetch=0,
            grid=grid,
            in_specs=[pl.BlockSpec((tm, tk), lambda i, j, kk: (i, kk)),
                      pl.BlockSpec((tk, tn), lambda i, j, kk: (kk, j))],
            out_specs=pl.BlockSpec((tm, tn), lambda i, j, kk: (i, j)),
            scratch_shapes=[pltpu.VMEM((tm, tn), jnp.float32)]),
        compiler_params=_compiler_params(),
        cost_estimate=_cost(mp, np_, kp, a_p.dtype.itemsize,
                            jnp.dtype(out_dtype).itemsize),
    )(a_p, b_p)
    return out[:m, :n]


def _tiled_matmul_relu_scale(a, b, r, *, out_dtype=jnp.float32,
                             tm=_TILE, tn=_TILE, tk=_TILE):
    m, k = a.shape
    k2, n = b.shape
    assert k == k2, (a.shape, b.shape)
    a_p = _pad2d(a, tm, tk)
    b_p = _pad2d(b, tk, tn)
    r_p = _pad2d(r, 1, tn)
    mp, kp = a_p.shape
    np_ = b_p.shape[1]
    grid = (mp // tm, np_ // tn, kp // tk)
    z, zr = pl.pallas_call(
        _matmul_relu_scale_kernel,
        out_shape=(jax.ShapeDtypeStruct((mp, np_), out_dtype),
                   jax.ShapeDtypeStruct((mp, np_), out_dtype)),
        grid_spec=pltpu.PrefetchScalarGridSpec(
            num_scalar_prefetch=0,
            grid=grid,
            in_specs=[pl.BlockSpec((tm, tk), lambda i, j, kk: (i, kk)),
                      pl.BlockSpec((tk, tn), lambda i, j, kk: (kk, j)),
                      pl.BlockSpec((1, tn), lambda i, j, kk: (0, j))],
            out_specs=(pl.BlockSpec((tm, tn), lambda i, j, kk: (i, j)),
                       pl.BlockSpec((tm, tn), lambda i, j, kk: (i, j))),
            scratch_shapes=[pltpu.VMEM((tm, tn), jnp.float32)]),
        compiler_params=_compiler_params(),
        cost_estimate=_cost(mp, np_, kp, a_p.dtype.itemsize,
                            2 * jnp.dtype(out_dtype).itemsize),
    )(a_p, b_p, r_p)
    return z[:m, :n], zr[:m, :n]


def _tiled_matmul_nt(a, b, *, out_dtype=jnp.float32,
                     tm=_TILE, tn=_TILE, tk=_TILE):
    """out[i, j] = sum_k a[i, k] * b[j, k]   (i.e. a @ b.T, no transpose)."""
    m, k = a.shape
    n, k2 = b.shape
    assert k == k2, (a.shape, b.shape)
    a_p = _pad2d(a, tm, tk)
    b_p = _pad2d(b, tn, tk)
    mp, kp = a_p.shape
    np_ = b_p.shape[0]
    grid = (mp // tm, np_ // tn, kp // tk)
    out = pl.pallas_call(
        _matmul_nt_kernel,
        out_shape=jax.ShapeDtypeStruct((mp, np_), out_dtype),
        grid_spec=pltpu.PrefetchScalarGridSpec(
            num_scalar_prefetch=0,
            grid=grid,
            in_specs=[pl.BlockSpec((tm, tk), lambda i, j, kk: (i, kk)),
                      pl.BlockSpec((tn, tk), lambda i, j, kk: (j, kk))],
            out_specs=pl.BlockSpec((tm, tn), lambda i, j, kk: (i, j)),
            scratch_shapes=[pltpu.VMEM((tm, tn), jnp.float32)]),
        compiler_params=_compiler_params(),
        cost_estimate=_cost(mp, np_, kp, a_p.dtype.itemsize,
                            jnp.dtype(out_dtype).itemsize),
    )(a_p, b_p)
    return out[:m, :n]


# ---------------------------------------------------------------------------
# GripNet-pose forward
# ---------------------------------------------------------------------------

def gripnet_forward(a_gg, x_g, w_gg, a_gd, w_gd, a_dd, w_dd, r_dmt,
                    *, compute_dtype=jnp.float32, tile=_TILE):
    """gg -> gd -> dd GCN stack + DistMult drug-drug decoder."""
    n_drug = a_dd.shape[0]
    cd = compute_dtype
    t = tile

    # Cast + zero-pad once at the boundary: everything downstream is
    # lane-dense and tile-aligned (zero padding is exact through matmul/relu).
    a_gg_p = _pad2d(a_gg.astype(cd), t, t)
    x_g_p = _pad2d(x_g.astype(cd), t, t)
    w_gg_p = _pad2d(w_gg.astype(cd), t, t)
    a_gd_p = _pad2d(a_gd.astype(cd), t, t)
    w_gd_p = _pad2d(w_gd.astype(cd), t, t)
    a_dd_p = _pad2d(a_dd.astype(cd), t, t)
    w_dd_p = _pad2d(w_dd.astype(cd), t, t)
    r_p = _pad2d(r_dmt.astype(cd), 1, t)

    kw = dict(out_dtype=cd, tm=t, tn=t, tk=t)

    # gg: gene super-vertex GCN layer
    t1 = _tiled_matmul(x_g_p, w_gg_p, **kw)
    h_g = _tiled_matmul(a_gg_p, t1, relu=True, **kw)
    # gd: gene -> drug bipartite propagation
    t2 = _tiled_matmul(h_g, w_gd_p, **kw)
    h_d = _tiled_matmul(a_gd_p, t2, relu=True, **kw)
    # dd: drug super-vertex GCN layer (+ fused DistMult relation scaling)
    t3 = _tiled_matmul(h_d, w_dd_p, **kw)
    z_d, z_r = _tiled_matmul_relu_scale(a_dd_p, t3, r_p, out_dtype=cd,
                                        tm=t, tn=t, tk=t)
    # dmt: DistMult decoder, scores = (z * r) @ z^T (contract feature axis)
    scores = _tiled_matmul_nt(z_r, z_d, out_dtype=jnp.float32,
                              tm=t, tn=t, tk=t)
    return scores[:n_drug, :n_drug]


def _row_normalize(a):
    return a / jnp.maximum(a.sum(axis=-1, keepdims=True), 1e-6)


if __name__ == "__main__":
    key = jax.random.PRNGKey(0)
    ks = jax.random.split(key, 8)

    # Small but deliberately non-tile-aligned, multi-tile shapes so padding,
    # slicing, the K-reduction accumulator and multi-block grids all run.
    n_gene, n_drug = 300, 200
    d_gene_in, d_gene_hid, d_drug_hid, d_out = 192, 128, 96, 160

    a_gg = _row_normalize(
        jax.random.uniform(ks[0], (n_gene, n_gene), jnp.float32))
    a_gd = _row_normalize(
        jax.random.uniform(ks[1], (n_drug, n_gene), jnp.float32))
    a_dd = _row_normalize(
        jax.random.uniform(ks[2], (n_drug, n_drug), jnp.float32))

    x_g = jax.random.normal(ks[3], (n_gene, d_gene_in), jnp.float32)
    w_gg = jax.random.normal(ks[4], (d_gene_in, d_gene_hid), jnp.float32) * 0.1
    w_gd = jax.random.normal(ks[5], (d_gene_hid, d_drug_hid), jnp.float32) * 0.1
    w_dd = jax.random.normal(ks[6], (d_drug_hid, d_out), jnp.float32) * 0.1
    r_dmt = jax.random.normal(ks[7], (1, d_out), jnp.float32) * 0.1

    # f32 demo (tile=128 keeps the toy problem multi-tile; use bf16 + tile=256
    # for production-size graphs on v6e/v7x).
    fwd = jax.jit(functools.partial(gripnet_forward,
                                    compute_dtype=jnp.float32, tile=128))
    out = fwd(a_gg, x_g, w_gg, a_gd, w_gd, a_dd, w_dd, r_dmt)
    jax.block_until_ready(out)

    # Pure-JAX reference check.
    h_g = jnp.maximum(a_gg @ (x_g @ w_gg), 0.0)
    h_d = jnp.maximum(a_gd @ (h_g @ w_gd), 0.0)
    z_d = jnp.maximum(a_dd @ (h_d @ w_dd), 0.0)
    ref = (z_d * r_dmt) @ z_d.T

    assert out.shape == ref.shape, (out.shape, ref.shape)
    max_err = float(jnp.max(jnp.abs(out - ref)))
    ref_scale = float(jnp.max(jnp.abs(ref)))
    assert max_err <= 1e-3 * ref_scale + 1e-6, (max_err, ref_scale)

    print("KERNEL_OK")
</pallas_src>

<mosaic_0001>
module attributes {stable_mosaic.version = 11 : i64} {
  func.func @_matmul_kernel(%arg0: i32, %arg1: i32, %arg2: i32, %arg3: memref<128x128xf32, #tpu.memory_space<vmem>>, %arg4: memref<128x128xf32, #tpu.memory_space<vmem>>, %arg5: memref<128x128xf32, #tpu.memory_space<vmem>>, %arg6: memref<128x128xf32, #tpu.memory_space<vmem>>) attributes {dimension_semantics = [#tpu.dimension_semantics<parallel>, #tpu.dimension_semantics<parallel>, #tpu.dimension_semantics<arbitrary>], iteration_bounds = array<i64: 3, 1, 2>, scalar_prefetch = 0 : i64, scratch_operands = 1 : i64, tpu.core_type = #tpu.core_type<tc>, window_params = [{transform_indices = @transform_0, window_bounds = array<i64: 128, 128>}, {transform_indices = @transform_1, window_bounds = array<i64: 128, 128>}, {transform_indices = @transform_2, window_bounds = array<i64: 128, 128>}]} {
    %c0_i32 = arith.constant 0 : i32
    %0 = arith.cmpi eq, %arg2, %c0_i32 : i32
    %1 = arith.extui %0 : i1 to i32
    %c0_i32_0 = arith.constant 0 : i32
    %2 = arith.cmpi ne, %1, %c0_i32_0 : i32
    scf.if %2 {
      %cst_9 = arith.constant 0.000000e+00 : f32
      %12 = vector.broadcast %cst_9 : f32 to vector<128x128xf32>
      %c0_10 = arith.constant 0 : index
      %c0_11 = arith.constant 0 : index
      %13 = vector.load %arg6[%c0_10, %c0_11] : memref<128x128xf32, #tpu.memory_space<vmem>>, vector<128x128xf32>
      tpu.vector_store %arg6[%c0_10, %c0_11], %12 {strides = array<i32>} : memref<128x128xf32, #tpu.memory_space<vmem>>, vector<128x128xf32>,
    } else {
    }
    %c0 = arith.constant 0 : index
    %c0_1 = arith.constant 0 : index
    %3 = vector.load %arg6[%c0, %c0_1] : memref<128x128xf32, #tpu.memory_space<vmem>>, vector<128x128xf32>
    %c0_2 = arith.constant 0 : index
    %c0_3 = arith.constant 0 : index
    %4 = vector.load %arg3[%c0_2, %c0_3] : memref<128x128xf32, #tpu.memory_space<vmem>>, vector<128x128xf32>
    %c0_4 = arith.constant 0 : index
    %c0_5 = arith.constant 0 : index
    %5 = vector.load %arg4[%c0_4, %c0_5] : memref<128x128xf32, #tpu.memory_space<vmem>>, vector<128x128xf32>
    %cst = arith.constant dense<0.000000e+00> : vector<128x128xf32>
    %6 = tpu.matmul %4, %5, %cst {dimension_numbers = #tpu.dot_dimension_numbers<[1], [0], [0], [1], [0, 0, 1, 1], [], []>} : vector<128x128xf32>, vector<128x128xf32>, vector<128x128xf32> -> vector<128x128xf32>
    %7 = arith.addf %3, %6 : vector<128x128xf32>
    %c0_6 = arith.constant 0 : index
    %c0_7 = arith.constant 0 : index
    %8 = vector.load %arg6[%c0_6, %c0_7] : memref<128x128xf32, #tpu.memory_space<vmem>>, vector<128x128xf32>
    tpu.vector_store %arg6[%c0_6, %c0_7], %7 {strides = array<i32>} : memref<128x128xf32, #tpu.memory_space<vmem>>, vector<128x128xf32>,
    %c1_i32 = arith.constant 1 : i32
    %9 = arith.cmpi eq, %arg2, %c1_i32 : i32
    %10 = arith.extui %9 : i1 to i32
    %c0_i32_8 = arith.constant 0 : i32
    %11 = arith.cmpi ne, %10, %c0_i32_8 : i32
    scf.if %11 {
      %c0_9 = arith.constant 0 : index
      %c0_10 = arith.constant 0 : index
      %12 = vector.load %arg6[%c0_9, %c0_10] : memref<128x128xf32, #tpu.memory_space<vmem>>, vector<128x128xf32>
      %c0_11 = arith.constant 0 : index
      %c0_12 = arith.constant 0 : index
      %13 = vector.load %arg5[%c0_11, %c0_12] : memref<128x128xf32, #tpu.memory_space<vmem>>, vector<128x128xf32>
      tpu.vector_store %arg5[%c0_11, %c0_12], %12 {strides = array<i32>} : memref<128x128xf32, #tpu.memory_space<vmem>>, vector<128x128xf32>,
    } else {
    }
    return
  }
  func.func @transform_0(%arg0: i32, %arg1: i32, %arg2: i32) -> (i32, i32) {
    %c0_i32 = arith.constant 0 : i32
    return %arg0, %arg2 : i32, i32
  }
  func.func @transform_1(%arg0: i32, %arg1: i32, %arg2: i32) -> (i32, i32) {
    %c0_i32 = arith.constant 0 : i32
    return %arg2, %arg1 : i32, i32
  }
  func.func @transform_2(%arg0: i32, %arg1: i32, %arg2: i32) -> (i32, i32) {
    %c0_i32 = arith.constant 0 : i32
    return %arg0, %arg1 : i32, i32
  }
}

module attributes {stable_mosaic.version = 11 : i64} {
  func.func @_matmul_kernel(%arg0: i32, %arg1: i32, %arg2: i32, %arg3: memref<128x128xf32, #tpu.memory_space<vmem>>, %arg4: memref<128x128xf32, #tpu.memory_space<vmem>>, %arg5: memref<128x128xf32, #tpu.memory_space<vmem>>, %arg6: memref<128x128xf32, #tpu.memory_space<vmem>>) attributes {dimension_semantics = [#tpu.dimension_semantics<parallel>, #tpu.dimension_semantics<parallel>, #tpu.dimension_semantics<arbitrary>], iteration_bounds = array<i64: 3, 1, 3>, scalar_prefetch = 0 : i64, scratch_operands = 1 : i64, tpu.core_type = #tpu.core_type<tc>, window_params = [{transform_indices = @transform_0, window_bounds = array<i64: 128, 128>}, {transform_indices = @transform_1, window_bounds = array<i64: 128, 128>}, {transform_indices = @transform_2, window_bounds = array<i64: 128, 128>}]} {
    %c0_i32 = arith.constant 0 : i32
    %0 = arith.cmpi eq, %arg2, %c0_i32 : i32
    %1 = arith.extui %0 : i1 to i32
    %c0_i32_0 = arith.constant 0 : i32
    %2 = arith.cmpi ne, %1, %c0_i32_0 : i32
    scf.if %2 {
      %cst_9 = arith.constant 0.000000e+00 : f32
      %12 = vector.broadcast %cst_9 : f32 to vector<128x128xf32>
      %c0_10 = arith.constant 0 : index
      %c0_11 = arith.constant 0 : index
      %13 = vector.load %arg6[%c0_10, %c0_11] : memref<128x128xf32, #tpu.memory_space<vmem>>, vector<128x128xf32>
      tpu.vector_store %arg6[%c0_10, %c0_11], %12 {strides = array<i32>} : memref<128x128xf32, #tpu.memory_space<vmem>>, vector<128x128xf32>,
    } else {
    }
    %c0 = arith.constant 0 : index
    %c0_1 = arith.constant 0 : index
    %3 = vector.load %arg6[%c0, %c0_1] : memref<128x128xf32, #tpu.memory_space<vmem>>, vector<128x128xf32>
    %c0_2 = arith.constant 0 : index
    %c0_3 = arith.constant 0 : index
    %4 = vector.load %arg3[%c0_2, %c0_3] : memref<128x128xf32, #tpu.memory_space<vmem>>, vector<128x128xf32>
    %c0_4 = arith.constant 0 : index
    %c0_5 = arith.constant 0 : index
    %5 = vector.load %arg4[%c0_4, %c0_5] : memref<128x128xf32, #tpu.memory_space<vmem>>, vector<128x128xf32>
    %cst = arith.constant dense<0.000000e+00> : vector<128x128xf32>
    %6 = tpu.matmul %4, %5, %cst {dimension_numbers = #tpu.dot_dimension_numbers<[1], [0], [0], [1], [0, 0, 1, 1], [], []>} : vector<128x128xf32>, vector<128x128xf32>, vector<128x128xf32> -> vector<128x128xf32>
    %7 = arith.addf %3, %6 : vector<128x128xf32>
    %c0_6 = arith.constant 0 : index
    %c0_7 = arith.constant 0 : index
    %8 = vector.load %arg6[%c0_6, %c0_7] : memref<128x128xf32, #tpu.memory_space<vmem>>, vector<128x128xf32>
    tpu.vector_store %arg6[%c0_6, %c0_7], %7 {strides = array<i32>} : memref<128x128xf32, #tpu.memory_space<vmem>>, vector<128x128xf32>,
    %c2_i32 = arith.constant 2 : i32
    %9 = arith.cmpi eq, %arg2, %c2_i32 : i32
    %10 = arith.extui %9 : i1 to i32
    %c0_i32_8 = arith.constant 0 : i32
    %11 = arith.cmpi ne, %10, %c0_i32_8 : i32
    scf.if %11 {
      %c0_9 = arith.constant 0 : index
      %c0_10 = arith.constant 0 : index
      %12 = vector.load %arg6[%c0_9, %c0_10] : memref<128x128xf32, #tpu.memory_space<vmem>>, vector<128x128xf32>
      %cst_11 = arith.constant 0.000000e+00 : f32
      %13 = vector.broadcast %cst_11 : f32 to vector<128x128xf32>
      %14 = arith.maximumf %12, %13 : vector<128x128xf32>
      %c0_12 = arith.constant 0 : index
      %c0_13 = arith.constant 0 : index
      %15 = vector.load %arg5[%c0_12, %c0_13] : memref<128x128xf32, #tpu.memory_space<vmem>>, vector<128x128xf32>
      tpu.vector_store %arg5[%c0_12, %c0_13], %14 {strides = array<i32>} : memref<128x128xf32, #tpu.memory_space<vmem>>, vector<128x128xf32>,
    } else {
    }
    return
  }
  func.func @transform_0(%arg0: i32, %arg1: i32, %arg2: i32) -> (i32, i32) {
    %c0_i32 = arith.constant 0 : i32
    return %arg0, %arg2 : i32, i32
  }
  func.func @transform_1(%arg0: i32, %arg1: i32, %arg2: i32) -> (i32, i32) {
    %c0_i32 = arith.constant 0 : i32
    return %arg2, %arg1 : i32, i32
  }
  func.func @transform_2(%arg0: i32, %arg1: i32, %arg2: i32) -> (i32, i32) {
    %c0_i32 = arith.constant 0 : i32
    return %arg0, %arg1 : i32, i32
  }
}

module attributes {stable_mosaic.version = 11 : i64} {
  func.func @_matmul_kernel(%arg0: i32, %arg1: i32, %arg2: i32, %arg3: memref<128x128xf32, #tpu.memory_space<vmem>>, %arg4: memref<128x128xf32, #tpu.memory_space<vmem>>, %arg5: memref<128x128xf32, #tpu.memory_space<vmem>>, %arg6: memref<128x128xf32, #tpu.memory_space<vmem>>) attributes {dimension_semantics = [#tpu.dimension_semantics<parallel>, #tpu.dimension_semantics<parallel>, #tpu.dimension_semantics<arbitrary>], iteration_bounds = array<i64: 3, 1, 1>, scalar_prefetch = 0 : i64, scratch_operands = 1 : i64, tpu.core_type = #tpu.core_type<tc>, window_params = [{transform_indices = @transform_0, window_bounds = array<i64: 128, 128>}, {transform_indices = @transform_1, window_bounds = array<i64: 128, 128>}, {transform_indices = @transform_2, window_bounds = array<i64: 128, 128>}]} {
    %c0_i32 = arith.constant 0 : i32
    %0 = arith.cmpi eq, %arg2, %c0_i32 : i32
    %1 = arith.extui %0 : i1 to i32
    %c0_i32_0 = arith.constant 0 : i32
    %2 = arith.cmpi ne, %1, %c0_i32_0 : i32
    scf.if %2 {
      %cst_10 = arith.constant 0.000000e+00 : f32
      %12 = vector.broadcast %cst_10 : f32 to vector<128x128xf32>
      %c0_11 = arith.constant 0 : index
      %c0_12 = arith.constant 0 : index
      %13 = vector.load %arg6[%c0_11, %c0_12] : memref<128x128xf32, #tpu.memory_space<vmem>>, vector<128x128xf32>
      tpu.vector_store %arg6[%c0_11, %c0_12], %12 {strides = array<i32>} : memref<128x128xf32, #tpu.memory_space<vmem>>, vector<128x128xf32>,
    } else {
    }
    %c0 = arith.constant 0 : index
    %c0_1 = arith.constant 0 : index
    %3 = vector.load %arg6[%c0, %c0_1] : memref<128x128xf32, #tpu.memory_space<vmem>>, vector<128x128xf32>
    %c0_2 = arith.constant 0 : index
    %c0_3 = arith.constant 0 : index
    %4 = vector.load %arg3[%c0_2, %c0_3] : memref<128x128xf32, #tpu.memory_space<vmem>>, vector<128x128xf32>
    %c0_4 = arith.constant 0 : index
    %c0_5 = arith.constant 0 : index
    %5 = vector.load %arg4[%c0_4, %c0_5] : memref<128x128xf32, #tpu.memory_space<vmem>>, vector<128x128xf32>
    %cst = arith.constant dense<0.000000e+00> : vector<128x128xf32>
    %6 = tpu.matmul %4, %5, %cst {dimension_numbers = #tpu.dot_dimension_numbers<[1], [0], [0], [1], [0, 0, 1, 1], [], []>} : vector<128x128xf32>, vector<128x128xf32>, vector<128x128xf32> -> vector<128x128xf32>
    %7 = arith.addf %3, %6 : vector<128x128xf32>
    %c0_6 = arith.constant 0 : index
    %c0_7 = arith.constant 0 : index
    %8 = vector.load %arg6[%c0_6, %c0_7] : memref<128x128xf32, #tpu.memory_space<vmem>>, vector<128x128xf32>
    tpu.vector_store %arg6[%c0_6, %c0_7], %7 {strides = array<i32>} : memref<128x128xf32, #tpu.memory_space<vmem>>, vector<128x128xf32>,
    %c0_i32_8 = arith.constant 0 : i32
    %9 = arith.cmpi eq, %arg2, %c0_i32_8 : i32
    %10 = arith.extui %9 : i1 to i32
    %c0_i32_9 = arith.constant 0 : i32
    %11 = arith.cmpi ne, %10, %c0_i32_9 : i32
    scf.if %11 {
      %c0_10 = arith.constant 0 : index
      %c0_11 = arith.constant 0 : index
      %12 = vector.load %arg6[%c0_10, %c0_11] : memref<128x128xf32, #tpu.memory_space<vmem>>, vector<128x128xf32>
      %c0_12 = arith.constant 0 : index
      %c0_13 = arith.constant 0 : index
      %13 = vector.load %arg5[%c0_12, %c0_13] : memref<128x128xf32, #tpu.memory_space<vmem>>, vector<128x128xf32>
      tpu.vector_store %arg5[%c0_12, %c0_13], %12 {strides = array<i32>} : memref<128x128xf32, #tpu.memory_space<vmem>>, vector<128x128xf32>,
    } else {
    }
    return
  }
  func.func @transform_0(%arg0: i32, %arg1: i32, %arg2: i32) -> (i32, i32) {
    %c0_i32 = arith.constant 0 : i32
    return %arg0, %arg2 : i32, i32
  }
  func.func @transform_1(%arg0: i32, %arg1: i32, %arg2: i32) -> (i32, i32) {
    %c0_i32 = arith.constant 0 : i32
    return %arg2, %arg1 : i32, i32
  }
  func.func @transform_2(%arg0: i32, %arg1: i32, %arg2: i32) -> (i32, i32) {
    %c0_i32 = arith.constant 0 : i32
    return %arg0, %arg1 : i32, i32
  }
}

module attributes {stable_mosaic.version = 11 : i64} {
  func.func @_matmul_kernel(%arg0: i32, %arg1: i32, %arg2: i32, %arg3: memref<128x128xf32, #tpu.memory_space<vmem>>, %arg4: memref<128x128xf32, #tpu.memory_space<vmem>>, %arg5: memref<128x128xf32, #tpu.memory_space<vmem>>, %arg6: memref<128x128xf32, #tpu.memory_space<vmem>>) attributes {dimension_semantics = [#tpu.dimension_semantics<parallel>, #tpu.dimension_semantics<parallel>, #tpu.dimension_semantics<arbitrary>], iteration_bounds = array<i64: 2, 1, 3>, scalar_prefetch = 0 : i64, scratch_operands = 1 : i64, tpu.core_type = #tpu.core_type<tc>, window_params = [{transform_indices = @transform_0, window_bounds = array<i64: 128, 128>}, {transform_indices = @transform_1, window_bounds = array<i64: 128, 128>}, {transform_indices = @transform_2, window_bounds = array<i64: 128, 128>}]} {
    %c0_i32 = arith.constant 0 : i32
    %0 = arith.cmpi eq, %arg2, %c0_i32 : i32
    %1 = arith.extui %0 : i1 to i32
    %c0_i32_0 = arith.constant 0 : i32
    %2 = arith.cmpi ne, %1, %c0_i32_0 : i32
    scf.if %2 {
      %cst_9 = arith.constant 0.000000e+00 : f32
      %12 = vector.broadcast %cst_9 : f32 to vector<128x128xf32>
      %c0_10 = arith.constant 0 : index
      %c0_11 = arith.constant 0 : index
      %13 = vector.load %arg6[%c0_10, %c0_11] : memref<128x128xf32, #tpu.memory_space<vmem>>, vector<128x128xf32>
      tpu.vector_store %arg6[%c0_10, %c0_11], %12 {strides = array<i32>} : memref<128x128xf32, #tpu.memory_space<vmem>>, vector<128x128xf32>,
    } else {
    }
    %c0 = arith.constant 0 : index
    %c0_1 = arith.constant 0 : index
    %3 = vector.load %arg6[%c0, %c0_1] : memref<128x128xf32, #tpu.memory_space<vmem>>, vector<128x128xf32>
    %c0_2 = arith.constant 0 : index
    %c0_3 = arith.constant 0 : index
    %4 = vector.load %arg3[%c0_2, %c0_3] : memref<128x128xf32, #tpu.memory_space<vmem>>, vector<128x128xf32>
    %c0_4 = arith.constant 0 : index
    %c0_5 = arith.constant 0 : index
    %5 = vector.load %arg4[%c0_4, %c0_5] : memref<128x128xf32, #tpu.memory_space<vmem>>, vector<128x128xf32>
    %cst = arith.constant dense<0.000000e+00> : vector<128x128xf32>
    %6 = tpu.matmul %4, %5, %cst {dimension_numbers = #tpu.dot_dimension_numbers<[1], [0], [0], [1], [0, 0, 1, 1], [], []>} : vector<128x128xf32>, vector<128x128xf32>, vector<128x128xf32> -> vector<128x128xf32>
    %7 = arith.addf %3, %6 : vector<128x128xf32>
    %c0_6 = arith.constant 0 : index
    %c0_7 = arith.constant 0 : index
    %8 = vector.load %arg6[%c0_6, %c0_7] : memref<128x128xf32, #tpu.memory_space<vmem>>, vector<128x128xf32>
    tpu.vector_store %arg6[%c0_6, %c0_7], %7 {strides = array<i32>} : memref<128x128xf32, #tpu.memory_space<vmem>>, vector<128x128xf32>,
    %c2_i32 = arith.constant 2 : i32
    %9 = arith.cmpi eq, %arg2, %c2_i32 : i32
    %10 = arith.extui %9 : i1 to i32
    %c0_i32_8 = arith.constant 0 : i32
    %11 = arith.cmpi ne, %10, %c0_i32_8 : i32
    scf.if %11 {
      %c0_9 = arith.constant 0 : index
      %c0_10 = arith.constant 0 : index
      %12 = vector.load %arg6[%c0_9, %c0_10] : memref<128x128xf32, #tpu.memory_space<vmem>>, vector<128x128xf32>
      %cst_11 = arith.constant 0.000000e+00 : f32
      %13 = vector.broadcast %cst_11 : f32 to vector<128x128xf32>
      %14 = arith.maximumf %12, %13 : vector<128x128xf32>
      %c0_12 = arith.constant 0 : index
      %c0_13 = arith.constant 0 : index
      %15 = vector.load %arg5[%c0_12, %c0_13] : memref<128x128xf32, #tpu.memory_space<vmem>>, vector<128x128xf32>
      tpu.vector_store %arg5[%c0_12, %c0_13], %14 {strides = array<i32>} : memref<128x128xf32, #tpu.memory_space<vmem>>, vector<128x128xf32>,
    } else {
    }
    return
  }
  func.func @transform_0(%arg0: i32, %arg1: i32, %arg2: i32) -> (i32, i32) {
    %c0_i32 = arith.constant 0 : i32
    return %arg0, %arg2 : i32, i32
  }
  func.func @transform_1(%arg0: i32, %arg1: i32, %arg2: i32) -> (i32, i32) {
    %c0_i32 = arith.constant 0 : i32
    return %arg2, %arg1 : i32, i32
  }
  func.func @transform_2(%arg0: i32, %arg1: i32, %arg2: i32) -> (i32, i32) {
    %c0_i32 = arith.constant 0 : i32
    return %arg0, %arg1 : i32, i32
  }
}

module attributes {stable_mosaic.version = 11 : i64} {
  func.func @_matmul_kernel(%arg0: i32, %arg1: i32, %arg2: i32, %arg3: memref<128x128xf32, #tpu.memory_space<vmem>>, %arg4: memref<128x128xf32, #tpu.memory_space<vmem>>, %arg5: memref<128x128xf32, #tpu.memory_space<vmem>>, %arg6: memref<128x128xf32, #tpu.memory_space<vmem>>) attributes {dimension_semantics = [#tpu.dimension_semantics<parallel>, #tpu.dimension_semantics<parallel>, #tpu.dimension_semantics<arbitrary>], iteration_bounds = array<i64: 2, 2, 1>, scalar_prefetch = 0 : i64, scratch_operands = 1 : i64, tpu.core_type = #tpu.core_type<tc>, window_params = [{transform_indices = @transform_0, window_bounds = array<i64: 128, 128>}, {transform_indices = @transform_1, window_bounds = array<i64: 128, 128>}, {transform_indices = @transform_2, window_bounds = array<i64: 128, 128>}]} {
    %c0_i32 = arith.constant 0 : i32
    %0 = arith.cmpi eq, %arg2, %c0_i32 : i32
    %1 = arith.extui %0 : i1 to i32
    %c0_i32_0 = arith.constant 0 : i32
    %2 = arith.cmpi ne, %1, %c0_i32_0 : i32
    scf.if %2 {
      %cst_10 = arith.constant 0.000000e+00 : f32
      %12 = vector.broadcast %cst_10 : f32 to vector<128x128xf32>
      %c0_11 = arith.constant 0 : index
      %c0_12 = arith.constant 0 : index
      %13 = vector.load %arg6[%c0_11, %c0_12] : memref<128x128xf32, #tpu.memory_space<vmem>>, vector<128x128xf32>
      tpu.vector_store %arg6[%c0_11, %c0_12], %12 {strides = array<i32>} : memref<128x128xf32, #tpu.memory_space<vmem>>, vector<128x128xf32>,
    } else {
    }
    %c0 = arith.constant 0 : index
    %c0_1 = arith.constant 0 : index
    %3 = vector.load %arg6[%c0, %c0_1] : memref<128x128xf32, #tpu.memory_space<vmem>>, vector<128x128xf32>
    %c0_2 = arith.constant 0 : index
    %c0_3 = arith.constant 0 : index
    %4 = vector.load %arg3[%c0_2, %c0_3] : memref<128x128xf32, #tpu.memory_space<vmem>>, vector<128x128xf32>
    %c0_4 = arith.constant 0 : index
    %c0_5 = arith.constant 0 : index
    %5 = vector.load %arg4[%c0_4, %c0_5] : memref<128x128xf32, #tpu.memory_space<vmem>>, vector<128x128xf32>
    %cst = arith.constant dense<0.000000e+00> : vector<128x128xf32>
    %6 = tpu.matmul %4, %5, %cst {dimension_numbers = #tpu.dot_dimension_numbers<[1], [0], [0], [1], [0, 0, 1, 1], [], []>} : vector<128x128xf32>, vector<128x128xf32>, vector<128x128xf32> -> vector<128x128xf32>
    %7 = arith.addf %3, %6 : vector<128x128xf32>
    %c0_6 = arith.constant 0 : index
    %c0_7 = arith.constant 0 : index
    %8 = vector.load %arg6[%c0_6, %c0_7] : memref<128x128xf32, #tpu.memory_space<vmem>>, vector<128x128xf32>
    tpu.vector_store %arg6[%c0_6, %c0_7], %7 {strides = array<i32>} : memref<128x128xf32, #tpu.memory_space<vmem>>, vector<128x128xf32>,
    %c0_i32_8 = arith.constant 0 : i32
    %9 = arith.cmpi eq, %arg2, %c0_i32_8 : i32
    %10 = arith.extui %9 : i1 to i32
    %c0_i32_9 = arith.constant 0 : i32
    %11 = arith.cmpi ne, %10, %c0_i32_9 : i32
    scf.if %11 {
      %c0_10 = arith.constant 0 : index
      %c0_11 = arith.constant 0 : index
      %12 = vector.load %arg6[%c0_10, %c0_11] : memref<128x128xf32, #tpu.memory_space<vmem>>, vector<128x128xf32>
      %c0_12 = arith.constant 0 : index
      %c0_13 = arith.constant 0 : index
      %13 = vector.load %arg5[%c0_12, %c0_13] : memref<128x128xf32, #tpu.memory_space<vmem>>, vector<128x128xf32>
      tpu.vector_store %arg5[%c0_12, %c0_13], %12 {strides = array<i32>} : memref<128x128xf32, #tpu.memory_space<vmem>>, vector<128x128xf32>,
    } else {
    }
    return
  }
  func.func @transform_0(%arg0: i32, %arg1: i32, %arg2: i32) -> (i32, i32) {
    %c0_i32 = arith.constant 0 : i32
    return %arg0, %arg2 : i32, i32
  }
  func.func @transform_1(%arg0: i32, %arg1: i32, %arg2: i32) -> (i32, i32) {
    %c0_i32 = arith.constant 0 : i32
    return %arg2, %arg1 : i32, i32
  }
  func.func @transform_2(%arg0: i32, %arg1: i32, %arg2: i32) -> (i32, i32) {
    %c0_i32 = arith.constant 0 : i32
    return %arg0, %arg1 : i32, i32
  }
}

module attributes {stable_mosaic.version = 11 : i64} {
  func.func @_matmul_relu_scale_kernel(%arg0: i32, %arg1: i32, %arg2: i32, %arg3: memref<128x128xf32, #tpu.memory_space<vmem>>, %arg4: memref<128x128xf32, #tpu.memory_space<vmem>>, %arg5: memref<1x128xf32, #tpu.memory_space<vmem>>, %arg6: memref<128x128xf32, #tpu.memory_space<vmem>>, %arg7: memref<128x128xf32, #tpu.memory_space<vmem>>, %arg8: memref<128x128xf32, #tpu.memory_space<vmem>>) attributes {dimension_semantics = [#tpu.dimension_semantics<parallel>, #tpu.dimension_semantics<parallel>, #tpu.dimension_semantics<arbitrary>], iteration_bounds = array<i64: 2, 2, 2>, scalar_prefetch = 0 : i64, scratch_operands = 1 : i64, tpu.core_type = #tpu.core_type<tc>, window_params = [{transform_indices = @transform_0, window_bounds = array<i64: 128, 128>}, {transform_indices = @transform_1, window_bounds = array<i64: 128, 128>}, {transform_indices = @transform_2, window_bounds = array<i64: 1, 128>}, {transform_indices = @transform_3, window_bounds = array<i64: 128, 128>}, {transform_indices = @transform_4, window_bounds = array<i64: 128, 128>}]} {
    %c0_i32 = arith.constant 0 : i32
    %0 = arith.cmpi eq, %arg2, %c0_i32 : i32
    %1 = arith.extui %0 : i1 to i32
    %c0_i32_0 = arith.constant 0 : i32
    %2 = arith.cmpi ne, %1, %c0_i32_0 : i32
    scf.if %2 {
      %cst_9 = arith.constant 0.000000e+00 : f32
      %12 = vector.broadcast %cst_9 : f32 to vector<128x128xf32>
      %c0_10 = arith.constant 0 : index
      %c0_11 = arith.constant 0 : index
      %13 = vector.load %arg8[%c0_10, %c0_11] : memref<128x128xf32, #tpu.memory_space<vmem>>, vector<128x128xf32>
      tpu.vector_store %arg8[%c0_10, %c0_11], %12 {strides = array<i32>} : memref<128x128xf32, #tpu.memory_space<vmem>>, vector<128x128xf32>,
    } else {
    }
    %c0 = arith.constant 0 : index
    %c0_1 = arith.constant 0 : index
    %3 = vector.load %arg8[%c0, %c0_1] : memref<128x128xf32, #tpu.memory_space<vmem>>, vector<128x128xf32>
    %c0_2 = arith.constant 0 : index
    %c0_3 = arith.constant 0 : index
    %4 = vector.load %arg3[%c0_2, %c0_3] : memref<128x128xf32, #tpu.memory_space<vmem>>, vector<128x128xf32>
    %c0_4 = arith.constant 0 : index
    %c0_5 = arith.constant 0 : index
    %5 = vector.load %arg4[%c0_4, %c0_5] : memref<128x128xf32, #tpu.memory_space<vmem>>, vector<128x128xf32>
    %cst = arith.constant dense<0.000000e+00> : vector<128x128xf32>
    %6 = tpu.matmul %4, %5, %cst {dimension_numbers = #tpu.dot_dimension_numbers<[1], [0], [0], [1], [0, 0, 1, 1], [], []>} : vector<128x128xf32>, vector<128x128xf32>, vector<128x128xf32> -> vector<128x128xf32>
    %7 = arith.addf %3, %6 : vector<128x128xf32>
    %c0_6 = arith.constant 0 : index
    %c0_7 = arith.constant 0 : index
    %8 = vector.load %arg8[%c0_6, %c0_7] : memref<128x128xf32, #tpu.memory_space<vmem>>, vector<128x128xf32>
    tpu.vector_store %arg8[%c0_6, %c0_7], %7 {strides = array<i32>} : memref<128x128xf32, #tpu.memory_space<vmem>>, vector<128x128xf32>,
    %c1_i32 = arith.constant 1 : i32
    %9 = arith.cmpi eq, %arg2, %c1_i32 : i32
    %10 = arith.extui %9 : i1 to i32
    %c0_i32_8 = arith.constant 0 : i32
    %11 = arith.cmpi ne, %10, %c0_i32_8 : i32
    scf.if %11 {
      %c0_9 = arith.constant 0 : index
      %c0_10 = arith.constant 0 : index
      %12 = vector.load %arg8[%c0_9, %c0_10] : memref<128x128xf32, #tpu.memory_space<vmem>>, vector<128x128xf32>
      %cst_11 = arith.constant 0.000000e+00 : f32
      %13 = vector.broadcast %cst_11 : f32 to vector<128x128xf32>
      %14 = arith.maximumf %12, %13 : vector<128x128xf32>
      %c0_12 = arith.constant 0 : index
      %c0_13 = arith.constant 0 : index
      %15 = vector.load %arg6[%c0_12, %c0_13] : memref<128x128xf32, #tpu.memory_space<vmem>>, vector<128x128xf32>
      tpu.vector_store %arg6[%c0_12, %c0_13], %14 {strides = array<i32>} : memref<128x128xf32, #tpu.memory_space<vmem>>, vector<128x128xf32>,
      %c0_14 = arith.constant 0 : index
      %c0_15 = arith.constant 0 : index
      %16 = vector.load %arg5[%c0_14, %c0_15] : memref<1x128xf32, #tpu.memory_space<vmem>>, vector<1x128xf32>
      %17 = vector.broadcast %16 : vector<1x128xf32> to vector<128x128xf32>
      %18 = arith.mulf %14, %17 : vector<128x128xf32>
      %c0_16 = arith.constant 0 : index
      %c0_17 = arith.constant 0 : index
      %19 = vector.load %arg7[%c0_16, %c0_17] : memref<128x128xf32, #tpu.memory_space<vmem>>, vector<128x128xf32>
      tpu.vector_store %arg7[%c0_16, %c0_17], %18 {strides = array<i32>} : memref<128x128xf32, #tpu.memory_space<vmem>>, vector<128x128xf32>,
    } else {
    }
    return
  }
  func.func @transform_0(%arg0: i32, %arg1: i32, %arg2: i32) -> (i32, i32) {
    %c0_i32 = arith.constant 0 : i32
    return %arg0, %arg2 : i32, i32
  }
  func.func @transform_1(%arg0: i32, %arg1: i32, %arg2: i32) -> (i32, i32) {
    %c0_i32 = arith.constant 0 : i32
    return %arg2, %arg1 : i32, i32
  }
  func.func @transform_2(%arg0: i32, %arg1: i32, %arg2: i32) -> (i32, i32) {
    %c0_i32 = arith.constant 0 : i32
    %c0_i32_0 = arith.constant 0 : i32
    return %c0_i32, %arg1 : i32, i32
  }
  func.func @transform_3(%arg0: i32, %arg1: i32, %arg2: i32) -> (i32, i32) {
    %c0_i32 = arith.constant 0 : i32
    return %arg0, %arg1 : i32, i32
  }
  func.func @transform_4(%arg0: i32, %arg1: i32, %arg2: i32) -> (i32, i32) {
    %c0_i32 = arith.constant 0 : i32
    return %arg0, %arg1 : i32, i32
  }
}

module attributes {stable_mosaic.version = 11 : i64} {
  func.func @_matmul_nt_kernel(%arg0: i32, %arg1: i32, %arg2: i32, %arg3: memref<128x128xf32, #tpu.memory_space<vmem>>, %arg4: memref<128x128xf32, #tpu.memory_space<vmem>>, %arg5: memref<128x128xf32, #tpu.memory_space<vmem>>, %arg6: memref<128x128xf32, #tpu.memory_space<vmem>>) attributes {dimension_semantics = [#tpu.dimension_semantics<parallel>, #tpu.dimension_semantics<parallel>, #tpu.dimension_semantics<arbitrary>], iteration_bounds = array<i64: 2, 2, 2>, scalar_prefetch = 0 : i64, scratch_operands = 1 : i64, tpu.core_type = #tpu.core_type<tc>, window_params = [{transform_indices = @transform_0, window_bounds = array<i64: 128, 128>}, {transform_indices = @transform_1, window_bounds = array<i64: 128, 128>}, {transform_indices = @transform_2, window_bounds = array<i64: 128, 128>}]} {
    %c0_i32 = arith.constant 0 : i32
    %0 = arith.cmpi eq, %arg2, %c0_i32 : i32
    %1 = arith.extui %0 : i1 to i32
    %c0_i32_0 = arith.constant 0 : i32
    %2 = arith.cmpi ne, %1, %c0_i32_0 : i32
    scf.if %2 {
      %cst_9 = arith.constant 0.000000e+00 : f32
      %12 = vector.broadcast %cst_9 : f32 to vector<128x128xf32>
      %c0_10 = arith.constant 0 : index
      %c0_11 = arith.constant 0 : index
      %13 = vector.load %arg6[%c0_10, %c0_11] : memref<128x128xf32, #tpu.memory_space<vmem>>, vector<128x128xf32>
      tpu.vector_store %arg6[%c0_10, %c0_11], %12 {strides = array<i32>} : memref<128x128xf32, #tpu.memory_space<vmem>>, vector<128x128xf32>,
    } else {
    }
    %c0 = arith.constant 0 : index
    %c0_1 = arith.constant 0 : index
    %3 = vector.load %arg6[%c0, %c0_1] : memref<128x128xf32, #tpu.memory_space<vmem>>, vector<128x128xf32>
    %c0_2 = arith.constant 0 : index
    %c0_3 = arith.constant 0 : index
    %4 = vector.load %arg3[%c0_2, %c0_3] : memref<128x128xf32, #tpu.memory_space<vmem>>, vector<128x128xf32>
    %c0_4 = arith.constant 0 : index
    %c0_5 = arith.constant 0 : index
    %5 = vector.load %arg4[%c0_4, %c0_5] : memref<128x128xf32, #tpu.memory_space<vmem>>, vector<128x128xf32>
    %cst = arith.constant dense<0.000000e+00> : vector<128x128xf32>
    %6 = tpu.matmul %4, %5, %cst {dimension_numbers = #tpu.dot_dimension_numbers<[1], [1], [0], [0], [0, 0, 1, 0], [], []>} : vector<128x128xf32>, vector<128x128xf32>, vector<128x128xf32> -> vector<128x128xf32>
    %7 = arith.addf %3, %6 : vector<128x128xf32>
    %c0_6 = arith.constant 0 : index
    %c0_7 = arith.constant 0 : index
    %8 = vector.load %arg6[%c0_6, %c0_7] : memref<128x128xf32, #tpu.memory_space<vmem>>, vector<128x128xf32>
    tpu.vector_store %arg6[%c0_6, %c0_7], %7 {strides = array<i32>} : memref<128x128xf32, #tpu.memory_space<vmem>>, vector<128x128xf32>,
    %c1_i32 = arith.constant 1 : i32
    %9 = arith.cmpi eq, %arg2, %c1_i32 : i32
    %10 = arith.extui %9 : i1 to i32
    %c0_i32_8 = arith.constant 0 : i32
    %11 = arith.cmpi ne, %10, %c0_i32_8 : i32
    scf.if %11 {
      %c0_9 = arith.constant 0 : index
      %c0_10 = arith.constant 0 : index
      %12 = vector.load %arg6[%c0_9, %c0_10] : memref<128x128xf32, #tpu.memory_space<vmem>>, vector<128x128xf32>
      %c0_11 = arith.constant 0 : index
      %c0_12 = arith.constant 0 : index
      %13 = vector.load %arg5[%c0_11, %c0_12] : memref<128x128xf32, #tpu.memory_space<vmem>>, vector<128x128xf32>
      tpu.vector_store %arg5[%c0_11, %c0_12], %12 {strides = array<i32>} : memref<128x128xf32, #tpu.memory_space<vmem>>, vector<128x128xf32>,
    } else {
    }
    return
  }
  func.func @transform_0(%arg0: i32, %arg1: i32, %arg2: i32) -> (i32, i32) {
    %c0_i32 = arith.constant 0 : i32
    return %arg0, %arg2 : i32, i32
  }
  func.func @transform_1(%arg0: i32, %arg1: i32, %arg2: i32) -> (i32, i32) {
    %c0_i32 = arith.constant 0 : i32
    return %arg1, %arg2 : i32, i32
  }
  func.func @transform_2(%arg0: i32, %arg1: i32, %arg2: i32) -> (i32, i32) {
    %c0_i32 = arith.constant 0 : i32
    return %arg0, %arg1 : i32, i32
  }
}

</mosaic_0001>

<llo_original>
// kernel: gripnet_forward.8
$region0: #{gripnet_forward.8}
  #allocation0 [shape = 'u32[]', space=smem, size = 0x4, offset = 0x4, fixed_abs, tag = 'smem constant byte address 0x4 - core index']
  #allocation1 [shape = 'u32[144,128]{1,0:T(1,128)}', space=vmem, size = 0x12000, scoped, tag = 'internal scratch']
  #allocation2 [shape = 'f32[128,128]{1,0:T(8,128)}', space=vmem, size = 0x10000, scoped, tag = 'scratch operand']
  %s0 = inlined_call_operand.vmem [shape: f32[384,384], index: 0, kind: input, shape index: {}]
  %s1 = inlined_call_operand.vmem [shape: f32[384,128], index: 1, kind: input, shape index: {}]
  %s2 = inlined_call_operand.vmem [shape: f32[384,128], index: 2, kind: output, shape index: {}]
  %s3 = sld [smem:[#allocation0]]
  $region87: #{gripnet_forward.8} parent=0
    _
  %s5 = ssub.s32 1, %s3
  %s6 = scalar_select 0, %s5, %s3
  $region1: #{gripnet_forward.8} parent=0
    #allocation3 [shape = 'u8[131072]{0}', space=vmem, size = 0x20000, scoped, tag = 'input window, operand 0']
    loop: start=0, step=1, limit=11
    $region2: #{gripnet_forward.8} parent=1 // loop_pre_header
      _
    $region3: #{gripnet_forward.8} parent=1 // loop_header
      %s8 = sphi 0, %s12
      %p9 = scmp.ge.s32.totalorder %s8, 11
      %s15 = sphi 0, %s34
      %s16 = sphi 0, %s30
      %s17 = sphi 0, %s26
      %s18 = sphi 0, %s15
      %s19 = sphi 0, %s16
      %s20 = sphi 0, %s17
      %s21 = sphi 0, %s18
      %s22 = sphi 0, %s19
      %s23 = sphi 0, %s20
      %s39 = sphi 0, %s41
      %s42 = sphi 0, %s39
      %s43 = sphi 0, %s42
      %s59 = sphi 0, %s43
      %s67 = sphi 0, %s69
      %s70 = sphi 0, %s67
      %s71 = sphi 0, %s70
      %s87 = sphi 0, %s71
      %s95 = sphi 0, %s97
      %s98 = sphi 0, %s95
      %s99 = sphi 0, %s98
      %s115 = sphi 0, %s99
    $region4: #{gripnet_forward.8} parent=1 // loop_header_branch
      %11 = sbr.rel (%p9) target = $region8
    $region5: #{gripnet_forward.8} parent=1 // loop_body
      %s13 = ssub.s32 %s8, 1
      %s14 = ssub.s32 %s8, 2
      %s24 = sadd.s32 1, %s17
      %p25 = scmp.ge.s32.totalorder %s24, 3
      %s26 = scalar_select %p25, 0, %s24
      %s27 = sadd.s32 1, %s16
      %s28 = scalar_select %p25, %s27, %s16
      %p29 = scmp.ge.s32.totalorder %s28, 1
      %s30 = scalar_select %p29, 0, %s28
      %s31 = sadd.s32 1, %s15
      %s32 = scalar_select %p29, %s31, %s15
      %p33 = scmp.ge.s32.totalorder %s32, 3
      %s34 = scalar_select %p33, 0, %s32
      %s35 = ssub.s32 %s15, %s34
      %s36 = ssub.s32 %s17, %s26
      %s37 = sor.u32 %s35, %s36
      %p38 = scmp.eq.s32.totalorder %s37, 0
      %s40 = sadd.s32 %s39, 1
      %s41 = scalar_select %p38, %s39, %s40
      %p44 = pneg %p38
      %p45 = scmp.eq.s32.totalorder %s8, 8
      %p46 = por %p44, %p45
      %p47 = scmp.ne.s32.totalorder %s39, %s42
      %p48 = scmp.eq.s32.totalorder %s8, 0
      %p49 = por %p47, %p48
      %p50 = scmp.ne.s32.totalorder %s39, %s42
      %p51 = scmp.eq.s32.totalorder %s13, 8
      %p52 = por %p50, %p51
      %p53 = scmp.ne.s32.totalorder %s42, %s43
      %p54 = scmp.eq.s32.totalorder %s13, 0
      %p55 = por %p53, %p54
      %p56 = scmp.ne.s32.totalorder %s42, %s43
      %p57 = scmp.eq.s32.totalorder %s14, 8
      %p58 = por %p56, %p57
      %p60 = scmp.ne.s32.totalorder %s43, %s59
      %p61 = scmp.eq.s32.totalorder %s14, 0
      %p62 = por %p60, %p61
      %s63 = ssub.s32 %s17, %s26
      %s64 = ssub.s32 %s16, %s30
      %s65 = sor.u32 %s63, %s64
      %p66 = scmp.eq.s32.totalorder %s65, 0
      %s68 = sadd.s32 %s67, 1
      %s69 = scalar_select %p66, %s67, %s68
      %p72 = pneg %p66
      %p73 = scmp.eq.s32.totalorder %s8, 8
      %p74 = por %p72, %p73
      %p75 = scmp.ne.s32.totalorder %s67, %s70
      %p76 = scmp.eq.s32.totalorder %s8, 0
      %p77 = por %p75, %p76
      %p78 = scmp.ne.s32.totalorder %s67, %s70
      %p79 = scmp.eq.s32.totalorder %s13, 8
      %p80 = por %p78, %p79
      %p81 = scmp.ne.s32.totalorder %s70, %s71
      %p82 = scmp.eq.s32.totalorder %s13, 0
      %p83 = por %p81, %p82
      %p84 = scmp.ne.s32.totalorder %s70, %s71
      %p85 = scmp.eq.s32.totalorder %s14, 8
      %p86 = por %p84, %p85
      %p88 = scmp.ne.s32.totalorder %s71, %s87
      %p89 = scmp.eq.s32.totalorder %s14, 0
      %p90 = por %p88, %p89
      %s91 = ssub.s32 %s15, %s34
      %s92 = ssub.s32 %s16, %s30
      %s93 = sor.u32 %s91, %s92
      %p94 = scmp.eq.s32.totalorder %s93, 0
      %s96 = sadd.s32 %s95, 1
      %s97 = scalar_select %p94, %s95, %s96
      %p100 = pneg %p94
      %p101 = scmp.eq.s32.totalorder %s8, 8
      %p102 = por %p100, %p101
      %p103 = scmp.ne.s32.totalorder %s95, %s98
      %p104 = scmp.eq.s32.totalorder %s8, 0
      %p105 = por %p103, %p104
      %p106 = scmp.ne.s32.totalorder %s95, %s98
      %p107 = scmp.eq.s32.totalorder %s13, 8
      %p108 = por %p106, %p107
      %p109 = scmp.ne.s32.totalorder %s98, %s99
      %p110 = scmp.eq.s32.totalorder %s13, 0
      %p111 = por %p109, %p110
      %p112 = scmp.ne.s32.totalorder %s98, %s99
      %p113 = scmp.eq.s32.totalorder %s14, 8
      %p114 = por %p112, %p113
      %p116 = scmp.ne.s32.totalorder %s99, %s115
      %p117 = scmp.eq.s32.totalorder %s14, 0
      %p118 = por %p116, %p117
      %p119 = scmp.le.s32.totalorder 1, %s8
      %p120 = scmp.lt.s32.totalorder %s8, 10
      %p121 = pnand %p119, %p120
      %p122 = pneg %p121
      // Predicated region
      $region9: #{gripnet_forward.8} parent=5 // pred_check
        _
      $region10: #{gripnet_forward.8} parent=5 // pred_check_branch
        %124 = sbr.rel (%p121) target = $region12
      $region11: #{gripnet_forward.8} parent=5 // pred_region
        %s125 = ssub.s32 %s8, 1
      $region12: #{gripnet_forward.8} parent=5 // pred_fallthru
        _
      %p126 = scmp.lt.s32.totalorder %s8, 9
      // Predicated region
      $region13: #{gripnet_forward.8} parent=5 // pred_check
        %p127 = pneg %p126
      $region14: #{gripnet_forward.8} parent=5 // pred_check_branch
        %129 = sbr.rel (%p127) target = $region16
      $region15: #{gripnet_forward.8} parent=5 // pred_region
        // Predicated region
        $region17: #{gripnet_forward.8} parent=15 // pred_check
          %p130 = pneg %p49
        $region18: #{gripnet_forward.8} parent=15 // pred_check_branch
          %132 = sbr.rel (%p130) target = $region20
        $region19: #{gripnet_forward.8} parent=15 // pred_region
          %s133 = sand.u32 %s39, 1
          %s134 = sand.u32 %s39, 1
          %s135 = smul.addr %s134, 128
          %s136 = scalar_lea.vmem [#allocation3], %s135
          %s137 = smul.u32 16, %s15
          %s138 = smul.addr %s137, 3
          %s139 = sadd.s32 %s17, %s138
          %s140 = smul.addr %s139, 8
          %s141 = scalar_lea.vmem %s0, %s140
          // Predicated region
          $region21: #{gripnet_forward.8} parent=19 // pred_check
            _
          $region22: #{gripnet_forward.8} parent=19 // pred_check_branch
            %143 = sbr.rel (0) target = $region24
          $region23: #{gripnet_forward.8} parent=19 // pred_region
            // Predicated region
            $region25: #{gripnet_forward.8} parent=23 // pred_check
              _
            $region26: #{gripnet_forward.8} parent=23 // pred_check_branch
              %145 = sbr.rel (0) target = $region28
            $region27: #{gripnet_forward.8} parent=23 // pred_region
              // Predicated region
              $region40: #{gripnet_forward.8} parent=27 // pred_check
                _
              $region41: #{gripnet_forward.8} parent=27 // pred_check_branch
                %190 = sbr.rel (0) target = $region43
              $region42: #{gripnet_forward.8} parent=27 // pred_region
                loop: start=0, step=1, limit=1
                $region44: #{gripnet_forward.8} parent=42 // loop_pre_header
                  _
                $region45: #{gripnet_forward.8} parent=42 // loop_header
                  %s192 = sphi 0, %s196
                  %p193 = scmp.ge.s32.totalorder %s192, 1
                  %s197 = sphi %s141, %s141
                  %s198 = sphi %s136, %s136
                $region46: #{gripnet_forward.8} parent=42 // loop_header_branch
                  %195 = sbr.rel (%p193) target = $region50
                $region47: #{gripnet_forward.8} parent=42 // loop_body
                  %v199 = vld [vmem:[%s197] sm:$0xff]
                  %200 = vst [vmem:[%s198] sm:$0xff] %v199
                  %v201 = vld [vmem:[%s197 + $0x18] sm:$0xff]
                  %202 = vst [vmem:[%s198 + $0x8] sm:$0xff] %v201
                  %v203 = vld [vmem:[%s197 + $0x30] sm:$0xff]
                  %204 = vst [vmem:[%s198 + $0x10] sm:$0xff] %v203
                  %v205 = vld [vmem:[%s197 + $0x48] sm:$0xff]
                  %206 = vst [vmem:[%s198 + $0x18] sm:$0xff] %v205
                  %v207 = vld [vmem:[%s197 + $0x60] sm:$0xff]
                  %208 = vst [vmem:[%s198 + $0x20] sm:$0xff] %v207
                  %v209 = vld [vmem:[%s197 + $0x78] sm:$0xff]
                  %210 = vst [vmem:[%s198 + $0x28] sm:$0xff] %v209
                  %v211 = vld [vmem:[%s197 + $0x90] sm:$0xff]
                  %212 = vst [vmem:[%s198 + $0x30] sm:$0xff] %v211
                  %v213 = vld [vmem:[%s197 + $0xa8] sm:$0xff]
                  %214 = vst [vmem:[%s198 + $0x38] sm:$0xff] %v213
                  %v215 = vld [vmem:[%s197 + $0xc0] sm:$0xff]
                  %216 = vst [vmem:[%s198 + $0x40] sm:$0xff] %v215
                  %v217 = vld [vmem:[%s197 + $0xd8] sm:$0xff]
                  %218 = vst [vmem:[%s198 + $0x48] sm:$0xff] %v217
                  %v219 = vld [vmem:[%s197 + $0xf0] sm:$0xff]
                  %220 = vst [vmem:[%s198 + $0x50] sm:$0xff] %v219
                  %v221 = vld [vmem:[%s197 + $0x108] sm:$0xff]
                  %222 = vst [vmem:[%s198 + $0x58] sm:$0xff] %v221
                  %v223 = vld [vmem:[%s197 + $0x120] sm:$0xff]
                  %224 = vst [vmem:[%s198 + $0x60] sm:$0xff] %v223
                  %v225 = vld [vmem:[%s197 + $0x138] sm:$0xff]
                  %226 = vst [vmem:[%s198 + $0x68] sm:$0xff] %v225
                  %v227 = vld [vmem:[%s197 + $0x150] sm:$0xff]
                  %228 = vst [vmem:[%s198 + $0x70] sm:$0xff] %v227
                  %v229 = vld [vmem:[%s197 + $0x168] sm:$0xff]
                  %230 = vst [vmem:[%s198 + $0x78] sm:$0xff] %v229
                $region48: #{gripnet_forward.8} parent=42 // loop_footer
                  %s196 = sadd.s32 1, %s192
                $region49: #{gripnet_forward.8} parent=42 // loop_footer_branch
                  %191 = sbr.rel target = $region45
                $region50: #{gripnet_forward.8} parent=42 // loop_exit
                  _
              $region43: #{gripnet_forward.8} parent=27 // pred_fallthru
                _
              // Predicated region
              $region51: #{gripnet_forward.8} parent=27 // pred_check
                _
              $region52: #{gripnet_forward.8} parent=27 // pred_check_branch
                %232 = sbr.rel target = $region54
              $region53: #{gripnet_forward.8} parent=27 // pred_region
                _
              $region54: #{gripnet_forward.8} parent=27 // pred_fallthru
                _
            $region28: #{gripnet_forward.8} parent=23 // pred_fallthru
              _
            // Predicated region
            $region29: #{gripnet_forward.8} parent=23 // pred_check
              _
            $region30: #{gripnet_forward.8} parent=23 // pred_check_branch
              %147 = sbr.rel target = $region32
            $region31: #{gripnet_forward.8} parent=23 // pred_region
              loop: start=0, step=1, limit=1
              $region33: #{gripnet_forward.8} parent=31 // loop_pre_header
                _
              $region34: #{gripnet_forward.8} parent=31 // loop_header
                %s150 = sphi 0, %s154
                %p151 = scmp.ge.s32.totalorder %s150, 1
                %s155 = sphi %s141, %s141
                %s156 = sphi %s136, %s136
              $region35: #{gripnet_forward.8} parent=31 // loop_header_branch
                %153 = sbr.rel (%p151) target = $region39
              $region36: #{gripnet_forward.8} parent=31 // loop_body
                %v157 = vld [vmem:[%s155] sm:$0xff]
                %158 = vst [vmem:[%s156] sm:$0xff] %v157
                %v159 = vld [vmem:[%s155 + $0x18] sm:$0xff]
                %160 = vst [vmem:[%s156 + $0x8] sm:$0xff] %v159
                %v161 = vld [vmem:[%s155 + $0x30] sm:$0xff]
                %162 = vst [vmem:[%s156 + $0x10] sm:$0xff] %v161
                %v163 = vld [vmem:[%s155 + $0x48] sm:$0xff]
                %164 = vst [vmem:[%s156 + $0x18] sm:$0xff] %v163
                %v165 = vld [vmem:[%s155 + $0x60] sm:$0xff]
                %166 = vst [vmem:[%s156 + $0x20] sm:$0xff] %v165
                %v167 = vld [vmem:[%s155 + $0x78] sm:$0xff]
                %168 = vst [vmem:[%s156 + $0x28] sm:$0xff] %v167
                %v169 = vld [vmem:[%s155 + $0x90] sm:$0xff]
                %170 = vst [vmem:[%s156 + $0x30] sm:$0xff] %v169
                %v171 = vld [vmem:[%s155 + $0xa8] sm:$0xff]
                %172 = vst [vmem:[%s156 + $0x38] sm:$0xff] %v171
                %v173 = vld [vmem:[%s155 + $0xc0] sm:$0xff]
                %174 = vst [vmem:[%s156 + $0x40] sm:$0xff] %v173
                %v175 = vld [vmem:[%s155 + $0xd8] sm:$0xff]
                %176 = vst [vmem:[%s156 + $0x48] sm:$0xff] %v175
                %v177 = vld [vmem:[%s155 + $0xf0] sm:$0xff]
                %178 = vst [vmem:[%s156 + $0x50] sm:$0xff] %v177
                %v179 = vld [vmem:[%s155 + $0x108] sm:$0xff]
                %180 = vst [vmem:[%s156 + $0x58] sm:$0xff] %v179
                %v181 = vld [vmem:[%s155 + $0x120] sm:$0xff]
                %182 = vst [vmem:[%s156 + $0x60] sm:$0xff] %v181
                %v183 = vld [vmem:[%s155 + $0x138] sm:$0xff]
                %184 = vst [vmem:[%s156 + $0x68] sm:$0xff] %v183
                %v185 = vld [vmem:[%s155 + $0x150] sm:$0xff]
                %186 = vst [vmem:[%s156 + $0x70] sm:$0xff] %v185
                %v187 = vld [vmem:[%s155 + $0x168] sm:$0xff]
                %188 = vst [vmem:[%s156 + $0x78] sm:$0xff] %v187
              $region37: #{gripnet_forward.8} parent=31 // loop_footer
                %s154 = sadd.s32 1, %s150
              $region38: #{gripnet_forward.8} parent=31 // loop_footer_branch
                %149 = sbr.rel target = $region34
              $region39: #{gripnet_forward.8} parent=31 // loop_exit
                _
            $region32: #{gripnet_forward.8} parent=23 // pred_fallthru
              _
          $region24: #{gripnet_forward.8} parent=19 // pred_fallthru
            _
          %233 = vnop
        $region20: #{gripnet_forward.8} parent=15 // pred_fallthru
          _
        // Predicated region
        $region55: #{gripnet_forward.8} parent=15 // pred_check
          %p234 = pneg %p77
        $region56: #{gripnet_forward.8} parent=15 // pred_check_branch
          %236 = sbr.rel (%p234) target = $region58
        $region57: #{gripnet_forward.8} parent=15 // pred_region
          %s237 = smul.u32 16, %s17
          %p238 = scmp.lt.s32.totalorder %s237, 47
          %s239 = scalar_select %p238, %s237, 47
          %p240 = scmp.lt.s32.totalorder %s16, 0
          %s241 = scalar_select %p240, %s16, 0
          %s242 = sadd.s32 %s241, %s239
          %s243 = smul.addr %s242, 8
          %s244 = scalar_lea.vmem %s1, %s243
          %s245 = smul.u32 16, %s17
        $region58: #{gripnet_forward.8} parent=15 // pred_fallthru
          _
      $region16: #{gripnet_forward.8} parent=5 // pred_fallthru
        _
      %p246 = scmp.le.s32.totalorder 1, %s8
      %p247 = scmp.lt.s32.totalorder %s8, 10
      %p248 = pnand %p246, %p247
      %p249 = pneg %p248
      // Predicated region
      $region59: #{gripnet_forward.8} parent=5 // pred_check
        _
      $region60: #{gripnet_forward.8} parent=5 // pred_check_branch
        %251 = sbr.rel (%p248) target = $region62
      $region61: #{gripnet_forward.8} parent=5 // pred_region
        %s252 = ssub.s32 %s8, 1
        %s253 = sand.u32 %s42, 1
        %s254 = sand.u32 %s42, 1
        %s255 = smul.addr %s254, 128
        %s256 = scalar_lea.vmem [#allocation3], %s255
        // Predicated region
        $region63: #{gripnet_forward.8} parent=61 // pred_check
          %p257 = pneg %p55
        $region64: #{gripnet_forward.8} parent=61 // pred_check_branch
          %259 = sbr.rel (%p257) target = $region66
        $region65: #{gripnet_forward.8} parent=61 // pred_region
          _
        $region66: #{gripnet_forward.8} parent=61 // pred_fallthru
          _
        %s260 = sand.u32 %s42, 1
        %s261 = sand.u32 %s42, 1
        %s262 = smul.addr %s261, 128
        %s263 = scalar_lea.vmem [#allocation3], %s262
        %p264 = pneg %p55
        %p265 = pneg %p52
        %s266 = smul.u32 16, %s20
        %p267 = scmp.lt.s32.totalorder %s266, 47
        %s268 = scalar_select %p267, %s266, 47
        %p269 = scmp.lt.s32.totalorder %s19, 0
        %s270 = scalar_select %p269, %s19, 0
        %s271 = sadd.s32 %s270, %s268
        %s272 = smul.addr %s271, 8
        %s273 = scalar_lea.vmem %s1, %s272
        %p274 = pneg %p83
        %p275 = pneg %p80
        %p276 = pneg %p111
        %p277 = pneg %p108
        %s278 = smul.u32 16, %s18
        %p279 = scmp.lt.s32.totalorder %s278, 47
        %s280 = scalar_select %p279, %s278, 47
        %p281 = scmp.lt.s32.totalorder %s19, 0
        %s282 = scalar_select %p281, %s19, 0
        %s283 = sadd.s32 %s282, %s280
        %s284 = smul.addr %s283, 8
        %s285 = scalar_lea.vmem %s2, %s284
        %s286 = smul.u32 16, %s18
        %s287 = smul.u32 16, %s20
        %p288 = scmp.lt.s32.totalorder %s287, 47
        %s289 = scalar_select %p288, %s287, 47
        %p290 = scmp.lt.s32.totalorder %s19, 0
        %s291 = scalar_select %p290, %s19, 0
        %s292 = sadd.s32 %s291, %s289
        %s293 = smul.addr %s292, 8
        %s294 = scalar_lea.vmem %s1, %s293
        %s295 = smul.u32 16, %s20
        %s296 = smul.u32 16, %s18
        %p297 = scmp.lt.s32.totalorder %s296, 47
        %s298 = scalar_select %p297, %s296, 47
        %p299 = scmp.lt.s32.totalorder %s19, 0
        %s300 = scalar_select %p299, %s19, 0
        %s301 = sadd.s32 %s300, %s298
        %s302 = smul.addr %s301, 8
        %s303 = scalar_lea.vmem %s2, %s302
        %s304 = smul.u32 16, %s18
        %p305 = scmp.eq.s32.totalorder %s20, 0
        // Predicated region
        $region67: #{gripnet_forward.8} parent=61 // pred_check
          %p306 = pneg %p305
        $region68: #{gripnet_forward.8} parent=61 // pred_check_branch
          %308 = sbr.rel (%p306) target = $region70
        $region69: #{gripnet_forward.8} parent=61 // pred_region
          %309 = vst [vmem:[#allocation2] sm:$0xff] 0.0
          %310 = vst [vmem:[#allocation2 + $0x8] sm:$0xff] 0.0
          %311 = vst [vmem:[#allocation2 + $0x10] sm:$0xff] 0.0
          %312 = vst [vmem:[#allocation2 + $0x18] sm:$0xff] 0.0
          %313 = vst [vmem:[#allocation2 + $0x20] sm:$0xff] 0.0
          %314 = vst [vmem:[#allocation2 + $0x28] sm:$0xff] 0.0
          %315 = vst [vmem:[#allocation2 + $0x30] sm:$0xff] 0.0
          %316 = vst [vmem:[#allocation2 + $0x38] sm:$0xff] 0.0
          %317 = vst [vmem:[#allocation2 + $0x40] sm:$0xff] 0.0
          %318 = vst [vmem:[#allocation2 + $0x48] sm:$0xff] 0.0
          %319 = vst [vmem:[#allocation2 + $0x50] sm:$0xff] 0.0
          %320 = vst [vmem:[#allocation2 + $0x58] sm:$0xff] 0.0
          %321 = vst [vmem:[#allocation2 + $0x60] sm:$0xff] 0.0
          %322 = vst [vmem:[#allocation2 + $0x68] sm:$0xff] 0.0
          %323 = vst [vmem:[#allocation2 + $0x70] sm:$0xff] 0.0
          %324 = vst [vmem:[#allocation2 + $0x78] sm:$0xff] 0.0
        $region70: #{gripnet_forward.8} parent=61 // pred_fallthru
          _
        %v325 = vld [vmem:[#allocation2] sm:$0xff]
        %v326 = vld [vmem:[#allocation2 + $0x8] sm:$0xff]
        %v327 = vld [vmem:[#allocation2 + $0x10] sm:$0xff]
        %v328 = vld [vmem:[#allocation2 + $0x18] sm:$0xff]
        %v329 = vld [vmem:[#allocation2 + $0x20] sm:$0xff]
        %v330 = vld [vmem:[#allocation2 + $0x28] sm:$0xff]
        %v331 = vld [vmem:[#allocation2 + $0x30] sm:$0xff]
        %v332 = vld [vmem:[#allocation2 + $0x38] sm:$0xff]
        %v333 = vld [vmem:[#allocation2 + $0x40] sm:$0xff]
        %v334 = vld [vmem:[#allocation2 + $0x48] sm:$0xff]
        %v335 = vld [vmem:[#allocation2 + $0x50] sm:$0xff]
        %v336 = vld [vmem:[#allocation2 + $0x58] sm:$0xff]
        %v337 = vld [vmem:[#allocation2 + $0x60] sm:$0xff]
        %v338 = vld [vmem:[#allocation2 + $0x68] sm:$0xff]
        %v339 = vld [vmem:[#allocation2 + $0x70] sm:$0xff]
        %v340 = vld [vmem:[#allocation2 + $0x78] sm:$0xff]
        %v341 = vld [vmem:[%s256] sm:$0xff]
        %v342 = vld [vmem:[%s256 + $0x8] sm:$0xff]
        %v343 = vld [vmem:[%s256 + $0x10] sm:$0xff]
        %v344 = vld [vmem:[%s256 + $0x18] sm:$0xff]
        %v345 = vld [vmem:[%s256 + $0x20] sm:$0xff]
        %v346 = vld [vmem:[%s256 + $0x28] sm:$0xff]
        %v347 = vld [vmem:[%s256 + $0x30] sm:$0xff]
        %v348 = vld [vmem:[%s256 + $0x38] sm:$0xff]
        %v349 = vld [vmem:[%s256 + $0x40] sm:$0xff]
        %v350 = vld [vmem:[%s256 + $0x48] sm:$0xff]
        %v351 = vld [vmem:[%s256 + $0x50] sm:$0xff]
        %v352 = vld [vmem:[%s256 + $0x58] sm:$0xff]
        %v353 = vld [vmem:[%s256 + $0x60] sm:$0xff]
        %v354 = vld [vmem:[%s256 + $0x68] sm:$0xff]
        %v355 = vld [vmem:[%s256 + $0x70] sm:$0xff]
        %v356 = vld [vmem:[%s256 + $0x78] sm:$0xff]
        %v357 = vld [vmem:[%s294] sm:$0xff]
        %v358 = vld [vmem:[%s294 + $0x8] sm:$0xff]
        %v359 = vld [vmem:[%s294 + $0x10] sm:$0xff]
        %v360 = vld [vmem:[%s294 + $0x18] sm:$0xff]
        %v361 = vld [vmem:[%s294 + $0x20] sm:$0xff]
        %v362 = vld [vmem:[%s294 + $0x28] sm:$0xff]
        %v363 = vld [vmem:[%s294 + $0x30] sm:$0xff]
        %v364 = vld [vmem:[%s294 + $0x38] sm:$0xff]
        %v365 = vld [vmem:[%s294 + $0x40] sm:$0xff]
        %v366 = vld [vmem:[%s294 + $0x48] sm:$0xff]
        %v367 = vld [vmem:[%s294 + $0x50] sm:$0xff]
        %v368 = vld [vmem:[%s294 + $0x58] sm:$0xff]
        %v369 = vld [vmem:[%s294 + $0x60] sm:$0xff]
        %v370 = vld [vmem:[%s294 + $0x68] sm:$0xff]
        %v371 = vld [vmem:[%s294 + $0x70] sm:$0xff]
        %v372 = vld [vmem:[%s294 + $0x78] sm:$0xff]
        %373 = vmatprep.subr.mxu0 0.0
        %374 = vmatpush1.msra.mxu0 %v357
        %375 = vmatprep.subr.mxu0 0.0
        %376 = vmatpush1.msra.mxu0 %v358
        %377 = vmatprep.subr.mxu0 0.0
        %378 = vmatpush1.msra.mxu0 %v359
        %379 = vmatprep.subr.mxu0 0.0
        %380 = vmatpush1.msra.mxu0 %v360
        %381 = vmatprep.subr.mxu0 0.0
        %382 = vmatpush1.msra.mxu0 %v361
        %383 = vmatprep.subr.mxu0 0.0
        %384 = vmatpush1.msra.mxu0 %v362
        %385 = vmatprep.subr.mxu0 0.0
        %386 = vmatpush1.msra.mxu0 %v363
        %387 = vmatprep.subr.mxu0 0.0
        %388 = vmatpush1.msra.mxu0 %v364
        %389 = vmatprep.subr.mxu0 0.0
        %390 = vmatpush1.msra.mxu0 %v365
        %391 = vmatprep.subr.mxu0 0.0
        %392 = vmatpush1.msra.mxu0 %v366
        %393 = vmatprep.subr.mxu0 0.0
        %394 = vmatpush1.msra.mxu0 %v367
        %395 = vmatprep.subr.mxu0 0.0
        %396 = vmatpush1.msra.mxu0 %v368
        %397 = vmatprep.subr.mxu0 0.0
        %398 = vmatpush1.msra.mxu0 %v369
        %399 = vmatprep.subr.mxu0 0.0
        %400 = vmatpush1.msra.mxu0 %v370
        %401 = vmatprep.subr.mxu0 0.0
        %402 = vmatpush1.msra.mxu0 %v371
        %403 = vmatprep.subr.mxu0 0.0
        %404 = vmatpush1.msra.mxu0 %v372
        %405 = vmatprep.subr.mxu0 0.0
        %406 = vmatpush1.msra.mxu0 0.0
        %407 = vmatprep.subr.mxu0 0.0
        %408 = vmatpush1.msra.mxu0 0.0
        %409 = vmatprep.subr.mxu0 0.0
        %410 = vmatpush1.msra.mxu0 0.0
        %411 = vmatprep.subr.mxu0 0.0
        %412 = vmatpush1.msra.mxu0 0.0
        %413 = vmatprep.subr.mxu0 0.0
        %414 = vmatpush1.msra.mxu0 0.0
        %415 = vmatprep.subr.mxu0 0.0
        %416 = vmatpush1.msra.mxu0 0.0
        %417 = vmatprep.subr.mxu0 0.0
        %418 = vmatpush1.msra.mxu0 0.0
        %419 = vmatprep.subr.mxu0 0.0
        %420 = vmatpush1.msra.mxu0 0.0
        %421 = vmatprep.subr.mxu0 0.0
        %422 = vmatpush1.msra.mxu0 0.0
        %423 = vmatprep.subr.mxu0 0.0
        %424 = vmatpush1.msra.mxu0 0.0
        %425 = vmatprep.subr.mxu0 0.0
        %426 = vmatpush1.msra.mxu0 0.0
        %427 = vmatprep.subr.mxu0 0.0
        %428 = vmatpush1.msra.mxu0 0.0
        %429 = vmatprep.subr.mxu0 0.0
        %430 = vmatpush1.msra.mxu0 0.0
        %431 = vmatprep.subr.mxu0 0.0
        %432 = vmatpush1.msra.mxu0 0.0
        %433 = vmatprep.subr.mxu0 0.0
        %434 = vmatpush1.msra.mxu0 0.0
        %435 = vmatprep.subr.mxu0 0.0
        %436 = vmatpush1.msra.mxu0 0.0
        %437 = vmatprep.mubr.f32.mxu0 0.0
        %438 = vmatmul.mubr.f32.gmra.mrb[0].mxu0 %v341
        %v439 = vpop.f32.mrb[0].mxu0
        %v440 = vadd.f32 0.0, %v439
        %v441 = vpop.f32.mrb[0].mxu0
        %442 = vmatprep.mubr.f32.mxu0 0.0
        %443 = vmatmul.mubr.f32.gmra.mrb[0].mxu0 %v342
        %v444 = vpop.f32.mrb[0].mxu0
        %v445 = vadd.f32 0.0, %v444
        %v446 = vpop.f32.mrb[0].mxu0
        %447 = vmatprep.mubr.f32.mxu0 0.0
        %448 = vmatmul.mubr.f32.gmra.mrb[0].mxu0 %v343
        %v449 = vpop.f32.mrb[0].mxu0
        %v450 = vadd.f32 0.0, %v449
        %v451 = vpop.f32.mrb[0].mxu0
        %452 = vmatprep.mubr.f32.mxu0 0.0
        %453 = vmatmul.mubr.f32.gmra.mrb[0].mxu0 %v344
        %v454 = vpop.f32.mrb[0].mxu0
        %v455 = vadd.f32 0.0, %v454
        %v456 = vpop.f32.mrb[0].mxu0
        %457 = vmatprep.mubr.f32.mxu0 0.0
        %458 = vmatmul.mubr.f32.gmra.mrb[0].mxu0 %v345
        %v459 = vpop.f32.mrb[0].mxu0
        %v460 = vadd.f32 0.0, %v459
        %v461 = vpop.f32.mrb[0].mxu0
        %462 = vmatprep.mubr.f32.mxu0 0.0
        %463 = vmatmul.mubr.f32.gmra.mrb[0].mxu0 %v346
        %v464 = vpop.f32.mrb[0].mxu0
        %v465 = vadd.f32 0.0, %v464
        %v466 = vpop.f32.mrb[0].mxu0
        %467 = vmatprep.mubr.f32.mxu0 0.0
        %468 = vmatmul.mubr.f32.gmra.mrb[0].mxu0 %v347
        %v469 = vpop.f32.mrb[0].mxu0
        %v470 = vadd.f32 0.0, %v469
        %v471 = vpop.f32.mrb[0].mxu0
        %472 = vmatprep.mubr.f32.mxu0 0.0
        %473 = vmatmul.mubr.f32.gmra.mrb[0].mxu0 %v348
        %v474 = vpop.f32.mrb[0].mxu0
        %v475 = vadd.f32 0.0, %v474
        %v476 = vpop.f32.mrb[0].mxu0
        %477 = vmatprep.mubr.f32.mxu0 0.0
        %478 = vmatmul.mubr.f32.gmra.mrb[0].mxu0 %v349
        %v479 = vpop.f32.mrb[0].mxu0
        %v480 = vadd.f32 0.0, %v479
        %v481 = vpop.f32.mrb[0].mxu0
        %482 = vmatprep.mubr.f32.mxu0 0.0
        %483 = vmatmul.mubr.f32.gmra.mrb[0].mxu0 %v350
        %v484 = vpop.f32.mrb[0].mxu0
        %v485 = vadd.f32 0.0, %v484
        %v486 = vpop.f32.mrb[0].mxu0
        %487 = vmatprep.mubr.f32.mxu0 0.0
        %488 = vmatmul.mubr.f32.gmra.mrb[0].mxu0 %v351
        %v489 = vpop.f32.mrb[0].mxu0
        %v490 = vadd.f32 0.0, %v489
        %v491 = vpop.f32.mrb[0].mxu0
        %492 = vmatprep.mubr.f32.mxu0 0.0
        %493 = vmatmul.mubr.f32.gmra.mrb[0].mxu0 %v352
        %v494 = vpop.f32.mrb[0].mxu0
        %v495 = vadd.f32 0.0, %v494
        %v496 = vpop.f32.mrb[0].mxu0
        %497 = vmatprep.mubr.f32.mxu0 0.0
        %498 = vmatmul.mubr.f32.gmra.mrb[0].mxu0 %v353
        %v499 = vpop.f32.mrb[0].mxu0
        %v500 = vadd.f32 0.0, %v499
        %v501 = vpop.f32.mrb[0].mxu0
        %502 = vmatprep.mubr.f32.mxu0 0.0
        %503 = vmatmul.mubr.f32.gmra.mrb[0].mxu0 %v354
        %v504 = vpop.f32.mrb[0].mxu0
        %v505 = vadd.f32 0.0, %v504
        %v506 = vpop.f32.mrb[0].mxu0
        %507 = vmatprep.mubr.f32.mxu0 0.0
        %508 = vmatmul.mubr.f32.gmra.mrb[0].mxu0 %v355
        %v509 = vpop.f32.mrb[0].mxu0
        %v510 = vadd.f32 0.0, %v509
        %v511 = vpop.f32.mrb[0].mxu0
        %512 = vmatprep.mubr.f32.mxu0 0.0
        %513 = vmatmul.mubr.f32.gmra.mrb[0].mxu0 %v356
        %v514 = vpop.f32.mrb[0].mxu0
        %v515 = vadd.f32 0.0, %v514
        %v516 = vpop.f32.mrb[0].mxu0
        %517 = vdwg.mxu0
        %v518 = vadd.f32 %v325, %v440
        %v519 = vadd.f32 %v326, %v445
        %v520 = vadd.f32 %v327, %v450
        %v521 = vadd.f32 %v328, %v455
        %v522 = vadd.f32 %v329, %v460
        %v523 = vadd.f32 %v330, %v465
        %v524 = vadd.f32 %v331, %v470
        %v525 = vadd.f32 %v332, %v475
        %v526 = vadd.f32 %v333, %v480
        %v527 = vadd.f32 %v334, %v485
        %v528 = vadd.f32 %v335, %v490
        %v529 = vadd.f32 %v336, %v495
        %v530 = vadd.f32 %v337, %v500
        %v531 = vadd.f32 %v338, %v505
        %v532 = vadd.f32 %v339, %v510
        %v533 = vadd.f32 %v340, %v515
        %534 = vst [vmem:[#allocation2] sm:$0xff] %v518
        %535 = vst [vmem:[#allocation2 + $0x8] sm:$0xff] %v519
        %536 = vst [vmem:[#allocation2 + $0x10] sm:$0xff] %v520
        %537 = vst [vmem:[#allocation2 + $0x18] sm:$0xff] %v521
        %538 = vst [vmem:[#allocation2 + $0x20] sm:$0xff] %v522
        %539 = vst [vmem:[#allocation2 + $0x28] sm:$0xff] %v523
        %540 = vst [vmem:[#allocation2 + $0x30] sm:$0xff] %v524
        %541 = vst [vmem:[#allocation2 + $0x38] sm:$0xff] %v525
        %542 = vst [vmem:[#allocation2 + $0x40] sm:$0xff] %v526
        %543 = vst [vmem:[#allocation2 + $0x48] sm:$0xff] %v527
        %544 = vst [vmem:[#allocation2 + $0x50] sm:$0xff] %v528
        %545 = vst [vmem:[#allocation2 + $0x58] sm:$0xff] %v529
        %546 = vst [vmem:[#allocation2 + $0x60] sm:$0xff] %v530
        %547 = vst [vmem:[#allocation2 + $0x68] sm:$0xff] %v531
        %548 = vst [vmem:[#allocation2 + $0x70] sm:$0xff] %v532
        %549 = vst [vmem:[#allocation2 + $0x78] sm:$0xff] %v533
        %p550 = scmp.eq.s32.totalorder %s20, 2
        // Predicated region
        $region71: #{gripnet_forward.8} parent=61 // pred_check
          %p551 = pneg %p550
        $region72: #{gripnet_forward.8} parent=61 // pred_check_branch
          %553 = sbr.rel (%p551) target = $region74
        $region73: #{gripnet_forward.8} parent=61 // pred_region
          %v554 = vld [vmem:[#allocation2] sm:$0xff]
          %v555 = vld [vmem:[#allocation2 + $0x8] sm:$0xff]
          %v556 = vld [vmem:[#allocation2 + $0x10] sm:$0xff]
          %v557 = vld [vmem:[#allocation2 + $0x18] sm:$0xff]
          %v558 = vld [vmem:[#allocation2 + $0x20] sm:$0xff]
          %v559 = vld [vmem:[#allocation2 + $0x28] sm:$0xff]
          %v560 = vld [vmem:[#allocation2 + $0x30] sm:$0xff]
          %v561 = vld [vmem:[#allocation2 + $0x38] sm:$0xff]
          %v562 = vld [vmem:[#allocation2 + $0x40] sm:$0xff]
          %v563 = vld [vmem:[#allocation2 + $0x48] sm:$0xff]
          %v564 = vld [vmem:[#allocation2 + $0x50] sm:$0xff]
          %v565 = vld [vmem:[#allocation2 + $0x58] sm:$0xff]
          %v566 = vld [vmem:[#allocation2 + $0x60] sm:$0xff]
          %v567 = vld [vmem:[#allocation2 + $0x68] sm:$0xff]
          %v568 = vld [vmem:[#allocation2 + $0x70] sm:$0xff]
          %v569 = vld [vmem:[#allocation2 + $0x78] sm:$0xff]
          %v570 = vmax.f32 %v554, 0.0
          %v571 = vmax.f32 %v555, 0.0
          %v572 = vmax.f32 %v556, 0.0
          %v573 = vmax.f32 %v557, 0.0
          %v574 = vmax.f32 %v558, 0.0
          %v575 = vmax.f32 %v559, 0.0
          %v576 = vmax.f32 %v560, 0.0
          %v577 = vmax.f32 %v561, 0.0
          %v578 = vmax.f32 %v562, 0.0
          %v579 = vmax.f32 %v563, 0.0
          %v580 = vmax.f32 %v564, 0.0
          %v581 = vmax.f32 %v565, 0.0
          %v582 = vmax.f32 %v566, 0.0
          %v583 = vmax.f32 %v567, 0.0
          %v584 = vmax.f32 %v568, 0.0
          %v585 = vmax.f32 %v569, 0.0
          %586 = vst [vmem:[%s303] sm:$0xff] %v570
          %587 = vst [vmem:[%s303 + $0x8] sm:$0xff] %v571
          %588 = vst [vmem:[%s303 + $0x10] sm:$0xff] %v572
          %589 = vst [vmem:[%s303 + $0x18] sm:$0xff] %v573
          %590 = vst [vmem:[%s303 + $0x20] sm:$0xff] %v574
          %591 = vst [vmem:[%s303 + $0x28] sm:$0xff] %v575
          %592 = vst [vmem:[%s303 + $0x30] sm:$0xff] %v576
          %593 = vst [vmem:[%s303 + $0x38] sm:$0xff] %v577
          %594 = vst [vmem:[%s303 + $0x40] sm:$0xff] %v578
          %595 = vst [vmem:[%s303 + $0x48] sm:$0xff] %v579
          %596 = vst [vmem:[%s303 + $0x50] sm:$0xff] %v580
          %597 = vst [vmem:[%s303 + $0x58] sm:$0xff] %v581
          %598 = vst [vmem:[%s303 + $0x60] sm:$0xff] %v582
          %599 = vst [vmem:[%s303 + $0x68] sm:$0xff] %v583
          %600 = vst [vmem:[%s303 + $0x70] sm:$0xff] %v584
          %601 = vst [vmem:[%s303 + $0x78] sm:$0xff] %v585
        $region74: #{gripnet_forward.8} parent=61 // pred_fallthru
          _
        %s602 = smul.u32 16, %s18
        %p603 = scmp.lt.s32.totalorder %s602, 47
        %s604 = scalar_select %p603, %s602, 47
        %p605 = scmp.lt.s32.totalorder %s19, 0
        %s606 = scalar_select %p605, %s19, 0
        %s607 = sadd.s32 %s606, %s604
        %s608 = smul.addr %s607, 8
        %s609 = scalar_lea.vmem %s2, %s608
        // Predicated region
        $region75: #{gripnet_forward.8} parent=61 // pred_check
          %p610 = pneg %p108
        $region76: #{gripnet_forward.8} parent=61 // pred_check_branch
          %612 = sbr.rel (%p610) target = $region78
        $region77: #{gripnet_forward.8} parent=61 // pred_region
          %s613 = smul.u32 16, %s18
        $region78: #{gripnet_forward.8} parent=61 // pred_fallthru
          _
      $region62: #{gripnet_forward.8} parent=5 // pred_fallthru
        _
      %p614 = scmp.le.s32.totalorder 2, %s8
      // Predicated region
      $region79: #{gripnet_forward.8} parent=5 // pred_check
        %p615 = pneg %p614
      $region80: #{gripnet_forward.8} parent=5 // pred_check_branch
        %617 = sbr.rel (%p615) target = $region82
      $region81: #{gripnet_forward.8} parent=5 // pred_region
        %s618 = ssub.s32 %s8, 2
        // Predicated region
        $region83: #{gripnet_forward.8} parent=81 // pred_check
          %p619 = pneg %p114
        $region84: #{gripnet_forward.8} parent=81 // pred_check_branch
          %621 = sbr.rel (%p619) target = $region86
        $region85: #{gripnet_forward.8} parent=81 // pred_region
          %s622 = smul.u32 16, %s21
          %p623 = scmp.lt.s32.totalorder %s622, 47
          %s624 = scalar_select %p623, %s622, 47
          %p625 = scmp.lt.s32.totalorder %s22, 0
          %s626 = scalar_select %p625, %s22, 0
          %s627 = sadd.s32 %s626, %s624
          %s628 = smul.addr %s627, 8
          %s629 = scalar_lea.vmem %s2, %s628
        $region86: #{gripnet_forward.8} parent=81 // pred_fallthru
          _
      $region82: #{gripnet_forward.8} parent=5 // pred_fallthru
        _
    $region6: #{gripnet_forward.8} parent=1 // loop_footer
      %s12 = sadd.s32 1, %s8
    $region7: #{gripnet_forward.8} parent=1 // loop_footer_branch
      %7 = sbr.rel target = $region3
    $region8: #{gripnet_forward.8} parent=1 // loop_exit
      _

// kernel: gripnet_forward.7
$region0: #{gripnet_forward.7}
  #allocation0 [shape = 'u32[]', space=smem, size = 0x4, offset = 0x4, fixed_abs, tag = 'smem constant byte address 0x4 - core index']
  #allocation1 [shape = 'u32[144,128]{1,0:T(1,128)}', space=vmem, size = 0x12000, scoped, tag = 'internal scratch']
  #allocation2 [shape = 'f32[128,128]{1,0:T(8,128)}', space=vmem, size = 0x10000, scoped, tag = 'scratch operand']
  %s0 = inlined_call_operand.vmem [shape: f32[384,256], index: 0, kind: input, shape index: {}]
  %s1 = inlined_call_operand.vmem [shape: f32[256,128], index: 1, kind: input, shape index: {}]
  %s2 = inlined_call_operand.vmem [shape: f32[384,128], index: 2, kind: output, shape index: {}]
  %s3 = sld [smem:[#allocation0]]
  $region87: #{gripnet_forward.7} parent=0
    _
  %s5 = ssub.s32 1, %s3
  %s6 = scalar_select 0, %s5, %s3
  $region1: #{gripnet_forward.7} parent=0
    #allocation3 [shape = 'u8[131072]{0}', space=vmem, size = 0x20000, scoped, tag = 'input window, operand 0']
    loop: start=0, step=1, limit=8
    $region2: #{gripnet_forward.7} parent=1 // loop_pre_header
      _
    $region3: #{gripnet_forward.7} parent=1 // loop_header
      %s8 = sphi 0, %s12
      %p9 = scmp.ge.s32.totalorder %s8, 8
      %s15 = sphi 0, %s34
      %s16 = sphi 0, %s30
      %s17 = sphi 0, %s26
      %s18 = sphi 0, %s15
      %s19 = sphi 0, %s16
      %s20 = sphi 0, %s17
      %s21 = sphi 0, %s18
      %s22 = sphi 0, %s19
      %s23 = sphi 0, %s20
      %s39 = sphi 0, %s41
      %s42 = sphi 0, %s39
      %s43 = sphi 0, %s42
      %s59 = sphi 0, %s43
      %s67 = sphi 0, %s69
      %s70 = sphi 0, %s67
      %s71 = sphi 0, %s70
      %s87 = sphi 0, %s71
      %s95 = sphi 0, %s97
      %s98 = sphi 0, %s95
      %s99 = sphi 0, %s98
      %s115 = sphi 0, %s99
    $region4: #{gripnet_forward.7} parent=1 // loop_header_branch
      %11 = sbr.rel (%p9) target = $region8
    $region5: #{gripnet_forward.7} parent=1 // loop_body
      %s13 = ssub.s32 %s8, 1
      %s14 = ssub.s32 %s8, 2
      %s24 = sadd.s32 1, %s17
      %p25 = scmp.ge.s32.totalorder %s24, 2
      %s26 = scalar_select %p25, 0, %s24
      %s27 = sadd.s32 1, %s16
      %s28 = scalar_select %p25, %s27, %s16
      %p29 = scmp.ge.s32.totalorder %s28, 1
      %s30 = scalar_select %p29, 0, %s28
      %s31 = sadd.s32 1, %s15
      %s32 = scalar_select %p29, %s31, %s15
      %p33 = scmp.ge.s32.totalorder %s32, 3
      %s34 = scalar_select %p33, 0, %s32
      %s35 = ssub.s32 %s15, %s34
      %s36 = ssub.s32 %s17, %s26
      %s37 = sor.u32 %s35, %s36
      %p38 = scmp.eq.s32.totalorder %s37, 0
      %s40 = sadd.s32 %s39, 1
      %s41 = scalar_select %p38, %s39, %s40
      %p44 = pneg %p38
      %p45 = scmp.eq.s32.totalorder %s8, 5
      %p46 = por %p44, %p45
      %p47 = scmp.ne.s32.totalorder %s39, %s42
      %p48 = scmp.eq.s32.totalorder %s8, 0
      %p49 = por %p47, %p48
      %p50 = scmp.ne.s32.totalorder %s39, %s42
      %p51 = scmp.eq.s32.totalorder %s13, 5
      %p52 = por %p50, %p51
      %p53 = scmp.ne.s32.totalorder %s42, %s43
      %p54 = scmp.eq.s32.totalorder %s13, 0
      %p55 = por %p53, %p54
      %p56 = scmp.ne.s32.totalorder %s42, %s43
      %p57 = scmp.eq.s32.totalorder %s14, 5
      %p58 = por %p56, %p57
      %p60 = scmp.ne.s32.totalorder %s43, %s59
      %p61 = scmp.eq.s32.totalorder %s14, 0
      %p62 = por %p60, %p61
      %s63 = ssub.s32 %s17, %s26
      %s64 = ssub.s32 %s16, %s30
      %s65 = sor.u32 %s63, %s64
      %p66 = scmp.eq.s32.totalorder %s65, 0
      %s68 = sadd.s32 %s67, 1
      %s69 = scalar_select %p66, %s67, %s68
      %p72 = pneg %p66
      %p73 = scmp.eq.s32.totalorder %s8, 5
      %p74 = por %p72, %p73
      %p75 = scmp.ne.s32.totalorder %s67, %s70
      %p76 = scmp.eq.s32.totalorder %s8, 0
      %p77 = por %p75, %p76
      %p78 = scmp.ne.s32.totalorder %s67, %s70
      %p79 = scmp.eq.s32.totalorder %s13, 5
      %p80 = por %p78, %p79
      %p81 = scmp.ne.s32.totalorder %s70, %s71
      %p82 = scmp.eq.s32.totalorder %s13, 0
      %p83 = por %p81, %p82
      %p84 = scmp.ne.s32.totalorder %s70, %s71
      %p85 = scmp.eq.s32.totalorder %s14, 5
      %p86 = por %p84, %p85
      %p88 = scmp.ne.s32.totalorder %s71, %s87
      %p89 = scmp.eq.s32.totalorder %s14, 0
      %p90 = por %p88, %p89
      %s91 = ssub.s32 %s15, %s34
      %s92 = ssub.s32 %s16, %s30
      %s93 = sor.u32 %s91, %s92
      %p94 = scmp.eq.s32.totalorder %s93, 0
      %s96 = sadd.s32 %s95, 1
      %s97 = scalar_select %p94, %s95, %s96
      %p100 = pneg %p94
      %p101 = scmp.eq.s32.totalorder %s8, 5
      %p102 = por %p100, %p101
      %p103 = scmp.ne.s32.totalorder %s95, %s98
      %p104 = scmp.eq.s32.totalorder %s8, 0
      %p105 = por %p103, %p104
      %p106 = scmp.ne.s32.totalorder %s95, %s98
      %p107 = scmp.eq.s32.totalorder %s13, 5
      %p108 = por %p106, %p107
      %p109 = scmp.ne.s32.totalorder %s98, %s99
      %p110 = scmp.eq.s32.totalorder %s13, 0
      %p111 = por %p109, %p110
      %p112 = scmp.ne.s32.totalorder %s98, %s99
      %p113 = scmp.eq.s32.totalorder %s14, 5
      %p114 = por %p112, %p113
      %p116 = scmp.ne.s32.totalorder %s99, %s115
      %p117 = scmp.eq.s32.totalorder %s14, 0
      %p118 = por %p116, %p117
      %p119 = scmp.le.s32.totalorder 1, %s8
      %p120 = scmp.lt.s32.totalorder %s8, 7
      %p121 = pnand %p119, %p120
      %p122 = pneg %p121
      // Predicated region
      $region9: #{gripnet_forward.7} parent=5 // pred_check
        _
      $region10: #{gripnet_forward.7} parent=5 // pred_check_branch
        %124 = sbr.rel (%p121) target = $region12
      $region11: #{gripnet_forward.7} parent=5 // pred_region
        %s125 = ssub.s32 %s8, 1
      $region12: #{gripnet_forward.7} parent=5 // pred_fallthru
        _
      %p126 = scmp.lt.s32.totalorder %s8, 6
      // Predicated region
      $region13: #{gripnet_forward.7} parent=5 // pred_check
        %p127 = pneg %p126
      $region14: #{gripnet_forward.7} parent=5 // pred_check_branch
        %129 = sbr.rel (%p127) target = $region16
      $region15: #{gripnet_forward.7} parent=5 // pred_region
        // Predicated region
        $region17: #{gripnet_forward.7} parent=15 // pred_check
          %p130 = pneg %p49
        $region18: #{gripnet_forward.7} parent=15 // pred_check_branch
          %132 = sbr.rel (%p130) target = $region20
        $region19: #{gripnet_forward.7} parent=15 // pred_region
          %s133 = sand.u32 %s39, 1
          %s134 = sand.u32 %s39, 1
          %s135 = smul.addr %s134, 128
          %s136 = scalar_lea.vmem [#allocation3], %s135
          %s137 = smul.u32 16, %s15
          %s138 = smul.addr %s137, 2
          %s139 = sadd.s32 %s17, %s138
          %s140 = smul.addr %s139, 8
          %s141 = scalar_lea.vmem %s0, %s140
          // Predicated region
          $region21: #{gripnet_forward.7} parent=19 // pred_check
            _
          $region22: #{gripnet_forward.7} parent=19 // pred_check_branch
            %143 = sbr.rel (0) target = $region24
          $region23: #{gripnet_forward.7} parent=19 // pred_region
            // Predicated region
            $region25: #{gripnet_forward.7} parent=23 // pred_check
              _
            $region26: #{gripnet_forward.7} parent=23 // pred_check_branch
              %145 = sbr.rel (0) target = $region28
            $region27: #{gripnet_forward.7} parent=23 // pred_region
              // Predicated region
              $region40: #{gripnet_forward.7} parent=27 // pred_check
                _
              $region41: #{gripnet_forward.7} parent=27 // pred_check_branch
                %190 = sbr.rel (0) target = $region43
              $region42: #{gripnet_forward.7} parent=27 // pred_region
                loop: start=0, step=1, limit=1
                $region44: #{gripnet_forward.7} parent=42 // loop_pre_header
                  _
                $region45: #{gripnet_forward.7} parent=42 // loop_header
                  %s192 = sphi 0, %s196
                  %p193 = scmp.ge.s32.totalorder %s192, 1
                  %s197 = sphi %s141, %s141
                  %s198 = sphi %s136, %s136
                $region46: #{gripnet_forward.7} parent=42 // loop_header_branch
                  %195 = sbr.rel (%p193) target = $region50
                $region47: #{gripnet_forward.7} parent=42 // loop_body
                  %v199 = vld [vmem:[%s197] sm:$0xff]
                  %200 = vst [vmem:[%s198] sm:$0xff] %v199
                  %v201 = vld [vmem:[%s197 + $0x10] sm:$0xff]
                  %202 = vst [vmem:[%s198 + $0x8] sm:$0xff] %v201
                  %v203 = vld [vmem:[%s197 + $0x20] sm:$0xff]
                  %204 = vst [vmem:[%s198 + $0x10] sm:$0xff] %v203
                  %v205 = vld [vmem:[%s197 + $0x30] sm:$0xff]
                  %206 = vst [vmem:[%s198 + $0x18] sm:$0xff] %v205
                  %v207 = vld [vmem:[%s197 + $0x40] sm:$0xff]
                  %208 = vst [vmem:[%s198 + $0x20] sm:$0xff] %v207
                  %v209 = vld [vmem:[%s197 + $0x50] sm:$0xff]
                  %210 = vst [vmem:[%s198 + $0x28] sm:$0xff] %v209
                  %v211 = vld [vmem:[%s197 + $0x60] sm:$0xff]
                  %212 = vst [vmem:[%s198 + $0x30] sm:$0xff] %v211
                  %v213 = vld [vmem:[%s197 + $0x70] sm:$0xff]
                  %214 = vst [vmem:[%s198 + $0x38] sm:$0xff] %v213
                  %v215 = vld [vmem:[%s197 + $0x80] sm:$0xff]
                  %216 = vst [vmem:[%s198 + $0x40] sm:$0xff] %v215
                  %v217 = vld [vmem:[%s197 + $0x90] sm:$0xff]
                  %218 = vst [vmem:[%s198 + $0x48] sm:$0xff] %v217
                  %v219 = vld [vmem:[%s197 + $0xa0] sm:$0xff]
                  %220 = vst [vmem:[%s198 + $0x50] sm:$0xff] %v219
                  %v221 = vld [vmem:[%s197 + $0xb0] sm:$0xff]
                  %222 = vst [vmem:[%s198 + $0x58] sm:$0xff] %v221
                  %v223 = vld [vmem:[%s197 + $0xc0] sm:$0xff]
                  %224 = vst [vmem:[%s198 + $0x60] sm:$0xff] %v223
                  %v225 = vld [vmem:[%s197 + $0xd0] sm:$0xff]
                  %226 = vst [vmem:[%s198 + $0x68] sm:$0xff] %v225
                  %v227 = vld [vmem:[%s197 + $0xe0] sm:$0xff]
                  %228 = vst [vmem:[%s198 + $0x70] sm:$0xff] %v227
                  %v229 = vld [vmem:[%s197 + $0xf0] sm:$0xff]
                  %230 = vst [vmem:[%s198 + $0x78] sm:$0xff] %v229
                $region48: #{gripnet_forward.7} parent=42 // loop_footer
                  %s196 = sadd.s32 1, %s192
                $region49: #{gripnet_forward.7} parent=42 // loop_footer_branch
                  %191 = sbr.rel target = $region45
                $region50: #{gripnet_forward.7} parent=42 // loop_exit
                  _
              $region43: #{gripnet_forward.7} parent=27 // pred_fallthru
                _
              // Predicated region
              $region51: #{gripnet_forward.7} parent=27 // pred_check
                _
              $region52: #{gripnet_forward.7} parent=27 // pred_check_branch
                %232 = sbr.rel target = $region54
              $region53: #{gripnet_forward.7} parent=27 // pred_region
                _
              $region54: #{gripnet_forward.7} parent=27 // pred_fallthru
                _
            $region28: #{gripnet_forward.7} parent=23 // pred_fallthru
              _
            // Predicated region
            $region29: #{gripnet_forward.7} parent=23 // pred_check
              _
            $region30: #{gripnet_forward.7} parent=23 // pred_check_branch
              %147 = sbr.rel target = $region32
            $region31: #{gripnet_forward.7} parent=23 // pred_region
              loop: start=0, step=1, limit=1
              $region33: #{gripnet_forward.7} parent=31 // loop_pre_header
                _
              $region34: #{gripnet_forward.7} parent=31 // loop_header
                %s150 = sphi 0, %s154
                %p151 = scmp.ge.s32.totalorder %s150, 1
                %s155 = sphi %s141, %s141
                %s156 = sphi %s136, %s136
              $region35: #{gripnet_forward.7} parent=31 // loop_header_branch
                %153 = sbr.rel (%p151) target = $region39
              $region36: #{gripnet_forward.7} parent=31 // loop_body
                %v157 = vld [vmem:[%s155] sm:$0xff]
                %158 = vst [vmem:[%s156] sm:$0xff] %v157
                %v159 = vld [vmem:[%s155 + $0x10] sm:$0xff]
                %160 = vst [vmem:[%s156 + $0x8] sm:$0xff] %v159
                %v161 = vld [vmem:[%s155 + $0x20] sm:$0xff]
                %162 = vst [vmem:[%s156 + $0x10] sm:$0xff] %v161
                %v163 = vld [vmem:[%s155 + $0x30] sm:$0xff]
                %164 = vst [vmem:[%s156 + $0x18] sm:$0xff] %v163
                %v165 = vld [vmem:[%s155 + $0x40] sm:$0xff]
                %166 = vst [vmem:[%s156 + $0x20] sm:$0xff] %v165
                %v167 = vld [vmem:[%s155 + $0x50] sm:$0xff]
                %168 = vst [vmem:[%s156 + $0x28] sm:$0xff] %v167
                %v169 = vld [vmem:[%s155 + $0x60] sm:$0xff]
                %170 = vst [vmem:[%s156 + $0x30] sm:$0xff] %v169
                %v171 = vld [vmem:[%s155 + $0x70] sm:$0xff]
                %172 = vst [vmem:[%s156 + $0x38] sm:$0xff] %v171
                %v173 = vld [vmem:[%s155 + $0x80] sm:$0xff]
                %174 = vst [vmem:[%s156 + $0x40] sm:$0xff] %v173
                %v175 = vld [vmem:[%s155 + $0x90] sm:$0xff]
                %176 = vst [vmem:[%s156 + $0x48] sm:$0xff] %v175
                %v177 = vld [vmem:[%s155 + $0xa0] sm:$0xff]
                %178 = vst [vmem:[%s156 + $0x50] sm:$0xff] %v177
                %v179 = vld [vmem:[%s155 + $0xb0] sm:$0xff]
                %180 = vst [vmem:[%s156 + $0x58] sm:$0xff] %v179
                %v181 = vld [vmem:[%s155 + $0xc0] sm:$0xff]
                %182 = vst [vmem:[%s156 + $0x60] sm:$0xff] %v181
                %v183 = vld [vmem:[%s155 + $0xd0] sm:$0xff]
                %184 = vst [vmem:[%s156 + $0x68] sm:$0xff] %v183
                %v185 = vld [vmem:[%s155 + $0xe0] sm:$0xff]
                %186 = vst [vmem:[%s156 + $0x70] sm:$0xff] %v185
                %v187 = vld [vmem:[%s155 + $0xf0] sm:$0xff]
                %188 = vst [vmem:[%s156 + $0x78] sm:$0xff] %v187
              $region37: #{gripnet_forward.7} parent=31 // loop_footer
                %s154 = sadd.s32 1, %s150
              $region38: #{gripnet_forward.7} parent=31 // loop_footer_branch
                %149 = sbr.rel target = $region34
              $region39: #{gripnet_forward.7} parent=31 // loop_exit
                _
            $region32: #{gripnet_forward.7} parent=23 // pred_fallthru
              _
          $region24: #{gripnet_forward.7} parent=19 // pred_fallthru
            _
          %233 = vnop
        $region20: #{gripnet_forward.7} parent=15 // pred_fallthru
          _
        // Predicated region
        $region55: #{gripnet_forward.7} parent=15 // pred_check
          %p234 = pneg %p77
        $region56: #{gripnet_forward.7} parent=15 // pred_check_branch
          %236 = sbr.rel (%p234) target = $region58
        $region57: #{gripnet_forward.7} parent=15 // pred_region
          %s237 = smul.u32 16, %s17
          %p238 = scmp.lt.s32.totalorder %s237, 31
          %s239 = scalar_select %p238, %s237, 31
          %p240 = scmp.lt.s32.totalorder %s16, 0
          %s241 = scalar_select %p240, %s16, 0
          %s242 = sadd.s32 %s241, %s239
          %s243 = smul.addr %s242, 8
          %s244 = scalar_lea.vmem %s1, %s243
          %s245 = smul.u32 16, %s17
        $region58: #{gripnet_forward.7} parent=15 // pred_fallthru
          _
      $region16: #{gripnet_forward.7} parent=5 // pred_fallthru
        _
      %p246 = scmp.le.s32.totalorder 1, %s8
      %p247 = scmp.lt.s32.totalorder %s8, 7
      %p248 = pnand %p246, %p247
      %p249 = pneg %p248
      // Predicated region
      $region59: #{gripnet_forward.7} parent=5 // pred_check
        _
      $region60: #{gripnet_forward.7} parent=5 // pred_check_branch
        %251 = sbr.rel (%p248) target = $region62
      $region61: #{gripnet_forward.7} parent=5 // pred_region
        %s252 = ssub.s32 %s8, 1
        %s253 = sand.u32 %s42, 1
        %s254 = sand.u32 %s42, 1
        %s255 = smul.addr %s254, 128
        %s256 = scalar_lea.vmem [#allocation3], %s255
        // Predicated region
        $region63: #{gripnet_forward.7} parent=61 // pred_check
          %p257 = pneg %p55
        $region64: #{gripnet_forward.7} parent=61 // pred_check_branch
          %259 = sbr.rel (%p257) target = $region66
        $region65: #{gripnet_forward.7} parent=61 // pred_region
          _
        $region66: #{gripnet_forward.7} parent=61 // pred_fallthru
          _
        %s260 = sand.u32 %s42, 1
        %s261 = sand.u32 %s42, 1
        %s262 = smul.addr %s261, 128
        %s263 = scalar_lea.vmem [#allocation3], %s262
        %p264 = pneg %p55
        %p265 = pneg %p52
        %s266 = smul.u32 16, %s20
        %p267 = scmp.lt.s32.totalorder %s266, 31
        %s268 = scalar_select %p267, %s266, 31
        %p269 = scmp.lt.s32.totalorder %s19, 0
        %s270 = scalar_select %p269, %s19, 0
        %s271 = sadd.s32 %s270, %s268
        %s272 = smul.addr %s271, 8
        %s273 = scalar_lea.vmem %s1, %s272
        %p274 = pneg %p83
        %p275 = pneg %p80
        %p276 = pneg %p111
        %p277 = pneg %p108
        %s278 = smul.u32 16, %s18
        %p279 = scmp.lt.s32.totalorder %s278, 47
        %s280 = scalar_select %p279, %s278, 47
        %p281 = scmp.lt.s32.totalorder %s19, 0
        %s282 = scalar_select %p281, %s19, 0
        %s283 = sadd.s32 %s282, %s280
        %s284 = smul.addr %s283, 8
        %s285 = scalar_lea.vmem %s2, %s284
        %s286 = smul.u32 16, %s18
        %s287 = smul.u32 16, %s20
        %p288 = scmp.lt.s32.totalorder %s287, 31
        %s289 = scalar_select %p288, %s287, 31
        %p290 = scmp.lt.s32.totalorder %s19, 0
        %s291 = scalar_select %p290, %s19, 0
        %s292 = sadd.s32 %s291, %s289
        %s293 = smul.addr %s292, 8
        %s294 = scalar_lea.vmem %s1, %s293
        %s295 = smul.u32 16, %s20
        %s296 = smul.u32 16, %s18
        %p297 = scmp.lt.s32.totalorder %s296, 47
        %s298 = scalar_select %p297, %s296, 47
        %p299 = scmp.lt.s32.totalorder %s19, 0
        %s300 = scalar_select %p299, %s19, 0
        %s301 = sadd.s32 %s300, %s298
        %s302 = smul.addr %s301, 8
        %s303 = scalar_lea.vmem %s2, %s302
        %s304 = smul.u32 16, %s18
        %p305 = scmp.eq.s32.totalorder %s20, 0
        // Predicated region
        $region67: #{gripnet_forward.7} parent=61 // pred_check
          %p306 = pneg %p305
        $region68: #{gripnet_forward.7} parent=61 // pred_check_branch
          %308 = sbr.rel (%p306) target = $region70
        $region69: #{gripnet_forward.7} parent=61 // pred_region
          %309 = vst [vmem:[#allocation2] sm:$0xff] 0.0
          %310 = vst [vmem:[#allocation2 + $0x8] sm:$0xff] 0.0
          %311 = vst [vmem:[#allocation2 + $0x10] sm:$0xff] 0.0
          %312 = vst [vmem:[#allocation2 + $0x18] sm:$0xff] 0.0
          %313 = vst [vmem:[#allocation2 + $0x20] sm:$0xff] 0.0
          %314 = vst [vmem:[#allocation2 + $0x28] sm:$0xff] 0.0
          %315 = vst [vmem:[#allocation2 + $0x30] sm:$0xff] 0.0
          %316 = vst [vmem:[#allocation2 + $0x38] sm:$0xff] 0.0
          %317 = vst [vmem:[#allocation2 + $0x40] sm:$0xff] 0.0
          %318 = vst [vmem:[#allocation2 + $0x48] sm:$0xff] 0.0
          %319 = vst [vmem:[#allocation2 + $0x50] sm:$0xff] 0.0
          %320 = vst [vmem:[#allocation2 + $0x58] sm:$0xff] 0.0
          %321 = vst [vmem:[#allocation2 + $0x60] sm:$0xff] 0.0
          %322 = vst [vmem:[#allocation2 + $0x68] sm:$0xff] 0.0
          %323 = vst [vmem:[#allocation2 + $0x70] sm:$0xff] 0.0
          %324 = vst [vmem:[#allocation2 + $0x78] sm:$0xff] 0.0
        $region70: #{gripnet_forward.7} parent=61 // pred_fallthru
          _
        %v325 = vld [vmem:[#allocation2] sm:$0xff]
        %v326 = vld [vmem:[#allocation2 + $0x8] sm:$0xff]
        %v327 = vld [vmem:[#allocation2 + $0x10] sm:$0xff]
        %v328 = vld [vmem:[#allocation2 + $0x18] sm:$0xff]
        %v329 = vld [vmem:[#allocation2 + $0x20] sm:$0xff]
        %v330 = vld [vmem:[#allocation2 + $0x28] sm:$0xff]
        %v331 = vld [vmem:[#allocation2 + $0x30] sm:$0xff]
        %v332 = vld [vmem:[#allocation2 + $0x38] sm:$0xff]
        %v333 = vld [vmem:[#allocation2 + $0x40] sm:$0xff]
        %v334 = vld [vmem:[#allocation2 + $0x48] sm:$0xff]
        %v335 = vld [vmem:[#allocation2 + $0x50] sm:$0xff]
        %v336 = vld [vmem:[#allocation2 + $0x58] sm:$0xff]
        %v337 = vld [vmem:[#allocation2 + $0x60] sm:$0xff]
        %v338 = vld [vmem:[#allocation2 + $0x68] sm:$0xff]
        %v339 = vld [vmem:[#allocation2 + $0x70] sm:$0xff]
        %v340 = vld [vmem:[#allocation2 + $0x78] sm:$0xff]
        %v341 = vld [vmem:[%s256] sm:$0xff]
        %v342 = vld [vmem:[%s256 + $0x8] sm:$0xff]
        %v343 = vld [vmem:[%s256 + $0x10] sm:$0xff]
        %v344 = vld [vmem:[%s256 + $0x18] sm:$0xff]
        %v345 = vld [vmem:[%s256 + $0x20] sm:$0xff]
        %v346 = vld [vmem:[%s256 + $0x28] sm:$0xff]
        %v347 = vld [vmem:[%s256 + $0x30] sm:$0xff]
        %v348 = vld [vmem:[%s256 + $0x38] sm:$0xff]
        %v349 = vld [vmem:[%s256 + $0x40] sm:$0xff]
        %v350 = vld [vmem:[%s256 + $0x48] sm:$0xff]
        %v351 = vld [vmem:[%s256 + $0x50] sm:$0xff]
        %v352 = vld [vmem:[%s256 + $0x58] sm:$0xff]
        %v353 = vld [vmem:[%s256 + $0x60] sm:$0xff]
        %v354 = vld [vmem:[%s256 + $0x68] sm:$0xff]
        %v355 = vld [vmem:[%s256 + $0x70] sm:$0xff]
        %v356 = vld [vmem:[%s256 + $0x78] sm:$0xff]
        %v357 = vld [vmem:[%s294] sm:$0xff]
        %v358 = vld [vmem:[%s294 + $0x8] sm:$0xff]
        %v359 = vld [vmem:[%s294 + $0x10] sm:$0xff]
        %v360 = vld [vmem:[%s294 + $0x18] sm:$0xff]
        %v361 = vld [vmem:[%s294 + $0x20] sm:$0xff]
        %v362 = vld [vmem:[%s294 + $0x28] sm:$0xff]
        %v363 = vld [vmem:[%s294 + $0x30] sm:$0xff]
        %v364 = vld [vmem:[%s294 + $0x38] sm:$0xff]
        %v365 = vld [vmem:[%s294 + $0x40] sm:$0xff]
        %v366 = vld [vmem:[%s294 + $0x48] sm:$0xff]
        %v367 = vld [vmem:[%s294 + $0x50] sm:$0xff]
        %v368 = vld [vmem:[%s294 + $0x58] sm:$0xff]
        %v369 = vld [vmem:[%s294 + $0x60] sm:$0xff]
        %v370 = vld [vmem:[%s294 + $0x68] sm:$0xff]
        %v371 = vld [vmem:[%s294 + $0x70] sm:$0xff]
        %v372 = vld [vmem:[%s294 + $0x78] sm:$0xff]
        %373 = vmatprep.subr.mxu0 0.0
        %374 = vmatpush1.msra.mxu0 %v357
        %375 = vmatprep.subr.mxu0 0.0
        %376 = vmatpush1.msra.mxu0 %v358
        %377 = vmatprep.subr.mxu0 0.0
        %378 = vmatpush1.msra.mxu0 %v359
        %379 = vmatprep.subr.mxu0 0.0
        %380 = vmatpush1.msra.mxu0 %v360
        %381 = vmatprep.subr.mxu0 0.0
        %382 = vmatpush1.msra.mxu0 %v361
        %383 = vmatprep.subr.mxu0 0.0
        %384 = vmatpush1.msra.mxu0 %v362
        %385 = vmatprep.subr.mxu0 0.0
        %386 = vmatpush1.msra.mxu0 %v363
        %387 = vmatprep.subr.mxu0 0.0
        %388 = vmatpush1.msra.mxu0 %v364
        %389 = vmatprep.subr.mxu0 0.0
        %390 = vmatpush1.msra.mxu0 %v365
        %391 = vmatprep.subr.mxu0 0.0
        %392 = vmatpush1.msra.mxu0 %v366
        %393 = vmatprep.subr.mxu0 0.0
        %394 = vmatpush1.msra.mxu0 %v367
        %395 = vmatprep.subr.mxu0 0.0
        %396 = vmatpush1.msra.mxu0 %v368
        %397 = vmatprep.subr.mxu0 0.0
        %398 = vmatpush1.msra.mxu0 %v369
        %399 = vmatprep.subr.mxu0 0.0
        %400 = vmatpush1.msra.mxu0 %v370
        %401 = vmatprep.subr.mxu0 0.0
        %402 = vmatpush1.msra.mxu0 %v371
        %403 = vmatprep.subr.mxu0 0.0
        %404 = vmatpush1.msra.mxu0 %v372
        %405 = vmatprep.subr.mxu0 0.0
        %406 = vmatpush1.msra.mxu0 0.0
        %407 = vmatprep.subr.mxu0 0.0
        %408 = vmatpush1.msra.mxu0 0.0
        %409 = vmatprep.subr.mxu0 0.0
        %410 = vmatpush1.msra.mxu0 0.0
        %411 = vmatprep.subr.mxu0 0.0
        %412 = vmatpush1.msra.mxu0 0.0
        %413 = vmatprep.subr.mxu0 0.0
        %414 = vmatpush1.msra.mxu0 0.0
        %415 = vmatprep.subr.mxu0 0.0
        %416 = vmatpush1.msra.mxu0 0.0
        %417 = vmatprep.subr.mxu0 0.0
        %418 = vmatpush1.msra.mxu0 0.0
        %419 = vmatprep.subr.mxu0 0.0
        %420 = vmatpush1.msra.mxu0 0.0
        %421 = vmatprep.subr.mxu0 0.0
        %422 = vmatpush1.msra.mxu0 0.0
        %423 = vmatprep.subr.mxu0 0.0
        %424 = vmatpush1.msra.mxu0 0.0
        %425 = vmatprep.subr.mxu0 0.0
        %426 = vmatpush1.msra.mxu0 0.0
        %427 = vmatprep.subr.mxu0 0.0
        %428 = vmatpush1.msra.mxu0 0.0
        %429 = vmatprep.subr.mxu0 0.0
        %430 = vmatpush1.msra.mxu0 0.0
        %431 = vmatprep.subr.mxu0 0.0
        %432 = vmatpush1.msra.mxu0 0.0
        %433 = vmatprep.subr.mxu0 0.0
        %434 = vmatpush1.msra.mxu0 0.0
        %435 = vmatprep.subr.mxu0 0.0
        %436 = vmatpush1.msra.mxu0 0.0
        %437 = vmatprep.mubr.f32.mxu0 0.0
        %438 = vmatmul.mubr.f32.gmra.mrb[0].mxu0 %v341
        %v439 = vpop.f32.mrb[0].mxu0
        %v440 = vadd.f32 0.0, %v439
        %v441 = vpop.f32.mrb[0].mxu0
        %442 = vmatprep.mubr.f32.mxu0 0.0
        %443 = vmatmul.mubr.f32.gmra.mrb[0].mxu0 %v342
        %v444 = vpop.f32.mrb[0].mxu0
        %v445 = vadd.f32 0.0, %v444
        %v446 = vpop.f32.mrb[0].mxu0
        %447 = vmatprep.mubr.f32.mxu0 0.0
        %448 = vmatmul.mubr.f32.gmra.mrb[0].mxu0 %v343
        %v449 = vpop.f32.mrb[0].mxu0
        %v450 = vadd.f32 0.0, %v449
        %v451 = vpop.f32.mrb[0].mxu0
        %452 = vmatprep.mubr.f32.mxu0 0.0
        %453 = vmatmul.mubr.f32.gmra.mrb[0].mxu0 %v344
        %v454 = vpop.f32.mrb[0].mxu0
        %v455 = vadd.f32 0.0, %v454
        %v456 = vpop.f32.mrb[0].mxu0
        %457 = vmatprep.mubr.f32.mxu0 0.0
        %458 = vmatmul.mubr.f32.gmra.mrb[0].mxu0 %v345
        %v459 = vpop.f32.mrb[0].mxu0
        %v460 = vadd.f32 0.0, %v459
        %v461 = vpop.f32.mrb[0].mxu0
        %462 = vmatprep.mubr.f32.mxu0 0.0
        %463 = vmatmul.mubr.f32.gmra.mrb[0].mxu0 %v346
        %v464 = vpop.f32.mrb[0].mxu0
        %v465 = vadd.f32 0.0, %v464
        %v466 = vpop.f32.mrb[0].mxu0
        %467 = vmatprep.mubr.f32.mxu0 0.0
        %468 = vmatmul.mubr.f32.gmra.mrb[0].mxu0 %v347
        %v469 = vpop.f32.mrb[0].mxu0
        %v470 = vadd.f32 0.0, %v469
        %v471 = vpop.f32.mrb[0].mxu0
        %472 = vmatprep.mubr.f32.mxu0 0.0
        %473 = vmatmul.mubr.f32.gmra.mrb[0].mxu0 %v348
        %v474 = vpop.f32.mrb[0].mxu0
        %v475 = vadd.f32 0.0, %v474
        %v476 = vpop.f32.mrb[0].mxu0
        %477 = vmatprep.mubr.f32.mxu0 0.0
        %478 = vmatmul.mubr.f32.gmra.mrb[0].mxu0 %v349
        %v479 = vpop.f32.mrb[0].mxu0
        %v480 = vadd.f32 0.0, %v479
        %v481 = vpop.f32.mrb[0].mxu0
        %482 = vmatprep.mubr.f32.mxu0 0.0
        %483 = vmatmul.mubr.f32.gmra.mrb[0].mxu0 %v350
        %v484 = vpop.f32.mrb[0].mxu0
        %v485 = vadd.f32 0.0, %v484
        %v486 = vpop.f32.mrb[0].mxu0
        %487 = vmatprep.mubr.f32.mxu0 0.0
        %488 = vmatmul.mubr.f32.gmra.mrb[0].mxu0 %v351
        %v489 = vpop.f32.mrb[0].mxu0
        %v490 = vadd.f32 0.0, %v489
        %v491 = vpop.f32.mrb[0].mxu0
        %492 = vmatprep.mubr.f32.mxu0 0.0
        %493 = vmatmul.mubr.f32.gmra.mrb[0].mxu0 %v352
        %v494 = vpop.f32.mrb[0].mxu0
        %v495 = vadd.f32 0.0, %v494
        %v496 = vpop.f32.mrb[0].mxu0
        %497 = vmatprep.mubr.f32.mxu0 0.0
        %498 = vmatmul.mubr.f32.gmra.mrb[0].mxu0 %v353
        %v499 = vpop.f32.mrb[0].mxu0
        %v500 = vadd.f32 0.0, %v499
        %v501 = vpop.f32.mrb[0].mxu0
        %502 = vmatprep.mubr.f32.mxu0 0.0
        %503 = vmatmul.mubr.f32.gmra.mrb[0].mxu0 %v354
        %v504 = vpop.f32.mrb[0].mxu0
        %v505 = vadd.f32 0.0, %v504
        %v506 = vpop.f32.mrb[0].mxu0
        %507 = vmatprep.mubr.f32.mxu0 0.0
        %508 = vmatmul.mubr.f32.gmra.mrb[0].mxu0 %v355
        %v509 = vpop.f32.mrb[0].mxu0
        %v510 = vadd.f32 0.0, %v509
        %v511 = vpop.f32.mrb[0].mxu0
        %512 = vmatprep.mubr.f32.mxu0 0.0
        %513 = vmatmul.mubr.f32.gmra.mrb[0].mxu0 %v356
        %v514 = vpop.f32.mrb[0].mxu0
        %v515 = vadd.f32 0.0, %v514
        %v516 = vpop.f32.mrb[0].mxu0
        %517 = vdwg.mxu0
        %v518 = vadd.f32 %v325, %v440
        %v519 = vadd.f32 %v326, %v445
        %v520 = vadd.f32 %v327, %v450
        %v521 = vadd.f32 %v328, %v455
        %v522 = vadd.f32 %v329, %v460
        %v523 = vadd.f32 %v330, %v465
        %v524 = vadd.f32 %v331, %v470
        %v525 = vadd.f32 %v332, %v475
        %v526 = vadd.f32 %v333, %v480
        %v527 = vadd.f32 %v334, %v485
        %v528 = vadd.f32 %v335, %v490
        %v529 = vadd.f32 %v336, %v495
        %v530 = vadd.f32 %v337, %v500
        %v531 = vadd.f32 %v338, %v505
        %v532 = vadd.f32 %v339, %v510
        %v533 = vadd.f32 %v340, %v515
        %534 = vst [vmem:[#allocation2] sm:$0xff] %v518
        %535 = vst [vmem:[#allocation2 + $0x8] sm:$0xff] %v519
        %536 = vst [vmem:[#allocation2 + $0x10] sm:$0xff] %v520
        %537 = vst [vmem:[#allocation2 + $0x18] sm:$0xff] %v521
        %538 = vst [vmem:[#allocation2 + $0x20] sm:$0xff] %v522
        %539 = vst [vmem:[#allocation2 + $0x28] sm:$0xff] %v523
        %540 = vst [vmem:[#allocation2 + $0x30] sm:$0xff] %v524
        %541 = vst [vmem:[#allocation2 + $0x38] sm:$0xff] %v525
        %542 = vst [vmem:[#allocation2 + $0x40] sm:$0xff] %v526
        %543 = vst [vmem:[#allocation2 + $0x48] sm:$0xff] %v527
        %544 = vst [vmem:[#allocation2 + $0x50] sm:$0xff] %v528
        %545 = vst [vmem:[#allocation2 + $0x58] sm:$0xff] %v529
        %546 = vst [vmem:[#allocation2 + $0x60] sm:$0xff] %v530
        %547 = vst [vmem:[#allocation2 + $0x68] sm:$0xff] %v531
        %548 = vst [vmem:[#allocation2 + $0x70] sm:$0xff] %v532
        %549 = vst [vmem:[#allocation2 + $0x78] sm:$0xff] %v533
        %p550 = scmp.eq.s32.totalorder %s20, 1
        // Predicated region
        $region71: #{gripnet_forward.7} parent=61 // pred_check
          %p551 = pneg %p550
        $region72: #{gripnet_forward.7} parent=61 // pred_check_branch
          %553 = sbr.rel (%p551) target = $region74
        $region73: #{gripnet_forward.7} parent=61 // pred_region
          %v554 = vld [vmem:[#allocation2] sm:$0xff]
          %v555 = vld [vmem:[#allocation2 + $0x8] sm:$0xff]
          %v556 = vld [vmem:[#allocation2 + $0x10] sm:$0xff]
          %v557 = vld [vmem:[#allocation2 + $0x18] sm:$0xff]
          %v558 = vld [vmem:[#allocation2 + $0x20] sm:$0xff]
          %v559 = vld [vmem:[#allocation2 + $0x28] sm:$0xff]
          %v560 = vld [vmem:[#allocation2 + $0x30] sm:$0xff]
          %v561 = vld [vmem:[#allocation2 + $0x38] sm:$0xff]
          %v562 = vld [vmem:[#allocation2 + $0x40] sm:$0xff]
          %v563 = vld [vmem:[#allocation2 + $0x48] sm:$0xff]
          %v564 = vld [vmem:[#allocation2 + $0x50] sm:$0xff]
          %v565 = vld [vmem:[#allocation2 + $0x58] sm:$0xff]
          %v566 = vld [vmem:[#allocation2 + $0x60] sm:$0xff]
          %v567 = vld [vmem:[#allocation2 + $0x68] sm:$0xff]
          %v568 = vld [vmem:[#allocation2 + $0x70] sm:$0xff]
          %v569 = vld [vmem:[#allocation2 + $0x78] sm:$0xff]
          %570 = vst [vmem:[%s303] sm:$0xff] %v554
          %571 = vst [vmem:[%s303 + $0x8] sm:$0xff] %v555
          %572 = vst [vmem:[%s303 + $0x10] sm:$0xff] %v556
          %573 = vst [vmem:[%s303 + $0x18] sm:$0xff] %v557
          %574 = vst [vmem:[%s303 + $0x20] sm:$0xff] %v558
          %575 = vst [vmem:[%s303 + $0x28] sm:$0xff] %v559
          %576 = vst [vmem:[%s303 + $0x30] sm:$0xff] %v560
          %577 = vst [vmem:[%s303 + $0x38] sm:$0xff] %v561
          %578 = vst [vmem:[%s303 + $0x40] sm:$0xff] %v562
          %579 = vst [vmem:[%s303 + $0x48] sm:$0xff] %v563
          %580 = vst [vmem:[%s303 + $0x50] sm:$0xff] %v564
          %581 = vst [vmem:[%s303 + $0x58] sm:$0xff] %v565
          %582 = vst [vmem:[%s303 + $0x60] sm:$0xff] %v566
          %583 = vst [vmem:[%s303 + $0x68] sm:$0xff] %v567
          %584 = vst [vmem:[%s303 + $0x70] sm:$0xff] %v568
          %585 = vst [vmem:[%s303 + $0x78] sm:$0xff] %v569
        $region74: #{gripnet_forward.7} parent=61 // pred_fallthru
          _
        %s586 = smul.u32 16, %s18
        %p587 = scmp.lt.s32.totalorder %s586, 47
        %s588 = scalar_select %p587, %s586, 47
        %p589 = scmp.lt.s32.totalorder %s19, 0
        %s590 = scalar_select %p589, %s19, 0
        %s591 = sadd.s32 %s590, %s588
        %s592 = smul.addr %s591, 8
        %s593 = scalar_lea.vmem %s2, %s592
        // Predicated region
        $region75: #{gripnet_forward.7} parent=61 // pred_check
          %p594 = pneg %p108
        $region76: #{gripnet_forward.7} parent=61 // pred_check_branch
          %596 = sbr.rel (%p594) target = $region78
        $region77: #{gripnet_forward.7} parent=61 // pred_region
          %s597 = smul.u32 16, %s18
        $region78: #{gripnet_forward.7} parent=61 // pred_fallthru
          _
      $region62: #{gripnet_forward.7} parent=5 // pred_fallthru
        _
      %p598 = scmp.le.s32.totalorder 2, %s8
      // Predicated region
      $region79: #{gripnet_forward.7} parent=5 // pred_check
        %p599 = pneg %p598
      $region80: #{gripnet_forward.7} parent=5 // pred_check_branch
        %601 = sbr.rel (%p599) target = $region82
      $region81: #{gripnet_forward.7} parent=5 // pred_region
        %s602 = ssub.s32 %s8, 2
        // Predicated region
        $region83: #{gripnet_forward.7} parent=81 // pred_check
          %p603 = pneg %p114
        $region84: #{gripnet_forward.7} parent=81 // pred_check_branch
          %605 = sbr.rel (%p603) target = $region86
        $region85: #{gripnet_forward.7} parent=81 // pred_region
          %s606 = smul.u32 16, %s21
          %p607 = scmp.lt.s32.totalorder %s606, 47
          %s608 = scalar_select %p607, %s606, 47
          %p609 = scmp.lt.s32.totalorder %s22, 0
          %s610 = scalar_select %p609, %s22, 0
          %s611 = sadd.s32 %s610, %s608
          %s612 = smul.addr %s611, 8
          %s613 = scalar_lea.vmem %s2, %s612
        $region86: #{gripnet_forward.7} parent=81 // pred_fallthru
          _
      $region82: #{gripnet_forward.7} parent=5 // pred_fallthru
        _
    $region6: #{gripnet_forward.7} parent=1 // loop_footer
      %s12 = sadd.s32 1, %s8
    $region7: #{gripnet_forward.7} parent=1 // loop_footer_branch
      %7 = sbr.rel target = $region3
    $region8: #{gripnet_forward.7} parent=1 // loop_exit
      _

// kernel: gripnet_forward.9
$region0: #{gripnet_forward.9}
  #allocation0 [shape = 'u32[]', space=smem, size = 0x4, offset = 0x4, fixed_abs, tag = 'smem constant byte address 0x4 - core index']
  #allocation1 [shape = 'u32[144,128]{1,0:T(1,128)}', space=vmem, size = 0x12000, scoped, tag = 'internal scratch']
  #allocation2 [shape = 'f32[128,128]{1,0:T(8,128)}', space=vmem, size = 0x10000, scoped, tag = 'scratch operand']
  %s0 = inlined_call_operand.vmem [shape: f32[384,128], index: 0, kind: input, shape index: {}]
  %s1 = inlined_call_operand.vmem [shape: f32[128,128], index: 1, kind: input, shape index: {}]
  %s2 = inlined_call_operand.vmem [shape: f32[384,128], index: 2, kind: output, shape index: {}]
  %s3 = sld [smem:[#allocation0]]
  $region49: #{gripnet_forward.9} parent=0
    _
  %s5 = ssub.s32 1, %s3
  %s6 = scalar_select 0, %s5, %s3
  loop: start=0, step=1, limit=5
  $region2: #{gripnet_forward.9} parent=0 // loop_pre_header
    _
  $region3: #{gripnet_forward.9} parent=0 // loop_header
    %s8 = sphi 0, %s12
    %p9 = scmp.ge.s32.totalorder %s8, 5
    %s15 = sphi 0, %s34
    %s16 = sphi 0, %s30
    %s17 = sphi 0, %s26
    %s18 = sphi 0, %s15
    %s19 = sphi 0, %s16
    %s20 = sphi 0, %s17
    %s21 = sphi 0, %s18
    %s22 = sphi 0, %s19
    %s23 = sphi 0, %s20
    %s39 = sphi 0, %s41
    %s42 = sphi 0, %s39
    %s43 = sphi 0, %s42
    %s59 = sphi 0, %s43
    %s67 = sphi 0, %s69
    %s70 = sphi 0, %s67
    %s71 = sphi 0, %s70
    %s87 = sphi 0, %s71
    %s95 = sphi 0, %s97
    %s98 = sphi 0, %s95
    %s99 = sphi 0, %s98
    %s115 = sphi 0, %s99
  $region4: #{gripnet_forward.9} parent=0 // loop_header_branch
    %11 = sbr.rel (%p9) target = $region8
  $region5: #{gripnet_forward.9} parent=0 // loop_body
    %s13 = ssub.s32 %s8, 1
    %s14 = ssub.s32 %s8, 2
    %s24 = sadd.s32 1, %s17
    %p25 = scmp.ge.s32.totalorder %s24, 1
    %s26 = scalar_select %p25, 0, %s24
    %s27 = sadd.s32 1, %s16
    %s28 = scalar_select %p25, %s27, %s16
    %p29 = scmp.ge.s32.totalorder %s28, 1
    %s30 = scalar_select %p29, 0, %s28
    %s31 = sadd.s32 1, %s15
    %s32 = scalar_select %p29, %s31, %s15
    %p33 = scmp.ge.s32.totalorder %s32, 3
    %s34 = scalar_select %p33, 0, %s32
    %s35 = ssub.s32 %s15, %s34
    %s36 = ssub.s32 %s17, %s26
    %s37 = sor.u32 %s35, %s36
    %p38 = scmp.eq.s32.totalorder %s37, 0
    %s40 = sadd.s32 %s39, 1
    %s41 = scalar_select %p38, %s39, %s40
    %p44 = pneg %p38
    %p45 = scmp.eq.s32.totalorder %s8, 2
    %p46 = por %p44, %p45
    %p47 = scmp.ne.s32.totalorder %s39, %s42
    %p48 = scmp.eq.s32.totalorder %s8, 0
    %p49 = por %p47, %p48
    %p50 = scmp.ne.s32.totalorder %s39, %s42
    %p51 = scmp.eq.s32.totalorder %s13, 2
    %p52 = por %p50, %p51
    %p53 = scmp.ne.s32.totalorder %s42, %s43
    %p54 = scmp.eq.s32.totalorder %s13, 0
    %p55 = por %p53, %p54
    %p56 = scmp.ne.s32.totalorder %s42, %s43
    %p57 = scmp.eq.s32.totalorder %s14, 2
    %p58 = por %p56, %p57
    %p60 = scmp.ne.s32.totalorder %s43, %s59
    %p61 = scmp.eq.s32.totalorder %s14, 0
    %p62 = por %p60, %p61
    %s63 = ssub.s32 %s17, %s26
    %s64 = ssub.s32 %s16, %s30
    %s65 = sor.u32 %s63, %s64
    %p66 = scmp.eq.s32.totalorder %s65, 0
    %s68 = sadd.s32 %s67, 1
    %s69 = scalar_select %p66, %s67, %s68
    %p72 = pneg %p66
    %p73 = scmp.eq.s32.totalorder %s8, 2
    %p74 = por %p72, %p73
    %p75 = scmp.ne.s32.totalorder %s67, %s70
    %p76 = scmp.eq.s32.totalorder %s8, 0
    %p77 = por %p75, %p76
    %p78 = scmp.ne.s32.totalorder %s67, %s70
    %p79 = scmp.eq.s32.totalorder %s13, 2
    %p80 = por %p78, %p79
    %p81 = scmp.ne.s32.totalorder %s70, %s71
    %p82 = scmp.eq.s32.totalorder %s13, 0
    %p83 = por %p81, %p82
    %p84 = scmp.ne.s32.totalorder %s70, %s71
    %p85 = scmp.eq.s32.totalorder %s14, 2
    %p86 = por %p84, %p85
    %p88 = scmp.ne.s32.totalorder %s71, %s87
    %p89 = scmp.eq.s32.totalorder %s14, 0
    %p90 = por %p88, %p89
    %s91 = ssub.s32 %s15, %s34
    %s92 = ssub.s32 %s16, %s30
    %s93 = sor.u32 %s91, %s92
    %p94 = scmp.eq.s32.totalorder %s93, 0
    %s96 = sadd.s32 %s95, 1
    %s97 = scalar_select %p94, %s95, %s96
    %p100 = pneg %p94
    %p101 = scmp.eq.s32.totalorder %s8, 2
    %p102 = por %p100, %p101
    %p103 = scmp.ne.s32.totalorder %s95, %s98
    %p104 = scmp.eq.s32.totalorder %s8, 0
    %p105 = por %p103, %p104
    %p106 = scmp.ne.s32.totalorder %s95, %s98
    %p107 = scmp.eq.s32.totalorder %s13, 2
    %p108 = por %p106, %p107
    %p109 = scmp.ne.s32.totalorder %s98, %s99
    %p110 = scmp.eq.s32.totalorder %s13, 0
    %p111 = por %p109, %p110
    %p112 = scmp.ne.s32.totalorder %s98, %s99
    %p113 = scmp.eq.s32.totalorder %s14, 2
    %p114 = por %p112, %p113
    %p116 = scmp.ne.s32.totalorder %s99, %s115
    %p117 = scmp.eq.s32.totalorder %s14, 0
    %p118 = por %p116, %p117
    %p119 = scmp.le.s32.totalorder 1, %s8
    %p120 = scmp.lt.s32.totalorder %s8, 4
    %p121 = pnand %p119, %p120
    %p122 = pneg %p121
    // Predicated region
    $region9: #{gripnet_forward.9} parent=5 // pred_check
      _
    $region10: #{gripnet_forward.9} parent=5 // pred_check_branch
      %124 = sbr.rel (%p121) target = $region12
    $region11: #{gripnet_forward.9} parent=5 // pred_region
      %s125 = ssub.s32 %s8, 1
      // Predicated region
      $region13: #{gripnet_forward.9} parent=11 // pred_check
        %p126 = pneg %p83
      $region14: #{gripnet_forward.9} parent=11 // pred_check_branch
        %128 = sbr.rel (%p126) target = $region16
      $region15: #{gripnet_forward.9} parent=11 // pred_region
        %s129 = smul.u32 16, %s20
        %p130 = scmp.lt.s32.totalorder %s129, 15
        %s131 = scalar_select %p130, %s129, 15
        %p132 = scmp.lt.s32.totalorder %s19, 0
        %s133 = scalar_select %p132, %s19, 0
        %s134 = sadd.s32 %s133, %s131
        %s135 = smul.addr %s134, 8
        %s136 = scalar_lea.vmem %s1, %s135
        %s137 = smul.u32 16, %s20
      $region16: #{gripnet_forward.9} parent=11 // pred_fallthru
        _
    $region12: #{gripnet_forward.9} parent=5 // pred_fallthru
      _
    %p138 = scmp.lt.s32.totalorder %s8, 3
    // Predicated region
    $region17: #{gripnet_forward.9} parent=5 // pred_check
      %p139 = pneg %p138
    $region18: #{gripnet_forward.9} parent=5 // pred_check_branch
      %141 = sbr.rel (%p139) target = $region20
    $region19: #{gripnet_forward.9} parent=5 // pred_region
      // Predicated region
      $region21: #{gripnet_forward.9} parent=19 // pred_check
        %p142 = pneg %p49
      $region22: #{gripnet_forward.9} parent=19 // pred_check_branch
        %144 = sbr.rel (%p142) target = $region24
      $region23: #{gripnet_forward.9} parent=19 // pred_region
        %s145 = smul.u32 16, %s15
        %p146 = scmp.lt.s32.totalorder %s145, 47
        %s147 = scalar_select %p146, %s145, 47
        %p148 = scmp.lt.s32.totalorder %s17, 0
        %s149 = scalar_select %p148, %s17, 0
        %s150 = sadd.s32 %s149, %s147
        %s151 = smul.addr %s150, 8
        %s152 = scalar_lea.vmem %s0, %s151
        %s153 = smul.u32 16, %s15
      $region24: #{gripnet_forward.9} parent=19 // pred_fallthru
        _
    $region20: #{gripnet_forward.9} parent=5 // pred_fallthru
      _
    %p154 = scmp.le.s32.totalorder 1, %s8
    %p155 = scmp.lt.s32.totalorder %s8, 4
    %p156 = pnand %p154, %p155
    %p157 = pneg %p156
    // Predicated region
    $region25: #{gripnet_forward.9} parent=5 // pred_check
      _
    $region26: #{gripnet_forward.9} parent=5 // pred_check_branch
      %159 = sbr.rel (%p156) target = $region28
    $region27: #{gripnet_forward.9} parent=5 // pred_region
      %s160 = ssub.s32 %s8, 1
      %s161 = smul.u32 16, %s18
      %p162 = scmp.lt.s32.totalorder %s161, 47
      %s163 = scalar_select %p162, %s161, 47
      %p164 = scmp.lt.s32.totalorder %s20, 0
      %s165 = scalar_select %p164, %s20, 0
      %s166 = sadd.s32 %s165, %s163
      %s167 = smul.addr %s166, 8
      %s168 = scalar_lea.vmem %s0, %s167
      %p169 = pneg %p55
      %p170 = pneg %p52
      %s171 = smul.u32 16, %s20
      %p172 = scmp.lt.s32.totalorder %s171, 15
      %s173 = scalar_select %p172, %s171, 15
      %p174 = scmp.lt.s32.totalorder %s19, 0
      %s175 = scalar_select %p174, %s19, 0
      %s176 = sadd.s32 %s175, %s173
      %s177 = smul.addr %s176, 8
      %s178 = scalar_lea.vmem %s1, %s177
      %p179 = pneg %p83
      %p180 = pneg %p80
      %p181 = pneg %p111
      %p182 = pneg %p108
      %s183 = smul.u32 16, %s18
      %p184 = scmp.lt.s32.totalorder %s183, 47
      %s185 = scalar_select %p184, %s183, 47
      %p186 = scmp.lt.s32.totalorder %s19, 0
      %s187 = scalar_select %p186, %s19, 0
      %s188 = sadd.s32 %s187, %s185
      %s189 = smul.addr %s188, 8
      %s190 = scalar_lea.vmem %s2, %s189
      %s191 = smul.u32 16, %s18
      %p192 = scmp.lt.s32.totalorder %s191, 47
      %s193 = scalar_select %p192, %s191, 47
      %p194 = scmp.lt.s32.totalorder %s20, 0
      %s195 = scalar_select %p194, %s20, 0
      %s196 = sadd.s32 %s195, %s193
      %s197 = smul.addr %s196, 8
      %s198 = scalar_lea.vmem %s0, %s197
      %s199 = smul.u32 16, %s18
      %s200 = smul.u32 16, %s20
      %p201 = scmp.lt.s32.totalorder %s200, 15
      %s202 = scalar_select %p201, %s200, 15
      %p203 = scmp.lt.s32.totalorder %s19, 0
      %s204 = scalar_select %p203, %s19, 0
      %s205 = sadd.s32 %s204, %s202
      %s206 = smul.addr %s205, 8
      %s207 = scalar_lea.vmem %s1, %s206
      %s208 = smul.u32 16, %s20
      %s209 = smul.u32 16, %s18
      %p210 = scmp.lt.s32.totalorder %s209, 47
      %s211 = scalar_select %p210, %s209, 47
      %p212 = scmp.lt.s32.totalorder %s19, 0
      %s213 = scalar_select %p212, %s19, 0
      %s214 = sadd.s32 %s213, %s211
      %s215 = smul.addr %s214, 8
      %s216 = scalar_lea.vmem %s2, %s215
      %s217 = smul.u32 16, %s18
      %p218 = scmp.eq.s32.totalorder %s20, 0
      // Predicated region
      $region29: #{gripnet_forward.9} parent=27 // pred_check
        %p219 = pneg %p218
      $region30: #{gripnet_forward.9} parent=27 // pred_check_branch
        %221 = sbr.rel (%p219) target = $region32
      $region31: #{gripnet_forward.9} parent=27 // pred_region
        %222 = vst [vmem:[#allocation2] sm:$0xff] 0.0
        %223 = vst [vmem:[#allocation2 + $0x8] sm:$0xff] 0.0
        %224 = vst [vmem:[#allocation2 + $0x10] sm:$0xff] 0.0
        %225 = vst [vmem:[#allocation2 + $0x18] sm:$0xff] 0.0
        %226 = vst [vmem:[#allocation2 + $0x20] sm:$0xff] 0.0
        %227 = vst [vmem:[#allocation2 + $0x28] sm:$0xff] 0.0
        %228 = vst [vmem:[#allocation2 + $0x30] sm:$0xff] 0.0
        %229 = vst [vmem:[#allocation2 + $0x38] sm:$0xff] 0.0
        %230 = vst [vmem:[#allocation2 + $0x40] sm:$0xff] 0.0
        %231 = vst [vmem:[#allocation2 + $0x48] sm:$0xff] 0.0
        %232 = vst [vmem:[#allocation2 + $0x50] sm:$0xff] 0.0
        %233 = vst [vmem:[#allocation2 + $0x58] sm:$0xff] 0.0
        %234 = vst [vmem:[#allocation2 + $0x60] sm:$0xff] 0.0
        %235 = vst [vmem:[#allocation2 + $0x68] sm:$0xff] 0.0
        %236 = vst [vmem:[#allocation2 + $0x70] sm:$0xff] 0.0
        %237 = vst [vmem:[#allocation2 + $0x78] sm:$0xff] 0.0
      $region32: #{gripnet_forward.9} parent=27 // pred_fallthru
        _
      %v238 = vld [vmem:[#allocation2] sm:$0xff]
      %v239 = vld [vmem:[#allocation2 + $0x8] sm:$0xff]
      %v240 = vld [vmem:[#allocation2 + $0x10] sm:$0xff]
      %v241 = vld [vmem:[#allocation2 + $0x18] sm:$0xff]
      %v242 = vld [vmem:[#allocation2 + $0x20] sm:$0xff]
      %v243 = vld [vmem:[#allocation2 + $0x28] sm:$0xff]
      %v244 = vld [vmem:[#allocation2 + $0x30] sm:$0xff]
      %v245 = vld [vmem:[#allocation2 + $0x38] sm:$0xff]
      %v246 = vld [vmem:[#allocation2 + $0x40] sm:$0xff]
      %v247 = vld [vmem:[#allocation2 + $0x48] sm:$0xff]
      %v248 = vld [vmem:[#allocation2 + $0x50] sm:$0xff]
      %v249 = vld [vmem:[#allocation2 + $0x58] sm:$0xff]
      %v250 = vld [vmem:[#allocation2 + $0x60] sm:$0xff]
      %v251 = vld [vmem:[#allocation2 + $0x68] sm:$0xff]
      %v252 = vld [vmem:[#allocation2 + $0x70] sm:$0xff]
      %v253 = vld [vmem:[#allocation2 + $0x78] sm:$0xff]
      %v254 = vld [vmem:[%s198] sm:$0xff]
      %v255 = vld [vmem:[%s198 + $0x8] sm:$0xff]
      %v256 = vld [vmem:[%s198 + $0x10] sm:$0xff]
      %v257 = vld [vmem:[%s198 + $0x18] sm:$0xff]
      %v258 = vld [vmem:[%s198 + $0x20] sm:$0xff]
      %v259 = vld [vmem:[%s198 + $0x28] sm:$0xff]
      %v260 = vld [vmem:[%s198 + $0x30] sm:$0xff]
      %v261 = vld [vmem:[%s198 + $0x38] sm:$0xff]
      %v262 = vld [vmem:[%s198 + $0x40] sm:$0xff]
      %v263 = vld [vmem:[%s198 + $0x48] sm:$0xff]
      %v264 = vld [vmem:[%s198 + $0x50] sm:$0xff]
      %v265 = vld [vmem:[%s198 + $0x58] sm:$0xff]
      %v266 = vld [vmem:[%s198 + $0x60] sm:$0xff]
      %v267 = vld [vmem:[%s198 + $0x68] sm:$0xff]
      %v268 = vld [vmem:[%s198 + $0x70] sm:$0xff]
      %v269 = vld [vmem:[%s198 + $0x78] sm:$0xff]
      %v270 = vld [vmem:[%s207] sm:$0xff]
      %v271 = vld [vmem:[%s207 + $0x8] sm:$0xff]
      %v272 = vld [vmem:[%s207 + $0x10] sm:$0xff]
      %v273 = vld [vmem:[%s207 + $0x18] sm:$0xff]
      %v274 = vld [vmem:[%s207 + $0x20] sm:$0xff]
      %v275 = vld [vmem:[%s207 + $0x28] sm:$0xff]
      %v276 = vld [vmem:[%s207 + $0x30] sm:$0xff]
      %v277 = vld [vmem:[%s207 + $0x38] sm:$0xff]
      %v278 = vld [vmem:[%s207 + $0x40] sm:$0xff]
      %v279 = vld [vmem:[%s207 + $0x48] sm:$0xff]
      %v280 = vld [vmem:[%s207 + $0x50] sm:$0xff]
      %v281 = vld [vmem:[%s207 + $0x58] sm:$0xff]
      %v282 = vld [vmem:[%s207 + $0x60] sm:$0xff]
      %v283 = vld [vmem:[%s207 + $0x68] sm:$0xff]
      %v284 = vld [vmem:[%s207 + $0x70] sm:$0xff]
      %v285 = vld [vmem:[%s207 + $0x78] sm:$0xff]
      %286 = vmatprep.subr.mxu0 0.0
      %287 = vmatpush1.msra.mxu0 %v270
      %288 = vmatprep.subr.mxu0 0.0
      %289 = vmatpush1.msra.mxu0 %v271
      %290 = vmatprep.subr.mxu0 0.0
      %291 = vmatpush1.msra.mxu0 %v272
      %292 = vmatprep.subr.mxu0 0.0
      %293 = vmatpush1.msra.mxu0 %v273
      %294 = vmatprep.subr.mxu0 0.0
      %295 = vmatpush1.msra.mxu0 %v274
      %296 = vmatprep.subr.mxu0 0.0
      %297 = vmatpush1.msra.mxu0 %v275
      %298 = vmatprep.subr.mxu0 0.0
      %299 = vmatpush1.msra.mxu0 %v276
      %300 = vmatprep.subr.mxu0 0.0
      %301 = vmatpush1.msra.mxu0 %v277
      %302 = vmatprep.subr.mxu0 0.0
      %303 = vmatpush1.msra.mxu0 %v278
      %304 = vmatprep.subr.mxu0 0.0
      %305 = vmatpush1.msra.mxu0 %v279
      %306 = vmatprep.subr.mxu0 0.0
      %307 = vmatpush1.msra.mxu0 %v280
      %308 = vmatprep.subr.mxu0 0.0
      %309 = vmatpush1.msra.mxu0 %v281
      %310 = vmatprep.subr.mxu0 0.0
      %311 = vmatpush1.msra.mxu0 %v282
      %312 = vmatprep.subr.mxu0 0.0
      %313 = vmatpush1.msra.mxu0 %v283
      %314 = vmatprep.subr.mxu0 0.0
      %315 = vmatpush1.msra.mxu0 %v284
      %316 = vmatprep.subr.mxu0 0.0
      %317 = vmatpush1.msra.mxu0 %v285
      %318 = vmatprep.subr.mxu0 0.0
      %319 = vmatpush1.msra.mxu0 0.0
      %320 = vmatprep.subr.mxu0 0.0
      %321 = vmatpush1.msra.mxu0 0.0
      %322 = vmatprep.subr.mxu0 0.0
      %323 = vmatpush1.msra.mxu0 0.0
      %324 = vmatprep.subr.mxu0 0.0
      %325 = vmatpush1.msra.mxu0 0.0
      %326 = vmatprep.subr.mxu0 0.0
      %327 = vmatpush1.msra.mxu0 0.0
      %328 = vmatprep.subr.mxu0 0.0
      %329 = vmatpush1.msra.mxu0 0.0
      %330 = vmatprep.subr.mxu0 0.0
      %331 = vmatpush1.msra.mxu0 0.0
      %332 = vmatprep.subr.mxu0 0.0
      %333 = vmatpush1.msra.mxu0 0.0
      %334 = vmatprep.subr.mxu0 0.0
      %335 = vmatpush1.msra.mxu0 0.0
      %336 = vmatprep.subr.mxu0 0.0
      %337 = vmatpush1.msra.mxu0 0.0
      %338 = vmatprep.subr.mxu0 0.0
      %339 = vmatpush1.msra.mxu0 0.0
      %340 = vmatprep.subr.mxu0 0.0
      %341 = vmatpush1.msra.mxu0 0.0
      %342 = vmatprep.subr.mxu0 0.0
      %343 = vmatpush1.msra.mxu0 0.0
      %344 = vmatprep.subr.mxu0 0.0
      %345 = vmatpush1.msra.mxu0 0.0
      %346 = vmatprep.subr.mxu0 0.0
      %347 = vmatpush1.msra.mxu0 0.0
      %348 = vmatprep.subr.mxu0 0.0
      %349 = vmatpush1.msra.mxu0 0.0
      %350 = vmatprep.mubr.f32.mxu0 0.0
      %351 = vmatmul.mubr.f32.gmra.mrb[0].mxu0 %v254
      %v352 = vpop.f32.mrb[0].mxu0
      %v353 = vadd.f32 0.0, %v352
      %v354 = vpop.f32.mrb[0].mxu0
      %355 = vmatprep.mubr.f32.mxu0 0.0
      %356 = vmatmul.mubr.f32.gmra.mrb[0].mxu0 %v255
      %v357 = vpop.f32.mrb[0].mxu0
      %v358 = vadd.f32 0.0, %v357
      %v359 = vpop.f32.mrb[0].mxu0
      %360 = vmatprep.mubr.f32.mxu0 0.0
      %361 = vmatmul.mubr.f32.gmra.mrb[0].mxu0 %v256
      %v362 = vpop.f32.mrb[0].mxu0
      %v363 = vadd.f32 0.0, %v362
      %v364 = vpop.f32.mrb[0].mxu0
      %365 = vmatprep.mubr.f32.mxu0 0.0
      %366 = vmatmul.mubr.f32.gmra.mrb[0].mxu0 %v257
      %v367 = vpop.f32.mrb[0].mxu0
      %v368 = vadd.f32 0.0, %v367
      %v369 = vpop.f32.mrb[0].mxu0
      %370 = vmatprep.mubr.f32.mxu0 0.0
      %371 = vmatmul.mubr.f32.gmra.mrb[0].mxu0 %v258
      %v372 = vpop.f32.mrb[0].mxu0
      %v373 = vadd.f32 0.0, %v372
      %v374 = vpop.f32.mrb[0].mxu0
      %375 = vmatprep.mubr.f32.mxu0 0.0
      %376 = vmatmul.mubr.f32.gmra.mrb[0].mxu0 %v259
      %v377 = vpop.f32.mrb[0].mxu0
      %v378 = vadd.f32 0.0, %v377
      %v379 = vpop.f32.mrb[0].mxu0
      %380 = vmatprep.mubr.f32.mxu0 0.0
      %381 = vmatmul.mubr.f32.gmra.mrb[0].mxu0 %v260
      %v382 = vpop.f32.mrb[0].mxu0
      %v383 = vadd.f32 0.0, %v382
      %v384 = vpop.f32.mrb[0].mxu0
      %385 = vmatprep.mubr.f32.mxu0 0.0
      %386 = vmatmul.mubr.f32.gmra.mrb[0].mxu0 %v261
      %v387 = vpop.f32.mrb[0].mxu0
      %v388 = vadd.f32 0.0, %v387
      %v389 = vpop.f32.mrb[0].mxu0
      %390 = vmatprep.mubr.f32.mxu0 0.0
      %391 = vmatmul.mubr.f32.gmra.mrb[0].mxu0 %v262
      %v392 = vpop.f32.mrb[0].mxu0
      %v393 = vadd.f32 0.0, %v392
      %v394 = vpop.f32.mrb[0].mxu0
      %395 = vmatprep.mubr.f32.mxu0 0.0
      %396 = vmatmul.mubr.f32.gmra.mrb[0].mxu0 %v263
      %v397 = vpop.f32.mrb[0].mxu0
      %v398 = vadd.f32 0.0, %v397
      %v399 = vpop.f32.mrb[0].mxu0
      %400 = vmatprep.mubr.f32.mxu0 0.0
      %401 = vmatmul.mubr.f32.gmra.mrb[0].mxu0 %v264
      %v402 = vpop.f32.mrb[0].mxu0
      %v403 = vadd.f32 0.0, %v402
      %v404 = vpop.f32.mrb[0].mxu0
      %405 = vmatprep.mubr.f32.mxu0 0.0
      %406 = vmatmul.mubr.f32.gmra.mrb[0].mxu0 %v265
      %v407 = vpop.f32.mrb[0].mxu0
      %v408 = vadd.f32 0.0, %v407
      %v409 = vpop.f32.mrb[0].mxu0
      %410 = vmatprep.mubr.f32.mxu0 0.0
      %411 = vmatmul.mubr.f32.gmra.mrb[0].mxu0 %v266
      %v412 = vpop.f32.mrb[0].mxu0
      %v413 = vadd.f32 0.0, %v412
      %v414 = vpop.f32.mrb[0].mxu0
      %415 = vmatprep.mubr.f32.mxu0 0.0
      %416 = vmatmul.mubr.f32.gmra.mrb[0].mxu0 %v267
      %v417 = vpop.f32.mrb[0].mxu0
      %v418 = vadd.f32 0.0, %v417
      %v419 = vpop.f32.mrb[0].mxu0
      %420 = vmatprep.mubr.f32.mxu0 0.0
      %421 = vmatmul.mubr.f32.gmra.mrb[0].mxu0 %v268
      %v422 = vpop.f32.mrb[0].mxu0
      %v423 = vadd.f32 0.0, %v422
      %v424 = vpop.f32.mrb[0].mxu0
      %425 = vmatprep.mubr.f32.mxu0 0.0
      %426 = vmatmul.mubr.f32.gmra.mrb[0].mxu0 %v269
      %v427 = vpop.f32.mrb[0].mxu0
      %v428 = vadd.f32 0.0, %v427
      %v429 = vpop.f32.mrb[0].mxu0
      %430 = vdwg.mxu0
      %v431 = vadd.f32 %v238, %v353
      %v432 = vadd.f32 %v239, %v358
      %v433 = vadd.f32 %v240, %v363
      %v434 = vadd.f32 %v241, %v368
      %v435 = vadd.f32 %v242, %v373
      %v436 = vadd.f32 %v243, %v378
      %v437 = vadd.f32 %v244, %v383
      %v438 = vadd.f32 %v245, %v388
      %v439 = vadd.f32 %v246, %v393
      %v440 = vadd.f32 %v247, %v398
      %v441 = vadd.f32 %v248, %v403
      %v442 = vadd.f32 %v249, %v408
      %v443 = vadd.f32 %v250, %v413
      %v444 = vadd.f32 %v251, %v418
      %v445 = vadd.f32 %v252, %v423
      %v446 = vadd.f32 %v253, %v428
      %447 = vst [vmem:[#allocation2] sm:$0xff] %v431
      %448 = vst [vmem:[#allocation2 + $0x8] sm:$0xff] %v432
      %449 = vst [vmem:[#allocation2 + $0x10] sm:$0xff] %v433
      %450 = vst [vmem:[#allocation2 + $0x18] sm:$0xff] %v434
      %451 = vst [vmem:[#allocation2 + $0x20] sm:$0xff] %v435
      %452 = vst [vmem:[#allocation2 + $0x28] sm:$0xff] %v436
      %453 = vst [vmem:[#allocation2 + $0x30] sm:$0xff] %v437
      %454 = vst [vmem:[#allocation2 + $0x38] sm:$0xff] %v438
      %455 = vst [vmem:[#allocation2 + $0x40] sm:$0xff] %v439
      %456 = vst [vmem:[#allocation2 + $0x48] sm:$0xff] %v440
      %457 = vst [vmem:[#allocation2 + $0x50] sm:$0xff] %v441
      %458 = vst [vmem:[#allocation2 + $0x58] sm:$0xff] %v442
      %459 = vst [vmem:[#allocation2 + $0x60] sm:$0xff] %v443
      %460 = vst [vmem:[#allocation2 + $0x68] sm:$0xff] %v444
      %461 = vst [vmem:[#allocation2 + $0x70] sm:$0xff] %v445
      %462 = vst [vmem:[#allocation2 + $0x78] sm:$0xff] %v446
      // Predicated region
      $region33: #{gripnet_forward.9} parent=27 // pred_check
        %p463 = pneg %p218
      $region34: #{gripnet_forward.9} parent=27 // pred_check_branch
        %465 = sbr.rel (%p463) target = $region36
      $region35: #{gripnet_forward.9} parent=27 // pred_region
        %v466 = vld [vmem:[#allocation2] sm:$0xff]
        %v467 = vld [vmem:[#allocation2 + $0x8] sm:$0xff]
        %v468 = vld [vmem:[#allocation2 + $0x10] sm:$0xff]
        %v469 = vld [vmem:[#allocation2 + $0x18] sm:$0xff]
        %v470 = vld [vmem:[#allocation2 + $0x20] sm:$0xff]
        %v471 = vld [vmem:[#allocation2 + $0x28] sm:$0xff]
        %v472 = vld [vmem:[#allocation2 + $0x30] sm:$0xff]
        %v473 = vld [vmem:[#allocation2 + $0x38] sm:$0xff]
        %v474 = vld [vmem:[#allocation2 + $0x40] sm:$0xff]
        %v475 = vld [vmem:[#allocation2 + $0x48] sm:$0xff]
        %v476 = vld [vmem:[#allocation2 + $0x50] sm:$0xff]
        %v477 = vld [vmem:[#allocation2 + $0x58] sm:$0xff]
        %v478 = vld [vmem:[#allocation2 + $0x60] sm:$0xff]
        %v479 = vld [vmem:[#allocation2 + $0x68] sm:$0xff]
        %v480 = vld [vmem:[#allocation2 + $0x70] sm:$0xff]
        %v481 = vld [vmem:[#allocation2 + $0x78] sm:$0xff]
        %482 = vst [vmem:[%s216] sm:$0xff] %v466
        %483 = vst [vmem:[%s216 + $0x8] sm:$0xff] %v467
        %484 = vst [vmem:[%s216 + $0x10] sm:$0xff] %v468
        %485 = vst [vmem:[%s216 + $0x18] sm:$0xff] %v469
        %486 = vst [vmem:[%s216 + $0x20] sm:$0xff] %v470
        %487 = vst [vmem:[%s216 + $0x28] sm:$0xff] %v471
        %488 = vst [vmem:[%s216 + $0x30] sm:$0xff] %v472
        %489 = vst [vmem:[%s216 + $0x38] sm:$0xff] %v473
        %490 = vst [vmem:[%s216 + $0x40] sm:$0xff] %v474
        %491 = vst [vmem:[%s216 + $0x48] sm:$0xff] %v475
        %492 = vst [vmem:[%s216 + $0x50] sm:$0xff] %v476
        %493 = vst [vmem:[%s216 + $0x58] sm:$0xff] %v477
        %494 = vst [vmem:[%s216 + $0x60] sm:$0xff] %v478
        %495 = vst [vmem:[%s216 + $0x68] sm:$0xff] %v479
        %496 = vst [vmem:[%s216 + $0x70] sm:$0xff] %v480
        %497 = vst [vmem:[%s216 + $0x78] sm:$0xff] %v481
      $region36: #{gripnet_forward.9} parent=27 // pred_fallthru
        _
      %s498 = smul.u32 16, %s18
      %p499 = scmp.lt.s32.totalorder %s498, 47
      %s500 = scalar_select %p499, %s498, 47
      %p501 = scmp.lt.s32.totalorder %s19, 0
      %s502 = scalar_select %p501, %s19, 0
      %s503 = sadd.s32 %s502, %s500
      %s504 = smul.addr %s503, 8
      %s505 = scalar_lea.vmem %s2, %s504
      // Predicated region
      $region37: #{gripnet_forward.9} parent=27 // pred_check
        %p506 = pneg %p108
      $region38: #{gripnet_forward.9} parent=27 // pred_check_branch
        %508 = sbr.rel (%p506) target = $region40
      $region39: #{gripnet_forward.9} parent=27 // pred_region
        %s509 = smul.u32 16, %s18
      $region40: #{gripnet_forward.9} parent=27 // pred_fallthru
        _
    $region28: #{gripnet_forward.9} parent=5 // pred_fallthru
      _
    %p510 = scmp.le.s32.totalorder 2, %s8
    // Predicated region
    $region41: #{gripnet_forward.9} parent=5 // pred_check
      %p511 = pneg %p510
    $region42: #{gripnet_forward.9} parent=5 // pred_check_branch
      %513 = sbr.rel (%p511) target = $region44
    $region43: #{gripnet_forward.9} parent=5 // pred_region
      %s514 = ssub.s32 %s8, 2
      // Predicated region
      $region45: #{gripnet_forward.9} parent=43 // pred_check
        %p515 = pneg %p114
      $region46: #{gripnet_forward.9} parent=43 // pred_check_branch
        %517 = sbr.rel (%p515) target = $region48
      $region47: #{gripnet_forward.9} parent=43 // pred_region
        %s518 = smul.u32 16, %s21
        %p519 = scmp.lt.s32.totalorder %s518, 47
        %s520 = scalar_select %p519, %s518, 47
        %p521 = scmp.lt.s32.totalorder %s22, 0
        %s522 = scalar_select %p521, %s22, 0
        %s523 = sadd.s32 %s522, %s520
        %s524 = smul.addr %s523, 8
        %s525 = scalar_lea.vmem %s2, %s524
      $region48: #{gripnet_forward.9} parent=43 // pred_fallthru
        _
    $region44: #{gripnet_forward.9} parent=5 // pred_fallthru
      _
  $region6: #{gripnet_forward.9} parent=0 // loop_footer
    %s12 = sadd.s32 1, %s8
  $region7: #{gripnet_forward.9} parent=0 // loop_footer_branch
    %7 = sbr.rel target = $region3
  $region8: #{gripnet_forward.9} parent=0 // loop_exit
    _

// kernel: gripnet_forward.11
$region0: #{gripnet_forward.11}
  #allocation0 [shape = 'u32[]', space=smem, size = 0x4, offset = 0x4, fixed_abs, tag = 'smem constant byte address 0x4 - core index']
  #allocation1 [shape = 'u32[144,128]{1,0:T(1,128)}', space=vmem, size = 0x12000, scoped, tag = 'internal scratch']
  #allocation2 [shape = 'f32[128,128]{1,0:T(8,128)}', space=vmem, size = 0x10000, scoped, tag = 'scratch operand']
  %s0 = inlined_call_operand.vmem [shape: f32[256,128], index: 0, kind: input, shape index: {}]
  %s1 = inlined_call_operand.vmem [shape: f32[128,256], index: 1, kind: input, shape index: {}]
  %s2 = inlined_call_operand.vmem [shape: f32[256,256], index: 2, kind: output, shape index: {}]
  %s3 = sld [smem:[#allocation0]]
  $region121: #{gripnet_forward.11} parent=0
    _
  %s5 = ssub.s32 1, %s3
  %s6 = scalar_select 0, %s5, %s3
  $region1: #{gripnet_forward.11} parent=0
    #allocation3 [shape = 'u8[131072]{0}', space=vmem, size = 0x20000, scoped, tag = 'input window, operand 1']
    #allocation4 [shape = 'u8[131072]{0}', space=vmem, size = 0x20000, scoped, tag = 'output window, operand 0']
    loop: start=0, step=1, limit=6
    $region2: #{gripnet_forward.11} parent=1 // loop_pre_header
      _
    $region3: #{gripnet_forward.11} parent=1 // loop_header
      %s8 = sphi 0, %s12
      %p9 = scmp.ge.s32.totalorder %s8, 6
      %s15 = sphi 0, %s34
      %s16 = sphi 0, %s30
      %s17 = sphi 0, %s26
      %s18 = sphi 0, %s15
      %s19 = sphi 0, %s16
      %s20 = sphi 0, %s17
      %s21 = sphi 0, %s18
      %s22 = sphi 0, %s19
      %s23 = sphi 0, %s20
      %s39 = sphi 0, %s41
      %s42 = sphi 0, %s39
      %s43 = sphi 0, %s42
      %s59 = sphi 0, %s43
      %s67 = sphi 0, %s69
      %s70 = sphi 0, %s67
      %s71 = sphi 0, %s70
      %s87 = sphi 0, %s71
      %s95 = sphi 0, %s97
      %s98 = sphi 0, %s95
      %s99 = sphi 0, %s98
      %s115 = sphi 0, %s99
    $region4: #{gripnet_forward.11} parent=1 // loop_header_branch
      %11 = sbr.rel (%p9) target = $region8
    $region5: #{gripnet_forward.11} parent=1 // loop_body
      %s13 = ssub.s32 %s8, 1
      %s14 = ssub.s32 %s8, 2
      %s24 = sadd.s32 1, %s17
      %p25 = scmp.ge.s32.totalorder %s24, 1
      %s26 = scalar_select %p25, 0, %s24
      %s27 = sadd.s32 1, %s16
      %s28 = scalar_select %p25, %s27, %s16
      %p29 = scmp.ge.s32.totalorder %s28, 2
      %s30 = scalar_select %p29, 0, %s28
      %s31 = sadd.s32 1, %s15
      %s32 = scalar_select %p29, %s31, %s15
      %p33 = scmp.ge.s32.totalorder %s32, 2
      %s34 = scalar_select %p33, 0, %s32
      %s35 = ssub.s32 %s15, %s34
      %s36 = ssub.s32 %s17, %s26
      %s37 = sor.u32 %s35, %s36
      %p38 = scmp.eq.s32.totalorder %s37, 0
      %s40 = sadd.s32 %s39, 1
      %s41 = scalar_select %p38, %s39, %s40
      %p44 = pneg %p38
      %p45 = scmp.eq.s32.totalorder %s8, 3
      %p46 = por %p44, %p45
      %p47 = scmp.ne.s32.totalorder %s39, %s42
      %p48 = scmp.eq.s32.totalorder %s8, 0
      %p49 = por %p47, %p48
      %p50 = scmp.ne.s32.totalorder %s39, %s42
      %p51 = scmp.eq.s32.totalorder %s13, 3
      %p52 = por %p50, %p51
      %p53 = scmp.ne.s32.totalorder %s42, %s43
      %p54 = scmp.eq.s32.totalorder %s13, 0
      %p55 = por %p53, %p54
      %p56 = scmp.ne.s32.totalorder %s42, %s43
      %p57 = scmp.eq.s32.totalorder %s14, 3
      %p58 = por %p56, %p57
      %p60 = scmp.ne.s32.totalorder %s43, %s59
      %p61 = scmp.eq.s32.totalorder %s14, 0
      %p62 = por %p60, %p61
      %s63 = ssub.s32 %s17, %s26
      %s64 = ssub.s32 %s16, %s30
      %s65 = sor.u32 %s63, %s64
      %p66 = scmp.eq.s32.totalorder %s65, 0
      %s68 = sadd.s32 %s67, 1
      %s69 = scalar_select %p66, %s67, %s68
      %p72 = pneg %p66
      %p73 = scmp.eq.s32.totalorder %s8, 3
      %p74 = por %p72, %p73
      %p75 = scmp.ne.s32.totalorder %s67, %s70
      %p76 = scmp.eq.s32.totalorder %s8, 0
      %p77 = por %p75, %p76
      %p78 = scmp.ne.s32.totalorder %s67, %s70
      %p79 = scmp.eq.s32.totalorder %s13, 3
      %p80 = por %p78, %p79
      %p81 = scmp.ne.s32.totalorder %s70, %s71
      %p82 = scmp.eq.s32.totalorder %s13, 0
      %p83 = por %p81, %p82
      %p84 = scmp.ne.s32.totalorder %s70, %s71
      %p85 = scmp.eq.s32.totalorder %s14, 3
      %p86 = por %p84, %p85
      %p88 = scmp.ne.s32.totalorder %s71, %s87
      %p89 = scmp.eq.s32.totalorder %s14, 0
      %p90 = por %p88, %p89
      %s91 = ssub.s32 %s15, %s34
      %s92 = ssub.s32 %s16, %s30
      %s93 = sor.u32 %s91, %s92
      %p94 = scmp.eq.s32.totalorder %s93, 0
      %s96 = sadd.s32 %s95, 1
      %s97 = scalar_select %p94, %s95, %s96
      %p100 = pneg %p94
      %p101 = scmp.eq.s32.totalorder %s8, 3
      %p102 = por %p100, %p101
      %p103 = scmp.ne.s32.totalorder %s95, %s98
      %p104 = scmp.eq.s32.totalorder %s8, 0
      %p105 = por %p103, %p104
      %p106 = scmp.ne.s32.totalorder %s95, %s98
      %p107 = scmp.eq.s32.totalorder %s13, 3
      %p108 = por %p106, %p107
      %p109 = scmp.ne.s32.totalorder %s98, %s99
      %p110 = scmp.eq.s32.totalorder %s13, 0
      %p111 = por %p109, %p110
      %p112 = scmp.ne.s32.totalorder %s98, %s99
      %p113 = scmp.eq.s32.totalorder %s14, 3
      %p114 = por %p112, %p113
      %p116 = scmp.ne.s32.totalorder %s99, %s115
      %p117 = scmp.eq.s32.totalorder %s14, 0
      %p118 = por %p116, %p117
      %p119 = scmp.le.s32.totalorder 1, %s8
      %p120 = scmp.lt.s32.totalorder %s8, 5
      %p121 = pnand %p119, %p120
      %p122 = pneg %p121
      // Predicated region
      $region9: #{gripnet_forward.11} parent=5 // pred_check
        _
      $region10: #{gripnet_forward.11} parent=5 // pred_check_branch
        %124 = sbr.rel (%p121) target = $region12
      $region11: #{gripnet_forward.11} parent=5 // pred_region
        %s125 = ssub.s32 %s8, 1
      $region12: #{gripnet_forward.11} parent=5 // pred_fallthru
        _
      %p126 = scmp.lt.s32.totalorder %s8, 4
      // Predicated region
      $region13: #{gripnet_forward.11} parent=5 // pred_check
        %p127 = pneg %p126
      $region14: #{gripnet_forward.11} parent=5 // pred_check_branch
        %129 = sbr.rel (%p127) target = $region16
      $region15: #{gripnet_forward.11} parent=5 // pred_region
        // Predicated region
        $region17: #{gripnet_forward.11} parent=15 // pred_check
          %p130 = pneg %p49
        $region18: #{gripnet_forward.11} parent=15 // pred_check_branch
          %132 = sbr.rel (%p130) target = $region20
        $region19: #{gripnet_forward.11} parent=15 // pred_region
          %s133 = smul.u32 16, %s15
          %p134 = scmp.lt.s32.totalorder %s133, 31
          %s135 = scalar_select %p134, %s133, 31
          %p136 = scmp.lt.s32.totalorder %s17, 0
          %s137 = scalar_select %p136, %s17, 0
          %s138 = sadd.s32 %s137, %s135
          %s139 = smul.addr %s138, 8
          %s140 = scalar_lea.vmem %s0, %s139
          %s141 = smul.u32 16, %s15
        $region20: #{gripnet_forward.11} parent=15 // pred_fallthru
          _
        // Predicated region
        $region21: #{gripnet_forward.11} parent=15 // pred_check
          %p142 = pneg %p77
        $region22: #{gripnet_forward.11} parent=15 // pred_check_branch
          %144 = sbr.rel (%p142) target = $region24
        $region23: #{gripnet_forward.11} parent=15 // pred_region
          %s145 = sand.u32 %s67, 1
          %s146 = sand.u32 %s67, 1
          %s147 = smul.addr %s146, 128
          %s148 = scalar_lea.vmem [#allocation3], %s147
          %s149 = smul.u32 16, %s17
          %s150 = smul.addr %s149, 2
          %s151 = sadd.s32 %s16, %s150
          %s152 = smul.addr %s151, 8
          %s153 = scalar_lea.vmem %s1, %s152
          // Predicated region
          $region25: #{gripnet_forward.11} parent=23 // pred_check
            _
          $region26: #{gripnet_forward.11} parent=23 // pred_check_branch
            %155 = sbr.rel (0) target = $region28
          $region27: #{gripnet_forward.11} parent=23 // pred_region
            // Predicated region
            $region29: #{gripnet_forward.11} parent=27 // pred_check
              _
            $region30: #{gripnet_forward.11} parent=27 // pred_check_branch
              %157 = sbr.rel (0) target = $region32
            $region31: #{gripnet_forward.11} parent=27 // pred_region
              // Predicated region
              $region44: #{gripnet_forward.11} parent=31 // pred_check
                _
              $region45: #{gripnet_forward.11} parent=31 // pred_check_branch
                %202 = sbr.rel (0) target = $region47
              $region46: #{gripnet_forward.11} parent=31 // pred_region
                loop: start=0, step=1, limit=1
                $region48: #{gripnet_forward.11} parent=46 // loop_pre_header
                  _
                $region49: #{gripnet_forward.11} parent=46 // loop_header
                  %s204 = sphi 0, %s208
                  %p205 = scmp.ge.s32.totalorder %s204, 1
                  %s209 = sphi %s153, %s153
                  %s210 = sphi %s148, %s148
                $region50: #{gripnet_forward.11} parent=46 // loop_header_branch
                  %207 = sbr.rel (%p205) target = $region54
                $region51: #{gripnet_forward.11} parent=46 // loop_body
                  %v211 = vld [vmem:[%s209] sm:$0xff]
                  %212 = vst [vmem:[%s210] sm:$0xff] %v211
                  %v213 = vld [vmem:[%s209 + $0x10] sm:$0xff]
                  %214 = vst [vmem:[%s210 + $0x8] sm:$0xff] %v213
                  %v215 = vld [vmem:[%s209 + $0x20] sm:$0xff]
                  %216 = vst [vmem:[%s210 + $0x10] sm:$0xff] %v215
                  %v217 = vld [vmem:[%s209 + $0x30] sm:$0xff]
                  %218 = vst [vmem:[%s210 + $0x18] sm:$0xff] %v217
                  %v219 = vld [vmem:[%s209 + $0x40] sm:$0xff]
                  %220 = vst [vmem:[%s210 + $0x20] sm:$0xff] %v219
                  %v221 = vld [vmem:[%s209 + $0x50] sm:$0xff]
                  %222 = vst [vmem:[%s210 + $0x28] sm:$0xff] %v221
                  %v223 = vld [vmem:[%s209 + $0x60] sm:$0xff]
                  %224 = vst [vmem:[%s210 + $0x30] sm:$0xff] %v223
                  %v225 = vld [vmem:[%s209 + $0x70] sm:$0xff]
                  %226 = vst [vmem:[%s210 + $0x38] sm:$0xff] %v225
                  %v227 = vld [vmem:[%s209 + $0x80] sm:$0xff]
                  %228 = vst [vmem:[%s210 + $0x40] sm:$0xff] %v227
                  %v229 = vld [vmem:[%s209 + $0x90] sm:$0xff]
                  %230 = vst [vmem:[%s210 + $0x48] sm:$0xff] %v229
                  %v231 = vld [vmem:[%s209 + $0xa0] sm:$0xff]
                  %232 = vst [vmem:[%s210 + $0x50] sm:$0xff] %v231
                  %v233 = vld [vmem:[%s209 + $0xb0] sm:$0xff]
                  %234 = vst [vmem:[%s210 + $0x58] sm:$0xff] %v233
                  %v235 = vld [vmem:[%s209 + $0xc0] sm:$0xff]
                  %236 = vst [vmem:[%s210 + $0x60] sm:$0xff] %v235
                  %v237 = vld [vmem:[%s209 + $0xd0] sm:$0xff]
                  %238 = vst [vmem:[%s210 + $0x68] sm:$0xff] %v237
                  %v239 = vld [vmem:[%s209 + $0xe0] sm:$0xff]
                  %240 = vst [vmem:[%s210 + $0x70] sm:$0xff] %v239
                  %v241 = vld [vmem:[%s209 + $0xf0] sm:$0xff]
                  %242 = vst [vmem:[%s210 + $0x78] sm:$0xff] %v241
                $region52: #{gripnet_forward.11} parent=46 // loop_footer
                  %s208 = sadd.s32 1, %s204
                $region53: #{gripnet_forward.11} parent=46 // loop_footer_branch
                  %203 = sbr.rel target = $region49
                $region54: #{gripnet_forward.11} parent=46 // loop_exit
                  _
              $region47: #{gripnet_forward.11} parent=31 // pred_fallthru
                _
              // Predicated region
              $region55: #{gripnet_forward.11} parent=31 // pred_check
                _
              $region56: #{gripnet_forward.11} parent=31 // pred_check_branch
                %244 = sbr.rel target = $region58
              $region57: #{gripnet_forward.11} parent=31 // pred_region
                _
              $region58: #{gripnet_forward.11} parent=31 // pred_fallthru
                _
            $region32: #{gripnet_forward.11} parent=27 // pred_fallthru
              _
            // Predicated region
            $region33: #{gripnet_forward.11} parent=27 // pred_check
              _
            $region34: #{gripnet_forward.11} parent=27 // pred_check_branch
              %159 = sbr.rel target = $region36
            $region35: #{gripnet_forward.11} parent=27 // pred_region
              loop: start=0, step=1, limit=1
              $region37: #{gripnet_forward.11} parent=35 // loop_pre_header
                _
              $region38: #{gripnet_forward.11} parent=35 // loop_header
                %s162 = sphi 0, %s166
                %p163 = scmp.ge.s32.totalorder %s162, 1
                %s167 = sphi %s153, %s153
                %s168 = sphi %s148, %s148
              $region39: #{gripnet_forward.11} parent=35 // loop_header_branch
                %165 = sbr.rel (%p163) target = $region43
              $region40: #{gripnet_forward.11} parent=35 // loop_body
                %v169 = vld [vmem:[%s167] sm:$0xff]
                %170 = vst [vmem:[%s168] sm:$0xff] %v169
                %v171 = vld [vmem:[%s167 + $0x10] sm:$0xff]
                %172 = vst [vmem:[%s168 + $0x8] sm:$0xff] %v171
                %v173 = vld [vmem:[%s167 + $0x20] sm:$0xff]
                %174 = vst [vmem:[%s168 + $0x10] sm:$0xff] %v173
                %v175 = vld [vmem:[%s167 + $0x30] sm:$0xff]
                %176 = vst [vmem:[%s168 + $0x18] sm:$0xff] %v175
                %v177 = vld [vmem:[%s167 + $0x40] sm:$0xff]
                %178 = vst [vmem:[%s168 + $0x20] sm:$0xff] %v177
                %v179 = vld [vmem:[%s167 + $0x50] sm:$0xff]
                %180 = vst [vmem:[%s168 + $0x28] sm:$0xff] %v179
                %v181 = vld [vmem:[%s167 + $0x60] sm:$0xff]
                %182 = vst [vmem:[%s168 + $0x30] sm:$0xff] %v181
                %v183 = vld [vmem:[%s167 + $0x70] sm:$0xff]
                %184 = vst [vmem:[%s168 + $0x38] sm:$0xff] %v183
                %v185 = vld [vmem:[%s167 + $0x80] sm:$0xff]
                %186 = vst [vmem:[%s168 + $0x40] sm:$0xff] %v185
                %v187 = vld [vmem:[%s167 + $0x90] sm:$0xff]
                %188 = vst [vmem:[%s168 + $0x48] sm:$0xff] %v187
                %v189 = vld [vmem:[%s167 + $0xa0] sm:$0xff]
                %190 = vst [vmem:[%s168 + $0x50] sm:$0xff] %v189
                %v191 = vld [vmem:[%s167 + $0xb0] sm:$0xff]
                %192 = vst [vmem:[%s168 + $0x58] sm:$0xff] %v191
                %v193 = vld [vmem:[%s167 + $0xc0] sm:$0xff]
                %194 = vst [vmem:[%s168 + $0x60] sm:$0xff] %v193
                %v195 = vld [vmem:[%s167 + $0xd0] sm:$0xff]
                %196 = vst [vmem:[%s168 + $0x68] sm:$0xff] %v195
                %v197 = vld [vmem:[%s167 + $0xe0] sm:$0xff]
                %198 = vst [vmem:[%s168 + $0x70] sm:$0xff] %v197
                %v199 = vld [vmem:[%s167 + $0xf0] sm:$0xff]
                %200 = vst [vmem:[%s168 + $0x78] sm:$0xff] %v199
              $region41: #{gripnet_forward.11} parent=35 // loop_footer
                %s166 = sadd.s32 1, %s162
              $region42: #{gripnet_forward.11} parent=35 // loop_footer_branch
                %161 = sbr.rel target = $region38
              $region43: #{gripnet_forward.11} parent=35 // loop_exit
                _
            $region36: #{gripnet_forward.11} parent=27 // pred_fallthru
              _
          $region28: #{gripnet_forward.11} parent=23 // pred_fallthru
            _
          %245 = vnop
        $region24: #{gripnet_forward.11} parent=15 // pred_fallthru
          _
      $region16: #{gripnet_forward.11} parent=5 // pred_fallthru
        _
      %p246 = scmp.le.s32.totalorder 1, %s8
      %p247 = scmp.lt.s32.totalorder %s8, 5
      %p248 = pnand %p246, %p247
      %p249 = pneg %p248
      // Predicated region
      $region59: #{gripnet_forward.11} parent=5 // pred_check
        _
      $region60: #{gripnet_forward.11} parent=5 // pred_check_branch
        %251 = sbr.rel (%p248) target = $region62
      $region61: #{gripnet_forward.11} parent=5 // pred_region
        %s252 = ssub.s32 %s8, 1
        %s253 = sand.u32 %s70, 1
        %s254 = sand.u32 %s70, 1
        %s255 = smul.addr %s254, 128
        %s256 = scalar_lea.vmem [#allocation3], %s255
        // Predicated region
        $region63: #{gripnet_forward.11} parent=61 // pred_check
          %p257 = pneg %p83
        $region64: #{gripnet_forward.11} parent=61 // pred_check_branch
          %259 = sbr.rel (%p257) target = $region66
        $region65: #{gripnet_forward.11} parent=61 // pred_region
          _
        $region66: #{gripnet_forward.11} parent=61 // pred_fallthru
          _
        %s260 = smul.u32 16, %s18
        %p261 = scmp.lt.s32.totalorder %s260, 31
        %s262 = scalar_select %p261, %s260, 31
        %p263 = scmp.lt.s32.totalorder %s20, 0
        %s264 = scalar_select %p263, %s20, 0
        %s265 = sadd.s32 %s264, %s262
        %s266 = smul.addr %s265, 8
        %s267 = scalar_lea.vmem %s0, %s266
        %p268 = pneg %p55
        %p269 = pneg %p52
        %s270 = sand.u32 %s70, 1
        %s271 = sand.u32 %s70, 1
        %s272 = smul.addr %s271, 128
        %s273 = scalar_lea.vmem [#allocation3], %s272
        %p274 = pneg %p83
        %p275 = pneg %p80
        %p276 = pneg %p111
        %p277 = pneg %p108
        %s278 = sand.u32 %s98, 1
        %s279 = sand.u32 %s98, 1
        %s280 = smul.addr %s279, 128
        %s281 = scalar_lea.vmem [#allocation4], %s280
        %s282 = smul.u32 16, %s18
        %p283 = scmp.lt.s32.totalorder %s282, 31
        %s284 = scalar_select %p283, %s282, 31
        %p285 = scmp.lt.s32.totalorder %s20, 0
        %s286 = scalar_select %p285, %s20, 0
        %s287 = sadd.s32 %s286, %s284
        %s288 = smul.addr %s287, 8
        %s289 = scalar_lea.vmem %s0, %s288
        %s290 = smul.u32 16, %s18
        %s291 = smul.u32 16, %s20
        %s292 = smul.u32 16, %s18
        %p293 = scmp.eq.s32.totalorder %s20, 0
        // Predicated region
        $region67: #{gripnet_forward.11} parent=61 // pred_check
          %p294 = pneg %p293
        $region68: #{gripnet_forward.11} parent=61 // pred_check_branch
          %296 = sbr.rel (%p294) target = $region70
        $region69: #{gripnet_forward.11} parent=61 // pred_region
          %297 = vst [vmem:[#allocation2] sm:$0xff] 0.0
          %298 = vst [vmem:[#allocation2 + $0x8] sm:$0xff] 0.0
          %299 = vst [vmem:[#allocation2 + $0x10] sm:$0xff] 0.0
          %300 = vst [vmem:[#allocation2 + $0x18] sm:$0xff] 0.0
          %301 = vst [vmem:[#allocation2 + $0x20] sm:$0xff] 0.0
          %302 = vst [vmem:[#allocation2 + $0x28] sm:$0xff] 0.0
          %303 = vst [vmem:[#allocation2 + $0x30] sm:$0xff] 0.0
          %304 = vst [vmem:[#allocation2 + $0x38] sm:$0xff] 0.0
          %305 = vst [vmem:[#allocation2 + $0x40] sm:$0xff] 0.0
          %306 = vst [vmem:[#allocation2 + $0x48] sm:$0xff] 0.0
          %307 = vst [vmem:[#allocation2 + $0x50] sm:$0xff] 0.0
          %308 = vst [vmem:[#allocation2 + $0x58] sm:$0xff] 0.0
          %309 = vst [vmem:[#allocation2 + $0x60] sm:$0xff] 0.0
          %310 = vst [vmem:[#allocation2 + $0x68] sm:$0xff] 0.0
          %311 = vst [vmem:[#allocation2 + $0x70] sm:$0xff] 0.0
          %312 = vst [vmem:[#allocation2 + $0x78] sm:$0xff] 0.0
        $region70: #{gripnet_forward.11} parent=61 // pred_fallthru
          _
        %v313 = vld [vmem:[#allocation2] sm:$0xff]
        %v314 = vld [vmem:[#allocation2 + $0x8] sm:$0xff]
        %v315 = vld [vmem:[#allocation2 + $0x10] sm:$0xff]
        %v316 = vld [vmem:[#allocation2 + $0x18] sm:$0xff]
        %v317 = vld [vmem:[#allocation2 + $0x20] sm:$0xff]
        %v318 = vld [vmem:[#allocation2 + $0x28] sm:$0xff]
        %v319 = vld [vmem:[#allocation2 + $0x30] sm:$0xff]
        %v320 = vld [vmem:[#allocation2 + $0x38] sm:$0xff]
        %v321 = vld [vmem:[#allocation2 + $0x40] sm:$0xff]
        %v322 = vld [vmem:[#allocation2 + $0x48] sm:$0xff]
        %v323 = vld [vmem:[#allocation2 + $0x50] sm:$0xff]
        %v324 = vld [vmem:[#allocation2 + $0x58] sm:$0xff]
        %v325 = vld [vmem:[#allocation2 + $0x60] sm:$0xff]
        %v326 = vld [vmem:[#allocation2 + $0x68] sm:$0xff]
        %v327 = vld [vmem:[#allocation2 + $0x70] sm:$0xff]
        %v328 = vld [vmem:[#allocation2 + $0x78] sm:$0xff]
        %v329 = vld [vmem:[%s289] sm:$0xff]
        %v330 = vld [vmem:[%s289 + $0x8] sm:$0xff]
        %v331 = vld [vmem:[%s289 + $0x10] sm:$0xff]
        %v332 = vld [vmem:[%s289 + $0x18] sm:$0xff]
        %v333 = vld [vmem:[%s289 + $0x20] sm:$0xff]
        %v334 = vld [vmem:[%s289 + $0x28] sm:$0xff]
        %v335 = vld [vmem:[%s289 + $0x30] sm:$0xff]
        %v336 = vld [vmem:[%s289 + $0x38] sm:$0xff]
        %v337 = vld [vmem:[%s289 + $0x40] sm:$0xff]
        %v338 = vld [vmem:[%s289 + $0x48] sm:$0xff]
        %v339 = vld [vmem:[%s289 + $0x50] sm:$0xff]
        %v340 = vld [vmem:[%s289 + $0x58] sm:$0xff]
        %v341 = vld [vmem:[%s289 + $0x60] sm:$0xff]
        %v342 = vld [vmem:[%s289 + $0x68] sm:$0xff]
        %v343 = vld [vmem:[%s289 + $0x70] sm:$0xff]
        %v344 = vld [vmem:[%s289 + $0x78] sm:$0xff]
        %v345 = vld [vmem:[%s256] sm:$0xff]
        %v346 = vld [vmem:[%s256 + $0x8] sm:$0xff]
        %v347 = vld [vmem:[%s256 + $0x10] sm:$0xff]
        %v348 = vld [vmem:[%s256 + $0x18] sm:$0xff]
        %v349 = vld [vmem:[%s256 + $0x20] sm:$0xff]
        %v350 = vld [vmem:[%s256 + $0x28] sm:$0xff]
        %v351 = vld [vmem:[%s256 + $0x30] sm:$0xff]
        %v352 = vld [vmem:[%s256 + $0x38] sm:$0xff]
        %v353 = vld [vmem:[%s256 + $0x40] sm:$0xff]
        %v354 = vld [vmem:[%s256 + $0x48] sm:$0xff]
        %v355 = vld [vmem:[%s256 + $0x50] sm:$0xff]
        %v356 = vld [vmem:[%s256 + $0x58] sm:$0xff]
        %v357 = vld [vmem:[%s256 + $0x60] sm:$0xff]
        %v358 = vld [vmem:[%s256 + $0x68] sm:$0xff]
        %v359 = vld [vmem:[%s256 + $0x70] sm:$0xff]
        %v360 = vld [vmem:[%s256 + $0x78] sm:$0xff]
        %361 = vmatprep.subr.mxu0 0.0
        %362 = vmatpush1.msra.mxu0 %v345
        %363 = vmatprep.subr.mxu0 0.0
        %364 = vmatpush1.msra.mxu0 %v346
        %365 = vmatprep.subr.mxu0 0.0
        %366 = vmatpush1.msra.mxu0 %v347
        %367 = vmatprep.subr.mxu0 0.0
        %368 = vmatpush1.msra.mxu0 %v348
        %369 = vmatprep.subr.mxu0 0.0
        %370 = vmatpush1.msra.mxu0 %v349
        %371 = vmatprep.subr.mxu0 0.0
        %372 = vmatpush1.msra.mxu0 %v350
        %373 = vmatprep.subr.mxu0 0.0
        %374 = vmatpush1.msra.mxu0 %v351
        %375 = vmatprep.subr.mxu0 0.0
        %376 = vmatpush1.msra.mxu0 %v352
        %377 = vmatprep.subr.mxu0 0.0
        %378 = vmatpush1.msra.mxu0 %v353
        %379 = vmatprep.subr.mxu0 0.0
        %380 = vmatpush1.msra.mxu0 %v354
        %381 = vmatprep.subr.mxu0 0.0
        %382 = vmatpush1.msra.mxu0 %v355
        %383 = vmatprep.subr.mxu0 0.0
        %384 = vmatpush1.msra.mxu0 %v356
        %385 = vmatprep.subr.mxu0 0.0
        %386 = vmatpush1.msra.mxu0 %v357
        %387 = vmatprep.subr.mxu0 0.0
        %388 = vmatpush1.msra.mxu0 %v358
        %389 = vmatprep.subr.mxu0 0.0
        %390 = vmatpush1.msra.mxu0 %v359
        %391 = vmatprep.subr.mxu0 0.0
        %392 = vmatpush1.msra.mxu0 %v360
        %393 = vmatprep.subr.mxu0 0.0
        %394 = vmatpush1.msra.mxu0 0.0
        %395 = vmatprep.subr.mxu0 0.0
        %396 = vmatpush1.msra.mxu0 0.0
        %397 = vmatprep.subr.mxu0 0.0
        %398 = vmatpush1.msra.mxu0 0.0
        %399 = vmatprep.subr.mxu0 0.0
        %400 = vmatpush1.msra.mxu0 0.0
        %401 = vmatprep.subr.mxu0 0.0
        %402 = vmatpush1.msra.mxu0 0.0
        %403 = vmatprep.subr.mxu0 0.0
        %404 = vmatpush1.msra.mxu0 0.0
        %405 = vmatprep.subr.mxu0 0.0
        %406 = vmatpush1.msra.mxu0 0.0
        %407 = vmatprep.subr.mxu0 0.0
        %408 = vmatpush1.msra.mxu0 0.0
        %409 = vmatprep.subr.mxu0 0.0
        %410 = vmatpush1.msra.mxu0 0.0
        %411 = vmatprep.subr.mxu0 0.0
        %412 = vmatpush1.msra.mxu0 0.0
        %413 = vmatprep.subr.mxu0 0.0
        %414 = vmatpush1.msra.mxu0 0.0
        %415 = vmatprep.subr.mxu0 0.0
        %416 = vmatpush1.msra.mxu0 0.0
        %417 = vmatprep.subr.mxu0 0.0
        %418 = vmatpush1.msra.mxu0 0.0
        %419 = vmatprep.subr.mxu0 0.0
        %420 = vmatpush1.msra.mxu0 0.0
        %421 = vmatprep.subr.mxu0 0.0
        %422 = vmatpush1.msra.mxu0 0.0
        %423 = vmatprep.subr.mxu0 0.0
        %424 = vmatpush1.msra.mxu0 0.0
        %425 = vmatprep.mubr.f32.mxu0 0.0
        %426 = vmatmul.mubr.f32.gmra.mrb[0].mxu0 %v329
        %v427 = vpop.f32.mrb[0].mxu0
        %v428 = vadd.f32 0.0, %v427
        %v429 = vpop.f32.mrb[0].mxu0
        %430 = vmatprep.mubr.f32.mxu0 0.0
        %431 = vmatmul.mubr.f32.gmra.mrb[0].mxu0 %v330
        %v432 = vpop.f32.mrb[0].mxu0
        %v433 = vadd.f32 0.0, %v432
        %v434 = vpop.f32.mrb[0].mxu0
        %435 = vmatprep.mubr.f32.mxu0 0.0
        %436 = vmatmul.mubr.f32.gmra.mrb[0].mxu0 %v331
        %v437 = vpop.f32.mrb[0].mxu0
        %v438 = vadd.f32 0.0, %v437
        %v439 = vpop.f32.mrb[0].mxu0
        %440 = vmatprep.mubr.f32.mxu0 0.0
        %441 = vmatmul.mubr.f32.gmra.mrb[0].mxu0 %v332
        %v442 = vpop.f32.mrb[0].mxu0
        %v443 = vadd.f32 0.0, %v442
        %v444 = vpop.f32.mrb[0].mxu0
        %445 = vmatprep.mubr.f32.mxu0 0.0
        %446 = vmatmul.mubr.f32.gmra.mrb[0].mxu0 %v333
        %v447 = vpop.f32.mrb[0].mxu0
        %v448 = vadd.f32 0.0, %v447
        %v449 = vpop.f32.mrb[0].mxu0
        %450 = vmatprep.mubr.f32.mxu0 0.0
        %451 = vmatmul.mubr.f32.gmra.mrb[0].mxu0 %v334
        %v452 = vpop.f32.mrb[0].mxu0
        %v453 = vadd.f32 0.0, %v452
        %v454 = vpop.f32.mrb[0].mxu0
        %455 = vmatprep.mubr.f32.mxu0 0.0
        %456 = vmatmul.mubr.f32.gmra.mrb[0].mxu0 %v335
        %v457 = vpop.f32.mrb[0].mxu0
        %v458 = vadd.f32 0.0, %v457
        %v459 = vpop.f32.mrb[0].mxu0
        %460 = vmatprep.mubr.f32.mxu0 0.0
        %461 = vmatmul.mubr.f32.gmra.mrb[0].mxu0 %v336
        %v462 = vpop.f32.mrb[0].mxu0
        %v463 = vadd.f32 0.0, %v462
        %v464 = vpop.f32.mrb[0].mxu0
        %465 = vmatprep.mubr.f32.mxu0 0.0
        %466 = vmatmul.mubr.f32.gmra.mrb[0].mxu0 %v337
        %v467 = vpop.f32.mrb[0].mxu0
        %v468 = vadd.f32 0.0, %v467
        %v469 = vpop.f32.mrb[0].mxu0
        %470 = vmatprep.mubr.f32.mxu0 0.0
        %471 = vmatmul.mubr.f32.gmra.mrb[0].mxu0 %v338
        %v472 = vpop.f32.mrb[0].mxu0
        %v473 = vadd.f32 0.0, %v472
        %v474 = vpop.f32.mrb[0].mxu0
        %475 = vmatprep.mubr.f32.mxu0 0.0
        %476 = vmatmul.mubr.f32.gmra.mrb[0].mxu0 %v339
        %v477 = vpop.f32.mrb[0].mxu0
        %v478 = vadd.f32 0.0, %v477
        %v479 = vpop.f32.mrb[0].mxu0
        %480 = vmatprep.mubr.f32.mxu0 0.0
        %481 = vmatmul.mubr.f32.gmra.mrb[0].mxu0 %v340
        %v482 = vpop.f32.mrb[0].mxu0
        %v483 = vadd.f32 0.0, %v482
        %v484 = vpop.f32.mrb[0].mxu0
        %485 = vmatprep.mubr.f32.mxu0 0.0
        %486 = vmatmul.mubr.f32.gmra.mrb[0].mxu0 %v341
        %v487 = vpop.f32.mrb[0].mxu0
        %v488 = vadd.f32 0.0, %v487
        %v489 = vpop.f32.mrb[0].mxu0
        %490 = vmatprep.mubr.f32.mxu0 0.0
        %491 = vmatmul.mubr.f32.gmra.mrb[0].mxu0 %v342
        %v492 = vpop.f32.mrb[0].mxu0
        %v493 = vadd.f32 0.0, %v492
        %v494 = vpop.f32.mrb[0].mxu0
        %495 = vmatprep.mubr.f32.mxu0 0.0
        %496 = vmatmul.mubr.f32.gmra.mrb[0].mxu0 %v343
        %v497 = vpop.f32.mrb[0].mxu0
        %v498 = vadd.f32 0.0, %v497
        %v499 = vpop.f32.mrb[0].mxu0
        %500 = vmatprep.mubr.f32.mxu0 0.0
        %501 = vmatmul.mubr.f32.gmra.mrb[0].mxu0 %v344
        %v502 = vpop.f32.mrb[0].mxu0
        %v503 = vadd.f32 0.0, %v502
        %v504 = vpop.f32.mrb[0].mxu0
        %505 = vdwg.mxu0
        %v506 = vadd.f32 %v313, %v428
        %v507 = vadd.f32 %v314, %v433
        %v508 = vadd.f32 %v315, %v438
        %v509 = vadd.f32 %v316, %v443
        %v510 = vadd.f32 %v317, %v448
        %v511 = vadd.f32 %v318, %v453
        %v512 = vadd.f32 %v319, %v458
        %v513 = vadd.f32 %v320, %v463
        %v514 = vadd.f32 %v321, %v468
        %v515 = vadd.f32 %v322, %v473
        %v516 = vadd.f32 %v323, %v478
        %v517 = vadd.f32 %v324, %v483
        %v518 = vadd.f32 %v325, %v488
        %v519 = vadd.f32 %v326, %v493
        %v520 = vadd.f32 %v327, %v498
        %v521 = vadd.f32 %v328, %v503
        %522 = vst [vmem:[#allocation2] sm:$0xff] %v506
        %523 = vst [vmem:[#allocation2 + $0x8] sm:$0xff] %v507
        %524 = vst [vmem:[#allocation2 + $0x10] sm:$0xff] %v508
        %525 = vst [vmem:[#allocation2 + $0x18] sm:$0xff] %v509
        %526 = vst [vmem:[#allocation2 + $0x20] sm:$0xff] %v510
        %527 = vst [vmem:[#allocation2 + $0x28] sm:$0xff] %v511
        %528 = vst [vmem:[#allocation2 + $0x30] sm:$0xff] %v512
        %529 = vst [vmem:[#allocation2 + $0x38] sm:$0xff] %v513
        %530 = vst [vmem:[#allocation2 + $0x40] sm:$0xff] %v514
        %531 = vst [vmem:[#allocation2 + $0x48] sm:$0xff] %v515
        %532 = vst [vmem:[#allocation2 + $0x50] sm:$0xff] %v516
        %533 = vst [vmem:[#allocation2 + $0x58] sm:$0xff] %v517
        %534 = vst [vmem:[#allocation2 + $0x60] sm:$0xff] %v518
        %535 = vst [vmem:[#allocation2 + $0x68] sm:$0xff] %v519
        %536 = vst [vmem:[#allocation2 + $0x70] sm:$0xff] %v520
        %537 = vst [vmem:[#allocation2 + $0x78] sm:$0xff] %v521
        // Predicated region
        $region71: #{gripnet_forward.11} parent=61 // pred_check
          %p538 = pneg %p293
        $region72: #{gripnet_forward.11} parent=61 // pred_check_branch
          %540 = sbr.rel (%p538) target = $region74
        $region73: #{gripnet_forward.11} parent=61 // pred_region
          %v541 = vld [vmem:[#allocation2] sm:$0xff]
          %v542 = vld [vmem:[#allocation2 + $0x8] sm:$0xff]
          %v543 = vld [vmem:[#allocation2 + $0x10] sm:$0xff]
          %v544 = vld [vmem:[#allocation2 + $0x18] sm:$0xff]
          %v545 = vld [vmem:[#allocation2 + $0x20] sm:$0xff]
          %v546 = vld [vmem:[#allocation2 + $0x28] sm:$0xff]
          %v547 = vld [vmem:[#allocation2 + $0x30] sm:$0xff]
          %v548 = vld [vmem:[#allocation2 + $0x38] sm:$0xff]
          %v549 = vld [vmem:[#allocation2 + $0x40] sm:$0xff]
          %v550 = vld [vmem:[#allocation2 + $0x48] sm:$0xff]
          %v551 = vld [vmem:[#allocation2 + $0x50] sm:$0xff]
          %v552 = vld [vmem:[#allocation2 + $0x58] sm:$0xff]
          %v553 = vld [vmem:[#allocation2 + $0x60] sm:$0xff]
          %v554 = vld [vmem:[#allocation2 + $0x68] sm:$0xff]
          %v555 = vld [vmem:[#allocation2 + $0x70] sm:$0xff]
          %v556 = vld [vmem:[#allocation2 + $0x78] sm:$0xff]
          %557 = vst [vmem:[%s281] sm:$0xff] %v541
          %558 = vst [vmem:[%s281 + $0x8] sm:$0xff] %v542
          %559 = vst [vmem:[%s281 + $0x10] sm:$0xff] %v543
          %560 = vst [vmem:[%s281 + $0x18] sm:$0xff] %v544
          %561 = vst [vmem:[%s281 + $0x20] sm:$0xff] %v545
          %562 = vst [vmem:[%s281 + $0x28] sm:$0xff] %v546
          %563 = vst [vmem:[%s281 + $0x30] sm:$0xff] %v547
          %564 = vst [vmem:[%s281 + $0x38] sm:$0xff] %v548
          %565 = vst [vmem:[%s281 + $0x40] sm:$0xff] %v549
          %566 = vst [vmem:[%s281 + $0x48] sm:$0xff] %v550
          %567 = vst [vmem:[%s281 + $0x50] sm:$0xff] %v551
          %568 = vst [vmem:[%s281 + $0x58] sm:$0xff] %v552
          %569 = vst [vmem:[%s281 + $0x60] sm:$0xff] %v553
          %570 = vst [vmem:[%s281 + $0x68] sm:$0xff] %v554
          %571 = vst [vmem:[%s281 + $0x70] sm:$0xff] %v555
          %572 = vst [vmem:[%s281 + $0x78] sm:$0xff] %v556
        $region74: #{gripnet_forward.11} parent=61 // pred_fallthru
          _
        %s573 = sand.u32 %s98, 1
        %s574 = sand.u32 %s98, 1
        %s575 = smul.addr %s574, 128
        %s576 = scalar_lea.vmem [#allocation4], %s575
        // Predicated region
        $region75: #{gripnet_forward.11} parent=61 // pred_check
          %p577 = pneg %p108
        $region76: #{gripnet_forward.11} parent=61 // pred_check_branch
          %579 = sbr.rel (%p577) target = $region78
        $region77: #{gripnet_forward.11} parent=61 // pred_region
          %s580 = smul.u32 16, %s18
          %s581 = smul.addr %s580, 2
          %s582 = sadd.s32 %s19, %s581
          %s583 = smul.addr %s582, 8
          %s584 = scalar_lea.vmem %s2, %s583
          // Predicated region
          $region79: #{gripnet_forward.11} parent=77 // pred_check
            _
          $region80: #{gripnet_forward.11} parent=77 // pred_check_branch
            %586 = sbr.rel (0) target = $region82
          $region81: #{gripnet_forward.11} parent=77 // pred_region
            // Predicated region
            $region83: #{gripnet_forward.11} parent=81 // pred_check
              _
            $region84: #{gripnet_forward.11} parent=81 // pred_check_branch
              %588 = sbr.rel (0) target = $region86
            $region85: #{gripnet_forward.11} parent=81 // pred_region
              // Predicated region
              $region98: #{gripnet_forward.11} parent=85 // pred_check
                _
              $region99: #{gripnet_forward.11} parent=85 // pred_check_branch
                %633 = sbr.rel (0) target = $region101
              $region100: #{gripnet_forward.11} parent=85 // pred_region
                loop: start=0, step=1, limit=1
                $region102: #{gripnet_forward.11} parent=100 // loop_pre_header
                  _
                $region103: #{gripnet_forward.11} parent=100 // loop_header
                  %s635 = sphi 0, %s639
                  %p636 = scmp.ge.s32.totalorder %s635, 1
                  %s640 = sphi %s576, %s576
                  %s641 = sphi %s584, %s584
                $region104: #{gripnet_forward.11} parent=100 // loop_header_branch
                  %638 = sbr.rel (%p636) target = $region108
                $region105: #{gripnet_forward.11} parent=100 // loop_body
                  %v642 = vld [vmem:[%s640] sm:$0xff]
                  %643 = vst [vmem:[%s641] sm:$0xff] %v642
                  %v644 = vld [vmem:[%s640 + $0x8] sm:$0xff]
                  %645 = vst [vmem:[%s641 + $0x10] sm:$0xff] %v644
                  %v646 = vld [vmem:[%s640 + $0x10] sm:$0xff]
                  %647 = vst [vmem:[%s641 + $0x20] sm:$0xff] %v646
                  %v648 = vld [vmem:[%s640 + $0x18] sm:$0xff]
                  %649 = vst [vmem:[%s641 + $0x30] sm:$0xff] %v648
                  %v650 = vld [vmem:[%s640 + $0x20] sm:$0xff]
                  %651 = vst [vmem:[%s641 + $0x40] sm:$0xff] %v650
                  %v652 = vld [vmem:[%s640 + $0x28] sm:$0xff]
                  %653 = vst [vmem:[%s641 + $0x50] sm:$0xff] %v652
                  %v654 = vld [vmem:[%s640 + $0x30] sm:$0xff]
                  %655 = vst [vmem:[%s641 + $0x60] sm:$0xff] %v654
                  %v656 = vld [vmem:[%s640 + $0x38] sm:$0xff]
                  %657 = vst [vmem:[%s641 + $0x70] sm:$0xff] %v656
                  %v658 = vld [vmem:[%s640 + $0x40] sm:$0xff]
                  %659 = vst [vmem:[%s641 + $0x80] sm:$0xff] %v658
                  %v660 = vld [vmem:[%s640 + $0x48] sm:$0xff]
                  %661 = vst [vmem:[%s641 + $0x90] sm:$0xff] %v660
                  %v662 = vld [vmem:[%s640 + $0x50] sm:$0xff]
                  %663 = vst [vmem:[%s641 + $0xa0] sm:$0xff] %v662
                  %v664 = vld [vmem:[%s640 + $0x58] sm:$0xff]
                  %665 = vst [vmem:[%s641 + $0xb0] sm:$0xff] %v664
                  %v666 = vld [vmem:[%s640 + $0x60] sm:$0xff]
                  %667 = vst [vmem:[%s641 + $0xc0] sm:$0xff] %v666
                  %v668 = vld [vmem:[%s640 + $0x68] sm:$0xff]
                  %669 = vst [vmem:[%s641 + $0xd0] sm:$0xff] %v668
                  %v670 = vld [vmem:[%s640 + $0x70] sm:$0xff]
                  %671 = vst [vmem:[%s641 + $0xe0] sm:$0xff] %v670
                  %v672 = vld [vmem:[%s640 + $0x78] sm:$0xff]
                  %673 = vst [vmem:[%s641 + $0xf0] sm:$0xff] %v672
                $region106: #{gripnet_forward.11} parent=100 // loop_footer
                  %s639 = sadd.s32 1, %s635
                $region107: #{gripnet_forward.11} parent=100 // loop_footer_branch
                  %634 = sbr.rel target = $region103
                $region108: #{gripnet_forward.11} parent=100 // loop_exit
                  _
              $region101: #{gripnet_forward.11} parent=85 // pred_fallthru
                _
              // Predicated region
              $region109: #{gripnet_forward.11} parent=85 // pred_check
                _
              $region110: #{gripnet_forward.11} parent=85 // pred_check_branch
                %675 = sbr.rel target = $region112
              $region111: #{gripnet_forward.11} parent=85 // pred_region
                _
              $region112: #{gripnet_forward.11} parent=85 // pred_fallthru
                _
            $region86: #{gripnet_forward.11} parent=81 // pred_fallthru
              _
            // Predicated region
            $region87: #{gripnet_forward.11} parent=81 // pred_check
              _
            $region88: #{gripnet_forward.11} parent=81 // pred_check_branch
              %590 = sbr.rel target = $region90
            $region89: #{gripnet_forward.11} parent=81 // pred_region
              loop: start=0, step=1, limit=1
              $region91: #{gripnet_forward.11} parent=89 // loop_pre_header
                _
              $region92: #{gripnet_forward.11} parent=89 // loop_header
                %s593 = sphi 0, %s597
                %p594 = scmp.ge.s32.totalorder %s593, 1
                %s598 = sphi %s576, %s576
                %s599 = sphi %s584, %s584
              $region93: #{gripnet_forward.11} parent=89 // loop_header_branch
                %596 = sbr.rel (%p594) target = $region97
              $region94: #{gripnet_forward.11} parent=89 // loop_body
                %v600 = vld [vmem:[%s598] sm:$0xff]
                %601 = vst [vmem:[%s599] sm:$0xff] %v600
                %v602 = vld [vmem:[%s598 + $0x8] sm:$0xff]
                %603 = vst [vmem:[%s599 + $0x10] sm:$0xff] %v602
                %v604 = vld [vmem:[%s598 + $0x10] sm:$0xff]
                %605 = vst [vmem:[%s599 + $0x20] sm:$0xff] %v604
                %v606 = vld [vmem:[%s598 + $0x18] sm:$0xff]
                %607 = vst [vmem:[%s599 + $0x30] sm:$0xff] %v606
                %v608 = vld [vmem:[%s598 + $0x20] sm:$0xff]
                %609 = vst [vmem:[%s599 + $0x40] sm:$0xff] %v608
                %v610 = vld [vmem:[%s598 + $0x28] sm:$0xff]
                %611 = vst [vmem:[%s599 + $0x50] sm:$0xff] %v610
                %v612 = vld [vmem:[%s598 + $0x30] sm:$0xff]
                %613 = vst [vmem:[%s599 + $0x60] sm:$0xff] %v612
                %v614 = vld [vmem:[%s598 + $0x38] sm:$0xff]
                %615 = vst [vmem:[%s599 + $0x70] sm:$0xff] %v614
                %v616 = vld [vmem:[%s598 + $0x40] sm:$0xff]
                %617 = vst [vmem:[%s599 + $0x80] sm:$0xff] %v616
                %v618 = vld [vmem:[%s598 + $0x48] sm:$0xff]
                %619 = vst [vmem:[%s599 + $0x90] sm:$0xff] %v618
                %v620 = vld [vmem:[%s598 + $0x50] sm:$0xff]
                %621 = vst [vmem:[%s599 + $0xa0] sm:$0xff] %v620
                %v622 = vld [vmem:[%s598 + $0x58] sm:$0xff]
                %623 = vst [vmem:[%s599 + $0xb0] sm:$0xff] %v622
                %v624 = vld [vmem:[%s598 + $0x60] sm:$0xff]
                %625 = vst [vmem:[%s599 + $0xc0] sm:$0xff] %v624
                %v626 = vld [vmem:[%s598 + $0x68] sm:$0xff]
                %627 = vst [vmem:[%s599 + $0xd0] sm:$0xff] %v626
                %v628 = vld [vmem:[%s598 + $0x70] sm:$0xff]
                %629 = vst [vmem:[%s599 + $0xe0] sm:$0xff] %v628
                %v630 = vld [vmem:[%s598 + $0x78] sm:$0xff]
                %631 = vst [vmem:[%s599 + $0xf0] sm:$0xff] %v630
              $region95: #{gripnet_forward.11} parent=89 // loop_footer
                %s597 = sadd.s32 1, %s593
              $region96: #{gripnet_forward.11} parent=89 // loop_footer_branch
                %592 = sbr.rel target = $region92
              $region97: #{gripnet_forward.11} parent=89 // loop_exit
                _
            $region90: #{gripnet_forward.11} parent=81 // pred_fallthru
              _
          $region82: #{gripnet_forward.11} parent=77 // pred_fallthru
            _
          %676 = vnop
        $region78: #{gripnet_forward.11} parent=61 // pred_fallthru
          _
      $region62: #{gripnet_forward.11} parent=5 // pred_fallthru
        _
      %p677 = scmp.le.s32.totalorder 2, %s8
      // Predicated region
      $region113: #{gripnet_forward.11} parent=5 // pred_check
        %p678 = pneg %p677
      $region114: #{gripnet_forward.11} parent=5 // pred_check_branch
        %680 = sbr.rel (%p678) target = $region116
      $region115: #{gripnet_forward.11} parent=5 // pred_region
        %s681 = ssub.s32 %s8, 2
        // Predicated region
        $region117: #{gripnet_forward.11} parent=115 // pred_check
          %p682 = pneg %p114
        $region118: #{gripnet_forward.11} parent=115 // pred_check_branch
          %684 = sbr.rel (%p682) target = $region120
        $region119: #{gripnet_forward.11} parent=115 // pred_region
          %s685 = sand.u32 %s99, 1
          %s686 = sand.u32 %s99, 1
          %s687 = smul.addr %s686, 128
          %s688 = scalar_lea.vmem [#allocation4], %s687
        $region120: #{gripnet_forward.11} parent=115 // pred_fallthru
          _
      $region116: #{gripnet_forward.11} parent=5 // pred_fallthru
        _
    $region6: #{gripnet_forward.11} parent=1 // loop_footer
      %s12 = sadd.s32 1, %s8
    $region7: #{gripnet_forward.11} parent=1 // loop_footer_branch
      %7 = sbr.rel target = $region3
    $region8: #{gripnet_forward.11} parent=1 // loop_exit
      _

// kernel: gripnet_forward.10
$region0: #{gripnet_forward.10}
  #allocation0 [shape = 'u32[]', space=smem, size = 0x4, offset = 0x4, fixed_abs, tag = 'smem constant byte address 0x4 - core index']
  #allocation1 [shape = 'u32[144,128]{1,0:T(1,128)}', space=vmem, size = 0x12000, scoped, tag = 'internal scratch']
  #allocation2 [shape = 'f32[128,128]{1,0:T(8,128)}', space=vmem, size = 0x10000, scoped, tag = 'scratch operand']
  %s0 = inlined_call_operand.vmem [shape: f32[256,384], index: 0, kind: input, shape index: {}]
  %s1 = inlined_call_operand.vmem [shape: f32[384,128], index: 1, kind: input, shape index: {}]
  %s2 = inlined_call_operand.vmem [shape: f32[256,128], index: 2, kind: output, shape index: {}]
  %s3 = sld [smem:[#allocation0]]
  $region87: #{gripnet_forward.10} parent=0
    _
  %s5 = ssub.s32 1, %s3
  %s6 = scalar_select 0, %s5, %s3
  $region1: #{gripnet_forward.10} parent=0
    #allocation3 [shape = 'u8[131072]{0}', space=vmem, size = 0x20000, scoped, tag = 'input window, operand 0']
    loop: start=0, step=1, limit=8
    $region2: #{gripnet_forward.10} parent=1 // loop_pre_header
      _
    $region3: #{gripnet_forward.10} parent=1 // loop_header
      %s8 = sphi 0, %s12
      %p9 = scmp.ge.s32.totalorder %s8, 8
      %s15 = sphi 0, %s34
      %s16 = sphi 0, %s30
      %s17 = sphi 0, %s26
      %s18 = sphi 0, %s15
      %s19 = sphi 0, %s16
      %s20 = sphi 0, %s17
      %s21 = sphi 0, %s18
      %s22 = sphi 0, %s19
      %s23 = sphi 0, %s20
      %s39 = sphi 0, %s41
      %s42 = sphi 0, %s39
      %s43 = sphi 0, %s42
      %s59 = sphi 0, %s43
      %s67 = sphi 0, %s69
      %s70 = sphi 0, %s67
      %s71 = sphi 0, %s70
      %s87 = sphi 0, %s71
      %s95 = sphi 0, %s97
      %s98 = sphi 0, %s95
      %s99 = sphi 0, %s98
      %s115 = sphi 0, %s99
    $region4: #{gripnet_forward.10} parent=1 // loop_header_branch
      %11 = sbr.rel (%p9) target = $region8
    $region5: #{gripnet_forward.10} parent=1 // loop_body
      %s13 = ssub.s32 %s8, 1
      %s14 = ssub.s32 %s8, 2
      %s24 = sadd.s32 1, %s17
      %p25 = scmp.ge.s32.totalorder %s24, 3
      %s26 = scalar_select %p25, 0, %s24
      %s27 = sadd.s32 1, %s16
      %s28 = scalar_select %p25, %s27, %s16
      %p29 = scmp.ge.s32.totalorder %s28, 1
      %s30 = scalar_select %p29, 0, %s28
      %s31 = sadd.s32 1, %s15
      %s32 = scalar_select %p29, %s31, %s15
      %p33 = scmp.ge.s32.totalorder %s32, 2
      %s34 = scalar_select %p33, 0, %s32
      %s35 = ssub.s32 %s15, %s34
      %s36 = ssub.s32 %s17, %s26
      %s37 = sor.u32 %s35, %s36
      %p38 = scmp.eq.s32.totalorder %s37, 0
      %s40 = sadd.s32 %s39, 1
      %s41 = scalar_select %p38, %s39, %s40
      %p44 = pneg %p38
      %p45 = scmp.eq.s32.totalorder %s8, 5
      %p46 = por %p44, %p45
      %p47 = scmp.ne.s32.totalorder %s39, %s42
      %p48 = scmp.eq.s32.totalorder %s8, 0
      %p49 = por %p47, %p48
      %p50 = scmp.ne.s32.totalorder %s39, %s42
      %p51 = scmp.eq.s32.totalorder %s13, 5
      %p52 = por %p50, %p51
      %p53 = scmp.ne.s32.totalorder %s42, %s43
      %p54 = scmp.eq.s32.totalorder %s13, 0
      %p55 = por %p53, %p54
      %p56 = scmp.ne.s32.totalorder %s42, %s43
      %p57 = scmp.eq.s32.totalorder %s14, 5
      %p58 = por %p56, %p57
      %p60 = scmp.ne.s32.totalorder %s43, %s59
      %p61 = scmp.eq.s32.totalorder %s14, 0
      %p62 = por %p60, %p61
      %s63 = ssub.s32 %s17, %s26
      %s64 = ssub.s32 %s16, %s30
      %s65 = sor.u32 %s63, %s64
      %p66 = scmp.eq.s32.totalorder %s65, 0
      %s68 = sadd.s32 %s67, 1
      %s69 = scalar_select %p66, %s67, %s68
      %p72 = pneg %p66
      %p73 = scmp.eq.s32.totalorder %s8, 5
      %p74 = por %p72, %p73
      %p75 = scmp.ne.s32.totalorder %s67, %s70
      %p76 = scmp.eq.s32.totalorder %s8, 0
      %p77 = por %p75, %p76
      %p78 = scmp.ne.s32.totalorder %s67, %s70
      %p79 = scmp.eq.s32.totalorder %s13, 5
      %p80 = por %p78, %p79
      %p81 = scmp.ne.s32.totalorder %s70, %s71
      %p82 = scmp.eq.s32.totalorder %s13, 0
      %p83 = por %p81, %p82
      %p84 = scmp.ne.s32.totalorder %s70, %s71
      %p85 = scmp.eq.s32.totalorder %s14, 5
      %p86 = por %p84, %p85
      %p88 = scmp.ne.s32.totalorder %s71, %s87
      %p89 = scmp.eq.s32.totalorder %s14, 0
      %p90 = por %p88, %p89
      %s91 = ssub.s32 %s15, %s34
      %s92 = ssub.s32 %s16, %s30
      %s93 = sor.u32 %s91, %s92
      %p94 = scmp.eq.s32.totalorder %s93, 0
      %s96 = sadd.s32 %s95, 1
      %s97 = scalar_select %p94, %s95, %s96
      %p100 = pneg %p94
      %p101 = scmp.eq.s32.totalorder %s8, 5
      %p102 = por %p100, %p101
      %p103 = scmp.ne.s32.totalorder %s95, %s98
      %p104 = scmp.eq.s32.totalorder %s8, 0
      %p105 = por %p103, %p104
      %p106 = scmp.ne.s32.totalorder %s95, %s98
      %p107 = scmp.eq.s32.totalorder %s13, 5
      %p108 = por %p106, %p107
      %p109 = scmp.ne.s32.totalorder %s98, %s99
      %p110 = scmp.eq.s32.totalorder %s13, 0
      %p111 = por %p109, %p110
      %p112 = scmp.ne.s32.totalorder %s98, %s99
      %p113 = scmp.eq.s32.totalorder %s14, 5
      %p114 = por %p112, %p113
      %p116 = scmp.ne.s32.totalorder %s99, %s115
      %p117 = scmp.eq.s32.totalorder %s14, 0
      %p118 = por %p116, %p117
      %p119 = scmp.le.s32.totalorder 1, %s8
      %p120 = scmp.lt.s32.totalorder %s8, 7
      %p121 = pnand %p119, %p120
      %p122 = pneg %p121
      // Predicated region
      $region9: #{gripnet_forward.10} parent=5 // pred_check
        _
      $region10: #{gripnet_forward.10} parent=5 // pred_check_branch
        %124 = sbr.rel (%p121) target = $region12
      $region11: #{gripnet_forward.10} parent=5 // pred_region
        %s125 = ssub.s32 %s8, 1
      $region12: #{gripnet_forward.10} parent=5 // pred_fallthru
        _
      %p126 = scmp.lt.s32.totalorder %s8, 6
      // Predicated region
      $region13: #{gripnet_forward.10} parent=5 // pred_check
        %p127 = pneg %p126
      $region14: #{gripnet_forward.10} parent=5 // pred_check_branch
        %129 = sbr.rel (%p127) target = $region16
      $region15: #{gripnet_forward.10} parent=5 // pred_region
        // Predicated region
        $region17: #{gripnet_forward.10} parent=15 // pred_check
          %p130 = pneg %p49
        $region18: #{gripnet_forward.10} parent=15 // pred_check_branch
          %132 = sbr.rel (%p130) target = $region20
        $region19: #{gripnet_forward.10} parent=15 // pred_region
          %s133 = sand.u32 %s39, 1
          %s134 = sand.u32 %s39, 1
          %s135 = smul.addr %s134, 128
          %s136 = scalar_lea.vmem [#allocation3], %s135
          %s137 = smul.u32 16, %s15
          %s138 = smul.addr %s137, 3
          %s139 = sadd.s32 %s17, %s138
          %s140 = smul.addr %s139, 8
          %s141 = scalar_lea.vmem %s0, %s140
          // Predicated region
          $region21: #{gripnet_forward.10} parent=19 // pred_check
            _
          $region22: #{gripnet_forward.10} parent=19 // pred_check_branch
            %143 = sbr.rel (0) target = $region24
          $region23: #{gripnet_forward.10} parent=19 // pred_region
            // Predicated region
            $region25: #{gripnet_forward.10} parent=23 // pred_check
              _
            $region26: #{gripnet_forward.10} parent=23 // pred_check_branch
              %145 = sbr.rel (0) target = $region28
            $region27: #{gripnet_forward.10} parent=23 // pred_region
              // Predicated region
              $region40: #{gripnet_forward.10} parent=27 // pred_check
                _
              $region41: #{gripnet_forward.10} parent=27 // pred_check_branch
                %190 = sbr.rel (0) target = $region43
              $region42: #{gripnet_forward.10} parent=27 // pred_region
                loop: start=0, step=1, limit=1
                $region44: #{gripnet_forward.10} parent=42 // loop_pre_header
                  _
                $region45: #{gripnet_forward.10} parent=42 // loop_header
                  %s192 = sphi 0, %s196
                  %p193 = scmp.ge.s32.totalorder %s192, 1
                  %s197 = sphi %s141, %s141
                  %s198 = sphi %s136, %s136
                $region46: #{gripnet_forward.10} parent=42 // loop_header_branch
                  %195 = sbr.rel (%p193) target = $region50
                $region47: #{gripnet_forward.10} parent=42 // loop_body
                  %v199 = vld [vmem:[%s197] sm:$0xff]
                  %200 = vst [vmem:[%s198] sm:$0xff] %v199
                  %v201 = vld [vmem:[%s197 + $0x18] sm:$0xff]
                  %202 = vst [vmem:[%s198 + $0x8] sm:$0xff] %v201
                  %v203 = vld [vmem:[%s197 + $0x30] sm:$0xff]
                  %204 = vst [vmem:[%s198 + $0x10] sm:$0xff] %v203
                  %v205 = vld [vmem:[%s197 + $0x48] sm:$0xff]
                  %206 = vst [vmem:[%s198 + $0x18] sm:$0xff] %v205
                  %v207 = vld [vmem:[%s197 + $0x60] sm:$0xff]
                  %208 = vst [vmem:[%s198 + $0x20] sm:$0xff] %v207
                  %v209 = vld [vmem:[%s197 + $0x78] sm:$0xff]
                  %210 = vst [vmem:[%s198 + $0x28] sm:$0xff] %v209
                  %v211 = vld [vmem:[%s197 + $0x90] sm:$0xff]
                  %212 = vst [vmem:[%s198 + $0x30] sm:$0xff] %v211
                  %v213 = vld [vmem:[%s197 + $0xa8] sm:$0xff]
                  %214 = vst [vmem:[%s198 + $0x38] sm:$0xff] %v213
                  %v215 = vld [vmem:[%s197 + $0xc0] sm:$0xff]
                  %216 = vst [vmem:[%s198 + $0x40] sm:$0xff] %v215
                  %v217 = vld [vmem:[%s197 + $0xd8] sm:$0xff]
                  %218 = vst [vmem:[%s198 + $0x48] sm:$0xff] %v217
                  %v219 = vld [vmem:[%s197 + $0xf0] sm:$0xff]
                  %220 = vst [vmem:[%s198 + $0x50] sm:$0xff] %v219
                  %v221 = vld [vmem:[%s197 + $0x108] sm:$0xff]
                  %222 = vst [vmem:[%s198 + $0x58] sm:$0xff] %v221
                  %v223 = vld [vmem:[%s197 + $0x120] sm:$0xff]
                  %224 = vst [vmem:[%s198 + $0x60] sm:$0xff] %v223
                  %v225 = vld [vmem:[%s197 + $0x138] sm:$0xff]
                  %226 = vst [vmem:[%s198 + $0x68] sm:$0xff] %v225
                  %v227 = vld [vmem:[%s197 + $0x150] sm:$0xff]
                  %228 = vst [vmem:[%s198 + $0x70] sm:$0xff] %v227
                  %v229 = vld [vmem:[%s197 + $0x168] sm:$0xff]
                  %230 = vst [vmem:[%s198 + $0x78] sm:$0xff] %v229
                $region48: #{gripnet_forward.10} parent=42 // loop_footer
                  %s196 = sadd.s32 1, %s192
                $region49: #{gripnet_forward.10} parent=42 // loop_footer_branch
                  %191 = sbr.rel target = $region45
                $region50: #{gripnet_forward.10} parent=42 // loop_exit
                  _
              $region43: #{gripnet_forward.10} parent=27 // pred_fallthru
                _
              // Predicated region
              $region51: #{gripnet_forward.10} parent=27 // pred_check
                _
              $region52: #{gripnet_forward.10} parent=27 // pred_check_branch
                %232 = sbr.rel target = $region54
              $region53: #{gripnet_forward.10} parent=27 // pred_region
                _
              $region54: #{gripnet_forward.10} parent=27 // pred_fallthru
                _
            $region28: #{gripnet_forward.10} parent=23 // pred_fallthru
              _
            // Predicated region
            $region29: #{gripnet_forward.10} parent=23 // pred_check
              _
            $region30: #{gripnet_forward.10} parent=23 // pred_check_branch
              %147 = sbr.rel target = $region32
            $region31: #{gripnet_forward.10} parent=23 // pred_region
              loop: start=0, step=1, limit=1
              $region33: #{gripnet_forward.10} parent=31 // loop_pre_header
                _
              $region34: #{gripnet_forward.10} parent=31 // loop_header
                %s150 = sphi 0, %s154
                %p151 = scmp.ge.s32.totalorder %s150, 1
                %s155 = sphi %s141, %s141
                %s156 = sphi %s136, %s136
              $region35: #{gripnet_forward.10} parent=31 // loop_header_branch
                %153 = sbr.rel (%p151) target = $region39
              $region36: #{gripnet_forward.10} parent=31 // loop_body
                %v157 = vld [vmem:[%s155] sm:$0xff]
                %158 = vst [vmem:[%s156] sm:$0xff] %v157
                %v159 = vld [vmem:[%s155 + $0x18] sm:$0xff]
                %160 = vst [vmem:[%s156 + $0x8] sm:$0xff] %v159
                %v161 = vld [vmem:[%s155 + $0x30] sm:$0xff]
                %162 = vst [vmem:[%s156 + $0x10] sm:$0xff] %v161
                %v163 = vld [vmem:[%s155 + $0x48] sm:$0xff]
                %164 = vst [vmem:[%s156 + $0x18] sm:$0xff] %v163
                %v165 = vld [vmem:[%s155 + $0x60] sm:$0xff]
                %166 = vst [vmem:[%s156 + $0x20] sm:$0xff] %v165
                %v167 = vld [vmem:[%s155 + $0x78] sm:$0xff]
                %168 = vst [vmem:[%s156 + $0x28] sm:$0xff] %v167
                %v169 = vld [vmem:[%s155 + $0x90] sm:$0xff]
                %170 = vst [vmem:[%s156 + $0x30] sm:$0xff] %v169
                %v171 = vld [vmem:[%s155 + $0xa8] sm:$0xff]
                %172 = vst [vmem:[%s156 + $0x38] sm:$0xff] %v171
                %v173 = vld [vmem:[%s155 + $0xc0] sm:$0xff]
                %174 = vst [vmem:[%s156 + $0x40] sm:$0xff] %v173
                %v175 = vld [vmem:[%s155 + $0xd8] sm:$0xff]
                %176 = vst [vmem:[%s156 + $0x48] sm:$0xff] %v175
                %v177 = vld [vmem:[%s155 + $0xf0] sm:$0xff]
                %178 = vst [vmem:[%s156 + $0x50] sm:$0xff] %v177
                %v179 = vld [vmem:[%s155 + $0x108] sm:$0xff]
                %180 = vst [vmem:[%s156 + $0x58] sm:$0xff] %v179
                %v181 = vld [vmem:[%s155 + $0x120] sm:$0xff]
                %182 = vst [vmem:[%s156 + $0x60] sm:$0xff] %v181
                %v183 = vld [vmem:[%s155 + $0x138] sm:$0xff]
                %184 = vst [vmem:[%s156 + $0x68] sm:$0xff] %v183
                %v185 = vld [vmem:[%s155 + $0x150] sm:$0xff]
                %186 = vst [vmem:[%s156 + $0x70] sm:$0xff] %v185
                %v187 = vld [vmem:[%s155 + $0x168] sm:$0xff]
                %188 = vst [vmem:[%s156 + $0x78] sm:$0xff] %v187
              $region37: #{gripnet_forward.10} parent=31 // loop_footer
                %s154 = sadd.s32 1, %s150
              $region38: #{gripnet_forward.10} parent=31 // loop_footer_branch
                %149 = sbr.rel target = $region34
              $region39: #{gripnet_forward.10} parent=31 // loop_exit
                _
            $region32: #{gripnet_forward.10} parent=23 // pred_fallthru
              _
          $region24: #{gripnet_forward.10} parent=19 // pred_fallthru
            _
          %233 = vnop
        $region20: #{gripnet_forward.10} parent=15 // pred_fallthru
          _
        // Predicated region
        $region55: #{gripnet_forward.10} parent=15 // pred_check
          %p234 = pneg %p77
        $region56: #{gripnet_forward.10} parent=15 // pred_check_branch
          %236 = sbr.rel (%p234) target = $region58
        $region57: #{gripnet_forward.10} parent=15 // pred_region
          %s237 = smul.u32 16, %s17
          %p238 = scmp.lt.s32.totalorder %s237, 47
          %s239 = scalar_select %p238, %s237, 47
          %p240 = scmp.lt.s32.totalorder %s16, 0
          %s241 = scalar_select %p240, %s16, 0
          %s242 = sadd.s32 %s241, %s239
          %s243 = smul.addr %s242, 8
          %s244 = scalar_lea.vmem %s1, %s243
          %s245 = smul.u32 16, %s17
        $region58: #{gripnet_forward.10} parent=15 // pred_fallthru
          _
      $region16: #{gripnet_forward.10} parent=5 // pred_fallthru
        _
      %p246 = scmp.le.s32.totalorder 1, %s8
      %p247 = scmp.lt.s32.totalorder %s8, 7
      %p248 = pnand %p246, %p247
      %p249 = pneg %p248
      // Predicated region
      $region59: #{gripnet_forward.10} parent=5 // pred_check
        _
      $region60: #{gripnet_forward.10} parent=5 // pred_check_branch
        %251 = sbr.rel (%p248) target = $region62
      $region61: #{gripnet_forward.10} parent=5 // pred_region
        %s252 = ssub.s32 %s8, 1
        %s253 = sand.u32 %s42, 1
        %s254 = sand.u32 %s42, 1
        %s255 = smul.addr %s254, 128
        %s256 = scalar_lea.vmem [#allocation3], %s255
        // Predicated region
        $region63: #{gripnet_forward.10} parent=61 // pred_check
          %p257 = pneg %p55
        $region64: #{gripnet_forward.10} parent=61 // pred_check_branch
          %259 = sbr.rel (%p257) target = $region66
        $region65: #{gripnet_forward.10} parent=61 // pred_region
          _
        $region66: #{gripnet_forward.10} parent=61 // pred_fallthru
          _
        %s260 = sand.u32 %s42, 1
        %s261 = sand.u32 %s42, 1
        %s262 = smul.addr %s261, 128
        %s263 = scalar_lea.vmem [#allocation3], %s262
        %p264 = pneg %p55
        %p265 = pneg %p52
        %s266 = smul.u32 16, %s20
        %p267 = scmp.lt.s32.totalorder %s266, 47
        %s268 = scalar_select %p267, %s266, 47
        %p269 = scmp.lt.s32.totalorder %s19, 0
        %s270 = scalar_select %p269, %s19, 0
        %s271 = sadd.s32 %s270, %s268
        %s272 = smul.addr %s271, 8
        %s273 = scalar_lea.vmem %s1, %s272
        %p274 = pneg %p83
        %p275 = pneg %p80
        %p276 = pneg %p111
        %p277 = pneg %p108
        %s278 = smul.u32 16, %s18
        %p279 = scmp.lt.s32.totalorder %s278, 31
        %s280 = scalar_select %p279, %s278, 31
        %p281 = scmp.lt.s32.totalorder %s19, 0
        %s282 = scalar_select %p281, %s19, 0
        %s283 = sadd.s32 %s282, %s280
        %s284 = smul.addr %s283, 8
        %s285 = scalar_lea.vmem %s2, %s284
        %s286 = smul.u32 16, %s18
        %s287 = smul.u32 16, %s20
        %p288 = scmp.lt.s32.totalorder %s287, 47
        %s289 = scalar_select %p288, %s287, 47
        %p290 = scmp.lt.s32.totalorder %s19, 0
        %s291 = scalar_select %p290, %s19, 0
        %s292 = sadd.s32 %s291, %s289
        %s293 = smul.addr %s292, 8
        %s294 = scalar_lea.vmem %s1, %s293
        %s295 = smul.u32 16, %s20
        %s296 = smul.u32 16, %s18
        %p297 = scmp.lt.s32.totalorder %s296, 31
        %s298 = scalar_select %p297, %s296, 31
        %p299 = scmp.lt.s32.totalorder %s19, 0
        %s300 = scalar_select %p299, %s19, 0
        %s301 = sadd.s32 %s300, %s298
        %s302 = smul.addr %s301, 8
        %s303 = scalar_lea.vmem %s2, %s302
        %s304 = smul.u32 16, %s18
        %p305 = scmp.eq.s32.totalorder %s20, 0
        // Predicated region
        $region67: #{gripnet_forward.10} parent=61 // pred_check
          %p306 = pneg %p305
        $region68: #{gripnet_forward.10} parent=61 // pred_check_branch
          %308 = sbr.rel (%p306) target = $region70
        $region69: #{gripnet_forward.10} parent=61 // pred_region
          %309 = vst [vmem:[#allocation2] sm:$0xff] 0.0
          %310 = vst [vmem:[#allocation2 + $0x8] sm:$0xff] 0.0
          %311 = vst [vmem:[#allocation2 + $0x10] sm:$0xff] 0.0
          %312 = vst [vmem:[#allocation2 + $0x18] sm:$0xff] 0.0
          %313 = vst [vmem:[#allocation2 + $0x20] sm:$0xff] 0.0
          %314 = vst [vmem:[#allocation2 + $0x28] sm:$0xff] 0.0
          %315 = vst [vmem:[#allocation2 + $0x30] sm:$0xff] 0.0
          %316 = vst [vmem:[#allocation2 + $0x38] sm:$0xff] 0.0
          %317 = vst [vmem:[#allocation2 + $0x40] sm:$0xff] 0.0
          %318 = vst [vmem:[#allocation2 + $0x48] sm:$0xff] 0.0
          %319 = vst [vmem:[#allocation2 + $0x50] sm:$0xff] 0.0
          %320 = vst [vmem:[#allocation2 + $0x58] sm:$0xff] 0.0
          %321 = vst [vmem:[#allocation2 + $0x60] sm:$0xff] 0.0
          %322 = vst [vmem:[#allocation2 + $0x68] sm:$0xff] 0.0
          %323 = vst [vmem:[#allocation2 + $0x70] sm:$0xff] 0.0
          %324 = vst [vmem:[#allocation2 + $0x78] sm:$0xff] 0.0
        $region70: #{gripnet_forward.10} parent=61 // pred_fallthru
          _
        %v325 = vld [vmem:[#allocation2] sm:$0xff]
        %v326 = vld [vmem:[#allocation2 + $0x8] sm:$0xff]
        %v327 = vld [vmem:[#allocation2 + $0x10] sm:$0xff]
        %v328 = vld [vmem:[#allocation2 + $0x18] sm:$0xff]
        %v329 = vld [vmem:[#allocation2 + $0x20] sm:$0xff]
        %v330 = vld [vmem:[#allocation2 + $0x28] sm:$0xff]
        %v331 = vld [vmem:[#allocation2 + $0x30] sm:$0xff]
        %v332 = vld [vmem:[#allocation2 + $0x38] sm:$0xff]
        %v333 = vld [vmem:[#allocation2 + $0x40] sm:$0xff]
        %v334 = vld [vmem:[#allocation2 + $0x48] sm:$0xff]
        %v335 = vld [vmem:[#allocation2 + $0x50] sm:$0xff]
        %v336 = vld [vmem:[#allocation2 + $0x58] sm:$0xff]
        %v337 = vld [vmem:[#allocation2 + $0x60] sm:$0xff]
        %v338 = vld [vmem:[#allocation2 + $0x68] sm:$0xff]
        %v339 = vld [vmem:[#allocation2 + $0x70] sm:$0xff]
        %v340 = vld [vmem:[#allocation2 + $0x78] sm:$0xff]
        %v341 = vld [vmem:[%s256] sm:$0xff]
        %v342 = vld [vmem:[%s256 + $0x8] sm:$0xff]
        %v343 = vld [vmem:[%s256 + $0x10] sm:$0xff]
        %v344 = vld [vmem:[%s256 + $0x18] sm:$0xff]
        %v345 = vld [vmem:[%s256 + $0x20] sm:$0xff]
        %v346 = vld [vmem:[%s256 + $0x28] sm:$0xff]
        %v347 = vld [vmem:[%s256 + $0x30] sm:$0xff]
        %v348 = vld [vmem:[%s256 + $0x38] sm:$0xff]
        %v349 = vld [vmem:[%s256 + $0x40] sm:$0xff]
        %v350 = vld [vmem:[%s256 + $0x48] sm:$0xff]
        %v351 = vld [vmem:[%s256 + $0x50] sm:$0xff]
        %v352 = vld [vmem:[%s256 + $0x58] sm:$0xff]
        %v353 = vld [vmem:[%s256 + $0x60] sm:$0xff]
        %v354 = vld [vmem:[%s256 + $0x68] sm:$0xff]
        %v355 = vld [vmem:[%s256 + $0x70] sm:$0xff]
        %v356 = vld [vmem:[%s256 + $0x78] sm:$0xff]
        %v357 = vld [vmem:[%s294] sm:$0xff]
        %v358 = vld [vmem:[%s294 + $0x8] sm:$0xff]
        %v359 = vld [vmem:[%s294 + $0x10] sm:$0xff]
        %v360 = vld [vmem:[%s294 + $0x18] sm:$0xff]
        %v361 = vld [vmem:[%s294 + $0x20] sm:$0xff]
        %v362 = vld [vmem:[%s294 + $0x28] sm:$0xff]
        %v363 = vld [vmem:[%s294 + $0x30] sm:$0xff]
        %v364 = vld [vmem:[%s294 + $0x38] sm:$0xff]
        %v365 = vld [vmem:[%s294 + $0x40] sm:$0xff]
        %v366 = vld [vmem:[%s294 + $0x48] sm:$0xff]
        %v367 = vld [vmem:[%s294 + $0x50] sm:$0xff]
        %v368 = vld [vmem:[%s294 + $0x58] sm:$0xff]
        %v369 = vld [vmem:[%s294 + $0x60] sm:$0xff]
        %v370 = vld [vmem:[%s294 + $0x68] sm:$0xff]
        %v371 = vld [vmem:[%s294 + $0x70] sm:$0xff]
        %v372 = vld [vmem:[%s294 + $0x78] sm:$0xff]
        %373 = vmatprep.subr.mxu0 0.0
        %374 = vmatpush1.msra.mxu0 %v357
        %375 = vmatprep.subr.mxu0 0.0
        %376 = vmatpush1.msra.mxu0 %v358
        %377 = vmatprep.subr.mxu0 0.0
        %378 = vmatpush1.msra.mxu0 %v359
        %379 = vmatprep.subr.mxu0 0.0
        %380 = vmatpush1.msra.mxu0 %v360
        %381 = vmatprep.subr.mxu0 0.0
        %382 = vmatpush1.msra.mxu0 %v361
        %383 = vmatprep.subr.mxu0 0.0
        %384 = vmatpush1.msra.mxu0 %v362
        %385 = vmatprep.subr.mxu0 0.0
        %386 = vmatpush1.msra.mxu0 %v363
        %387 = vmatprep.subr.mxu0 0.0
        %388 = vmatpush1.msra.mxu0 %v364
        %389 = vmatprep.subr.mxu0 0.0
        %390 = vmatpush1.msra.mxu0 %v365
        %391 = vmatprep.subr.mxu0 0.0
        %392 = vmatpush1.msra.mxu0 %v366
        %393 = vmatprep.subr.mxu0 0.0
        %394 = vmatpush1.msra.mxu0 %v367
        %395 = vmatprep.subr.mxu0 0.0
        %396 = vmatpush1.msra.mxu0 %v368
        %397 = vmatprep.subr.mxu0 0.0
        %398 = vmatpush1.msra.mxu0 %v369
        %399 = vmatprep.subr.mxu0 0.0
        %400 = vmatpush1.msra.mxu0 %v370
        %401 = vmatprep.subr.mxu0 0.0
        %402 = vmatpush1.msra.mxu0 %v371
        %403 = vmatprep.subr.mxu0 0.0
        %404 = vmatpush1.msra.mxu0 %v372
        %405 = vmatprep.subr.mxu0 0.0
        %406 = vmatpush1.msra.mxu0 0.0
        %407 = vmatprep.subr.mxu0 0.0
        %408 = vmatpush1.msra.mxu0 0.0
        %409 = vmatprep.subr.mxu0 0.0
        %410 = vmatpush1.msra.mxu0 0.0
        %411 = vmatprep.subr.mxu0 0.0
        %412 = vmatpush1.msra.mxu0 0.0
        %413 = vmatprep.subr.mxu0 0.0
        %414 = vmatpush1.msra.mxu0 0.0
        %415 = vmatprep.subr.mxu0 0.0
        %416 = vmatpush1.msra.mxu0 0.0
        %417 = vmatprep.subr.mxu0 0.0
        %418 = vmatpush1.msra.mxu0 0.0
        %419 = vmatprep.subr.mxu0 0.0
        %420 = vmatpush1.msra.mxu0 0.0
        %421 = vmatprep.subr.mxu0 0.0
        %422 = vmatpush1.msra.mxu0 0.0
        %423 = vmatprep.subr.mxu0 0.0
        %424 = vmatpush1.msra.mxu0 0.0
        %425 = vmatprep.subr.mxu0 0.0
        %426 = vmatpush1.msra.mxu0 0.0
        %427 = vmatprep.subr.mxu0 0.0
        %428 = vmatpush1.msra.mxu0 0.0
        %429 = vmatprep.subr.mxu0 0.0
        %430 = vmatpush1.msra.mxu0 0.0
        %431 = vmatprep.subr.mxu0 0.0
        %432 = vmatpush1.msra.mxu0 0.0
        %433 = vmatprep.subr.mxu0 0.0
        %434 = vmatpush1.msra.mxu0 0.0
        %435 = vmatprep.subr.mxu0 0.0
        %436 = vmatpush1.msra.mxu0 0.0
        %437 = vmatprep.mubr.f32.mxu0 0.0
        %438 = vmatmul.mubr.f32.gmra.mrb[0].mxu0 %v341
        %v439 = vpop.f32.mrb[0].mxu0
        %v440 = vadd.f32 0.0, %v439
        %v441 = vpop.f32.mrb[0].mxu0
        %442 = vmatprep.mubr.f32.mxu0 0.0
        %443 = vmatmul.mubr.f32.gmra.mrb[0].mxu0 %v342
        %v444 = vpop.f32.mrb[0].mxu0
        %v445 = vadd.f32 0.0, %v444
        %v446 = vpop.f32.mrb[0].mxu0
        %447 = vmatprep.mubr.f32.mxu0 0.0
        %448 = vmatmul.mubr.f32.gmra.mrb[0].mxu0 %v343
        %v449 = vpop.f32.mrb[0].mxu0
        %v450 = vadd.f32 0.0, %v449
        %v451 = vpop.f32.mrb[0].mxu0
        %452 = vmatprep.mubr.f32.mxu0 0.0
        %453 = vmatmul.mubr.f32.gmra.mrb[0].mxu0 %v344
        %v454 = vpop.f32.mrb[0].mxu0
        %v455 = vadd.f32 0.0, %v454
        %v456 = vpop.f32.mrb[0].mxu0
        %457 = vmatprep.mubr.f32.mxu0 0.0
        %458 = vmatmul.mubr.f32.gmra.mrb[0].mxu0 %v345
        %v459 = vpop.f32.mrb[0].mxu0
        %v460 = vadd.f32 0.0, %v459
        %v461 = vpop.f32.mrb[0].mxu0
        %462 = vmatprep.mubr.f32.mxu0 0.0
        %463 = vmatmul.mubr.f32.gmra.mrb[0].mxu0 %v346
        %v464 = vpop.f32.mrb[0].mxu0
        %v465 = vadd.f32 0.0, %v464
        %v466 = vpop.f32.mrb[0].mxu0
        %467 = vmatprep.mubr.f32.mxu0 0.0
        %468 = vmatmul.mubr.f32.gmra.mrb[0].mxu0 %v347
        %v469 = vpop.f32.mrb[0].mxu0
        %v470 = vadd.f32 0.0, %v469
        %v471 = vpop.f32.mrb[0].mxu0
        %472 = vmatprep.mubr.f32.mxu0 0.0
        %473 = vmatmul.mubr.f32.gmra.mrb[0].mxu0 %v348
        %v474 = vpop.f32.mrb[0].mxu0
        %v475 = vadd.f32 0.0, %v474
        %v476 = vpop.f32.mrb[0].mxu0
        %477 = vmatprep.mubr.f32.mxu0 0.0
        %478 = vmatmul.mubr.f32.gmra.mrb[0].mxu0 %v349
        %v479 = vpop.f32.mrb[0].mxu0
        %v480 = vadd.f32 0.0, %v479
        %v481 = vpop.f32.mrb[0].mxu0
        %482 = vmatprep.mubr.f32.mxu0 0.0
        %483 = vmatmul.mubr.f32.gmra.mrb[0].mxu0 %v350
        %v484 = vpop.f32.mrb[0].mxu0
        %v485 = vadd.f32 0.0, %v484
        %v486 = vpop.f32.mrb[0].mxu0
        %487 = vmatprep.mubr.f32.mxu0 0.0
        %488 = vmatmul.mubr.f32.gmra.mrb[0].mxu0 %v351
        %v489 = vpop.f32.mrb[0].mxu0
        %v490 = vadd.f32 0.0, %v489
        %v491 = vpop.f32.mrb[0].mxu0
        %492 = vmatprep.mubr.f32.mxu0 0.0
        %493 = vmatmul.mubr.f32.gmra.mrb[0].mxu0 %v352
        %v494 = vpop.f32.mrb[0].mxu0
        %v495 = vadd.f32 0.0, %v494
        %v496 = vpop.f32.mrb[0].mxu0
        %497 = vmatprep.mubr.f32.mxu0 0.0
        %498 = vmatmul.mubr.f32.gmra.mrb[0].mxu0 %v353
        %v499 = vpop.f32.mrb[0].mxu0
        %v500 = vadd.f32 0.0, %v499
        %v501 = vpop.f32.mrb[0].mxu0
        %502 = vmatprep.mubr.f32.mxu0 0.0
        %503 = vmatmul.mubr.f32.gmra.mrb[0].mxu0 %v354
        %v504 = vpop.f32.mrb[0].mxu0
        %v505 = vadd.f32 0.0, %v504
        %v506 = vpop.f32.mrb[0].mxu0
        %507 = vmatprep.mubr.f32.mxu0 0.0
        %508 = vmatmul.mubr.f32.gmra.mrb[0].mxu0 %v355
        %v509 = vpop.f32.mrb[0].mxu0
        %v510 = vadd.f32 0.0, %v509
        %v511 = vpop.f32.mrb[0].mxu0
        %512 = vmatprep.mubr.f32.mxu0 0.0
        %513 = vmatmul.mubr.f32.gmra.mrb[0].mxu0 %v356
        %v514 = vpop.f32.mrb[0].mxu0
        %v515 = vadd.f32 0.0, %v514
        %v516 = vpop.f32.mrb[0].mxu0
        %517 = vdwg.mxu0
        %v518 = vadd.f32 %v325, %v440
        %v519 = vadd.f32 %v326, %v445
        %v520 = vadd.f32 %v327, %v450
        %v521 = vadd.f32 %v328, %v455
        %v522 = vadd.f32 %v329, %v460
        %v523 = vadd.f32 %v330, %v465
        %v524 = vadd.f32 %v331, %v470
        %v525 = vadd.f32 %v332, %v475
        %v526 = vadd.f32 %v333, %v480
        %v527 = vadd.f32 %v334, %v485
        %v528 = vadd.f32 %v335, %v490
        %v529 = vadd.f32 %v336, %v495
        %v530 = vadd.f32 %v337, %v500
        %v531 = vadd.f32 %v338, %v505
        %v532 = vadd.f32 %v339, %v510
        %v533 = vadd.f32 %v340, %v515
        %534 = vst [vmem:[#allocation2] sm:$0xff] %v518
        %535 = vst [vmem:[#allocation2 + $0x8] sm:$0xff] %v519
        %536 = vst [vmem:[#allocation2 + $0x10] sm:$0xff] %v520
        %537 = vst [vmem:[#allocation2 + $0x18] sm:$0xff] %v521
        %538 = vst [vmem:[#allocation2 + $0x20] sm:$0xff] %v522
        %539 = vst [vmem:[#allocation2 + $0x28] sm:$0xff] %v523
        %540 = vst [vmem:[#allocation2 + $0x30] sm:$0xff] %v524
        %541 = vst [vmem:[#allocation2 + $0x38] sm:$0xff] %v525
        %542 = vst [vmem:[#allocation2 + $0x40] sm:$0xff] %v526
        %543 = vst [vmem:[#allocation2 + $0x48] sm:$0xff] %v527
        %544 = vst [vmem:[#allocation2 + $0x50] sm:$0xff] %v528
        %545 = vst [vmem:[#allocation2 + $0x58] sm:$0xff] %v529
        %546 = vst [vmem:[#allocation2 + $0x60] sm:$0xff] %v530
        %547 = vst [vmem:[#allocation2 + $0x68] sm:$0xff] %v531
        %548 = vst [vmem:[#allocation2 + $0x70] sm:$0xff] %v532
        %549 = vst [vmem:[#allocation2 + $0x78] sm:$0xff] %v533
        %p550 = scmp.eq.s32.totalorder %s20, 2
        // Predicated region
        $region71: #{gripnet_forward.10} parent=61 // pred_check
          %p551 = pneg %p550
        $region72: #{gripnet_forward.10} parent=61 // pred_check_branch
          %553 = sbr.rel (%p551) target = $region74
        $region73: #{gripnet_forward.10} parent=61 // pred_region
          %v554 = vld [vmem:[#allocation2] sm:$0xff]
          %v555 = vld [vmem:[#allocation2 + $0x8] sm:$0xff]
          %v556 = vld [vmem:[#allocation2 + $0x10] sm:$0xff]
          %v557 = vld [vmem:[#allocation2 + $0x18] sm:$0xff]
          %v558 = vld [vmem:[#allocation2 + $0x20] sm:$0xff]
          %v559 = vld [vmem:[#allocation2 + $0x28] sm:$0xff]
          %v560 = vld [vmem:[#allocation2 + $0x30] sm:$0xff]
          %v561 = vld [vmem:[#allocation2 + $0x38] sm:$0xff]
          %v562 = vld [vmem:[#allocation2 + $0x40] sm:$0xff]
          %v563 = vld [vmem:[#allocation2 + $0x48] sm:$0xff]
          %v564 = vld [vmem:[#allocation2 + $0x50] sm:$0xff]
          %v565 = vld [vmem:[#allocation2 + $0x58] sm:$0xff]
          %v566 = vld [vmem:[#allocation2 + $0x60] sm:$0xff]
          %v567 = vld [vmem:[#allocation2 + $0x68] sm:$0xff]
          %v568 = vld [vmem:[#allocation2 + $0x70] sm:$0xff]
          %v569 = vld [vmem:[#allocation2 + $0x78] sm:$0xff]
          %v570 = vmax.f32 %v554, 0.0
          %v571 = vmax.f32 %v555, 0.0
          %v572 = vmax.f32 %v556, 0.0
          %v573 = vmax.f32 %v557, 0.0
          %v574 = vmax.f32 %v558, 0.0
          %v575 = vmax.f32 %v559, 0.0
          %v576 = vmax.f32 %v560, 0.0
          %v577 = vmax.f32 %v561, 0.0
          %v578 = vmax.f32 %v562, 0.0
          %v579 = vmax.f32 %v563, 0.0
          %v580 = vmax.f32 %v564, 0.0
          %v581 = vmax.f32 %v565, 0.0
          %v582 = vmax.f32 %v566, 0.0
          %v583 = vmax.f32 %v567, 0.0
          %v584 = vmax.f32 %v568, 0.0
          %v585 = vmax.f32 %v569, 0.0
          %586 = vst [vmem:[%s303] sm:$0xff] %v570
          %587 = vst [vmem:[%s303 + $0x8] sm:$0xff] %v571
          %588 = vst [vmem:[%s303 + $0x10] sm:$0xff] %v572
          %589 = vst [vmem:[%s303 + $0x18] sm:$0xff] %v573
          %590 = vst [vmem:[%s303 + $0x20] sm:$0xff] %v574
          %591 = vst [vmem:[%s303 + $0x28] sm:$0xff] %v575
          %592 = vst [vmem:[%s303 + $0x30] sm:$0xff] %v576
          %593 = vst [vmem:[%s303 + $0x38] sm:$0xff] %v577
          %594 = vst [vmem:[%s303 + $0x40] sm:$0xff] %v578
          %595 = vst [vmem:[%s303 + $0x48] sm:$0xff] %v579
          %596 = vst [vmem:[%s303 + $0x50] sm:$0xff] %v580
          %597 = vst [vmem:[%s303 + $0x58] sm:$0xff] %v581
          %598 = vst [vmem:[%s303 + $0x60] sm:$0xff] %v582
          %599 = vst [vmem:[%s303 + $0x68] sm:$0xff] %v583
          %600 = vst [vmem:[%s303 + $0x70] sm:$0xff] %v584
          %601 = vst [vmem:[%s303 + $0x78] sm:$0xff] %v585
        $region74: #{gripnet_forward.10} parent=61 // pred_fallthru
          _
        %s602 = smul.u32 16, %s18
        %p603 = scmp.lt.s32.totalorder %s602, 31
        %s604 = scalar_select %p603, %s602, 31
        %p605 = scmp.lt.s32.totalorder %s19, 0
        %s606 = scalar_select %p605, %s19, 0
        %s607 = sadd.s32 %s606, %s604
        %s608 = smul.addr %s607, 8
        %s609 = scalar_lea.vmem %s2, %s608
        // Predicated region
        $region75: #{gripnet_forward.10} parent=61 // pred_check
          %p610 = pneg %p108
        $region76: #{gripnet_forward.10} parent=61 // pred_check_branch
          %612 = sbr.rel (%p610) target = $region78
        $region77: #{gripnet_forward.10} parent=61 // pred_region
          %s613 = smul.u32 16, %s18
        $region78: #{gripnet_forward.10} parent=61 // pred_fallthru
          _
      $region62: #{gripnet_forward.10} parent=5 // pred_fallthru
        _
      %p614 = scmp.le.s32.totalorder 2, %s8
      // Predicated region
      $region79: #{gripnet_forward.10} parent=5 // pred_check
        %p615 = pneg %p614
      $region80: #{gripnet_forward.10} parent=5 // pred_check_branch
        %617 = sbr.rel (%p615) target = $region82
      $region81: #{gripnet_forward.10} parent=5 // pred_region
        %s618 = ssub.s32 %s8, 2
        // Predicated region
        $region83: #{gripnet_forward.10} parent=81 // pred_check
          %p619 = pneg %p114
        $region84: #{gripnet_forward.10} parent=81 // pred_check_branch
          %621 = sbr.rel (%p619) target = $region86
        $region85: #{gripnet_forward.10} parent=81 // pred_region
          %s622 = smul.u32 16, %s21
          %p623 = scmp.lt.s32.totalorder %s622, 31
          %s624 = scalar_select %p623, %s622, 31
          %p625 = scmp.lt.s32.totalorder %s22, 0
          %s626 = scalar_select %p625, %s22, 0
          %s627 = sadd.s32 %s626, %s624
          %s628 = smul.addr %s627, 8
          %s629 = scalar_lea.vmem %s2, %s628
        $region86: #{gripnet_forward.10} parent=81 // pred_fallthru
          _
      $region82: #{gripnet_forward.10} parent=5 // pred_fallthru
        _
    $region6: #{gripnet_forward.10} parent=1 // loop_footer
      %s12 = sadd.s32 1, %s8
    $region7: #{gripnet_forward.10} parent=1 // loop_footer_branch
      %7 = sbr.rel target = $region3
    $region8: #{gripnet_forward.10} parent=1 // loop_exit
      _

// kernel: gripnet_forward.12
$region0: #{gripnet_forward.12}
  #allocation0 [shape = 'u32[]', space=smem, size = 0x4, offset = 0x4, fixed_abs, tag = 'smem constant byte address 0x4 - core index']
  #allocation1 [shape = 'u32[144,128]{1,0:T(1,128)}', space=vmem, size = 0x12000, scoped, tag = 'internal scratch']
  #allocation2 [shape = 'f32[128,128]{1,0:T(8,128)}', space=vmem, size = 0x10000, scoped, tag = 'scratch operand']
  %s0 = inlined_call_operand.vmem [shape: f32[256,256], index: 0, kind: input, shape index: {}]
  %s1 = inlined_call_operand.vmem [shape: f32[256,256], index: 1, kind: input, shape index: {}]
  %s2 = inlined_call_operand.vmem [shape: f32[1,256], index: 2, kind: input, shape index: {}]
  %s3 = inlined_call_operand.vmem [shape: f32[256,256], index: 3, kind: output, shape index: {0}]
  %s4 = inlined_call_operand.vmem [shape: f32[256,256], index: 4, kind: output, shape index: {1}]
  %5 = xla_tuple %s3, %s4
  %s6 = sld [smem:[#allocation0]]
  $region205: #{gripnet_forward.12} parent=0
    _
  %s8 = ssub.s32 1, %s6
  %s9 = scalar_select 0, %s8, %s6
  $region1: #{gripnet_forward.12} parent=0
    #allocation3 [shape = 'u8[131072]{0}', space=vmem, size = 0x20000, scoped, tag = 'input window, operand 0']
    #allocation4 [shape = 'u8[131072]{0}', space=vmem, size = 0x20000, scoped, tag = 'input window, operand 1']
    #allocation5 [shape = 'u8[131072]{0}', space=vmem, size = 0x20000, scoped, tag = 'output window, operand 0']
    #allocation6 [shape = 'u8[131072]{0}', space=vmem, size = 0x20000, scoped, tag = 'output window, operand 1']
    loop: start=0, step=1, limit=10
    $region2: #{gripnet_forward.12} parent=1 // loop_pre_header
      _
    $region3: #{gripnet_forward.12} parent=1 // loop_header
      %s11 = sphi 0, %s15
      %p12 = scmp.ge.s32.totalorder %s11, 10
      %s18 = sphi 0, %s37
      %s19 = sphi 0, %s33
      %s20 = sphi 0, %s29
      %s21 = sphi 0, %s18
      %s22 = sphi 0, %s19
      %s23 = sphi 0, %s20
      %s24 = sphi 0, %s21
      %s25 = sphi 0, %s22
      %s26 = sphi 0, %s23
      %s42 = sphi 0, %s44
      %s45 = sphi 0, %s42
      %s46 = sphi 0, %s45
      %s62 = sphi 0, %s46
      %s70 = sphi 0, %s72
      %s73 = sphi 0, %s70
      %s74 = sphi 0, %s73
      %s90 = sphi 0, %s74
      %s96 = sphi 0, %s98
      %s99 = sphi 0, %s96
      %s100 = sphi 0, %s99
      %s116 = sphi 0, %s100
      %s124 = sphi 0, %s126
      %s127 = sphi 0, %s124
      %s128 = sphi 0, %s127
      %s144 = sphi 0, %s128
      %s152 = sphi 0, %s154
      %s155 = sphi 0, %s152
      %s156 = sphi 0, %s155
      %s172 = sphi 0, %s156
    $region4: #{gripnet_forward.12} parent=1 // loop_header_branch
      %14 = sbr.rel (%p12) target = $region8
    $region5: #{gripnet_forward.12} parent=1 // loop_body
      %s16 = ssub.s32 %s11, 1
      %s17 = ssub.s32 %s11, 2
      %s27 = sadd.s32 1, %s20
      %p28 = scmp.ge.s32.totalorder %s27, 2
      %s29 = scalar_select %p28, 0, %s27
      %s30 = sadd.s32 1, %s19
      %s31 = scalar_select %p28, %s30, %s19
      %p32 = scmp.ge.s32.totalorder %s31, 2
      %s33 = scalar_select %p32, 0, %s31
      %s34 = sadd.s32 1, %s18
      %s35 = scalar_select %p32, %s34, %s18
      %p36 = scmp.ge.s32.totalorder %s35, 2
      %s37 = scalar_select %p36, 0, %s35
      %s38 = ssub.s32 %s18, %s37
      %s39 = ssub.s32 %s20, %s29
      %s40 = sor.u32 %s38, %s39
      %p41 = scmp.eq.s32.totalorder %s40, 0
      %s43 = sadd.s32 %s42, 1
      %s44 = scalar_select %p41, %s42, %s43
      %p47 = pneg %p41
      %p48 = scmp.eq.s32.totalorder %s11, 7
      %p49 = por %p47, %p48
      %p50 = scmp.ne.s32.totalorder %s42, %s45
      %p51 = scmp.eq.s32.totalorder %s11, 0
      %p52 = por %p50, %p51
      %p53 = scmp.ne.s32.totalorder %s42, %s45
      %p54 = scmp.eq.s32.totalorder %s16, 7
      %p55 = por %p53, %p54
      %p56 = scmp.ne.s32.totalorder %s45, %s46
      %p57 = scmp.eq.s32.totalorder %s16, 0
      %p58 = por %p56, %p57
      %p59 = scmp.ne.s32.totalorder %s45, %s46
      %p60 = scmp.eq.s32.totalorder %s17, 7
      %p61 = por %p59, %p60
      %p63 = scmp.ne.s32.totalorder %s46, %s62
      %p64 = scmp.eq.s32.totalorder %s17, 0
      %p65 = por %p63, %p64
      %s66 = ssub.s32 %s20, %s29
      %s67 = ssub.s32 %s19, %s33
      %s68 = sor.u32 %s66, %s67
      %p69 = scmp.eq.s32.totalorder %s68, 0
      %s71 = sadd.s32 %s70, 1
      %s72 = scalar_select %p69, %s70, %s71
      %p75 = pneg %p69
      %p76 = scmp.eq.s32.totalorder %s11, 7
      %p77 = por %p75, %p76
      %p78 = scmp.ne.s32.totalorder %s70, %s73
      %p79 = scmp.eq.s32.totalorder %s11, 0
      %p80 = por %p78, %p79
      %p81 = scmp.ne.s32.totalorder %s70, %s73
      %p82 = scmp.eq.s32.totalorder %s16, 7
      %p83 = por %p81, %p82
      %p84 = scmp.ne.s32.totalorder %s73, %s74
      %p85 = scmp.eq.s32.totalorder %s16, 0
      %p86 = por %p84, %p85
      %p87 = scmp.ne.s32.totalorder %s73, %s74
      %p88 = scmp.eq.s32.totalorder %s17, 7
      %p89 = por %p87, %p88
      %p91 = scmp.ne.s32.totalorder %s74, %s90
      %p92 = scmp.eq.s32.totalorder %s17, 0
      %p93 = por %p91, %p92
      %s94 = ssub.s32 %s19, %s33
      %p95 = scmp.eq.s32.totalorder %s94, 0
      %s97 = sadd.s32 %s96, 1
      %s98 = scalar_select %p95, %s96, %s97
      %p101 = pneg %p95
      %p102 = scmp.eq.s32.totalorder %s11, 7
      %p103 = por %p101, %p102
      %p104 = scmp.ne.s32.totalorder %s96, %s99
      %p105 = scmp.eq.s32.totalorder %s11, 0
      %p106 = por %p104, %p105
      %p107 = scmp.ne.s32.totalorder %s96, %s99
      %p108 = scmp.eq.s32.totalorder %s16, 7
      %p109 = por %p107, %p108
      %p110 = scmp.ne.s32.totalorder %s99, %s100
      %p111 = scmp.eq.s32.totalorder %s16, 0
      %p112 = por %p110, %p111
      %p113 = scmp.ne.s32.totalorder %s99, %s100
      %p114 = scmp.eq.s32.totalorder %s17, 7
      %p115 = por %p113, %p114
      %p117 = scmp.ne.s32.totalorder %s100, %s116
      %p118 = scmp.eq.s32.totalorder %s17, 0
      %p119 = por %p117, %p118
      %s120 = ssub.s32 %s18, %s37
      %s121 = ssub.s32 %s19, %s33
      %s122 = sor.u32 %s120, %s121
      %p123 = scmp.eq.s32.totalorder %s122, 0
      %s125 = sadd.s32 %s124, 1
      %s126 = scalar_select %p123, %s124, %s125
      %p129 = pneg %p123
      %p130 = scmp.eq.s32.totalorder %s11, 7
      %p131 = por %p129, %p130
      %p132 = scmp.ne.s32.totalorder %s124, %s127
      %p133 = scmp.eq.s32.totalorder %s11, 0
      %p134 = por %p132, %p133
      %p135 = scmp.ne.s32.totalorder %s124, %s127
      %p136 = scmp.eq.s32.totalorder %s16, 7
      %p137 = por %p135, %p136
      %p138 = scmp.ne.s32.totalorder %s127, %s128
      %p139 = scmp.eq.s32.totalorder %s16, 0
      %p140 = por %p138, %p139
      %p141 = scmp.ne.s32.totalorder %s127, %s128
      %p142 = scmp.eq.s32.totalorder %s17, 7
      %p143 = por %p141, %p142
      %p145 = scmp.ne.s32.totalorder %s128, %s144
      %p146 = scmp.eq.s32.totalorder %s17, 0
      %p147 = por %p145, %p146
      %s148 = ssub.s32 %s18, %s37
      %s149 = ssub.s32 %s19, %s33
      %s150 = sor.u32 %s148, %s149
      %p151 = scmp.eq.s32.totalorder %s150, 0
      %s153 = sadd.s32 %s152, 1
      %s154 = scalar_select %p151, %s152, %s153
      %p157 = pneg %p151
      %p158 = scmp.eq.s32.totalorder %s11, 7
      %p159 = por %p157, %p158
      %p160 = scmp.ne.s32.totalorder %s152, %s155
      %p161 = scmp.eq.s32.totalorder %s11, 0
      %p162 = por %p160, %p161
      %p163 = scmp.ne.s32.totalorder %s152, %s155
      %p164 = scmp.eq.s32.totalorder %s16, 7
      %p165 = por %p163, %p164
      %p166 = scmp.ne.s32.totalorder %s155, %s156
      %p167 = scmp.eq.s32.totalorder %s16, 0
      %p168 = por %p166, %p167
      %p169 = scmp.ne.s32.totalorder %s155, %s156
      %p170 = scmp.eq.s32.totalorder %s17, 7
      %p171 = por %p169, %p170
      %p173 = scmp.ne.s32.totalorder %s156, %s172
      %p174 = scmp.eq.s32.totalorder %s17, 0
      %p175 = por %p173, %p174
      %p176 = scmp.le.s32.totalorder 1, %s11
      %p177 = scmp.lt.s32.totalorder %s11, 9
      %p178 = pnand %p176, %p177
      %p179 = pneg %p178
      // Predicated region
      $region9: #{gripnet_forward.12} parent=5 // pred_check
        _
      $region10: #{gripnet_forward.12} parent=5 // pred_check_branch
        %181 = sbr.rel (%p178) target = $region12
      $region11: #{gripnet_forward.12} parent=5 // pred_region
        %s182 = ssub.s32 %s11, 1
      $region12: #{gripnet_forward.12} parent=5 // pred_fallthru
        _
      %p183 = scmp.lt.s32.totalorder %s11, 8
      // Predicated region
      $region13: #{gripnet_forward.12} parent=5 // pred_check
        %p184 = pneg %p183
      $region14: #{gripnet_forward.12} parent=5 // pred_check_branch
        %186 = sbr.rel (%p184) target = $region16
      $region15: #{gripnet_forward.12} parent=5 // pred_region
        // Predicated region
        $region17: #{gripnet_forward.12} parent=15 // pred_check
          %p187 = pneg %p52
        $region18: #{gripnet_forward.12} parent=15 // pred_check_branch
          %189 = sbr.rel (%p187) target = $region20
        $region19: #{gripnet_forward.12} parent=15 // pred_region
          %s190 = sand.u32 %s42, 1
          %s191 = sand.u32 %s42, 1
          %s192 = smul.addr %s191, 128
          %s193 = scalar_lea.vmem [#allocation3], %s192
          %s194 = smul.u32 16, %s18
          %s195 = smul.addr %s194, 2
          %s196 = sadd.s32 %s20, %s195
          %s197 = smul.addr %s196, 8
          %s198 = scalar_lea.vmem %s0, %s197
          // Predicated region
          $region21: #{gripnet_forward.12} parent=19 // pred_check
            _
          $region22: #{gripnet_forward.12} parent=19 // pred_check_branch
            %200 = sbr.rel (0) target = $region24
          $region23: #{gripnet_forward.12} parent=19 // pred_region
            // Predicated region
            $region25: #{gripnet_forward.12} parent=23 // pred_check
              _
            $region26: #{gripnet_forward.12} parent=23 // pred_check_branch
              %202 = sbr.rel (0) target = $region28
            $region27: #{gripnet_forward.12} parent=23 // pred_region
              // Predicated region
              $region40: #{gripnet_forward.12} parent=27 // pred_check
                _
              $region41: #{gripnet_forward.12} parent=27 // pred_check_branch
                %247 = sbr.rel (0) target = $region43
              $region42: #{gripnet_forward.12} parent=27 // pred_region
                loop: start=0, step=1, limit=1
                $region44: #{gripnet_forward.12} parent=42 // loop_pre_header
                  _
                $region45: #{gripnet_forward.12} parent=42 // loop_header
                  %s249 = sphi 0, %s253
                  %p250 = scmp.ge.s32.totalorder %s249, 1
                  %s254 = sphi %s198, %s198
                  %s255 = sphi %s193, %s193
                $region46: #{gripnet_forward.12} parent=42 // loop_header_branch
                  %252 = sbr.rel (%p250) target = $region50
                $region47: #{gripnet_forward.12} parent=42 // loop_body
                  %v256 = vld [vmem:[%s254] sm:$0xff]
                  %257 = vst [vmem:[%s255] sm:$0xff] %v256
                  %v258 = vld [vmem:[%s254 + $0x10] sm:$0xff]
                  %259 = vst [vmem:[%s255 + $0x8] sm:$0xff] %v258
                  %v260 = vld [vmem:[%s254 + $0x20] sm:$0xff]
                  %261 = vst [vmem:[%s255 + $0x10] sm:$0xff] %v260
                  %v262 = vld [vmem:[%s254 + $0x30] sm:$0xff]
                  %263 = vst [vmem:[%s255 + $0x18] sm:$0xff] %v262
                  %v264 = vld [vmem:[%s254 + $0x40] sm:$0xff]
                  %265 = vst [vmem:[%s255 + $0x20] sm:$0xff] %v264
                  %v266 = vld [vmem:[%s254 + $0x50] sm:$0xff]
                  %267 = vst [vmem:[%s255 + $0x28] sm:$0xff] %v266
                  %v268 = vld [vmem:[%s254 + $0x60] sm:$0xff]
                  %269 = vst [vmem:[%s255 + $0x30] sm:$0xff] %v268
                  %v270 = vld [vmem:[%s254 + $0x70] sm:$0xff]
                  %271 = vst [vmem:[%s255 + $0x38] sm:$0xff] %v270
                  %v272 = vld [vmem:[%s254 + $0x80] sm:$0xff]
                  %273 = vst [vmem:[%s255 + $0x40] sm:$0xff] %v272
                  %v274 = vld [vmem:[%s254 + $0x90] sm:$0xff]
                  %275 = vst [vmem:[%s255 + $0x48] sm:$0xff] %v274
                  %v276 = vld [vmem:[%s254 + $0xa0] sm:$0xff]
                  %277 = vst [vmem:[%s255 + $0x50] sm:$0xff] %v276
                  %v278 = vld [vmem:[%s254 + $0xb0] sm:$0xff]
                  %279 = vst [vmem:[%s255 + $0x58] sm:$0xff] %v278
                  %v280 = vld [vmem:[%s254 + $0xc0] sm:$0xff]
                  %281 = vst [vmem:[%s255 + $0x60] sm:$0xff] %v280
                  %v282 = vld [vmem:[%s254 + $0xd0] sm:$0xff]
                  %283 = vst [vmem:[%s255 + $0x68] sm:$0xff] %v282
                  %v284 = vld [vmem:[%s254 + $0xe0] sm:$0xff]
                  %285 = vst [vmem:[%s255 + $0x70] sm:$0xff] %v284
                  %v286 = vld [vmem:[%s254 + $0xf0] sm:$0xff]
                  %287 = vst [vmem:[%s255 + $0x78] sm:$0xff] %v286
                $region48: #{gripnet_forward.12} parent=42 // loop_footer
                  %s253 = sadd.s32 1, %s249
                $region49: #{gripnet_forward.12} parent=42 // loop_footer_branch
                  %248 = sbr.rel target = $region45
                $region50: #{gripnet_forward.12} parent=42 // loop_exit
                  _
              $region43: #{gripnet_forward.12} parent=27 // pred_fallthru
                _
              // Predicated region
              $region51: #{gripnet_forward.12} parent=27 // pred_check
                _
              $region52: #{gripnet_forward.12} parent=27 // pred_check_branch
                %289 = sbr.rel target = $region54
              $region53: #{gripnet_forward.12} parent=27 // pred_region
                _
              $region54: #{gripnet_forward.12} parent=27 // pred_fallthru
                _
            $region28: #{gripnet_forward.12} parent=23 // pred_fallthru
              _
            // Predicated region
            $region29: #{gripnet_forward.12} parent=23 // pred_check
              _
            $region30: #{gripnet_forward.12} parent=23 // pred_check_branch
              %204 = sbr.rel target = $region32
            $region31: #{gripnet_forward.12} parent=23 // pred_region
              loop: start=0, step=1, limit=1
              $region33: #{gripnet_forward.12} parent=31 // loop_pre_header
                _
              $region34: #{gripnet_forward.12} parent=31 // loop_header
                %s207 = sphi 0, %s211
                %p208 = scmp.ge.s32.totalorder %s207, 1
                %s212 = sphi %s198, %s198
                %s213 = sphi %s193, %s193
              $region35: #{gripnet_forward.12} parent=31 // loop_header_branch
                %210 = sbr.rel (%p208) target = $region39
              $region36: #{gripnet_forward.12} parent=31 // loop_body
                %v214 = vld [vmem:[%s212] sm:$0xff]
                %215 = vst [vmem:[%s213] sm:$0xff] %v214
                %v216 = vld [vmem:[%s212 + $0x10] sm:$0xff]
                %217 = vst [vmem:[%s213 + $0x8] sm:$0xff] %v216
                %v218 = vld [vmem:[%s212 + $0x20] sm:$0xff]
                %219 = vst [vmem:[%s213 + $0x10] sm:$0xff] %v218
                %v220 = vld [vmem:[%s212 + $0x30] sm:$0xff]
                %221 = vst [vmem:[%s213 + $0x18] sm:$0xff] %v220
                %v222 = vld [vmem:[%s212 + $0x40] sm:$0xff]
                %223 = vst [vmem:[%s213 + $0x20] sm:$0xff] %v222
                %v224 = vld [vmem:[%s212 + $0x50] sm:$0xff]
                %225 = vst [vmem:[%s213 + $0x28] sm:$0xff] %v224
                %v226 = vld [vmem:[%s212 + $0x60] sm:$0xff]
                %227 = vst [vmem:[%s213 + $0x30] sm:$0xff] %v226
                %v228 = vld [vmem:[%s212 + $0x70] sm:$0xff]
                %229 = vst [vmem:[%s213 + $0x38] sm:$0xff] %v228
                %v230 = vld [vmem:[%s212 + $0x80] sm:$0xff]
                %231 = vst [vmem:[%s213 + $0x40] sm:$0xff] %v230
                %v232 = vld [vmem:[%s212 + $0x90] sm:$0xff]
                %233 = vst [vmem:[%s213 + $0x48] sm:$0xff] %v232
                %v234 = vld [vmem:[%s212 + $0xa0] sm:$0xff]
                %235 = vst [vmem:[%s213 + $0x50] sm:$0xff] %v234
                %v236 = vld [vmem:[%s212 + $0xb0] sm:$0xff]
                %237 = vst [vmem:[%s213 + $0x58] sm:$0xff] %v236
                %v238 = vld [vmem:[%s212 + $0xc0] sm:$0xff]
                %239 = vst [vmem:[%s213 + $0x60] sm:$0xff] %v238
                %v240 = vld [vmem:[%s212 + $0xd0] sm:$0xff]
                %241 = vst [vmem:[%s213 + $0x68] sm:$0xff] %v240
                %v242 = vld [vmem:[%s212 + $0xe0] sm:$0xff]
                %243 = vst [vmem:[%s213 + $0x70] sm:$0xff] %v242
                %v244 = vld [vmem:[%s212 + $0xf0] sm:$0xff]
                %245 = vst [vmem:[%s213 + $0x78] sm:$0xff] %v244
              $region37: #{gripnet_forward.12} parent=31 // loop_footer
                %s211 = sadd.s32 1, %s207
              $region38: #{gripnet_forward.12} parent=31 // loop_footer_branch
                %206 = sbr.rel target = $region34
              $region39: #{gripnet_forward.12} parent=31 // loop_exit
                _
            $region32: #{gripnet_forward.12} parent=23 // pred_fallthru
              _
          $region24: #{gripnet_forward.12} parent=19 // pred_fallthru
            _
          %290 = vnop
        $region20: #{gripnet_forward.12} parent=15 // pred_fallthru
          _
        // Predicated region
        $region55: #{gripnet_forward.12} parent=15 // pred_check
          %p291 = pneg %p80
        $region56: #{gripnet_forward.12} parent=15 // pred_check_branch
          %293 = sbr.rel (%p291) target = $region58
        $region57: #{gripnet_forward.12} parent=15 // pred_region
          %s294 = sand.u32 %s70, 1
          %s295 = sand.u32 %s70, 1
          %s296 = smul.addr %s295, 128
          %s297 = scalar_lea.vmem [#allocation4], %s296
          %s298 = smul.u32 16, %s20
          %s299 = smul.addr %s298, 2
          %s300 = sadd.s32 %s19, %s299
          %s301 = smul.addr %s300, 8
          %s302 = scalar_lea.vmem %s1, %s301
          // Predicated region
          $region59: #{gripnet_forward.12} parent=57 // pred_check
            _
          $region60: #{gripnet_forward.12} parent=57 // pred_check_branch
            %304 = sbr.rel (0) target = $region62
          $region61: #{gripnet_forward.12} parent=57 // pred_region
            // Predicated region
            $region63: #{gripnet_forward.12} parent=61 // pred_check
              _
            $region64: #{gripnet_forward.12} parent=61 // pred_check_branch
              %306 = sbr.rel (0) target = $region66
            $region65: #{gripnet_forward.12} parent=61 // pred_region
              // Predicated region
              $region78: #{gripnet_forward.12} parent=65 // pred_check
                _
              $region79: #{gripnet_forward.12} parent=65 // pred_check_branch
                %351 = sbr.rel (0) target = $region81
              $region80: #{gripnet_forward.12} parent=65 // pred_region
                loop: start=0, step=1, limit=1
                $region82: #{gripnet_forward.12} parent=80 // loop_pre_header
                  _
                $region83: #{gripnet_forward.12} parent=80 // loop_header
                  %s353 = sphi 0, %s357
                  %p354 = scmp.ge.s32.totalorder %s353, 1
                  %s358 = sphi %s302, %s302
                  %s359 = sphi %s297, %s297
                $region84: #{gripnet_forward.12} parent=80 // loop_header_branch
                  %356 = sbr.rel (%p354) target = $region88
                $region85: #{gripnet_forward.12} parent=80 // loop_body
                  %v360 = vld [vmem:[%s358] sm:$0xff]
                  %361 = vst [vmem:[%s359] sm:$0xff] %v360
                  %v362 = vld [vmem:[%s358 + $0x10] sm:$0xff]
                  %363 = vst [vmem:[%s359 + $0x8] sm:$0xff] %v362
                  %v364 = vld [vmem:[%s358 + $0x20] sm:$0xff]
                  %365 = vst [vmem:[%s359 + $0x10] sm:$0xff] %v364
                  %v366 = vld [vmem:[%s358 + $0x30] sm:$0xff]
                  %367 = vst [vmem:[%s359 + $0x18] sm:$0xff] %v366
                  %v368 = vld [vmem:[%s358 + $0x40] sm:$0xff]
                  %369 = vst [vmem:[%s359 + $0x20] sm:$0xff] %v368
                  %v370 = vld [vmem:[%s358 + $0x50] sm:$0xff]
                  %371 = vst [vmem:[%s359 + $0x28] sm:$0xff] %v370
                  %v372 = vld [vmem:[%s358 + $0x60] sm:$0xff]
                  %373 = vst [vmem:[%s359 + $0x30] sm:$0xff] %v372
                  %v374 = vld [vmem:[%s358 + $0x70] sm:$0xff]
                  %375 = vst [vmem:[%s359 + $0x38] sm:$0xff] %v374
                  %v376 = vld [vmem:[%s358 + $0x80] sm:$0xff]
                  %377 = vst [vmem:[%s359 + $0x40] sm:$0xff] %v376
                  %v378 = vld [vmem:[%s358 + $0x90] sm:$0xff]
                  %379 = vst [vmem:[%s359 + $0x48] sm:$0xff] %v378
                  %v380 = vld [vmem:[%s358 + $0xa0] sm:$0xff]
                  %381 = vst [vmem:[%s359 + $0x50] sm:$0xff] %v380
                  %v382 = vld [vmem:[%s358 + $0xb0] sm:$0xff]
                  %383 = vst [vmem:[%s359 + $0x58] sm:$0xff] %v382
                  %v384 = vld [vmem:[%s358 + $0xc0] sm:$0xff]
                  %385 = vst [vmem:[%s359 + $0x60] sm:$0xff] %v384
                  %v386 = vld [vmem:[%s358 + $0xd0] sm:$0xff]
                  %387 = vst [vmem:[%s359 + $0x68] sm:$0xff] %v386
                  %v388 = vld [vmem:[%s358 + $0xe0] sm:$0xff]
                  %389 = vst [vmem:[%s359 + $0x70] sm:$0xff] %v388
                  %v390 = vld [vmem:[%s358 + $0xf0] sm:$0xff]
                  %391 = vst [vmem:[%s359 + $0x78] sm:$0xff] %v390
                $region86: #{gripnet_forward.12} parent=80 // loop_footer
                  %s357 = sadd.s32 1, %s353
                $region87: #{gripnet_forward.12} parent=80 // loop_footer_branch
                  %352 = sbr.rel target = $region83
                $region88: #{gripnet_forward.12} parent=80 // loop_exit
                  _
              $region81: #{gripnet_forward.12} parent=65 // pred_fallthru
                _
              // Predicated region
              $region89: #{gripnet_forward.12} parent=65 // pred_check
                _
              $region90: #{gripnet_forward.12} parent=65 // pred_check_branch
                %393 = sbr.rel target = $region92
              $region91: #{gripnet_forward.12} parent=65 // pred_region
                _
              $region92: #{gripnet_forward.12} parent=65 // pred_fallthru
                _
            $region66: #{gripnet_forward.12} parent=61 // pred_fallthru
              _
            // Predicated region
            $region67: #{gripnet_forward.12} parent=61 // pred_check
              _
            $region68: #{gripnet_forward.12} parent=61 // pred_check_branch
              %308 = sbr.rel target = $region70
            $region69: #{gripnet_forward.12} parent=61 // pred_region
              loop: start=0, step=1, limit=1
              $region71: #{gripnet_forward.12} parent=69 // loop_pre_header
                _
              $region72: #{gripnet_forward.12} parent=69 // loop_header
                %s311 = sphi 0, %s315
                %p312 = scmp.ge.s32.totalorder %s311, 1
                %s316 = sphi %s302, %s302
                %s317 = sphi %s297, %s297
              $region73: #{gripnet_forward.12} parent=69 // loop_header_branch
                %314 = sbr.rel (%p312) target = $region77
              $region74: #{gripnet_forward.12} parent=69 // loop_body
                %v318 = vld [vmem:[%s316] sm:$0xff]
                %319 = vst [vmem:[%s317] sm:$0xff] %v318
                %v320 = vld [vmem:[%s316 + $0x10] sm:$0xff]
                %321 = vst [vmem:[%s317 + $0x8] sm:$0xff] %v320
                %v322 = vld [vmem:[%s316 + $0x20] sm:$0xff]
                %323 = vst [vmem:[%s317 + $0x10] sm:$0xff] %v322
                %v324 = vld [vmem:[%s316 + $0x30] sm:$0xff]
                %325 = vst [vmem:[%s317 + $0x18] sm:$0xff] %v324
                %v326 = vld [vmem:[%s316 + $0x40] sm:$0xff]
                %327 = vst [vmem:[%s317 + $0x20] sm:$0xff] %v326
                %v328 = vld [vmem:[%s316 + $0x50] sm:$0xff]
                %329 = vst [vmem:[%s317 + $0x28] sm:$0xff] %v328
                %v330 = vld [vmem:[%s316 + $0x60] sm:$0xff]
                %331 = vst [vmem:[%s317 + $0x30] sm:$0xff] %v330
                %v332 = vld [vmem:[%s316 + $0x70] sm:$0xff]
                %333 = vst [vmem:[%s317 + $0x38] sm:$0xff] %v332
                %v334 = vld [vmem:[%s316 + $0x80] sm:$0xff]
                %335 = vst [vmem:[%s317 + $0x40] sm:$0xff] %v334
                %v336 = vld [vmem:[%s316 + $0x90] sm:$0xff]
                %337 = vst [vmem:[%s317 + $0x48] sm:$0xff] %v336
                %v338 = vld [vmem:[%s316 + $0xa0] sm:$0xff]
                %339 = vst [vmem:[%s317 + $0x50] sm:$0xff] %v338
                %v340 = vld [vmem:[%s316 + $0xb0] sm:$0xff]
                %341 = vst [vmem:[%s317 + $0x58] sm:$0xff] %v340
                %v342 = vld [vmem:[%s316 + $0xc0] sm:$0xff]
                %343 = vst [vmem:[%s317 + $0x60] sm:$0xff] %v342
                %v344 = vld [vmem:[%s316 + $0xd0] sm:$0xff]
                %345 = vst [vmem:[%s317 + $0x68] sm:$0xff] %v344
                %v346 = vld [vmem:[%s316 + $0xe0] sm:$0xff]
                %347 = vst [vmem:[%s317 + $0x70] sm:$0xff] %v346
                %v348 = vld [vmem:[%s316 + $0xf0] sm:$0xff]
                %349 = vst [vmem:[%s317 + $0x78] sm:$0xff] %v348
              $region75: #{gripnet_forward.12} parent=69 // loop_footer
                %s315 = sadd.s32 1, %s311
              $region76: #{gripnet_forward.12} parent=69 // loop_footer_branch
                %310 = sbr.rel target = $region72
              $region77: #{gripnet_forward.12} parent=69 // loop_exit
                _
            $region70: #{gripnet_forward.12} parent=61 // pred_fallthru
              _
          $region62: #{gripnet_forward.12} parent=57 // pred_fallthru
            _
          %394 = vnop
        $region58: #{gripnet_forward.12} parent=15 // pred_fallthru
          _
        // Predicated region
        $region93: #{gripnet_forward.12} parent=15 // pred_check
          %p395 = pneg %p106
        $region94: #{gripnet_forward.12} parent=15 // pred_check_branch
          %397 = sbr.rel (%p395) target = $region96
        $region95: #{gripnet_forward.12} parent=15 // pred_region
          %p398 = scmp.lt.s32.totalorder %s19, 1
          %s399 = scalar_select %p398, %s19, 1
          %s400 = scalar_lea.vmem %s2, %s399
        $region96: #{gripnet_forward.12} parent=15 // pred_fallthru
          _
      $region16: #{gripnet_forward.12} parent=5 // pred_fallthru
        _
      %p401 = scmp.le.s32.totalorder 1, %s11
      %p402 = scmp.lt.s32.totalorder %s11, 9
      %p403 = pnand %p401, %p402
      %p404 = pneg %p403
      // Predicated region
      $region97: #{gripnet_forward.12} parent=5 // pred_check
        _
      $region98: #{gripnet_forward.12} parent=5 // pred_check_branch
        %406 = sbr.rel (%p403) target = $region100
      $region99: #{gripnet_forward.12} parent=5 // pred_region
        %s407 = ssub.s32 %s11, 1
        %s408 = sand.u32 %s45, 1
        %s409 = sand.u32 %s45, 1
        %s410 = smul.addr %s409, 128
        %s411 = scalar_lea.vmem [#allocation3], %s410
        // Predicated region
        $region101: #{gripnet_forward.12} parent=99 // pred_check
          %p412 = pneg %p58
        $region102: #{gripnet_forward.12} parent=99 // pred_check_branch
          %414 = sbr.rel (%p412) target = $region104
        $region103: #{gripnet_forward.12} parent=99 // pred_region
          _
        $region104: #{gripnet_forward.12} parent=99 // pred_fallthru
          _
        %s415 = sand.u32 %s73, 1
        %s416 = sand.u32 %s73, 1
        %s417 = smul.addr %s416, 128
        %s418 = scalar_lea.vmem [#allocation4], %s417
        // Predicated region
        $region105: #{gripnet_forward.12} parent=99 // pred_check
          %p419 = pneg %p86
        $region106: #{gripnet_forward.12} parent=99 // pred_check_branch
          %421 = sbr.rel (%p419) target = $region108
        $region107: #{gripnet_forward.12} parent=99 // pred_region
          _
        $region108: #{gripnet_forward.12} parent=99 // pred_fallthru
          _
        %s422 = sand.u32 %s45, 1
        %s423 = sand.u32 %s45, 1
        %s424 = smul.addr %s423, 128
        %s425 = scalar_lea.vmem [#allocation3], %s424
        %p426 = pneg %p58
        %p427 = pneg %p55
        %s428 = sand.u32 %s73, 1
        %s429 = sand.u32 %s73, 1
        %s430 = smul.addr %s429, 128
        %s431 = scalar_lea.vmem [#allocation4], %s430
        %p432 = pneg %p86
        %p433 = pneg %p83
        %p434 = scmp.lt.s32.totalorder %s22, 1
        %s435 = scalar_select %p434, %s22, 1
        %s436 = scalar_lea.vmem %s2, %s435
        %p437 = pneg %p112
        %p438 = pneg %p109
        %p439 = pneg %p140
        %p440 = pneg %p137
        %s441 = sand.u32 %s127, 1
        %s442 = sand.u32 %s127, 1
        %s443 = smul.addr %s442, 128
        %s444 = scalar_lea.vmem [#allocation5], %s443
        %p445 = pneg %p168
        %p446 = pneg %p165
        %s447 = sand.u32 %s155, 1
        %s448 = sand.u32 %s155, 1
        %s449 = smul.addr %s448, 128
        %s450 = scalar_lea.vmem [#allocation6], %s449
        %s451 = smul.u32 16, %s21
        %s452 = smul.u32 16, %s23
        %p453 = scmp.lt.s32.totalorder %s22, 1
        %s454 = scalar_select %p453, %s22, 1
        %s455 = scalar_lea.vmem %s2, %s454
        %s456 = smul.u32 16, %s21
        %s457 = smul.u32 16, %s21
        %p458 = scmp.eq.s32.totalorder %s23, 0
        // Predicated region
        $region109: #{gripnet_forward.12} parent=99 // pred_check
          %p459 = pneg %p458
        $region110: #{gripnet_forward.12} parent=99 // pred_check_branch
          %461 = sbr.rel (%p459) target = $region112
        $region111: #{gripnet_forward.12} parent=99 // pred_region
          %462 = vst [vmem:[#allocation2] sm:$0xff] 0.0
          %463 = vst [vmem:[#allocation2 + $0x8] sm:$0xff] 0.0
          %464 = vst [vmem:[#allocation2 + $0x10] sm:$0xff] 0.0
          %465 = vst [vmem:[#allocation2 + $0x18] sm:$0xff] 0.0
          %466 = vst [vmem:[#allocation2 + $0x20] sm:$0xff] 0.0
          %467 = vst [vmem:[#allocation2 + $0x28] sm:$0xff] 0.0
          %468 = vst [vmem:[#allocation2 + $0x30] sm:$0xff] 0.0
          %469 = vst [vmem:[#allocation2 + $0x38] sm:$0xff] 0.0
          %470 = vst [vmem:[#allocation2 + $0x40] sm:$0xff] 0.0
          %471 = vst [vmem:[#allocation2 + $0x48] sm:$0xff] 0.0
          %472 = vst [vmem:[#allocation2 + $0x50] sm:$0xff] 0.0
          %473 = vst [vmem:[#allocation2 + $0x58] sm:$0xff] 0.0
          %474 = vst [vmem:[#allocation2 + $0x60] sm:$0xff] 0.0
          %475 = vst [vmem:[#allocation2 + $0x68] sm:$0xff] 0.0
          %476 = vst [vmem:[#allocation2 + $0x70] sm:$0xff] 0.0
          %477 = vst [vmem:[#allocation2 + $0x78] sm:$0xff] 0.0
        $region112: #{gripnet_forward.12} parent=99 // pred_fallthru
          _
        %v478 = vld [vmem:[#allocation2] sm:$0xff]
        %v479 = vld [vmem:[#allocation2 + $0x8] sm:$0xff]
        %v480 = vld [vmem:[#allocation2 + $0x10] sm:$0xff]
        %v481 = vld [vmem:[#allocation2 + $0x18] sm:$0xff]
        %v482 = vld [vmem:[#allocation2 + $0x20] sm:$0xff]
        %v483 = vld [vmem:[#allocation2 + $0x28] sm:$0xff]
        %v484 = vld [vmem:[#allocation2 + $0x30] sm:$0xff]
        %v485 = vld [vmem:[#allocation2 + $0x38] sm:$0xff]
        %v486 = vld [vmem:[#allocation2 + $0x40] sm:$0xff]
        %v487 = vld [vmem:[#allocation2 + $0x48] sm:$0xff]
        %v488 = vld [vmem:[#allocation2 + $0x50] sm:$0xff]
        %v489 = vld [vmem:[#allocation2 + $0x58] sm:$0xff]
        %v490 = vld [vmem:[#allocation2 + $0x60] sm:$0xff]
        %v491 = vld [vmem:[#allocation2 + $0x68] sm:$0xff]
        %v492 = vld [vmem:[#allocation2 + $0x70] sm:$0xff]
        %v493 = vld [vmem:[#allocation2 + $0x78] sm:$0xff]
        %v494 = vld [vmem:[%s411] sm:$0xff]
        %v495 = vld [vmem:[%s411 + $0x8] sm:$0xff]
        %v496 = vld [vmem:[%s411 + $0x10] sm:$0xff]
        %v497 = vld [vmem:[%s411 + $0x18] sm:$0xff]
        %v498 = vld [vmem:[%s411 + $0x20] sm:$0xff]
        %v499 = vld [vmem:[%s411 + $0x28] sm:$0xff]
        %v500 = vld [vmem:[%s411 + $0x30] sm:$0xff]
        %v501 = vld [vmem:[%s411 + $0x38] sm:$0xff]
        %v502 = vld [vmem:[%s411 + $0x40] sm:$0xff]
        %v503 = vld [vmem:[%s411 + $0x48] sm:$0xff]
        %v504 = vld [vmem:[%s411 + $0x50] sm:$0xff]
        %v505 = vld [vmem:[%s411 + $0x58] sm:$0xff]
        %v506 = vld [vmem:[%s411 + $0x60] sm:$0xff]
        %v507 = vld [vmem:[%s411 + $0x68] sm:$0xff]
        %v508 = vld [vmem:[%s411 + $0x70] sm:$0xff]
        %v509 = vld [vmem:[%s411 + $0x78] sm:$0xff]
        %v510 = vld [vmem:[%s418] sm:$0xff]
        %v511 = vld [vmem:[%s418 + $0x8] sm:$0xff]
        %v512 = vld [vmem:[%s418 + $0x10] sm:$0xff]
        %v513 = vld [vmem:[%s418 + $0x18] sm:$0xff]
        %v514 = vld [vmem:[%s418 + $0x20] sm:$0xff]
        %v515 = vld [vmem:[%s418 + $0x28] sm:$0xff]
        %v516 = vld [vmem:[%s418 + $0x30] sm:$0xff]
        %v517 = vld [vmem:[%s418 + $0x38] sm:$0xff]
        %v518 = vld [vmem:[%s418 + $0x40] sm:$0xff]
        %v519 = vld [vmem:[%s418 + $0x48] sm:$0xff]
        %v520 = vld [vmem:[%s418 + $0x50] sm:$0xff]
        %v521 = vld [vmem:[%s418 + $0x58] sm:$0xff]
        %v522 = vld [vmem:[%s418 + $0x60] sm:$0xff]
        %v523 = vld [vmem:[%s418 + $0x68] sm:$0xff]
        %v524 = vld [vmem:[%s418 + $0x70] sm:$0xff]
        %v525 = vld [vmem:[%s418 + $0x78] sm:$0xff]
        %526 = vmatprep.subr.mxu0 0.0
        %527 = vmatpush1.msra.mxu0 %v510
        %528 = vmatprep.subr.mxu0 0.0
        %529 = vmatpush1.msra.mxu0 %v511
        %530 = vmatprep.subr.mxu0 0.0
        %531 = vmatpush1.msra.mxu0 %v512
        %532 = vmatprep.subr.mxu0 0.0
        %533 = vmatpush1.msra.mxu0 %v513
        %534 = vmatprep.subr.mxu0 0.0
        %535 = vmatpush1.msra.mxu0 %v514
        %536 = vmatprep.subr.mxu0 0.0
        %537 = vmatpush1.msra.mxu0 %v515
        %538 = vmatprep.subr.mxu0 0.0
        %539 = vmatpush1.msra.mxu0 %v516
        %540 = vmatprep.subr.mxu0 0.0
        %541 = vmatpush1.msra.mxu0 %v517
        %542 = vmatprep.subr.mxu0 0.0
        %543 = vmatpush1.msra.mxu0 %v518
        %544 = vmatprep.subr.mxu0 0.0
        %545 = vmatpush1.msra.mxu0 %v519
        %546 = vmatprep.subr.mxu0 0.0
        %547 = vmatpush1.msra.mxu0 %v520
        %548 = vmatprep.subr.mxu0 0.0
        %549 = vmatpush1.msra.mxu0 %v521
        %550 = vmatprep.subr.mxu0 0.0
        %551 = vmatpush1.msra.mxu0 %v522
        %552 = vmatprep.subr.mxu0 0.0
        %553 = vmatpush1.msra.mxu0 %v523
        %554 = vmatprep.subr.mxu0 0.0
        %555 = vmatpush1.msra.mxu0 %v524
        %556 = vmatprep.subr.mxu0 0.0
        %557 = vmatpush1.msra.mxu0 %v525
        %558 = vmatprep.subr.mxu0 0.0
        %559 = vmatpush1.msra.mxu0 0.0
        %560 = vmatprep.subr.mxu0 0.0
        %561 = vmatpush1.msra.mxu0 0.0
        %562 = vmatprep.subr.mxu0 0.0
        %563 = vmatpush1.msra.mxu0 0.0
        %564 = vmatprep.subr.mxu0 0.0
        %565 = vmatpush1.msra.mxu0 0.0
        %566 = vmatprep.subr.mxu0 0.0
        %567 = vmatpush1.msra.mxu0 0.0
        %568 = vmatprep.subr.mxu0 0.0
        %569 = vmatpush1.msra.mxu0 0.0
        %570 = vmatprep.subr.mxu0 0.0
        %571 = vmatpush1.msra.mxu0 0.0
        %572 = vmatprep.subr.mxu0 0.0
        %573 = vmatpush1.msra.mxu0 0.0
        %574 = vmatprep.subr.mxu0 0.0
        %575 = vmatpush1.msra.mxu0 0.0
        %576 = vmatprep.subr.mxu0 0.0
        %577 = vmatpush1.msra.mxu0 0.0
        %578 = vmatprep.subr.mxu0 0.0
        %579 = vmatpush1.msra.mxu0 0.0
        %580 = vmatprep.subr.mxu0 0.0
        %581 = vmatpush1.msra.mxu0 0.0
        %582 = vmatprep.subr.mxu0 0.0
        %583 = vmatpush1.msra.mxu0 0.0
        %584 = vmatprep.subr.mxu0 0.0
        %585 = vmatpush1.msra.mxu0 0.0
        %586 = vmatprep.subr.mxu0 0.0
        %587 = vmatpush1.msra.mxu0 0.0
        %588 = vmatprep.subr.mxu0 0.0
        %589 = vmatpush1.msra.mxu0 0.0
        %590 = vmatprep.mubr.f32.mxu0 0.0
        %591 = vmatmul.mubr.f32.gmra.mrb[0].mxu0 %v494
        %v592 = vpop.f32.mrb[0].mxu0
        %v593 = vadd.f32 0.0, %v592
        %v594 = vpop.f32.mrb[0].mxu0
        %595 = vmatprep.mubr.f32.mxu0 0.0
        %596 = vmatmul.mubr.f32.gmra.mrb[0].mxu0 %v495
        %v597 = vpop.f32.mrb[0].mxu0
        %v598 = vadd.f32 0.0, %v597
        %v599 = vpop.f32.mrb[0].mxu0
        %600 = vmatprep.mubr.f32.mxu0 0.0
        %601 = vmatmul.mubr.f32.gmra.mrb[0].mxu0 %v496
        %v602 = vpop.f32.mrb[0].mxu0
        %v603 = vadd.f32 0.0, %v602
        %v604 = vpop.f32.mrb[0].mxu0
        %605 = vmatprep.mubr.f32.mxu0 0.0
        %606 = vmatmul.mubr.f32.gmra.mrb[0].mxu0 %v497
        %v607 = vpop.f32.mrb[0].mxu0
        %v608 = vadd.f32 0.0, %v607
        %v609 = vpop.f32.mrb[0].mxu0
        %610 = vmatprep.mubr.f32.mxu0 0.0
        %611 = vmatmul.mubr.f32.gmra.mrb[0].mxu0 %v498
        %v612 = vpop.f32.mrb[0].mxu0
        %v613 = vadd.f32 0.0, %v612
        %v614 = vpop.f32.mrb[0].mxu0
        %615 = vmatprep.mubr.f32.mxu0 0.0
        %616 = vmatmul.mubr.f32.gmra.mrb[0].mxu0 %v499
        %v617 = vpop.f32.mrb[0].mxu0
        %v618 = vadd.f32 0.0, %v617
        %v619 = vpop.f32.mrb[0].mxu0
        %620 = vmatprep.mubr.f32.mxu0 0.0
        %621 = vmatmul.mubr.f32.gmra.mrb[0].mxu0 %v500
        %v622 = vpop.f32.mrb[0].mxu0
        %v623 = vadd.f32 0.0, %v622
        %v624 = vpop.f32.mrb[0].mxu0
        %625 = vmatprep.mubr.f32.mxu0 0.0
        %626 = vmatmul.mubr.f32.gmra.mrb[0].mxu0 %v501
        %v627 = vpop.f32.mrb[0].mxu0
        %v628 = vadd.f32 0.0, %v627
        %v629 = vpop.f32.mrb[0].mxu0
        %630 = vmatprep.mubr.f32.mxu0 0.0
        %631 = vmatmul.mubr.f32.gmra.mrb[0].mxu0 %v502
        %v632 = vpop.f32.mrb[0].mxu0
        %v633 = vadd.f32 0.0, %v632
        %v634 = vpop.f32.mrb[0].mxu0
        %635 = vmatprep.mubr.f32.mxu0 0.0
        %636 = vmatmul.mubr.f32.gmra.mrb[0].mxu0 %v503
        %v637 = vpop.f32.mrb[0].mxu0
        %v638 = vadd.f32 0.0, %v637
        %v639 = vpop.f32.mrb[0].mxu0
        %640 = vmatprep.mubr.f32.mxu0 0.0
        %641 = vmatmul.mubr.f32.gmra.mrb[0].mxu0 %v504
        %v642 = vpop.f32.mrb[0].mxu0
        %v643 = vadd.f32 0.0, %v642
        %v644 = vpop.f32.mrb[0].mxu0
        %645 = vmatprep.mubr.f32.mxu0 0.0
        %646 = vmatmul.mubr.f32.gmra.mrb[0].mxu0 %v505
        %v647 = vpop.f32.mrb[0].mxu0
        %v648 = vadd.f32 0.0, %v647
        %v649 = vpop.f32.mrb[0].mxu0
        %650 = vmatprep.mubr.f32.mxu0 0.0
        %651 = vmatmul.mubr.f32.gmra.mrb[0].mxu0 %v506
        %v652 = vpop.f32.mrb[0].mxu0
        %v653 = vadd.f32 0.0, %v652
        %v654 = vpop.f32.mrb[0].mxu0
        %655 = vmatprep.mubr.f32.mxu0 0.0
        %656 = vmatmul.mubr.f32.gmra.mrb[0].mxu0 %v507
        %v657 = vpop.f32.mrb[0].mxu0
        %v658 = vadd.f32 0.0, %v657
        %v659 = vpop.f32.mrb[0].mxu0
        %660 = vmatprep.mubr.f32.mxu0 0.0
        %661 = vmatmul.mubr.f32.gmra.mrb[0].mxu0 %v508
        %v662 = vpop.f32.mrb[0].mxu0
        %v663 = vadd.f32 0.0, %v662
        %v664 = vpop.f32.mrb[0].mxu0
        %665 = vmatprep.mubr.f32.mxu0 0.0
        %666 = vmatmul.mubr.f32.gmra.mrb[0].mxu0 %v509
        %v667 = vpop.f32.mrb[0].mxu0
        %v668 = vadd.f32 0.0, %v667
        %v669 = vpop.f32.mrb[0].mxu0
        %670 = vdwg.mxu0
        %v671 = vadd.f32 %v478, %v593
        %v672 = vadd.f32 %v479, %v598
        %v673 = vadd.f32 %v480, %v603
        %v674 = vadd.f32 %v481, %v608
        %v675 = vadd.f32 %v482, %v613
        %v676 = vadd.f32 %v483, %v618
        %v677 = vadd.f32 %v484, %v623
        %v678 = vadd.f32 %v485, %v628
        %v679 = vadd.f32 %v486, %v633
        %v680 = vadd.f32 %v487, %v638
        %v681 = vadd.f32 %v488, %v643
        %v682 = vadd.f32 %v489, %v648
        %v683 = vadd.f32 %v490, %v653
        %v684 = vadd.f32 %v491, %v658
        %v685 = vadd.f32 %v492, %v663
        %v686 = vadd.f32 %v493, %v668
        %687 = vst [vmem:[#allocation2] sm:$0xff] %v671
        %688 = vst [vmem:[#allocation2 + $0x8] sm:$0xff] %v672
        %689 = vst [vmem:[#allocation2 + $0x10] sm:$0xff] %v673
        %690 = vst [vmem:[#allocation2 + $0x18] sm:$0xff] %v674
        %691 = vst [vmem:[#allocation2 + $0x20] sm:$0xff] %v675
        %692 = vst [vmem:[#allocation2 + $0x28] sm:$0xff] %v676
        %693 = vst [vmem:[#allocation2 + $0x30] sm:$0xff] %v677
        %694 = vst [vmem:[#allocation2 + $0x38] sm:$0xff] %v678
        %695 = vst [vmem:[#allocation2 + $0x40] sm:$0xff] %v679
        %696 = vst [vmem:[#allocation2 + $0x48] sm:$0xff] %v680
        %697 = vst [vmem:[#allocation2 + $0x50] sm:$0xff] %v681
        %698 = vst [vmem:[#allocation2 + $0x58] sm:$0xff] %v682
        %699 = vst [vmem:[#allocation2 + $0x60] sm:$0xff] %v683
        %700 = vst [vmem:[#allocation2 + $0x68] sm:$0xff] %v684
        %701 = vst [vmem:[#allocation2 + $0x70] sm:$0xff] %v685
        %702 = vst [vmem:[#allocation2 + $0x78] sm:$0xff] %v686
        %p703 = scmp.eq.s32.totalorder %s23, 1
        // Predicated region
        $region113: #{gripnet_forward.12} parent=99 // pred_check
          %p704 = pneg %p703
        $region114: #{gripnet_forward.12} parent=99 // pred_check_branch
          %706 = sbr.rel (%p704) target = $region116
        $region115: #{gripnet_forward.12} parent=99 // pred_region
          %v707 = vld [vmem:[#allocation2] sm:$0xff]
          %v708 = vld [vmem:[#allocation2 + $0x8] sm:$0xff]
          %v709 = vld [vmem:[#allocation2 + $0x10] sm:$0xff]
          %v710 = vld [vmem:[#allocation2 + $0x18] sm:$0xff]
          %v711 = vld [vmem:[#allocation2 + $0x20] sm:$0xff]
          %v712 = vld [vmem:[#allocation2 + $0x28] sm:$0xff]
          %v713 = vld [vmem:[#allocation2 + $0x30] sm:$0xff]
          %v714 = vld [vmem:[#allocation2 + $0x38] sm:$0xff]
          %v715 = vld [vmem:[#allocation2 + $0x40] sm:$0xff]
          %v716 = vld [vmem:[#allocation2 + $0x48] sm:$0xff]
          %v717 = vld [vmem:[#allocation2 + $0x50] sm:$0xff]
          %v718 = vld [vmem:[#allocation2 + $0x58] sm:$0xff]
          %v719 = vld [vmem:[#allocation2 + $0x60] sm:$0xff]
          %v720 = vld [vmem:[#allocation2 + $0x68] sm:$0xff]
          %v721 = vld [vmem:[#allocation2 + $0x70] sm:$0xff]
          %v722 = vld [vmem:[#allocation2 + $0x78] sm:$0xff]
          %v723 = vmax.f32 %v707, 0.0
          %v724 = vmax.f32 %v708, 0.0
          %v725 = vmax.f32 %v709, 0.0
          %v726 = vmax.f32 %v710, 0.0
          %v727 = vmax.f32 %v711, 0.0
          %v728 = vmax.f32 %v712, 0.0
          %v729 = vmax.f32 %v713, 0.0
          %v730 = vmax.f32 %v714, 0.0
          %v731 = vmax.f32 %v715, 0.0
          %v732 = vmax.f32 %v716, 0.0
          %v733 = vmax.f32 %v717, 0.0
          %v734 = vmax.f32 %v718, 0.0
          %v735 = vmax.f32 %v719, 0.0
          %v736 = vmax.f32 %v720, 0.0
          %v737 = vmax.f32 %v721, 0.0
          %v738 = vmax.f32 %v722, 0.0
          %739 = vst [vmem:[%s444] sm:$0xff] %v723
          %740 = vst [vmem:[%s444 + $0x8] sm:$0xff] %v724
          %741 = vst [vmem:[%s444 + $0x10] sm:$0xff] %v725
          %742 = vst [vmem:[%s444 + $0x18] sm:$0xff] %v726
          %743 = vst [vmem:[%s444 + $0x20] sm:$0xff] %v727
          %744 = vst [vmem:[%s444 + $0x28] sm:$0xff] %v728
          %745 = vst [vmem:[%s444 + $0x30] sm:$0xff] %v729
          %746 = vst [vmem:[%s444 + $0x38] sm:$0xff] %v730
          %747 = vst [vmem:[%s444 + $0x40] sm:$0xff] %v731
          %748 = vst [vmem:[%s444 + $0x48] sm:$0xff] %v732
          %749 = vst [vmem:[%s444 + $0x50] sm:$0xff] %v733
          %750 = vst [vmem:[%s444 + $0x58] sm:$0xff] %v734
          %751 = vst [vmem:[%s444 + $0x60] sm:$0xff] %v735
          %752 = vst [vmem:[%s444 + $0x68] sm:$0xff] %v736
          %753 = vst [vmem:[%s444 + $0x70] sm:$0xff] %v737
          %754 = vst [vmem:[%s444 + $0x78] sm:$0xff] %v738
          %v755 = vld [vmem:[%s455] sm:$0x1]
          %v757 = vlaneseq
          %v758 = vshrl.u32 %v757, 7
          %v759 = vsub.s32 0, %v758
          %v760 = vrot.slane %v755, %v759
          %v762 = vmul.f32 %v723, %v760
          %v763 = vmul.f32 %v724, %v760
          %v764 = vmul.f32 %v725, %v760
          %v765 = vmul.f32 %v726, %v760
          %v766 = vmul.f32 %v727, %v760
          %v767 = vmul.f32 %v728, %v760
          %v768 = vmul.f32 %v729, %v760
          %v769 = vmul.f32 %v730, %v760
          %v770 = vmul.f32 %v731, %v760
          %v771 = vmul.f32 %v732, %v760
          %v772 = vmul.f32 %v733, %v760
          %v773 = vmul.f32 %v734, %v760
          %v774 = vmul.f32 %v735, %v760
          %v775 = vmul.f32 %v736, %v760
          %v776 = vmul.f32 %v737, %v760
          %v777 = vmul.f32 %v738, %v760
          %778 = vst [vmem:[%s450] sm:$0xff] %v762
          %779 = vst [vmem:[%s450 + $0x8] sm:$0xff] %v763
          %780 = vst [vmem:[%s450 + $0x10] sm:$0xff] %v764
          %781 = vst [vmem:[%s450 + $0x18] sm:$0xff] %v765
          %782 = vst [vmem:[%s450 + $0x20] sm:$0xff] %v766
          %783 = vst [vmem:[%s450 + $0x28] sm:$0xff] %v767
          %784 = vst [vmem:[%s450 + $0x30] sm:$0xff] %v768
          %785 = vst [vmem:[%s450 + $0x38] sm:$0xff] %v769
          %786 = vst [vmem:[%s450 + $0x40] sm:$0xff] %v770
          %787 = vst [vmem:[%s450 + $0x48] sm:$0xff] %v771
          %788 = vst [vmem:[%s450 + $0x50] sm:$0xff] %v772
          %789 = vst [vmem:[%s450 + $0x58] sm:$0xff] %v773
          %790 = vst [vmem:[%s450 + $0x60] sm:$0xff] %v774
          %791 = vst [vmem:[%s450 + $0x68] sm:$0xff] %v775
          %792 = vst [vmem:[%s450 + $0x70] sm:$0xff] %v776
          %793 = vst [vmem:[%s450 + $0x78] sm:$0xff] %v777
        $region116: #{gripnet_forward.12} parent=99 // pred_fallthru
          _
        %s794 = sand.u32 %s127, 1
        %s795 = sand.u32 %s127, 1
        %s796 = smul.addr %s795, 128
        %s797 = scalar_lea.vmem [#allocation5], %s796
        %s798 = sand.u32 %s155, 1
        %s799 = sand.u32 %s155, 1
        %s800 = smul.addr %s799, 128
        %s801 = scalar_lea.vmem [#allocation6], %s800
        // Predicated region
        $region117: #{gripnet_forward.12} parent=99 // pred_check
          %p802 = pneg %p137
        $region118: #{gripnet_forward.12} parent=99 // pred_check_branch
          %804 = sbr.rel (%p802) target = $region120
        $region119: #{gripnet_forward.12} parent=99 // pred_region
          %s805 = smul.u32 16, %s21
          %s806 = smul.addr %s805, 2
          %s807 = sadd.s32 %s22, %s806
          %s808 = smul.addr %s807, 8
          %s809 = scalar_lea.vmem %s3, %s808
          // Predicated region
          $region121: #{gripnet_forward.12} parent=119 // pred_check
            _
          $region122: #{gripnet_forward.12} parent=119 // pred_check_branch
            %811 = sbr.rel (0) target = $region124
          $region123: #{gripnet_forward.12} parent=119 // pred_region
            // Predicated region
            $region125: #{gripnet_forward.12} parent=123 // pred_check
              _
            $region126: #{gripnet_forward.12} parent=123 // pred_check_branch
              %813 = sbr.rel (0) target = $region128
            $region127: #{gripnet_forward.12} parent=123 // pred_region
              // Predicated region
              $region140: #{gripnet_forward.12} parent=127 // pred_check
                _
              $region141: #{gripnet_forward.12} parent=127 // pred_check_branch
                %858 = sbr.rel (0) target = $region143
              $region142: #{gripnet_forward.12} parent=127 // pred_region
                loop: start=0, step=1, limit=1
                $region144: #{gripnet_forward.12} parent=142 // loop_pre_header
                  _
                $region145: #{gripnet_forward.12} parent=142 // loop_header
                  %s860 = sphi 0, %s864
                  %p861 = scmp.ge.s32.totalorder %s860, 1
                  %s865 = sphi %s797, %s797
                  %s866 = sphi %s809, %s809
                $region146: #{gripnet_forward.12} parent=142 // loop_header_branch
                  %863 = sbr.rel (%p861) target = $region150
                $region147: #{gripnet_forward.12} parent=142 // loop_body
                  %v867 = vld [vmem:[%s865] sm:$0xff]
                  %868 = vst [vmem:[%s866] sm:$0xff] %v867
                  %v869 = vld [vmem:[%s865 + $0x8] sm:$0xff]
                  %870 = vst [vmem:[%s866 + $0x10] sm:$0xff] %v869
                  %v871 = vld [vmem:[%s865 + $0x10] sm:$0xff]
                  %872 = vst [vmem:[%s866 + $0x20] sm:$0xff] %v871
                  %v873 = vld [vmem:[%s865 + $0x18] sm:$0xff]
                  %874 = vst [vmem:[%s866 + $0x30] sm:$0xff] %v873
                  %v875 = vld [vmem:[%s865 + $0x20] sm:$0xff]
                  %876 = vst [vmem:[%s866 + $0x40] sm:$0xff] %v875
                  %v877 = vld [vmem:[%s865 + $0x28] sm:$0xff]
                  %878 = vst [vmem:[%s866 + $0x50] sm:$0xff] %v877
                  %v879 = vld [vmem:[%s865 + $0x30] sm:$0xff]
                  %880 = vst [vmem:[%s866 + $0x60] sm:$0xff] %v879
                  %v881 = vld [vmem:[%s865 + $0x38] sm:$0xff]
                  %882 = vst [vmem:[%s866 + $0x70] sm:$0xff] %v881
                  %v883 = vld [vmem:[%s865 + $0x40] sm:$0xff]
                  %884 = vst [vmem:[%s866 + $0x80] sm:$0xff] %v883
                  %v885 = vld [vmem:[%s865 + $0x48] sm:$0xff]
                  %886 = vst [vmem:[%s866 + $0x90] sm:$0xff] %v885
                  %v887 = vld [vmem:[%s865 + $0x50] sm:$0xff]
                  %888 = vst [vmem:[%s866 + $0xa0] sm:$0xff] %v887
                  %v889 = vld [vmem:[%s865 + $0x58] sm:$0xff]
                  %890 = vst [vmem:[%s866 + $0xb0] sm:$0xff] %v889
                  %v891 = vld [vmem:[%s865 + $0x60] sm:$0xff]
                  %892 = vst [vmem:[%s866 + $0xc0] sm:$0xff] %v891
                  %v893 = vld [vmem:[%s865 + $0x68] sm:$0xff]
                  %894 = vst [vmem:[%s866 + $0xd0] sm:$0xff] %v893
                  %v895 = vld [vmem:[%s865 + $0x70] sm:$0xff]
                  %896 = vst [vmem:[%s866 + $0xe0] sm:$0xff] %v895
                  %v897 = vld [vmem:[%s865 + $0x78] sm:$0xff]
                  %898 = vst [vmem:[%s866 + $0xf0] sm:$0xff] %v897
                $region148: #{gripnet_forward.12} parent=142 // loop_footer
                  %s864 = sadd.s32 1, %s860
                $region149: #{gripnet_forward.12} parent=142 // loop_footer_branch
                  %859 = sbr.rel target = $region145
                $region150: #{gripnet_forward.12} parent=142 // loop_exit
                  _
              $region143: #{gripnet_forward.12} parent=127 // pred_fallthru
                _
              // Predicated region
              $region151: #{gripnet_forward.12} parent=127 // pred_check
                _
              $region152: #{gripnet_forward.12} parent=127 // pred_check_branch
                %900 = sbr.rel target = $region154
              $region153: #{gripnet_forward.12} parent=127 // pred_region
                _
              $region154: #{gripnet_forward.12} parent=127 // pred_fallthru
                _
            $region128: #{gripnet_forward.12} parent=123 // pred_fallthru
              _
            // Predicated region
            $region129: #{gripnet_forward.12} parent=123 // pred_check
              _
            $region130: #{gripnet_forward.12} parent=123 // pred_check_branch
              %815 = sbr.rel target = $region132
            $region131: #{gripnet_forward.12} parent=123 // pred_region
              loop: start=0, step=1, limit=1
              $region133: #{gripnet_forward.12} parent=131 // loop_pre_header
                _
              $region134: #{gripnet_forward.12} parent=131 // loop_header
                %s818 = sphi 0, %s822
                %p819 = scmp.ge.s32.totalorder %s818, 1
                %s823 = sphi %s797, %s797
                %s824 = sphi %s809, %s809
              $region135: #{gripnet_forward.12} parent=131 // loop_header_branch
                %821 = sbr.rel (%p819) target = $region139
              $region136: #{gripnet_forward.12} parent=131 // loop_body
                %v825 = vld [vmem:[%s823] sm:$0xff]
                %826 = vst [vmem:[%s824] sm:$0xff] %v825
                %v827 = vld [vmem:[%s823 + $0x8] sm:$0xff]
                %828 = vst [vmem:[%s824 + $0x10] sm:$0xff] %v827
                %v829 = vld [vmem:[%s823 + $0x10] sm:$0xff]
                %830 = vst [vmem:[%s824 + $0x20] sm:$0xff] %v829
                %v831 = vld [vmem:[%s823 + $0x18] sm:$0xff]
                %832 = vst [vmem:[%s824 + $0x30] sm:$0xff] %v831
                %v833 = vld [vmem:[%s823 + $0x20] sm:$0xff]
                %834 = vst [vmem:[%s824 + $0x40] sm:$0xff] %v833
                %v835 = vld [vmem:[%s823 + $0x28] sm:$0xff]
                %836 = vst [vmem:[%s824 + $0x50] sm:$0xff] %v835
                %v837 = vld [vmem:[%s823 + $0x30] sm:$0xff]
                %838 = vst [vmem:[%s824 + $0x60] sm:$0xff] %v837
                %v839 = vld [vmem:[%s823 + $0x38] sm:$0xff]
                %840 = vst [vmem:[%s824 + $0x70] sm:$0xff] %v839
                %v841 = vld [vmem:[%s823 + $0x40] sm:$0xff]
                %842 = vst [vmem:[%s824 + $0x80] sm:$0xff] %v841
                %v843 = vld [vmem:[%s823 + $0x48] sm:$0xff]
                %844 = vst [vmem:[%s824 + $0x90] sm:$0xff] %v843
                %v845 = vld [vmem:[%s823 + $0x50] sm:$0xff]
                %846 = vst [vmem:[%s824 + $0xa0] sm:$0xff] %v845
                %v847 = vld [vmem:[%s823 + $0x58] sm:$0xff]
                %848 = vst [vmem:[%s824 + $0xb0] sm:$0xff] %v847
                %v849 = vld [vmem:[%s823 + $0x60] sm:$0xff]
                %850 = vst [vmem:[%s824 + $0xc0] sm:$0xff] %v849
                %v851 = vld [vmem:[%s823 + $0x68] sm:$0xff]
                %852 = vst [vmem:[%s824 + $0xd0] sm:$0xff] %v851
                %v853 = vld [vmem:[%s823 + $0x70] sm:$0xff]
                %854 = vst [vmem:[%s824 + $0xe0] sm:$0xff] %v853
                %v855 = vld [vmem:[%s823 + $0x78] sm:$0xff]
                %856 = vst [vmem:[%s824 + $0xf0] sm:$0xff] %v855
              $region137: #{gripnet_forward.12} parent=131 // loop_footer
                %s822 = sadd.s32 1, %s818
              $region138: #{gripnet_forward.12} parent=131 // loop_footer_branch
                %817 = sbr.rel target = $region134
              $region139: #{gripnet_forward.12} parent=131 // loop_exit
                _
            $region132: #{gripnet_forward.12} parent=123 // pred_fallthru
              _
          $region124: #{gripnet_forward.12} parent=119 // pred_fallthru
            _
          %901 = vnop
        $region120: #{gripnet_forward.12} parent=99 // pred_fallthru
          _
        // Predicated region
        $region155: #{gripnet_forward.12} parent=99 // pred_check
          %p902 = pneg %p165
        $region156: #{gripnet_forward.12} parent=99 // pred_check_branch
          %904 = sbr.rel (%p902) target = $region158
        $region157: #{gripnet_forward.12} parent=99 // pred_region
          %s905 = smul.u32 16, %s21
          %s906 = smul.addr %s905, 2
          %s907 = sadd.s32 %s22, %s906
          %s908 = smul.addr %s907, 8
          %s909 = scalar_lea.vmem %s4, %s908
          // Predicated region
          $region159: #{gripnet_forward.12} parent=157 // pred_check
            _
          $region160: #{gripnet_forward.12} parent=157 // pred_check_branch
            %911 = sbr.rel (0) target = $region162
          $region161: #{gripnet_forward.12} parent=157 // pred_region
            // Predicated region
            $region163: #{gripnet_forward.12} parent=161 // pred_check
              _
            $region164: #{gripnet_forward.12} parent=161 // pred_check_branch
              %913 = sbr.rel (0) target = $region166
            $region165: #{gripnet_forward.12} parent=161 // pred_region
              // Predicated region
              $region178: #{gripnet_forward.12} parent=165 // pred_check
                _
              $region179: #{gripnet_forward.12} parent=165 // pred_check_branch
                %958 = sbr.rel (0) target = $region181
              $region180: #{gripnet_forward.12} parent=165 // pred_region
                loop: start=0, step=1, limit=1
                $region182: #{gripnet_forward.12} parent=180 // loop_pre_header
                  _
                $region183: #{gripnet_forward.12} parent=180 // loop_header
                  %s960 = sphi 0, %s964
                  %p961 = scmp.ge.s32.totalorder %s960, 1
                  %s965 = sphi %s801, %s801
                  %s966 = sphi %s909, %s909
                $region184: #{gripnet_forward.12} parent=180 // loop_header_branch
                  %963 = sbr.rel (%p961) target = $region188
                $region185: #{gripnet_forward.12} parent=180 // loop_body
                  %v967 = vld [vmem:[%s965] sm:$0xff]
                  %968 = vst [vmem:[%s966] sm:$0xff] %v967
                  %v969 = vld [vmem:[%s965 + $0x8] sm:$0xff]
                  %970 = vst [vmem:[%s966 + $0x10] sm:$0xff] %v969
                  %v971 = vld [vmem:[%s965 + $0x10] sm:$0xff]
                  %972 = vst [vmem:[%s966 + $0x20] sm:$0xff] %v971
                  %v973 = vld [vmem:[%s965 + $0x18] sm:$0xff]
                  %974 = vst [vmem:[%s966 + $0x30] sm:$0xff] %v973
                  %v975 = vld [vmem:[%s965 + $0x20] sm:$0xff]
                  %976 = vst [vmem:[%s966 + $0x40] sm:$0xff] %v975
                  %v977 = vld [vmem:[%s965 + $0x28] sm:$0xff]
                  %978 = vst [vmem:[%s966 + $0x50] sm:$0xff] %v977
                  %v979 = vld [vmem:[%s965 + $0x30] sm:$0xff]
                  %980 = vst [vmem:[%s966 + $0x60] sm:$0xff] %v979
                  %v981 = vld [vmem:[%s965 + $0x38] sm:$0xff]
                  %982 = vst [vmem:[%s966 + $0x70] sm:$0xff] %v981
                  %v983 = vld [vmem:[%s965 + $0x40] sm:$0xff]
                  %984 = vst [vmem:[%s966 + $0x80] sm:$0xff] %v983
                  %v985 = vld [vmem:[%s965 + $0x48] sm:$0xff]
                  %986 = vst [vmem:[%s966 + $0x90] sm:$0xff] %v985
                  %v987 = vld [vmem:[%s965 + $0x50] sm:$0xff]
                  %988 = vst [vmem:[%s966 + $0xa0] sm:$0xff] %v987
                  %v989 = vld [vmem:[%s965 + $0x58] sm:$0xff]
                  %990 = vst [vmem:[%s966 + $0xb0] sm:$0xff] %v989
                  %v991 = vld [vmem:[%s965 + $0x60] sm:$0xff]
                  %992 = vst [vmem:[%s966 + $0xc0] sm:$0xff] %v991
                  %v993 = vld [vmem:[%s965 + $0x68] sm:$0xff]
                  %994 = vst [vmem:[%s966 + $0xd0] sm:$0xff] %v993
                  %v995 = vld [vmem:[%s965 + $0x70] sm:$0xff]
                  %996 = vst [vmem:[%s966 + $0xe0] sm:$0xff] %v995
                  %v997 = vld [vmem:[%s965 + $0x78] sm:$0xff]
                  %998 = vst [vmem:[%s966 + $0xf0] sm:$0xff] %v997
                $region186: #{gripnet_forward.12} parent=180 // loop_footer
                  %s964 = sadd.s32 1, %s960
                $region187: #{gripnet_forward.12} parent=180 // loop_footer_branch
                  %959 = sbr.rel target = $region183
                $region188: #{gripnet_forward.12} parent=180 // loop_exit
                  _
              $region181: #{gripnet_forward.12} parent=165 // pred_fallthru
                _
              // Predicated region
              $region189: #{gripnet_forward.12} parent=165 // pred_check
                _
              $region190: #{gripnet_forward.12} parent=165 // pred_check_branch
                %1000 = sbr.rel target = $region192
              $region191: #{gripnet_forward.12} parent=165 // pred_region
                _
              $region192: #{gripnet_forward.12} parent=165 // pred_fallthru
                _
            $region166: #{gripnet_forward.12} parent=161 // pred_fallthru
              _
            // Predicated region
            $region167: #{gripnet_forward.12} parent=161 // pred_check
              _
            $region168: #{gripnet_forward.12} parent=161 // pred_check_branch
              %915 = sbr.rel target = $region170
            $region169: #{gripnet_forward.12} parent=161 // pred_region
              loop: start=0, step=1, limit=1
              $region171: #{gripnet_forward.12} parent=169 // loop_pre_header
                _
              $region172: #{gripnet_forward.12} parent=169 // loop_header
                %s918 = sphi 0, %s922
                %p919 = scmp.ge.s32.totalorder %s918, 1
                %s923 = sphi %s801, %s801
                %s924 = sphi %s909, %s909
              $region173: #{gripnet_forward.12} parent=169 // loop_header_branch
                %921 = sbr.rel (%p919) target = $region177
              $region174: #{gripnet_forward.12} parent=169 // loop_body
                %v925 = vld [vmem:[%s923] sm:$0xff]
                %926 = vst [vmem:[%s924] sm:$0xff] %v925
                %v927 = vld [vmem:[%s923 + $0x8] sm:$0xff]
                %928 = vst [vmem:[%s924 + $0x10] sm:$0xff] %v927
                %v929 = vld [vmem:[%s923 + $0x10] sm:$0xff]
                %930 = vst [vmem:[%s924 + $0x20] sm:$0xff] %v929
                %v931 = vld [vmem:[%s923 + $0x18] sm:$0xff]
                %932 = vst [vmem:[%s924 + $0x30] sm:$0xff] %v931
                %v933 = vld [vmem:[%s923 + $0x20] sm:$0xff]
                %934 = vst [vmem:[%s924 + $0x40] sm:$0xff] %v933
                %v935 = vld [vmem:[%s923 + $0x28] sm:$0xff]
                %936 = vst [vmem:[%s924 + $0x50] sm:$0xff] %v935
                %v937 = vld [vmem:[%s923 + $0x30] sm:$0xff]
                %938 = vst [vmem:[%s924 + $0x60] sm:$0xff] %v937
                %v939 = vld [vmem:[%s923 + $0x38] sm:$0xff]
                %940 = vst [vmem:[%s924 + $0x70] sm:$0xff] %v939
                %v941 = vld [vmem:[%s923 + $0x40] sm:$0xff]
                %942 = vst [vmem:[%s924 + $0x80] sm:$0xff] %v941
                %v943 = vld [vmem:[%s923 + $0x48] sm:$0xff]
                %944 = vst [vmem:[%s924 + $0x90] sm:$0xff] %v943
                %v945 = vld [vmem:[%s923 + $0x50] sm:$0xff]
                %946 = vst [vmem:[%s924 + $0xa0] sm:$0xff] %v945
                %v947 = vld [vmem:[%s923 + $0x58] sm:$0xff]
                %948 = vst [vmem:[%s924 + $0xb0] sm:$0xff] %v947
                %v949 = vld [vmem:[%s923 + $0x60] sm:$0xff]
                %950 = vst [vmem:[%s924 + $0xc0] sm:$0xff] %v949
                %v951 = vld [vmem:[%s923 + $0x68] sm:$0xff]
                %952 = vst [vmem:[%s924 + $0xd0] sm:$0xff] %v951
                %v953 = vld [vmem:[%s923 + $0x70] sm:$0xff]
                %954 = vst [vmem:[%s924 + $0xe0] sm:$0xff] %v953
                %v955 = vld [vmem:[%s923 + $0x78] sm:$0xff]
                %956 = vst [vmem:[%s924 + $0xf0] sm:$0xff] %v955
              $region175: #{gripnet_forward.12} parent=169 // loop_footer
                %s922 = sadd.s32 1, %s918
              $region176: #{gripnet_forward.12} parent=169 // loop_footer_branch
                %917 = sbr.rel target = $region172
              $region177: #{gripnet_forward.12} parent=169 // loop_exit
                _
            $region170: #{gripnet_forward.12} parent=161 // pred_fallthru
              _
          $region162: #{gripnet_forward.12} parent=157 // pred_fallthru
            _
          %1001 = vnop
        $region158: #{gripnet_forward.12} parent=99 // pred_fallthru
          _
      $region100: #{gripnet_forward.12} parent=5 // pred_fallthru
        _
      %p1002 = scmp.le.s32.totalorder 2, %s11
      // Predicated region
      $region193: #{gripnet_forward.12} parent=5 // pred_check
        %p1003 = pneg %p1002
      $region194: #{gripnet_forward.12} parent=5 // pred_check_branch
        %1005 = sbr.rel (%p1003) target = $region196
      $region195: #{gripnet_forward.12} parent=5 // pred_region
        %s1006 = ssub.s32 %s11, 2
        // Predicated region
        $region197: #{gripnet_forward.12} parent=195 // pred_check
          %p1007 = pneg %p143
        $region198: #{gripnet_forward.12} parent=195 // pred_check_branch
          %1009 = sbr.rel (%p1007) target = $region200
        $region199: #{gripnet_forward.12} parent=195 // pred_region
          %s1010 = sand.u32 %s128, 1
          %s1011 = sand.u32 %s128, 1
          %s1012 = smul.addr %s1011, 128
          %s1013 = scalar_lea.vmem [#allocation5], %s1012
        $region200: #{gripnet_forward.12} parent=195 // pred_fallthru
          _
        // Predicated region
        $region201: #{gripnet_forward.12} parent=195 // pred_check
          %p1014 = pneg %p171
        $region202: #{gripnet_forward.12} parent=195 // pred_check_branch
          %1016 = sbr.rel (%p1014) target = $region204
        $region203: #{gripnet_forward.12} parent=195 // pred_region
          %s1017 = sand.u32 %s156, 1
          %s1018 = sand.u32 %s156, 1
          %s1019 = smul.addr %s1018, 128
          %s1020 = scalar_lea.vmem [#allocation6], %s1019
        $region204: #{gripnet_forward.12} parent=195 // pred_fallthru
          _
      $region196: #{gripnet_forward.12} parent=5 // pred_fallthru
        _
    $region6: #{gripnet_forward.12} parent=1 // loop_footer
      %s15 = sadd.s32 1, %s11
    $region7: #{gripnet_forward.12} parent=1 // loop_footer_branch
      %10 = sbr.rel target = $region3
    $region8: #{gripnet_forward.12} parent=1 // loop_exit
      _

// kernel: gripnet_forward.13
$region0: #{gripnet_forward.13}
  #allocation0 [shape = 'u32[]', space=smem, size = 0x4, offset = 0x4, fixed_abs, tag = 'smem constant byte address 0x4 - core index']
  #allocation1 [shape = 'u32[144,128]{1,0:T(1,128)}', space=vmem, size = 0x12000, scoped, tag = 'internal scratch']
  #allocation2 [shape = 'f32[128,128]{1,0:T(8,128)}', space=vmem, size = 0x10000, scoped, tag = 'scratch operand']
  %s0 = inlined_call_operand.vmem [shape: f32[256,256], index: 0, kind: input, shape index: {}]
  %s1 = inlined_call_operand.vmem [shape: f32[256,256], index: 1, kind: input, shape index: {}]
  %s2 = inlined_call_operand.vmem [shape: f32[256,256], index: 2, kind: output, shape index: {}]
  %s3 = sld [smem:[#allocation0]]
  $region159: #{gripnet_forward.13} parent=0
    _
  %s5 = ssub.s32 1, %s3
  %s6 = scalar_select 0, %s5, %s3
  $region1: #{gripnet_forward.13} parent=0
    #allocation3 [shape = 'u8[131072]{0}', space=vmem, size = 0x20000, scoped, tag = 'input window, operand 0']
    #allocation4 [shape = 'u8[131072]{0}', space=vmem, size = 0x20000, scoped, tag = 'input window, operand 1']
    #allocation5 [shape = 'u8[131072]{0}', space=vmem, size = 0x20000, scoped, tag = 'output window, operand 0']
    loop: start=0, step=1, limit=10
    $region2: #{gripnet_forward.13} parent=1 // loop_pre_header
      _
    $region3: #{gripnet_forward.13} parent=1 // loop_header
      %s8 = sphi 0, %s12
      %p9 = scmp.ge.s32.totalorder %s8, 10
      %s15 = sphi 0, %s34
      %s16 = sphi 0, %s30
      %s17 = sphi 0, %s26
      %s18 = sphi 0, %s15
      %s19 = sphi 0, %s16
      %s20 = sphi 0, %s17
      %s21 = sphi 0, %s18
      %s22 = sphi 0, %s19
      %s23 = sphi 0, %s20
      %s39 = sphi 0, %s41
      %s42 = sphi 0, %s39
      %s43 = sphi 0, %s42
      %s59 = sphi 0, %s43
      %s67 = sphi 0, %s69
      %s70 = sphi 0, %s67
      %s71 = sphi 0, %s70
      %s87 = sphi 0, %s71
      %s95 = sphi 0, %s97
      %s98 = sphi 0, %s95
      %s99 = sphi 0, %s98
      %s115 = sphi 0, %s99
    $region4: #{gripnet_forward.13} parent=1 // loop_header_branch
      %11 = sbr.rel (%p9) target = $region8
    $region5: #{gripnet_forward.13} parent=1 // loop_body
      %s13 = ssub.s32 %s8, 1
      %s14 = ssub.s32 %s8, 2
      %s24 = sadd.s32 1, %s17
      %p25 = scmp.ge.s32.totalorder %s24, 2
      %s26 = scalar_select %p25, 0, %s24
      %s27 = sadd.s32 1, %s16
      %s28 = scalar_select %p25, %s27, %s16
      %p29 = scmp.ge.s32.totalorder %s28, 2
      %s30 = scalar_select %p29, 0, %s28
      %s31 = sadd.s32 1, %s15
      %s32 = scalar_select %p29, %s31, %s15
      %p33 = scmp.ge.s32.totalorder %s32, 2
      %s34 = scalar_select %p33, 0, %s32
      %s35 = ssub.s32 %s15, %s34
      %s36 = ssub.s32 %s17, %s26
      %s37 = sor.u32 %s35, %s36
      %p38 = scmp.eq.s32.totalorder %s37, 0
      %s40 = sadd.s32 %s39, 1
      %s41 = scalar_select %p38, %s39, %s40
      %p44 = pneg %p38
      %p45 = scmp.eq.s32.totalorder %s8, 7
      %p46 = por %p44, %p45
      %p47 = scmp.ne.s32.totalorder %s39, %s42
      %p48 = scmp.eq.s32.totalorder %s8, 0
      %p49 = por %p47, %p48
      %p50 = scmp.ne.s32.totalorder %s39, %s42
      %p51 = scmp.eq.s32.totalorder %s13, 7
      %p52 = por %p50, %p51
      %p53 = scmp.ne.s32.totalorder %s42, %s43
      %p54 = scmp.eq.s32.totalorder %s13, 0
      %p55 = por %p53, %p54
      %p56 = scmp.ne.s32.totalorder %s42, %s43
      %p57 = scmp.eq.s32.totalorder %s14, 7
      %p58 = por %p56, %p57
      %p60 = scmp.ne.s32.totalorder %s43, %s59
      %p61 = scmp.eq.s32.totalorder %s14, 0
      %p62 = por %p60, %p61
      %s63 = ssub.s32 %s16, %s30
      %s64 = ssub.s32 %s17, %s26
      %s65 = sor.u32 %s63, %s64
      %p66 = scmp.eq.s32.totalorder %s65, 0
      %s68 = sadd.s32 %s67, 1
      %s69 = scalar_select %p66, %s67, %s68
      %p72 = pneg %p66
      %p73 = scmp.eq.s32.totalorder %s8, 7
      %p74 = por %p72, %p73
      %p75 = scmp.ne.s32.totalorder %s67, %s70
      %p76 = scmp.eq.s32.totalorder %s8, 0
      %p77 = por %p75, %p76
      %p78 = scmp.ne.s32.totalorder %s67, %s70
      %p79 = scmp.eq.s32.totalorder %s13, 7
      %p80 = por %p78, %p79
      %p81 = scmp.ne.s32.totalorder %s70, %s71
      %p82 = scmp.eq.s32.totalorder %s13, 0
      %p83 = por %p81, %p82
      %p84 = scmp.ne.s32.totalorder %s70, %s71
      %p85 = scmp.eq.s32.totalorder %s14, 7
      %p86 = por %p84, %p85
      %p88 = scmp.ne.s32.totalorder %s71, %s87
      %p89 = scmp.eq.s32.totalorder %s14, 0
      %p90 = por %p88, %p89
      %s91 = ssub.s32 %s15, %s34
      %s92 = ssub.s32 %s16, %s30
      %s93 = sor.u32 %s91, %s92
      %p94 = scmp.eq.s32.totalorder %s93, 0
      %s96 = sadd.s32 %s95, 1
      %s97 = scalar_select %p94, %s95, %s96
      %p100 = pneg %p94
      %p101 = scmp.eq.s32.totalorder %s8, 7
      %p102 = por %p100, %p101
      %p103 = scmp.ne.s32.totalorder %s95, %s98
      %p104 = scmp.eq.s32.totalorder %s8, 0
      %p105 = por %p103, %p104
      %p106 = scmp.ne.s32.totalorder %s95, %s98
      %p107 = scmp.eq.s32.totalorder %s13, 7
      %p108 = por %p106, %p107
      %p109 = scmp.ne.s32.totalorder %s98, %s99
      %p110 = scmp.eq.s32.totalorder %s13, 0
      %p111 = por %p109, %p110
      %p112 = scmp.ne.s32.totalorder %s98, %s99
      %p113 = scmp.eq.s32.totalorder %s14, 7
      %p114 = por %p112, %p113
      %p116 = scmp.ne.s32.totalorder %s99, %s115
      %p117 = scmp.eq.s32.totalorder %s14, 0
      %p118 = por %p116, %p117
      %p119 = scmp.le.s32.totalorder 1, %s8
      %p120 = scmp.lt.s32.totalorder %s8, 9
      %p121 = pnand %p119, %p120
      %p122 = pneg %p121
      // Predicated region
      $region9: #{gripnet_forward.13} parent=5 // pred_check
        _
      $region10: #{gripnet_forward.13} parent=5 // pred_check_branch
        %124 = sbr.rel (%p121) target = $region12
      $region11: #{gripnet_forward.13} parent=5 // pred_region
        %s125 = ssub.s32 %s8, 1
      $region12: #{gripnet_forward.13} parent=5 // pred_fallthru
        _
      %p126 = scmp.lt.s32.totalorder %s8, 8
      // Predicated region
      $region13: #{gripnet_forward.13} parent=5 // pred_check
        %p127 = pneg %p126
      $region14: #{gripnet_forward.13} parent=5 // pred_check_branch
        %129 = sbr.rel (%p127) target = $region16
      $region15: #{gripnet_forward.13} parent=5 // pred_region
        // Predicated region
        $region17: #{gripnet_forward.13} parent=15 // pred_check
          %p130 = pneg %p49
        $region18: #{gripnet_forward.13} parent=15 // pred_check_branch
          %132 = sbr.rel (%p130) target = $region20
        $region19: #{gripnet_forward.13} parent=15 // pred_region
          %s133 = sand.u32 %s39, 1
          %s134 = sand.u32 %s39, 1
          %s135 = smul.addr %s134, 128
          %s136 = scalar_lea.vmem [#allocation3], %s135
          %s137 = smul.u32 16, %s15
          %s138 = smul.addr %s137, 2
          %s139 = sadd.s32 %s17, %s138
          %s140 = smul.addr %s139, 8
          %s141 = scalar_lea.vmem %s0, %s140
          // Predicated region
          $region21: #{gripnet_forward.13} parent=19 // pred_check
            _
          $region22: #{gripnet_forward.13} parent=19 // pred_check_branch
            %143 = sbr.rel (0) target = $region24
          $region23: #{gripnet_forward.13} parent=19 // pred_region
            // Predicated region
            $region25: #{gripnet_forward.13} parent=23 // pred_check
              _
            $region26: #{gripnet_forward.13} parent=23 // pred_check_branch
              %145 = sbr.rel (0) target = $region28
            $region27: #{gripnet_forward.13} parent=23 // pred_region
              // Predicated region
              $region40: #{gripnet_forward.13} parent=27 // pred_check
                _
              $region41: #{gripnet_forward.13} parent=27 // pred_check_branch
                %190 = sbr.rel (0) target = $region43
              $region42: #{gripnet_forward.13} parent=27 // pred_region
                loop: start=0, step=1, limit=1
                $region44: #{gripnet_forward.13} parent=42 // loop_pre_header
                  _
                $region45: #{gripnet_forward.13} parent=42 // loop_header
                  %s192 = sphi 0, %s196
                  %p193 = scmp.ge.s32.totalorder %s192, 1
                  %s197 = sphi %s141, %s141
                  %s198 = sphi %s136, %s136
                $region46: #{gripnet_forward.13} parent=42 // loop_header_branch
                  %195 = sbr.rel (%p193) target = $region50
                $region47: #{gripnet_forward.13} parent=42 // loop_body
                  %v199 = vld [vmem:[%s197] sm:$0xff]
                  %200 = vst [vmem:[%s198] sm:$0xff] %v199
                  %v201 = vld [vmem:[%s197 + $0x10] sm:$0xff]
                  %202 = vst [vmem:[%s198 + $0x8] sm:$0xff] %v201
                  %v203 = vld [vmem:[%s197 + $0x20] sm:$0xff]
                  %204 = vst [vmem:[%s198 + $0x10] sm:$0xff] %v203
                  %v205 = vld [vmem:[%s197 + $0x30] sm:$0xff]
                  %206 = vst [vmem:[%s198 + $0x18] sm:$0xff] %v205
                  %v207 = vld [vmem:[%s197 + $0x40] sm:$0xff]
                  %208 = vst [vmem:[%s198 + $0x20] sm:$0xff] %v207
                  %v209 = vld [vmem:[%s197 + $0x50] sm:$0xff]
                  %210 = vst [vmem:[%s198 + $0x28] sm:$0xff] %v209
                  %v211 = vld [vmem:[%s197 + $0x60] sm:$0xff]
                  %212 = vst [vmem:[%s198 + $0x30] sm:$0xff] %v211
                  %v213 = vld [vmem:[%s197 + $0x70] sm:$0xff]
                  %214 = vst [vmem:[%s198 + $0x38] sm:$0xff] %v213
                  %v215 = vld [vmem:[%s197 + $0x80] sm:$0xff]
                  %216 = vst [vmem:[%s198 + $0x40] sm:$0xff] %v215
                  %v217 = vld [vmem:[%s197 + $0x90] sm:$0xff]
                  %218 = vst [vmem:[%s198 + $0x48] sm:$0xff] %v217
                  %v219 = vld [vmem:[%s197 + $0xa0] sm:$0xff]
                  %220 = vst [vmem:[%s198 + $0x50] sm:$0xff] %v219
                  %v221 = vld [vmem:[%s197 + $0xb0] sm:$0xff]
                  %222 = vst [vmem:[%s198 + $0x58] sm:$0xff] %v221
                  %v223 = vld [vmem:[%s197 + $0xc0] sm:$0xff]
                  %224 = vst [vmem:[%s198 + $0x60] sm:$0xff] %v223
                  %v225 = vld [vmem:[%s197 + $0xd0] sm:$0xff]
                  %226 = vst [vmem:[%s198 + $0x68] sm:$0xff] %v225
                  %v227 = vld [vmem:[%s197 + $0xe0] sm:$0xff]
                  %228 = vst [vmem:[%s198 + $0x70] sm:$0xff] %v227
                  %v229 = vld [vmem:[%s197 + $0xf0] sm:$0xff]
                  %230 = vst [vmem:[%s198 + $0x78] sm:$0xff] %v229
                $region48: #{gripnet_forward.13} parent=42 // loop_footer
                  %s196 = sadd.s32 1, %s192
                $region49: #{gripnet_forward.13} parent=42 // loop_footer_branch
                  %191 = sbr.rel target = $region45
                $region50: #{gripnet_forward.13} parent=42 // loop_exit
                  _
              $region43: #{gripnet_forward.13} parent=27 // pred_fallthru
                _
              // Predicated region
              $region51: #{gripnet_forward.13} parent=27 // pred_check
                _
              $region52: #{gripnet_forward.13} parent=27 // pred_check_branch
                %232 = sbr.rel target = $region54
              $region53: #{gripnet_forward.13} parent=27 // pred_region
                _
              $region54: #{gripnet_forward.13} parent=27 // pred_fallthru
                _
            $region28: #{gripnet_forward.13} parent=23 // pred_fallthru
              _
            // Predicated region
            $region29: #{gripnet_forward.13} parent=23 // pred_check
              _
            $region30: #{gripnet_forward.13} parent=23 // pred_check_branch
              %147 = sbr.rel target = $region32
            $region31: #{gripnet_forward.13} parent=23 // pred_region
              loop: start=0, step=1, limit=1
              $region33: #{gripnet_forward.13} parent=31 // loop_pre_header
                _
              $region34: #{gripnet_forward.13} parent=31 // loop_header
                %s150 = sphi 0, %s154
                %p151 = scmp.ge.s32.totalorder %s150, 1
                %s155 = sphi %s141, %s141
                %s156 = sphi %s136, %s136
              $region35: #{gripnet_forward.13} parent=31 // loop_header_branch
                %153 = sbr.rel (%p151) target = $region39
              $region36: #{gripnet_forward.13} parent=31 // loop_body
                %v157 = vld [vmem:[%s155] sm:$0xff]
                %158 = vst [vmem:[%s156] sm:$0xff] %v157
                %v159 = vld [vmem:[%s155 + $0x10] sm:$0xff]
                %160 = vst [vmem:[%s156 + $0x8] sm:$0xff] %v159
                %v161 = vld [vmem:[%s155 + $0x20] sm:$0xff]
                %162 = vst [vmem:[%s156 + $0x10] sm:$0xff] %v161
                %v163 = vld [vmem:[%s155 + $0x30] sm:$0xff]
                %164 = vst [vmem:[%s156 + $0x18] sm:$0xff] %v163
                %v165 = vld [vmem:[%s155 + $0x40] sm:$0xff]
                %166 = vst [vmem:[%s156 + $0x20] sm:$0xff] %v165
                %v167 = vld [vmem:[%s155 + $0x50] sm:$0xff]
                %168 = vst [vmem:[%s156 + $0x28] sm:$0xff] %v167
                %v169 = vld [vmem:[%s155 + $0x60] sm:$0xff]
                %170 = vst [vmem:[%s156 + $0x30] sm:$0xff] %v169
                %v171 = vld [vmem:[%s155 + $0x70] sm:$0xff]
                %172 = vst [vmem:[%s156 + $0x38] sm:$0xff] %v171
                %v173 = vld [vmem:[%s155 + $0x80] sm:$0xff]
                %174 = vst [vmem:[%s156 + $0x40] sm:$0xff] %v173
                %v175 = vld [vmem:[%s155 + $0x90] sm:$0xff]
                %176 = vst [vmem:[%s156 + $0x48] sm:$0xff] %v175
                %v177 = vld [vmem:[%s155 + $0xa0] sm:$0xff]
                %178 = vst [vmem:[%s156 + $0x50] sm:$0xff] %v177
                %v179 = vld [vmem:[%s155 + $0xb0] sm:$0xff]
                %180 = vst [vmem:[%s156 + $0x58] sm:$0xff] %v179
                %v181 = vld [vmem:[%s155 + $0xc0] sm:$0xff]
                %182 = vst [vmem:[%s156 + $0x60] sm:$0xff] %v181
                %v183 = vld [vmem:[%s155 + $0xd0] sm:$0xff]
                %184 = vst [vmem:[%s156 + $0x68] sm:$0xff] %v183
                %v185 = vld [vmem:[%s155 + $0xe0] sm:$0xff]
                %186 = vst [vmem:[%s156 + $0x70] sm:$0xff] %v185
                %v187 = vld [vmem:[%s155 + $0xf0] sm:$0xff]
                %188 = vst [vmem:[%s156 + $0x78] sm:$0xff] %v187
              $region37: #{gripnet_forward.13} parent=31 // loop_footer
                %s154 = sadd.s32 1, %s150
              $region38: #{gripnet_forward.13} parent=31 // loop_footer_branch
                %149 = sbr.rel target = $region34
              $region39: #{gripnet_forward.13} parent=31 // loop_exit
                _
            $region32: #{gripnet_forward.13} parent=23 // pred_fallthru
              _
          $region24: #{gripnet_forward.13} parent=19 // pred_fallthru
            _
          %233 = vnop
        $region20: #{gripnet_forward.13} parent=15 // pred_fallthru
          _
        // Predicated region
        $region55: #{gripnet_forward.13} parent=15 // pred_check
          %p234 = pneg %p77
        $region56: #{gripnet_forward.13} parent=15 // pred_check_branch
          %236 = sbr.rel (%p234) target = $region58
        $region57: #{gripnet_forward.13} parent=15 // pred_region
          %s237 = sand.u32 %s67, 1
          %s238 = sand.u32 %s67, 1
          %s239 = smul.addr %s238, 128
          %s240 = scalar_lea.vmem [#allocation4], %s239
          %s241 = smul.u32 16, %s16
          %s242 = smul.addr %s241, 2
          %s243 = sadd.s32 %s17, %s242
          %s244 = smul.addr %s243, 8
          %s245 = scalar_lea.vmem %s1, %s244
          // Predicated region
          $region59: #{gripnet_forward.13} parent=57 // pred_check
            _
          $region60: #{gripnet_forward.13} parent=57 // pred_check_branch
            %247 = sbr.rel (0) target = $region62
          $region61: #{gripnet_forward.13} parent=57 // pred_region
            // Predicated region
            $region63: #{gripnet_forward.13} parent=61 // pred_check
              _
            $region64: #{gripnet_forward.13} parent=61 // pred_check_branch
              %249 = sbr.rel (0) target = $region66
            $region65: #{gripnet_forward.13} parent=61 // pred_region
              // Predicated region
              $region78: #{gripnet_forward.13} parent=65 // pred_check
                _
              $region79: #{gripnet_forward.13} parent=65 // pred_check_branch
                %294 = sbr.rel (0) target = $region81
              $region80: #{gripnet_forward.13} parent=65 // pred_region
                loop: start=0, step=1, limit=1
                $region82: #{gripnet_forward.13} parent=80 // loop_pre_header
                  _
                $region83: #{gripnet_forward.13} parent=80 // loop_header
                  %s296 = sphi 0, %s300
                  %p297 = scmp.ge.s32.totalorder %s296, 1
                  %s301 = sphi %s245, %s245
                  %s302 = sphi %s240, %s240
                $region84: #{gripnet_forward.13} parent=80 // loop_header_branch
                  %299 = sbr.rel (%p297) target = $region88
                $region85: #{gripnet_forward.13} parent=80 // loop_body
                  %v303 = vld [vmem:[%s301] sm:$0xff]
                  %304 = vst [vmem:[%s302] sm:$0xff] %v303
                  %v305 = vld [vmem:[%s301 + $0x10] sm:$0xff]
                  %306 = vst [vmem:[%s302 + $0x8] sm:$0xff] %v305
                  %v307 = vld [vmem:[%s301 + $0x20] sm:$0xff]
                  %308 = vst [vmem:[%s302 + $0x10] sm:$0xff] %v307
                  %v309 = vld [vmem:[%s301 + $0x30] sm:$0xff]
                  %310 = vst [vmem:[%s302 + $0x18] sm:$0xff] %v309
                  %v311 = vld [vmem:[%s301 + $0x40] sm:$0xff]
                  %312 = vst [vmem:[%s302 + $0x20] sm:$0xff] %v311
                  %v313 = vld [vmem:[%s301 + $0x50] sm:$0xff]
                  %314 = vst [vmem:[%s302 + $0x28] sm:$0xff] %v313
                  %v315 = vld [vmem:[%s301 + $0x60] sm:$0xff]
                  %316 = vst [vmem:[%s302 + $0x30] sm:$0xff] %v315
                  %v317 = vld [vmem:[%s301 + $0x70] sm:$0xff]
                  %318 = vst [vmem:[%s302 + $0x38] sm:$0xff] %v317
                  %v319 = vld [vmem:[%s301 + $0x80] sm:$0xff]
                  %320 = vst [vmem:[%s302 + $0x40] sm:$0xff] %v319
                  %v321 = vld [vmem:[%s301 + $0x90] sm:$0xff]
                  %322 = vst [vmem:[%s302 + $0x48] sm:$0xff] %v321
                  %v323 = vld [vmem:[%s301 + $0xa0] sm:$0xff]
                  %324 = vst [vmem:[%s302 + $0x50] sm:$0xff] %v323
                  %v325 = vld [vmem:[%s301 + $0xb0] sm:$0xff]
                  %326 = vst [vmem:[%s302 + $0x58] sm:$0xff] %v325
                  %v327 = vld [vmem:[%s301 + $0xc0] sm:$0xff]
                  %328 = vst [vmem:[%s302 + $0x60] sm:$0xff] %v327
                  %v329 = vld [vmem:[%s301 + $0xd0] sm:$0xff]
                  %330 = vst [vmem:[%s302 + $0x68] sm:$0xff] %v329
                  %v331 = vld [vmem:[%s301 + $0xe0] sm:$0xff]
                  %332 = vst [vmem:[%s302 + $0x70] sm:$0xff] %v331
                  %v333 = vld [vmem:[%s301 + $0xf0] sm:$0xff]
                  %334 = vst [vmem:[%s302 + $0x78] sm:$0xff] %v333
                $region86: #{gripnet_forward.13} parent=80 // loop_footer
                  %s300 = sadd.s32 1, %s296
                $region87: #{gripnet_forward.13} parent=80 // loop_footer_branch
                  %295 = sbr.rel target = $region83
                $region88: #{gripnet_forward.13} parent=80 // loop_exit
                  _
              $region81: #{gripnet_forward.13} parent=65 // pred_fallthru
                _
              // Predicated region
              $region89: #{gripnet_forward.13} parent=65 // pred_check
                _
              $region90: #{gripnet_forward.13} parent=65 // pred_check_branch
                %336 = sbr.rel target = $region92
              $region91: #{gripnet_forward.13} parent=65 // pred_region
                _
              $region92: #{gripnet_forward.13} parent=65 // pred_fallthru
                _
            $region66: #{gripnet_forward.13} parent=61 // pred_fallthru
              _
            // Predicated region
            $region67: #{gripnet_forward.13} parent=61 // pred_check
              _
            $region68: #{gripnet_forward.13} parent=61 // pred_check_branch
              %251 = sbr.rel target = $region70
            $region69: #{gripnet_forward.13} parent=61 // pred_region
              loop: start=0, step=1, limit=1
              $region71: #{gripnet_forward.13} parent=69 // loop_pre_header
                _
              $region72: #{gripnet_forward.13} parent=69 // loop_header
                %s254 = sphi 0, %s258
                %p255 = scmp.ge.s32.totalorder %s254, 1
                %s259 = sphi %s245, %s245
                %s260 = sphi %s240, %s240
              $region73: #{gripnet_forward.13} parent=69 // loop_header_branch
                %257 = sbr.rel (%p255) target = $region77
              $region74: #{gripnet_forward.13} parent=69 // loop_body
                %v261 = vld [vmem:[%s259] sm:$0xff]
                %262 = vst [vmem:[%s260] sm:$0xff] %v261
                %v263 = vld [vmem:[%s259 + $0x10] sm:$0xff]
                %264 = vst [vmem:[%s260 + $0x8] sm:$0xff] %v263
                %v265 = vld [vmem:[%s259 + $0x20] sm:$0xff]
                %266 = vst [vmem:[%s260 + $0x10] sm:$0xff] %v265
                %v267 = vld [vmem:[%s259 + $0x30] sm:$0xff]
                %268 = vst [vmem:[%s260 + $0x18] sm:$0xff] %v267
                %v269 = vld [vmem:[%s259 + $0x40] sm:$0xff]
                %270 = vst [vmem:[%s260 + $0x20] sm:$0xff] %v269
                %v271 = vld [vmem:[%s259 + $0x50] sm:$0xff]
                %272 = vst [vmem:[%s260 + $0x28] sm:$0xff] %v271
                %v273 = vld [vmem:[%s259 + $0x60] sm:$0xff]
                %274 = vst [vmem:[%s260 + $0x30] sm:$0xff] %v273
                %v275 = vld [vmem:[%s259 + $0x70] sm:$0xff]
                %276 = vst [vmem:[%s260 + $0x38] sm:$0xff] %v275
                %v277 = vld [vmem:[%s259 + $0x80] sm:$0xff]
                %278 = vst [vmem:[%s260 + $0x40] sm:$0xff] %v277
                %v279 = vld [vmem:[%s259 + $0x90] sm:$0xff]
                %280 = vst [vmem:[%s260 + $0x48] sm:$0xff] %v279
                %v281 = vld [vmem:[%s259 + $0xa0] sm:$0xff]
                %282 = vst [vmem:[%s260 + $0x50] sm:$0xff] %v281
                %v283 = vld [vmem:[%s259 + $0xb0] sm:$0xff]
                %284 = vst [vmem:[%s260 + $0x58] sm:$0xff] %v283
                %v285 = vld [vmem:[%s259 + $0xc0] sm:$0xff]
                %286 = vst [vmem:[%s260 + $0x60] sm:$0xff] %v285
                %v287 = vld [vmem:[%s259 + $0xd0] sm:$0xff]
                %288 = vst [vmem:[%s260 + $0x68] sm:$0xff] %v287
                %v289 = vld [vmem:[%s259 + $0xe0] sm:$0xff]
                %290 = vst [vmem:[%s260 + $0x70] sm:$0xff] %v289
                %v291 = vld [vmem:[%s259 + $0xf0] sm:$0xff]
                %292 = vst [vmem:[%s260 + $0x78] sm:$0xff] %v291
              $region75: #{gripnet_forward.13} parent=69 // loop_footer
                %s258 = sadd.s32 1, %s254
              $region76: #{gripnet_forward.13} parent=69 // loop_footer_branch
                %253 = sbr.rel target = $region72
              $region77: #{gripnet_forward.13} parent=69 // loop_exit
                _
            $region70: #{gripnet_forward.13} parent=61 // pred_fallthru
              _
          $region62: #{gripnet_forward.13} parent=57 // pred_fallthru
            _
          %337 = vnop
        $region58: #{gripnet_forward.13} parent=15 // pred_fallthru
          _
      $region16: #{gripnet_forward.13} parent=5 // pred_fallthru
        _
      %p338 = scmp.le.s32.totalorder 1, %s8
      %p339 = scmp.lt.s32.totalorder %s8, 9
      %p340 = pnand %p338, %p339
      %p341 = pneg %p340
      // Predicated region
      $region93: #{gripnet_forward.13} parent=5 // pred_check
        _
      $region94: #{gripnet_forward.13} parent=5 // pred_check_branch
        %343 = sbr.rel (%p340) target = $region96
      $region95: #{gripnet_forward.13} parent=5 // pred_region
        %s344 = ssub.s32 %s8, 1
        %s345 = sand.u32 %s42, 1
        %s346 = sand.u32 %s42, 1
        %s347 = smul.addr %s346, 128
        %s348 = scalar_lea.vmem [#allocation3], %s347
        // Predicated region
        $region97: #{gripnet_forward.13} parent=95 // pred_check
          %p349 = pneg %p55
        $region98: #{gripnet_forward.13} parent=95 // pred_check_branch
          %351 = sbr.rel (%p349) target = $region100
        $region99: #{gripnet_forward.13} parent=95 // pred_region
          _
        $region100: #{gripnet_forward.13} parent=95 // pred_fallthru
          _
        %s352 = sand.u32 %s70, 1
        %s353 = sand.u32 %s70, 1
        %s354 = smul.addr %s353, 128
        %s355 = scalar_lea.vmem [#allocation4], %s354
        // Predicated region
        $region101: #{gripnet_forward.13} parent=95 // pred_check
          %p356 = pneg %p83
        $region102: #{gripnet_forward.13} parent=95 // pred_check_branch
          %358 = sbr.rel (%p356) target = $region104
        $region103: #{gripnet_forward.13} parent=95 // pred_region
          _
        $region104: #{gripnet_forward.13} parent=95 // pred_fallthru
          _
        %s359 = sand.u32 %s42, 1
        %s360 = sand.u32 %s42, 1
        %s361 = smul.addr %s360, 128
        %s362 = scalar_lea.vmem [#allocation3], %s361
        %p363 = pneg %p55
        %p364 = pneg %p52
        %s365 = sand.u32 %s70, 1
        %s366 = sand.u32 %s70, 1
        %s367 = smul.addr %s366, 128
        %s368 = scalar_lea.vmem [#allocation4], %s367
        %p369 = pneg %p83
        %p370 = pneg %p80
        %p371 = pneg %p111
        %p372 = pneg %p108
        %s373 = sand.u32 %s98, 1
        %s374 = sand.u32 %s98, 1
        %s375 = smul.addr %s374, 128
        %s376 = scalar_lea.vmem [#allocation5], %s375
        %s377 = smul.u32 16, %s18
        %s378 = smul.u32 16, %s19
        %s379 = smul.u32 16, %s18
        %p380 = scmp.eq.s32.totalorder %s20, 0
        // Predicated region
        $region105: #{gripnet_forward.13} parent=95 // pred_check
          %p381 = pneg %p380
        $region106: #{gripnet_forward.13} parent=95 // pred_check_branch
          %383 = sbr.rel (%p381) target = $region108
        $region107: #{gripnet_forward.13} parent=95 // pred_region
          %384 = vst [vmem:[#allocation2] sm:$0xff] 0.0
          %385 = vst [vmem:[#allocation2 + $0x8] sm:$0xff] 0.0
          %386 = vst [vmem:[#allocation2 + $0x10] sm:$0xff] 0.0
          %387 = vst [vmem:[#allocation2 + $0x18] sm:$0xff] 0.0
          %388 = vst [vmem:[#allocation2 + $0x20] sm:$0xff] 0.0
          %389 = vst [vmem:[#allocation2 + $0x28] sm:$0xff] 0.0
          %390 = vst [vmem:[#allocation2 + $0x30] sm:$0xff] 0.0
          %391 = vst [vmem:[#allocation2 + $0x38] sm:$0xff] 0.0
          %392 = vst [vmem:[#allocation2 + $0x40] sm:$0xff] 0.0
          %393 = vst [vmem:[#allocation2 + $0x48] sm:$0xff] 0.0
          %394 = vst [vmem:[#allocation2 + $0x50] sm:$0xff] 0.0
          %395 = vst [vmem:[#allocation2 + $0x58] sm:$0xff] 0.0
          %396 = vst [vmem:[#allocation2 + $0x60] sm:$0xff] 0.0
          %397 = vst [vmem:[#allocation2 + $0x68] sm:$0xff] 0.0
          %398 = vst [vmem:[#allocation2 + $0x70] sm:$0xff] 0.0
          %399 = vst [vmem:[#allocation2 + $0x78] sm:$0xff] 0.0
        $region108: #{gripnet_forward.13} parent=95 // pred_fallthru
          _
        %v400 = vld [vmem:[#allocation2] sm:$0xff]
        %v401 = vld [vmem:[#allocation2 + $0x8] sm:$0xff]
        %v402 = vld [vmem:[#allocation2 + $0x10] sm:$0xff]
        %v403 = vld [vmem:[#allocation2 + $0x18] sm:$0xff]
        %v404 = vld [vmem:[#allocation2 + $0x20] sm:$0xff]
        %v405 = vld [vmem:[#allocation2 + $0x28] sm:$0xff]
        %v406 = vld [vmem:[#allocation2 + $0x30] sm:$0xff]
        %v407 = vld [vmem:[#allocation2 + $0x38] sm:$0xff]
        %v408 = vld [vmem:[#allocation2 + $0x40] sm:$0xff]
        %v409 = vld [vmem:[#allocation2 + $0x48] sm:$0xff]
        %v410 = vld [vmem:[#allocation2 + $0x50] sm:$0xff]
        %v411 = vld [vmem:[#allocation2 + $0x58] sm:$0xff]
        %v412 = vld [vmem:[#allocation2 + $0x60] sm:$0xff]
        %v413 = vld [vmem:[#allocation2 + $0x68] sm:$0xff]
        %v414 = vld [vmem:[#allocation2 + $0x70] sm:$0xff]
        %v415 = vld [vmem:[#allocation2 + $0x78] sm:$0xff]
        %v416 = vld [vmem:[%s348] sm:$0xff]
        %v417 = vld [vmem:[%s348 + $0x8] sm:$0xff]
        %v418 = vld [vmem:[%s348 + $0x10] sm:$0xff]
        %v419 = vld [vmem:[%s348 + $0x18] sm:$0xff]
        %v420 = vld [vmem:[%s348 + $0x20] sm:$0xff]
        %v421 = vld [vmem:[%s348 + $0x28] sm:$0xff]
        %v422 = vld [vmem:[%s348 + $0x30] sm:$0xff]
        %v423 = vld [vmem:[%s348 + $0x38] sm:$0xff]
        %v424 = vld [vmem:[%s348 + $0x40] sm:$0xff]
        %v425 = vld [vmem:[%s348 + $0x48] sm:$0xff]
        %v426 = vld [vmem:[%s348 + $0x50] sm:$0xff]
        %v427 = vld [vmem:[%s348 + $0x58] sm:$0xff]
        %v428 = vld [vmem:[%s348 + $0x60] sm:$0xff]
        %v429 = vld [vmem:[%s348 + $0x68] sm:$0xff]
        %v430 = vld [vmem:[%s348 + $0x70] sm:$0xff]
        %v431 = vld [vmem:[%s348 + $0x78] sm:$0xff]
        %v432 = vld [vmem:[%s355] sm:$0xff]
        %v433 = vld [vmem:[%s355 + $0x8] sm:$0xff]
        %v434 = vld [vmem:[%s355 + $0x10] sm:$0xff]
        %v435 = vld [vmem:[%s355 + $0x18] sm:$0xff]
        %v436 = vld [vmem:[%s355 + $0x20] sm:$0xff]
        %v437 = vld [vmem:[%s355 + $0x28] sm:$0xff]
        %v438 = vld [vmem:[%s355 + $0x30] sm:$0xff]
        %v439 = vld [vmem:[%s355 + $0x38] sm:$0xff]
        %v440 = vld [vmem:[%s355 + $0x40] sm:$0xff]
        %v441 = vld [vmem:[%s355 + $0x48] sm:$0xff]
        %v442 = vld [vmem:[%s355 + $0x50] sm:$0xff]
        %v443 = vld [vmem:[%s355 + $0x58] sm:$0xff]
        %v444 = vld [vmem:[%s355 + $0x60] sm:$0xff]
        %v445 = vld [vmem:[%s355 + $0x68] sm:$0xff]
        %v446 = vld [vmem:[%s355 + $0x70] sm:$0xff]
        %v447 = vld [vmem:[%s355 + $0x78] sm:$0xff]
        %448 = vmatprep.subr.mxu0 0.0
        %449 = vmatpush1.xpose.msra.mxu0 %v432
        %450 = vmatprep.subr.mxu0 0.0
        %451 = vmatpush1.xpose.msra.mxu0 %v433
        %452 = vmatprep.subr.mxu0 0.0
        %453 = vmatpush1.xpose.msra.mxu0 %v434
        %454 = vmatprep.subr.mxu0 0.0
        %455 = vmatpush1.xpose.msra.mxu0 %v435
        %456 = vmatprep.subr.mxu0 0.0
        %457 = vmatpush1.xpose.msra.mxu0 %v436
        %458 = vmatprep.subr.mxu0 0.0
        %459 = vmatpush1.xpose.msra.mxu0 %v437
        %460 = vmatprep.subr.mxu0 0.0
        %461 = vmatpush1.xpose.msra.mxu0 %v438
        %462 = vmatprep.subr.mxu0 0.0
        %463 = vmatpush1.xpose.msra.mxu0 %v439
        %464 = vmatprep.subr.mxu0 0.0
        %465 = vmatpush1.xpose.msra.mxu0 %v440
        %466 = vmatprep.subr.mxu0 0.0
        %467 = vmatpush1.xpose.msra.mxu0 %v441
        %468 = vmatprep.subr.mxu0 0.0
        %469 = vmatpush1.xpose.msra.mxu0 %v442
        %470 = vmatprep.subr.mxu0 0.0
        %471 = vmatpush1.xpose.msra.mxu0 %v443
        %472 = vmatprep.subr.mxu0 0.0
        %473 = vmatpush1.xpose.msra.mxu0 %v444
        %474 = vmatprep.subr.mxu0 0.0
        %475 = vmatpush1.xpose.msra.mxu0 %v445
        %476 = vmatprep.subr.mxu0 0.0
        %477 = vmatpush1.xpose.msra.mxu0 %v446
        %478 = vmatprep.subr.mxu0 0.0
        %479 = vmatpush1.xpose.msra.mxu0 %v447
        %480 = vmatprep.subr.mxu0 0.0
        %481 = vmatpush1.xpose.msra.mxu0 0.0
        %482 = vmatprep.subr.mxu0 0.0
        %483 = vmatpush1.xpose.msra.mxu0 0.0
        %484 = vmatprep.subr.mxu0 0.0
        %485 = vmatpush1.xpose.msra.mxu0 0.0
        %486 = vmatprep.subr.mxu0 0.0
        %487 = vmatpush1.xpose.msra.mxu0 0.0
        %488 = vmatprep.subr.mxu0 0.0
        %489 = vmatpush1.xpose.msra.mxu0 0.0
        %490 = vmatprep.subr.mxu0 0.0
        %491 = vmatpush1.xpose.msra.mxu0 0.0
        %492 = vmatprep.subr.mxu0 0.0
        %493 = vmatpush1.xpose.msra.mxu0 0.0
        %494 = vmatprep.subr.mxu0 0.0
        %495 = vmatpush1.xpose.msra.mxu0 0.0
        %496 = vmatprep.subr.mxu0 0.0
        %497 = vmatpush1.xpose.msra.mxu0 0.0
        %498 = vmatprep.subr.mxu0 0.0
        %499 = vmatpush1.xpose.msra.mxu0 0.0
        %500 = vmatprep.subr.mxu0 0.0
        %501 = vmatpush1.xpose.msra.mxu0 0.0
        %502 = vmatprep.subr.mxu0 0.0
        %503 = vmatpush1.xpose.msra.mxu0 0.0
        %504 = vmatprep.subr.mxu0 0.0
        %505 = vmatpush1.xpose.msra.mxu0 0.0
        %506 = vmatprep.subr.mxu0 0.0
        %507 = vmatpush1.xpose.msra.mxu0 0.0
        %508 = vmatprep.subr.mxu0 0.0
        %509 = vmatpush1.xpose.msra.mxu0 0.0
        %510 = vmatprep.subr.mxu0 0.0
        %511 = vmatpush1.xpose.msra.mxu0 0.0
        %512 = vmatprep.mubr.f32.mxu0 0.0
        %513 = vmatmul.mubr.f32.gmra.mrb[0].mxu0 %v416
        %v514 = vpop.f32.mrb[0].mxu0
        %v515 = vadd.f32 0.0, %v514
        %v516 = vpop.f32.mrb[0].mxu0
        %517 = vmatprep.mubr.f32.mxu0 0.0
        %518 = vmatmul.mubr.f32.gmra.mrb[0].mxu0 %v417
        %v519 = vpop.f32.mrb[0].mxu0
        %v520 = vadd.f32 0.0, %v519
        %v521 = vpop.f32.mrb[0].mxu0
        %522 = vmatprep.mubr.f32.mxu0 0.0
        %523 = vmatmul.mubr.f32.gmra.mrb[0].mxu0 %v418
        %v524 = vpop.f32.mrb[0].mxu0
        %v525 = vadd.f32 0.0, %v524
        %v526 = vpop.f32.mrb[0].mxu0
        %527 = vmatprep.mubr.f32.mxu0 0.0
        %528 = vmatmul.mubr.f32.gmra.mrb[0].mxu0 %v419
        %v529 = vpop.f32.mrb[0].mxu0
        %v530 = vadd.f32 0.0, %v529
        %v531 = vpop.f32.mrb[0].mxu0
        %532 = vmatprep.mubr.f32.mxu0 0.0
        %533 = vmatmul.mubr.f32.gmra.mrb[0].mxu0 %v420
        %v534 = vpop.f32.mrb[0].mxu0
        %v535 = vadd.f32 0.0, %v534
        %v536 = vpop.f32.mrb[0].mxu0
        %537 = vmatprep.mubr.f32.mxu0 0.0
        %538 = vmatmul.mubr.f32.gmra.mrb[0].mxu0 %v421
        %v539 = vpop.f32.mrb[0].mxu0
        %v540 = vadd.f32 0.0, %v539
        %v541 = vpop.f32.mrb[0].mxu0
        %542 = vmatprep.mubr.f32.mxu0 0.0
        %543 = vmatmul.mubr.f32.gmra.mrb[0].mxu0 %v422
        %v544 = vpop.f32.mrb[0].mxu0
        %v545 = vadd.f32 0.0, %v544
        %v546 = vpop.f32.mrb[0].mxu0
        %547 = vmatprep.mubr.f32.mxu0 0.0
        %548 = vmatmul.mubr.f32.gmra.mrb[0].mxu0 %v423
        %v549 = vpop.f32.mrb[0].mxu0
        %v550 = vadd.f32 0.0, %v549
        %v551 = vpop.f32.mrb[0].mxu0
        %552 = vmatprep.mubr.f32.mxu0 0.0
        %553 = vmatmul.mubr.f32.gmra.mrb[0].mxu0 %v424
        %v554 = vpop.f32.mrb[0].mxu0
        %v555 = vadd.f32 0.0, %v554
        %v556 = vpop.f32.mrb[0].mxu0
        %557 = vmatprep.mubr.f32.mxu0 0.0
        %558 = vmatmul.mubr.f32.gmra.mrb[0].mxu0 %v425
        %v559 = vpop.f32.mrb[0].mxu0
        %v560 = vadd.f32 0.0, %v559
        %v561 = vpop.f32.mrb[0].mxu0
        %562 = vmatprep.mubr.f32.mxu0 0.0
        %563 = vmatmul.mubr.f32.gmra.mrb[0].mxu0 %v426
        %v564 = vpop.f32.mrb[0].mxu0
        %v565 = vadd.f32 0.0, %v564
        %v566 = vpop.f32.mrb[0].mxu0
        %567 = vmatprep.mubr.f32.mxu0 0.0
        %568 = vmatmul.mubr.f32.gmra.mrb[0].mxu0 %v427
        %v569 = vpop.f32.mrb[0].mxu0
        %v570 = vadd.f32 0.0, %v569
        %v571 = vpop.f32.mrb[0].mxu0
        %572 = vmatprep.mubr.f32.mxu0 0.0
        %573 = vmatmul.mubr.f32.gmra.mrb[0].mxu0 %v428
        %v574 = vpop.f32.mrb[0].mxu0
        %v575 = vadd.f32 0.0, %v574
        %v576 = vpop.f32.mrb[0].mxu0
        %577 = vmatprep.mubr.f32.mxu0 0.0
        %578 = vmatmul.mubr.f32.gmra.mrb[0].mxu0 %v429
        %v579 = vpop.f32.mrb[0].mxu0
        %v580 = vadd.f32 0.0, %v579
        %v581 = vpop.f32.mrb[0].mxu0
        %582 = vmatprep.mubr.f32.mxu0 0.0
        %583 = vmatmul.mubr.f32.gmra.mrb[0].mxu0 %v430
        %v584 = vpop.f32.mrb[0].mxu0
        %v585 = vadd.f32 0.0, %v584
        %v586 = vpop.f32.mrb[0].mxu0
        %587 = vmatprep.mubr.f32.mxu0 0.0
        %588 = vmatmul.mubr.f32.gmra.mrb[0].mxu0 %v431
        %v589 = vpop.f32.mrb[0].mxu0
        %v590 = vadd.f32 0.0, %v589
        %v591 = vpop.f32.mrb[0].mxu0
        %592 = vdwg.mxu0
        %v593 = vadd.f32 %v400, %v515
        %v594 = vadd.f32 %v401, %v520
        %v595 = vadd.f32 %v402, %v525
        %v596 = vadd.f32 %v403, %v530
        %v597 = vadd.f32 %v404, %v535
        %v598 = vadd.f32 %v405, %v540
        %v599 = vadd.f32 %v406, %v545
        %v600 = vadd.f32 %v407, %v550
        %v601 = vadd.f32 %v408, %v555
        %v602 = vadd.f32 %v409, %v560
        %v603 = vadd.f32 %v410, %v565
        %v604 = vadd.f32 %v411, %v570
        %v605 = vadd.f32 %v412, %v575
        %v606 = vadd.f32 %v413, %v580
        %v607 = vadd.f32 %v414, %v585
        %v608 = vadd.f32 %v415, %v590
        %609 = vst [vmem:[#allocation2] sm:$0xff] %v593
        %610 = vst [vmem:[#allocation2 + $0x8] sm:$0xff] %v594
        %611 = vst [vmem:[#allocation2 + $0x10] sm:$0xff] %v595
        %612 = vst [vmem:[#allocation2 + $0x18] sm:$0xff] %v596
        %613 = vst [vmem:[#allocation2 + $0x20] sm:$0xff] %v597
        %614 = vst [vmem:[#allocation2 + $0x28] sm:$0xff] %v598
        %615 = vst [vmem:[#allocation2 + $0x30] sm:$0xff] %v599
        %616 = vst [vmem:[#allocation2 + $0x38] sm:$0xff] %v600
        %617 = vst [vmem:[#allocation2 + $0x40] sm:$0xff] %v601
        %618 = vst [vmem:[#allocation2 + $0x48] sm:$0xff] %v602
        %619 = vst [vmem:[#allocation2 + $0x50] sm:$0xff] %v603
        %620 = vst [vmem:[#allocation2 + $0x58] sm:$0xff] %v604
        %621 = vst [vmem:[#allocation2 + $0x60] sm:$0xff] %v605
        %622 = vst [vmem:[#allocation2 + $0x68] sm:$0xff] %v606
        %623 = vst [vmem:[#allocation2 + $0x70] sm:$0xff] %v607
        %624 = vst [vmem:[#allocation2 + $0x78] sm:$0xff] %v608
        %p625 = scmp.eq.s32.totalorder %s20, 1
        // Predicated region
        $region109: #{gripnet_forward.13} parent=95 // pred_check
          %p626 = pneg %p625
        $region110: #{gripnet_forward.13} parent=95 // pred_check_branch
          %628 = sbr.rel (%p626) target = $region112
        $region111: #{gripnet_forward.13} parent=95 // pred_region
          %v629 = vld [vmem:[#allocation2] sm:$0xff]
          %v630 = vld [vmem:[#allocation2 + $0x8] sm:$0xff]
          %v631 = vld [vmem:[#allocation2 + $0x10] sm:$0xff]
          %v632 = vld [vmem:[#allocation2 + $0x18] sm:$0xff]
          %v633 = vld [vmem:[#allocation2 + $0x20] sm:$0xff]
          %v634 = vld [vmem:[#allocation2 + $0x28] sm:$0xff]
          %v635 = vld [vmem:[#allocation2 + $0x30] sm:$0xff]
          %v636 = vld [vmem:[#allocation2 + $0x38] sm:$0xff]
          %v637 = vld [vmem:[#allocation2 + $0x40] sm:$0xff]
          %v638 = vld [vmem:[#allocation2 + $0x48] sm:$0xff]
          %v639 = vld [vmem:[#allocation2 + $0x50] sm:$0xff]
          %v640 = vld [vmem:[#allocation2 + $0x58] sm:$0xff]
          %v641 = vld [vmem:[#allocation2 + $0x60] sm:$0xff]
          %v642 = vld [vmem:[#allocation2 + $0x68] sm:$0xff]
          %v643 = vld [vmem:[#allocation2 + $0x70] sm:$0xff]
          %v644 = vld [vmem:[#allocation2 + $0x78] sm:$0xff]
          %645 = vst [vmem:[%s376] sm:$0xff] %v629
          %646 = vst [vmem:[%s376 + $0x8] sm:$0xff] %v630
          %647 = vst [vmem:[%s376 + $0x10] sm:$0xff] %v631
          %648 = vst [vmem:[%s376 + $0x18] sm:$0xff] %v632
          %649 = vst [vmem:[%s376 + $0x20] sm:$0xff] %v633
          %650 = vst [vmem:[%s376 + $0x28] sm:$0xff] %v634
          %651 = vst [vmem:[%s376 + $0x30] sm:$0xff] %v635
          %652 = vst [vmem:[%s376 + $0x38] sm:$0xff] %v636
          %653 = vst [vmem:[%s376 + $0x40] sm:$0xff] %v637
          %654 = vst [vmem:[%s376 + $0x48] sm:$0xff] %v638
          %655 = vst [vmem:[%s376 + $0x50] sm:$0xff] %v639
          %656 = vst [vmem:[%s376 + $0x58] sm:$0xff] %v640
          %657 = vst [vmem:[%s376 + $0x60] sm:$0xff] %v641
          %658 = vst [vmem:[%s376 + $0x68] sm:$0xff] %v642
          %659 = vst [vmem:[%s376 + $0x70] sm:$0xff] %v643
          %660 = vst [vmem:[%s376 + $0x78] sm:$0xff] %v644
        $region112: #{gripnet_forward.13} parent=95 // pred_fallthru
          _
        %s661 = sand.u32 %s98, 1
        %s662 = sand.u32 %s98, 1
        %s663 = smul.addr %s662, 128
        %s664 = scalar_lea.vmem [#allocation5], %s663
        // Predicated region
        $region113: #{gripnet_forward.13} parent=95 // pred_check
          %p665 = pneg %p108
        $region114: #{gripnet_forward.13} parent=95 // pred_check_branch
          %667 = sbr.rel (%p665) target = $region116
        $region115: #{gripnet_forward.13} parent=95 // pred_region
          %s668 = smul.u32 16, %s18
          %s669 = smul.addr %s668, 2
          %s670 = sadd.s32 %s19, %s669
          %s671 = smul.addr %s670, 8
          %s672 = scalar_lea.vmem %s2, %s671
          // Predicated region
          $region117: #{gripnet_forward.13} parent=115 // pred_check
            _
          $region118: #{gripnet_forward.13} parent=115 // pred_check_branch
            %674 = sbr.rel (0) target = $region120
          $region119: #{gripnet_forward.13} parent=115 // pred_region
            // Predicated region
            $region121: #{gripnet_forward.13} parent=119 // pred_check
              _
            $region122: #{gripnet_forward.13} parent=119 // pred_check_branch
              %676 = sbr.rel (0) target = $region124
            $region123: #{gripnet_forward.13} parent=119 // pred_region
              // Predicated region
              $region136: #{gripnet_forward.13} parent=123 // pred_check
                _
              $region137: #{gripnet_forward.13} parent=123 // pred_check_branch
                %721 = sbr.rel (0) target = $region139
              $region138: #{gripnet_forward.13} parent=123 // pred_region
                loop: start=0, step=1, limit=1
                $region140: #{gripnet_forward.13} parent=138 // loop_pre_header
                  _
                $region141: #{gripnet_forward.13} parent=138 // loop_header
                  %s723 = sphi 0, %s727
                  %p724 = scmp.ge.s32.totalorder %s723, 1
                  %s728 = sphi %s664, %s664
                  %s729 = sphi %s672, %s672
                $region142: #{gripnet_forward.13} parent=138 // loop_header_branch
                  %726 = sbr.rel (%p724) target = $region146
                $region143: #{gripnet_forward.13} parent=138 // loop_body
                  %v730 = vld [vmem:[%s728] sm:$0xff]
                  %731 = vst [vmem:[%s729] sm:$0xff] %v730
                  %v732 = vld [vmem:[%s728 + $0x8] sm:$0xff]
                  %733 = vst [vmem:[%s729 + $0x10] sm:$0xff] %v732
                  %v734 = vld [vmem:[%s728 + $0x10] sm:$0xff]
                  %735 = vst [vmem:[%s729 + $0x20] sm:$0xff] %v734
                  %v736 = vld [vmem:[%s728 + $0x18] sm:$0xff]
                  %737 = vst [vmem:[%s729 + $0x30] sm:$0xff] %v736
                  %v738 = vld [vmem:[%s728 + $0x20] sm:$0xff]
                  %739 = vst [vmem:[%s729 + $0x40] sm:$0xff] %v738
                  %v740 = vld [vmem:[%s728 + $0x28] sm:$0xff]
                  %741 = vst [vmem:[%s729 + $0x50] sm:$0xff] %v740
                  %v742 = vld [vmem:[%s728 + $0x30] sm:$0xff]
                  %743 = vst [vmem:[%s729 + $0x60] sm:$0xff] %v742
                  %v744 = vld [vmem:[%s728 + $0x38] sm:$0xff]
                  %745 = vst [vmem:[%s729 + $0x70] sm:$0xff] %v744
                  %v746 = vld [vmem:[%s728 + $0x40] sm:$0xff]
                  %747 = vst [vmem:[%s729 + $0x80] sm:$0xff] %v746
                  %v748 = vld [vmem:[%s728 + $0x48] sm:$0xff]
                  %749 = vst [vmem:[%s729 + $0x90] sm:$0xff] %v748
                  %v750 = vld [vmem:[%s728 + $0x50] sm:$0xff]
                  %751 = vst [vmem:[%s729 + $0xa0] sm:$0xff] %v750
                  %v752 = vld [vmem:[%s728 + $0x58] sm:$0xff]
                  %753 = vst [vmem:[%s729 + $0xb0] sm:$0xff] %v752
                  %v754 = vld [vmem:[%s728 + $0x60] sm:$0xff]
                  %755 = vst [vmem:[%s729 + $0xc0] sm:$0xff] %v754
                  %v756 = vld [vmem:[%s728 + $0x68] sm:$0xff]
                  %757 = vst [vmem:[%s729 + $0xd0] sm:$0xff] %v756
                  %v758 = vld [vmem:[%s728 + $0x70] sm:$0xff]
                  %759 = vst [vmem:[%s729 + $0xe0] sm:$0xff] %v758
                  %v760 = vld [vmem:[%s728 + $0x78] sm:$0xff]
                  %761 = vst [vmem:[%s729 + $0xf0] sm:$0xff] %v760
                $region144: #{gripnet_forward.13} parent=138 // loop_footer
                  %s727 = sadd.s32 1, %s723
                $region145: #{gripnet_forward.13} parent=138 // loop_footer_branch
                  %722 = sbr.rel target = $region141
                $region146: #{gripnet_forward.13} parent=138 // loop_exit
                  _
              $region139: #{gripnet_forward.13} parent=123 // pred_fallthru
                _
              // Predicated region
              $region147: #{gripnet_forward.13} parent=123 // pred_check
                _
              $region148: #{gripnet_forward.13} parent=123 // pred_check_branch
                %763 = sbr.rel target = $region150
              $region149: #{gripnet_forward.13} parent=123 // pred_region
                _
              $region150: #{gripnet_forward.13} parent=123 // pred_fallthru
                _
            $region124: #{gripnet_forward.13} parent=119 // pred_fallthru
              _
            // Predicated region
            $region125: #{gripnet_forward.13} parent=119 // pred_check
              _
            $region126: #{gripnet_forward.13} parent=119 // pred_check_branch
              %678 = sbr.rel target = $region128
            $region127: #{gripnet_forward.13} parent=119 // pred_region
              loop: start=0, step=1, limit=1
              $region129: #{gripnet_forward.13} parent=127 // loop_pre_header
                _
              $region130: #{gripnet_forward.13} parent=127 // loop_header
                %s681 = sphi 0, %s685
                %p682 = scmp.ge.s32.totalorder %s681, 1
                %s686 = sphi %s664, %s664
                %s687 = sphi %s672, %s672
              $region131: #{gripnet_forward.13} parent=127 // loop_header_branch
                %684 = sbr.rel (%p682) target = $region135
              $region132: #{gripnet_forward.13} parent=127 // loop_body
                %v688 = vld [vmem:[%s686] sm:$0xff]
                %689 = vst [vmem:[%s687] sm:$0xff] %v688
                %v690 = vld [vmem:[%s686 + $0x8] sm:$0xff]
                %691 = vst [vmem:[%s687 + $0x10] sm:$0xff] %v690
                %v692 = vld [vmem:[%s686 + $0x10] sm:$0xff]
                %693 = vst [vmem:[%s687 + $0x20] sm:$0xff] %v692
                %v694 = vld [vmem:[%s686 + $0x18] sm:$0xff]
                %695 = vst [vmem:[%s687 + $0x30] sm:$0xff] %v694
                %v696 = vld [vmem:[%s686 + $0x20] sm:$0xff]
                %697 = vst [vmem:[%s687 + $0x40] sm:$0xff] %v696
                %v698 = vld [vmem:[%s686 + $0x28] sm:$0xff]
                %699 = vst [vmem:[%s687 + $0x50] sm:$0xff] %v698
                %v700 = vld [vmem:[%s686 + $0x30] sm:$0xff]
                %701 = vst [vmem:[%s687 + $0x60] sm:$0xff] %v700
                %v702 = vld [vmem:[%s686 + $0x38] sm:$0xff]
                %703 = vst [vmem:[%s687 + $0x70] sm:$0xff] %v702
                %v704 = vld [vmem:[%s686 + $0x40] sm:$0xff]
                %705 = vst [vmem:[%s687 + $0x80] sm:$0xff] %v704
                %v706 = vld [vmem:[%s686 + $0x48] sm:$0xff]
                %707 = vst [vmem:[%s687 + $0x90] sm:$0xff] %v706
                %v708 = vld [vmem:[%s686 + $0x50] sm:$0xff]
                %709 = vst [vmem:[%s687 + $0xa0] sm:$0xff] %v708
                %v710 = vld [vmem:[%s686 + $0x58] sm:$0xff]
                %711 = vst [vmem:[%s687 + $0xb0] sm:$0xff] %v710
                %v712 = vld [vmem:[%s686 + $0x60] sm:$0xff]
                %713 = vst [vmem:[%s687 + $0xc0] sm:$0xff] %v712
                %v714 = vld [vmem:[%s686 + $0x68] sm:$0xff]
                %715 = vst [vmem:[%s687 + $0xd0] sm:$0xff] %v714
                %v716 = vld [vmem:[%s686 + $0x70] sm:$0xff]
                %717 = vst [vmem:[%s687 + $0xe0] sm:$0xff] %v716
                %v718 = vld [vmem:[%s686 + $0x78] sm:$0xff]
                %719 = vst [vmem:[%s687 + $0xf0] sm:$0xff] %v718
              $region133: #{gripnet_forward.13} parent=127 // loop_footer
                %s685 = sadd.s32 1, %s681
              $region134: #{gripnet_forward.13} parent=127 // loop_footer_branch
                %680 = sbr.rel target = $region130
              $region135: #{gripnet_forward.13} parent=127 // loop_exit
                _
            $region128: #{gripnet_forward.13} parent=119 // pred_fallthru
              _
          $region120: #{gripnet_forward.13} parent=115 // pred_fallthru
            _
          %764 = vnop
        $region116: #{gripnet_forward.13} parent=95 // pred_fallthru
          _
      $region96: #{gripnet_forward.13} parent=5 // pred_fallthru
        _
      %p765 = scmp.le.s32.totalorder 2, %s8
      // Predicated region
      $region151: #{gripnet_forward.13} parent=5 // pred_check
        %p766 = pneg %p765
      $region152: #{gripnet_forward.13} parent=5 // pred_check_branch
        %768 = sbr.rel (%p766) target = $region154
      $region153: #{gripnet_forward.13} parent=5 // pred_region
        %s769 = ssub.s32 %s8, 2
        // Predicated region
        $region155: #{gripnet_forward.13} parent=153 // pred_check
          %p770 = pneg %p114
        $region156: #{gripnet_forward.13} parent=153 // pred_check_branch
          %772 = sbr.rel (%p770) target = $region158
        $region157: #{gripnet_forward.13} parent=153 // pred_region
          %s773 = sand.u32 %s99, 1
          %s774 = sand.u32 %s99, 1
          %s775 = smul.addr %s774, 128
          %s776 = scalar_lea.vmem [#allocation5], %s775
        $region158: #{gripnet_forward.13} parent=153 // pred_fallthru
          _
      $region154: #{gripnet_forward.13} parent=5 // pred_fallthru
        _
    $region6: #{gripnet_forward.13} parent=1 // loop_footer
      %s12 = sadd.s32 1, %s8
    $region7: #{gripnet_forward.13} parent=1 // loop_footer_branch
      %7 = sbr.rel target = $region3
    $region8: #{gripnet_forward.13} parent=1 // loop_exit
      _

</llo_original>
